<compile_context>
chip_gen: v7x
topology: tpu7x:2x2x1
jax: 0.10.0
libtpu: 0.0.40
codegen_flags: <defaults>
</compile_context>

<pallas_src>
import functools

import jax
import jax.numpy as jnp
from jax import lax
from jax.experimental import pallas as pl
from jax.experimental.pallas import tpu as pltpu


def autoencoder_kernel(x_ref,
                       w1, b1, w2, b2, w3, b3,      # encoder params
                       w4, b4, w5, b5, w6, b6,      # decoder params
                       lat_ref, rec_ref,
                       *, chunk):
    """All six matmuls + ReLUs, fused. Processes the (tile_m, 3) row tile in
    `chunk`-row sub-chunks to bound vreg/VMEM pressure."""
    tile_rows = x_ref.shape[0]
    n_chunks = tile_rows // chunk          # static

    def body(c, carry):
        r0 = pl.multiple_of(c * chunk, chunk)
        x = x_ref[pl.ds(r0, chunk), :]

        # ---- encoder ----
        h = jnp.maximum(
            jnp.dot(x, w1[...], preferred_element_type=jnp.float32) + b1[...], 0.0)
        h = jnp.maximum(
            jnp.dot(h, w2[...], preferred_element_type=jnp.float32) + b2[...], 0.0)
        lat = jnp.dot(h, w3[...], preferred_element_type=jnp.float32) + b3[...]
        lat_ref[pl.ds(r0, chunk), :] = lat

        # ---- decoder ----
        h = jnp.maximum(
            jnp.dot(lat, w4[...], preferred_element_type=jnp.float32) + b4[...], 0.0)
        h = jnp.maximum(
            jnp.dot(h, w5[...], preferred_element_type=jnp.float32) + b5[...], 0.0)
        rec_ref[pl.ds(r0, chunk), :] = (
            jnp.dot(h, w6[...], preferred_element_type=jnp.float32) + b6[...])
        return carry

    lax.fori_loop(0, n_chunks, body, 0, unroll=True)


def _full_spec(shape):
    # Whole (small) parameter array resident in VMEM for every grid step.
    return pl.BlockSpec(shape, lambda i: tuple(0 for _ in shape))


@functools.partial(jax.jit, static_argnames=("tile_m", "chunk"))
def autoencoder_forward(x, params, tile_m=1024, chunk=256):
    """x: (N, 3) float32. params: flat tuple (w1,b1,...,w6,b6) with w: (in,out), b: (1,out)."""
    n, d_in = x.shape
    chunk = min(chunk, tile_m)
    assert tile_m % chunk == 0 and chunk % 8 == 0

    # Pad rows up to a multiple of tile_m (handles arbitrary N); slice back after.
    n_pad = pl.cdiv(n, tile_m) * tile_m
    if n_pad != n:
        x = jnp.pad(x, ((0, n_pad - n), (0, 0)))

    in_specs = [pl.BlockSpec((tile_m, d_in), lambda i: (i, 0))]
    in_specs += [_full_spec(p.shape) for p in params]

    out_shapes = (
        jax.ShapeDtypeStruct((n_pad, 16), jnp.float32),  # latent
        jax.ShapeDtypeStruct((n_pad, 3), jnp.float32),   # reconstructed
    )
    out_specs = (
        pl.BlockSpec((tile_m, 16), lambda i: (i, 0)),
        pl.BlockSpec((tile_m, 3), lambda i: (i, 0)),
    )

    # Advisory cost estimate (matmul flops; I/O bytes).
    dims = [(3, 64), (64, 32), (32, 16), (16, 32), (32, 64), (64, 3)]
    flops_per_row = sum(2 * fi * fo + fo for fi, fo in dims)
    param_bytes = int(sum(p.size for p in params)) * 4
    io_bytes = n_pad * (3 + 16 + 3) * 4 + param_bytes

    kernel = functools.partial(autoencoder_kernel, chunk=chunk)

    lat, rec = pl.pallas_call(
        kernel,
        out_shape=out_shapes,
        grid_spec=pltpu.PrefetchScalarGridSpec(
            num_scalar_prefetch=0,
            grid=(n_pad // tile_m,),
            in_specs=in_specs,
            out_specs=out_specs,
        ),
        compiler_params=pltpu.CompilerParams(
            dimension_semantics=("parallel",),
            vmem_limit_bytes=32 * 1024 * 1024,
        ),
        cost_estimate=pl.CostEstimate(
            flops=n_pad * flops_per_row,
            transcendentals=0,
            bytes_accessed=io_bytes,
        ),
    )(x, *params)

    if n_pad != n:
        lat, rec = lat[:n], rec[:n]
    return lat, rec


def init_linear(key, fan_in, fan_out):
    """Deterministic init mirroring torch.nn.Linear defaults:
    weight, bias ~ U(-1/sqrt(fan_in), 1/sqrt(fan_in)). Weight returned as (in, out)."""
    kw, kb = jax.random.split(key)
    bound = 1.0 / jnp.sqrt(jnp.float32(fan_in))
    # torch stores weight as (out, in); create that and transpose to (in, out).
    w = jax.random.uniform(kw, (fan_out, fan_in), jnp.float32, -bound, bound).T
    b = jax.random.uniform(kb, (1, fan_out), jnp.float32, -bound, bound)
    return w, b


def make_params(key):
    dims = [(3, 64), (64, 32), (32, 16),   # encoder
            (16, 32), (32, 64), (64, 3)]   # decoder
    keys = jax.random.split(key, len(dims))
    params = []
    for k, (fi, fo) in zip(keys, dims):
        w, b = init_linear(k, fi, fo)
        params += [w, b]
    return tuple(params)


def reference_forward(x, params):
    """Plain-JAX reference matching the PyTorch forward."""
    w1, b1, w2, b2, w3, b3, w4, b4, w5, b5, w6, b6 = params
    h = jnp.maximum(x @ w1 + b1, 0.0)
    h = jnp.maximum(h @ w2 + b2, 0.0)
    lat = h @ w3 + b3
    h = jnp.maximum(lat @ w4 + b4, 0.0)
    h = jnp.maximum(h @ w5 + b5, 0.0)
    rec = h @ w6 + b6
    return lat, rec


if __name__ == "__main__":
    key = jax.random.PRNGKey(0)
    k_param, k_x = jax.random.split(key)

    params = make_params(k_param)

    # Point-cloud-like input: N points with (x, y, z) coordinates.
    # N = 2048 -> 2 parallel grid steps at tile_m=1024 (keeps both v7x TCs busy).
    N = 2048
    x = jax.random.uniform(k_x, (N, 3), jnp.float32, -1.0, 1.0)

    latent, reconstructed = autoencoder_forward(x, params)
    jax.block_until_ready((latent, reconstructed))

    lat_ref, rec_ref = reference_forward(x, params)
    assert latent.shape == (N, 16) and reconstructed.shape == (N, 3)
    assert jnp.allclose(latent, lat_ref, atol=1e-4, rtol=1e-4)
    assert jnp.allclose(reconstructed, rec_ref, atol=1e-4, rtol=1e-4)

    # Exercise the non-multiple-of-tile_m (padding) path as well.
    N2 = 300
    x2 = jax.random.uniform(jax.random.PRNGKey(1), (N2, 3), jnp.float32, -1.0, 1.0)
    lat2, rec2 = autoencoder_forward(x2, params)
    jax.block_until_ready((lat2, rec2))
    lat2_ref, rec2_ref = reference_forward(x2, params)
    assert lat2.shape == (N2, 16) and rec2.shape == (N2, 3)
    assert jnp.allclose(lat2, lat2_ref, atol=1e-4, rtol=1e-4)
    assert jnp.allclose(rec2, rec2_ref, atol=1e-4, rtol=1e-4)

    print("KERNEL_OK")
</pallas_src>

<mosaic_0001>
module attributes {stable_mosaic.version = 11 : i64} {
  func.func @autoencoder_kernel(%arg0: i32, %arg1: memref<1024x3xf32, #tpu.memory_space<vmem>>, %arg2: memref<3x64xf32, #tpu.memory_space<vmem>>, %arg3: memref<1x64xf32, #tpu.memory_space<vmem>>, %arg4: memref<64x32xf32, #tpu.memory_space<vmem>>, %arg5: memref<1x32xf32, #tpu.memory_space<vmem>>, %arg6: memref<32x16xf32, #tpu.memory_space<vmem>>, %arg7: memref<1x16xf32, #tpu.memory_space<vmem>>, %arg8: memref<16x32xf32, #tpu.memory_space<vmem>>, %arg9: memref<1x32xf32, #tpu.memory_space<vmem>>, %arg10: memref<32x64xf32, #tpu.memory_space<vmem>>, %arg11: memref<1x64xf32, #tpu.memory_space<vmem>>, %arg12: memref<64x3xf32, #tpu.memory_space<vmem>>, %arg13: memref<1x3xf32, #tpu.memory_space<vmem>>, %arg14: memref<1024x16xf32, #tpu.memory_space<vmem>>, %arg15: memref<1024x3xf32, #tpu.memory_space<vmem>>) attributes {dimension_semantics = [#tpu.dimension_semantics<parallel>], iteration_bounds = array<i64: 2>, scalar_prefetch = 0 : i64, scratch_operands = 0 : i64, tpu.core_type = #tpu.core_type<tc>, window_params = [{transform_indices = @transform_0, window_bounds = array<i64: 1024, 3>}, {pipeline_mode = #tpu.pipeline_mode<synchronous>, transform_indices = @transform_1, window_bounds = array<i64: 3, 64>}, {pipeline_mode = #tpu.pipeline_mode<synchronous>, transform_indices = @transform_2, window_bounds = array<i64: 1, 64>}, {pipeline_mode = #tpu.pipeline_mode<synchronous>, transform_indices = @transform_3, window_bounds = array<i64: 64, 32>}, {pipeline_mode = #tpu.pipeline_mode<synchronous>, transform_indices = @transform_4, window_bounds = array<i64: 1, 32>}, {pipeline_mode = #tpu.pipeline_mode<synchronous>, transform_indices = @transform_5, window_bounds = array<i64: 32, 16>}, {pipeline_mode = #tpu.pipeline_mode<synchronous>, transform_indices = @transform_6, window_bounds = array<i64: 1, 16>}, {pipeline_mode = #tpu.pipeline_mode<synchronous>, transform_indices = @transform_7, window_bounds = array<i64: 16, 32>}, {pipeline_mode = #tpu.pipeline_mode<synchronous>, transform_indices = @transform_8, window_bounds = array<i64: 1, 32>}, {pipeline_mode = #tpu.pipeline_mode<synchronous>, transform_indices = @transform_9, window_bounds = array<i64: 32, 64>}, {pipeline_mode = #tpu.pipeline_mode<synchronous>, transform_indices = @transform_10, window_bounds = array<i64: 1, 64>}, {pipeline_mode = #tpu.pipeline_mode<synchronous>, transform_indices = @transform_11, window_bounds = array<i64: 64, 3>}, {pipeline_mode = #tpu.pipeline_mode<synchronous>, transform_indices = @transform_12, window_bounds = array<i64: 1, 3>}, {transform_indices = @transform_13, window_bounds = array<i64: 1024, 16>}, {transform_indices = @transform_14, window_bounds = array<i64: 1024, 3>}]} {
    %c0_i32 = arith.constant 0 : i32
    %c256_i32 = arith.constant 256 : i32
    %0 = arith.muli %c0_i32, %c256_i32 : i32
    %1 = tpu.assume_multiple %0, 256 : i32
    %2 = arith.index_cast %1 : i32 to index
    %c0 = arith.constant 0 : index
    %3 = vector.load %arg1[%2, %c0] : memref<1024x3xf32, #tpu.memory_space<vmem>>, vector<256x3xf32>
    %c0_0 = arith.constant 0 : index
    %c0_1 = arith.constant 0 : index
    %4 = vector.load %arg2[%c0_0, %c0_1] : memref<3x64xf32, #tpu.memory_space<vmem>>, vector<3x64xf32>
    %cst = arith.constant dense<0.000000e+00> : vector<256x64xf32>
    %5 = tpu.matmul %3, %4, %cst {dimension_numbers = #tpu.dot_dimension_numbers<[1], [0], [0], [1], [0, 0, 1, 1], [], []>} : vector<256x3xf32>, vector<3x64xf32>, vector<256x64xf32> -> vector<256x64xf32>
    %c0_2 = arith.constant 0 : index
    %c0_3 = arith.constant 0 : index
    %6 = vector.load %arg3[%c0_2, %c0_3] : memref<1x64xf32, #tpu.memory_space<vmem>>, vector<1x64xf32>
    %7 = vector.broadcast %6 : vector<1x64xf32> to vector<256x64xf32>
    %8 = arith.addf %5, %7 : vector<256x64xf32>
    %cst_4 = arith.constant 0.000000e+00 : f32
    %9 = vector.broadcast %cst_4 : f32 to vector<256x64xf32>
    %10 = arith.maximumf %8, %9 : vector<256x64xf32>
    %c0_5 = arith.constant 0 : index
    %c0_6 = arith.constant 0 : index
    %11 = vector.load %arg4[%c0_5, %c0_6] : memref<64x32xf32, #tpu.memory_space<vmem>>, vector<64x32xf32>
    %cst_7 = arith.constant dense<0.000000e+00> : vector<256x32xf32>
    %12 = tpu.matmul %10, %11, %cst_7 {dimension_numbers = #tpu.dot_dimension_numbers<[1], [0], [0], [1], [0, 0, 1, 1], [], []>} : vector<256x64xf32>, vector<64x32xf32>, vector<256x32xf32> -> vector<256x32xf32>
    %c0_8 = arith.constant 0 : index
    %c0_9 = arith.constant 0 : index
    %13 = vector.load %arg5[%c0_8, %c0_9] : memref<1x32xf32, #tpu.memory_space<vmem>>, vector<1x32xf32>
    %14 = vector.broadcast %13 : vector<1x32xf32> to vector<256x32xf32>
    %15 = arith.addf %12, %14 : vector<256x32xf32>
    %cst_10 = arith.constant 0.000000e+00 : f32
    %16 = vector.broadcast %cst_10 : f32 to vector<256x32xf32>
    %17 = arith.maximumf %15, %16 : vector<256x32xf32>
    %c0_11 = arith.constant 0 : index
    %c0_12 = arith.constant 0 : index
    %18 = vector.load %arg6[%c0_11, %c0_12] : memref<32x16xf32, #tpu.memory_space<vmem>>, vector<32x16xf32>
    %cst_13 = arith.constant dense<0.000000e+00> : vector<256x16xf32>
    %19 = tpu.matmul %17, %18, %cst_13 {dimension_numbers = #tpu.dot_dimension_numbers<[1], [0], [0], [1], [0, 0, 1, 1], [], []>} : vector<256x32xf32>, vector<32x16xf32>, vector<256x16xf32> -> vector<256x16xf32>
    %c0_14 = arith.constant 0 : index
    %c0_15 = arith.constant 0 : index
    %20 = vector.load %arg7[%c0_14, %c0_15] : memref<1x16xf32, #tpu.memory_space<vmem>>, vector<1x16xf32>
    %21 = vector.broadcast %20 : vector<1x16xf32> to vector<256x16xf32>
    %22 = arith.addf %19, %21 : vector<256x16xf32>
    %23 = arith.index_cast %1 : i32 to index
    %c0_16 = arith.constant 0 : index
    %24 = vector.load %arg14[%23, %c0_16] : memref<1024x16xf32, #tpu.memory_space<vmem>>, vector<256x16xf32>
    tpu.vector_store %arg14[%23, %c0_16], %22 {strides = array<i32>} : memref<1024x16xf32, #tpu.memory_space<vmem>>, vector<256x16xf32>,
    %c0_17 = arith.constant 0 : index
    %c0_18 = arith.constant 0 : index
    %25 = vector.load %arg8[%c0_17, %c0_18] : memref<16x32xf32, #tpu.memory_space<vmem>>, vector<16x32xf32>
    %cst_19 = arith.constant dense<0.000000e+00> : vector<256x32xf32>
    %26 = tpu.matmul %22, %25, %cst_19 {dimension_numbers = #tpu.dot_dimension_numbers<[1], [0], [0], [1], [0, 0, 1, 1], [], []>} : vector<256x16xf32>, vector<16x32xf32>, vector<256x32xf32> -> vector<256x32xf32>
    %c0_20 = arith.constant 0 : index
    %c0_21 = arith.constant 0 : index
    %27 = vector.load %arg9[%c0_20, %c0_21] : memref<1x32xf32, #tpu.memory_space<vmem>>, vector<1x32xf32>
    %28 = vector.broadcast %27 : vector<1x32xf32> to vector<256x32xf32>
    %29 = arith.addf %26, %28 : vector<256x32xf32>
    %cst_22 = arith.constant 0.000000e+00 : f32
    %30 = vector.broadcast %cst_22 : f32 to vector<256x32xf32>
    %31 = arith.maximumf %29, %30 : vector<256x32xf32>
    %c0_23 = arith.constant 0 : index
    %c0_24 = arith.constant 0 : index
    %32 = vector.load %arg10[%c0_23, %c0_24] : memref<32x64xf32, #tpu.memory_space<vmem>>, vector<32x64xf32>
    %cst_25 = arith.constant dense<0.000000e+00> : vector<256x64xf32>
    %33 = tpu.matmul %31, %32, %cst_25 {dimension_numbers = #tpu.dot_dimension_numbers<[1], [0], [0], [1], [0, 0, 1, 1], [], []>} : vector<256x32xf32>, vector<32x64xf32>, vector<256x64xf32> -> vector<256x64xf32>
    %c0_26 = arith.constant 0 : index
    %c0_27 = arith.constant 0 : index
    %34 = vector.load %arg11[%c0_26, %c0_27] : memref<1x64xf32, #tpu.memory_space<vmem>>, vector<1x64xf32>
    %35 = vector.broadcast %34 : vector<1x64xf32> to vector<256x64xf32>
    %36 = arith.addf %33, %35 : vector<256x64xf32>
    %cst_28 = arith.constant 0.000000e+00 : f32
    %37 = vector.broadcast %cst_28 : f32 to vector<256x64xf32>
    %38 = arith.maximumf %36, %37 : vector<256x64xf32>
    %c0_29 = arith.constant 0 : index
    %c0_30 = arith.constant 0 : index
    %39 = vector.load %arg12[%c0_29, %c0_30] : memref<64x3xf32, #tpu.memory_space<vmem>>, vector<64x3xf32>
    %cst_31 = arith.constant dense<0.000000e+00> : vector<256x3xf32>
    %40 = tpu.matmul %38, %39, %cst_31 {dimension_numbers = #tpu.dot_dimension_numbers<[1], [0], [0], [1], [0, 0, 1, 1], [], []>} : vector<256x64xf32>, vector<64x3xf32>, vector<256x3xf32> -> vector<256x3xf32>
    %c0_32 = arith.constant 0 : index
    %c0_33 = arith.constant 0 : index
    %41 = vector.load %arg13[%c0_32, %c0_33] : memref<1x3xf32, #tpu.memory_space<vmem>>, vector<1x3xf32>
    %42 = vector.broadcast %41 : vector<1x3xf32> to vector<256x3xf32>
    %43 = arith.addf %40, %42 : vector<256x3xf32>
    %44 = arith.index_cast %1 : i32 to index
    %c0_34 = arith.constant 0 : index
    %45 = vector.load %arg15[%44, %c0_34] : memref<1024x3xf32, #tpu.memory_space<vmem>>, vector<256x3xf32>
    tpu.vector_store %arg15[%44, %c0_34], %43 {strides = array<i32>} : memref<1024x3xf32, #tpu.memory_space<vmem>>, vector<256x3xf32>,
    %c1_i32 = arith.constant 1 : i32
    %c256_i32_35 = arith.constant 256 : i32
    %46 = arith.muli %c1_i32, %c256_i32_35 : i32
    %47 = tpu.assume_multiple %46, 256 : i32
    %48 = arith.index_cast %47 : i32 to index
    %c0_36 = arith.constant 0 : index
    %49 = vector.load %arg1[%48, %c0_36] : memref<1024x3xf32, #tpu.memory_space<vmem>>, vector<256x3xf32>
    %c0_37 = arith.constant 0 : index
    %c0_38 = arith.constant 0 : index
    %50 = vector.load %arg2[%c0_37, %c0_38] : memref<3x64xf32, #tpu.memory_space<vmem>>, vector<3x64xf32>
    %cst_39 = arith.constant dense<0.000000e+00> : vector<256x64xf32>
    %51 = tpu.matmul %49, %50, %cst_39 {dimension_numbers = #tpu.dot_dimension_numbers<[1], [0], [0], [1], [0, 0, 1, 1], [], []>} : vector<256x3xf32>, vector<3x64xf32>, vector<256x64xf32> -> vector<256x64xf32>
    %c0_40 = arith.constant 0 : index
    %c0_41 = arith.constant 0 : index
    %52 = vector.load %arg3[%c0_40, %c0_41] : memref<1x64xf32, #tpu.memory_space<vmem>>, vector<1x64xf32>
    %53 = vector.broadcast %52 : vector<1x64xf32> to vector<256x64xf32>
    %54 = arith.addf %51, %53 : vector<256x64xf32>
    %cst_42 = arith.constant 0.000000e+00 : f32
    %55 = vector.broadcast %cst_42 : f32 to vector<256x64xf32>
    %56 = arith.maximumf %54, %55 : vector<256x64xf32>
    %c0_43 = arith.constant 0 : index
    %c0_44 = arith.constant 0 : index
    %57 = vector.load %arg4[%c0_43, %c0_44] : memref<64x32xf32, #tpu.memory_space<vmem>>, vector<64x32xf32>
    %cst_45 = arith.constant dense<0.000000e+00> : vector<256x32xf32>
    %58 = tpu.matmul %56, %57, %cst_45 {dimension_numbers = #tpu.dot_dimension_numbers<[1], [0], [0], [1], [0, 0, 1, 1], [], []>} : vector<256x64xf32>, vector<64x32xf32>, vector<256x32xf32> -> vector<256x32xf32>
    %c0_46 = arith.constant 0 : index
    %c0_47 = arith.constant 0 : index
    %59 = vector.load %arg5[%c0_46, %c0_47] : memref<1x32xf32, #tpu.memory_space<vmem>>, vector<1x32xf32>
    %60 = vector.broadcast %59 : vector<1x32xf32> to vector<256x32xf32>
    %61 = arith.addf %58, %60 : vector<256x32xf32>
    %cst_48 = arith.constant 0.000000e+00 : f32
    %62 = vector.broadcast %cst_48 : f32 to vector<256x32xf32>
    %63 = arith.maximumf %61, %62 : vector<256x32xf32>
    %c0_49 = arith.constant 0 : index
    %c0_50 = arith.constant 0 : index
    %64 = vector.load %arg6[%c0_49, %c0_50] : memref<32x16xf32, #tpu.memory_space<vmem>>, vector<32x16xf32>
    %cst_51 = arith.constant dense<0.000000e+00> : vector<256x16xf32>
    %65 = tpu.matmul %63, %64, %cst_51 {dimension_numbers = #tpu.dot_dimension_numbers<[1], [0], [0], [1], [0, 0, 1, 1], [], []>} : vector<256x32xf32>, vector<32x16xf32>, vector<256x16xf32> -> vector<256x16xf32>
    %c0_52 = arith.constant 0 : index
    %c0_53 = arith.constant 0 : index
    %66 = vector.load %arg7[%c0_52, %c0_53] : memref<1x16xf32, #tpu.memory_space<vmem>>, vector<1x16xf32>
    %67 = vector.broadcast %66 : vector<1x16xf32> to vector<256x16xf32>
    %68 = arith.addf %65, %67 : vector<256x16xf32>
    %69 = arith.index_cast %47 : i32 to index
    %c0_54 = arith.constant 0 : index
    %70 = vector.load %arg14[%69, %c0_54] : memref<1024x16xf32, #tpu.memory_space<vmem>>, vector<256x16xf32>
    tpu.vector_store %arg14[%69, %c0_54], %68 {strides = array<i32>} : memref<1024x16xf32, #tpu.memory_space<vmem>>, vector<256x16xf32>,
    %c0_55 = arith.constant 0 : index
    %c0_56 = arith.constant 0 : index
    %71 = vector.load %arg8[%c0_55, %c0_56] : memref<16x32xf32, #tpu.memory_space<vmem>>, vector<16x32xf32>
    %cst_57 = arith.constant dense<0.000000e+00> : vector<256x32xf32>
    %72 = tpu.matmul %68, %71, %cst_57 {dimension_numbers = #tpu.dot_dimension_numbers<[1], [0], [0], [1], [0, 0, 1, 1], [], []>} : vector<256x16xf32>, vector<16x32xf32>, vector<256x32xf32> -> vector<256x32xf32>
    %c0_58 = arith.constant 0 : index
    %c0_59 = arith.constant 0 : index
    %73 = vector.load %arg9[%c0_58, %c0_59] : memref<1x32xf32, #tpu.memory_space<vmem>>, vector<1x32xf32>
    %74 = vector.broadcast %73 : vector<1x32xf32> to vector<256x32xf32>
    %75 = arith.addf %72, %74 : vector<256x32xf32>
    %cst_60 = arith.constant 0.000000e+00 : f32
    %76 = vector.broadcast %cst_60 : f32 to vector<256x32xf32>
    %77 = arith.maximumf %75, %76 : vector<256x32xf32>
    %c0_61 = arith.constant 0 : index
    %c0_62 = arith.constant 0 : index
    %78 = vector.load %arg10[%c0_61, %c0_62] : memref<32x64xf32, #tpu.memory_space<vmem>>, vector<32x64xf32>
    %cst_63 = arith.constant dense<0.000000e+00> : vector<256x64xf32>
    %79 = tpu.matmul %77, %78, %cst_63 {dimension_numbers = #tpu.dot_dimension_numbers<[1], [0], [0], [1], [0, 0, 1, 1], [], []>} : vector<256x32xf32>, vector<32x64xf32>, vector<256x64xf32> -> vector<256x64xf32>
    %c0_64 = arith.constant 0 : index
    %c0_65 = arith.constant 0 : index
    %80 = vector.load %arg11[%c0_64, %c0_65] : memref<1x64xf32, #tpu.memory_space<vmem>>, vector<1x64xf32>
    %81 = vector.broadcast %80 : vector<1x64xf32> to vector<256x64xf32>
    %82 = arith.addf %79, %81 : vector<256x64xf32>
    %cst_66 = arith.constant 0.000000e+00 : f32
    %83 = vector.broadcast %cst_66 : f32 to vector<256x64xf32>
    %84 = arith.maximumf %82, %83 : vector<256x64xf32>
    %c0_67 = arith.constant 0 : index
    %c0_68 = arith.constant 0 : index
    %85 = vector.load %arg12[%c0_67, %c0_68] : memref<64x3xf32, #tpu.memory_space<vmem>>, vector<64x3xf32>
    %cst_69 = arith.constant dense<0.000000e+00> : vector<256x3xf32>
    %86 = tpu.matmul %84, %85, %cst_69 {dimension_numbers = #tpu.dot_dimension_numbers<[1], [0], [0], [1], [0, 0, 1, 1], [], []>} : vector<256x64xf32>, vector<64x3xf32>, vector<256x3xf32> -> vector<256x3xf32>
    %c0_70 = arith.constant 0 : index
    %c0_71 = arith.constant 0 : index
    %87 = vector.load %arg13[%c0_70, %c0_71] : memref<1x3xf32, #tpu.memory_space<vmem>>, vector<1x3xf32>
    %88 = vector.broadcast %87 : vector<1x3xf32> to vector<256x3xf32>
    %89 = arith.addf %86, %88 : vector<256x3xf32>
    %90 = arith.index_cast %47 : i32 to index
    %c0_72 = arith.constant 0 : index
    %91 = vector.load %arg15[%90, %c0_72] : memref<1024x3xf32, #tpu.memory_space<vmem>>, vector<256x3xf32>
    tpu.vector_store %arg15[%90, %c0_72], %89 {strides = array<i32>} : memref<1024x3xf32, #tpu.memory_space<vmem>>, vector<256x3xf32>,
    %c2_i32 = arith.constant 2 : i32
    %c256_i32_73 = arith.constant 256 : i32
    %92 = arith.muli %c2_i32, %c256_i32_73 : i32
    %93 = tpu.assume_multiple %92, 256 : i32
    %94 = arith.index_cast %93 : i32 to index
    %c0_74 = arith.constant 0 : index
    %95 = vector.load %arg1[%94, %c0_74] : memref<1024x3xf32, #tpu.memory_space<vmem>>, vector<256x3xf32>
    %c0_75 = arith.constant 0 : index
    %c0_76 = arith.constant 0 : index
    %96 = vector.load %arg2[%c0_75, %c0_76] : memref<3x64xf32, #tpu.memory_space<vmem>>, vector<3x64xf32>
    %cst_77 = arith.constant dense<0.000000e+00> : vector<256x64xf32>
    %97 = tpu.matmul %95, %96, %cst_77 {dimension_numbers = #tpu.dot_dimension_numbers<[1], [0], [0], [1], [0, 0, 1, 1], [], []>} : vector<256x3xf32>, vector<3x64xf32>, vector<256x64xf32> -> vector<256x64xf32>
    %c0_78 = arith.constant 0 : index
    %c0_79 = arith.constant 0 : index
    %98 = vector.load %arg3[%c0_78, %c0_79] : memref<1x64xf32, #tpu.memory_space<vmem>>, vector<1x64xf32>
    %99 = vector.broadcast %98 : vector<1x64xf32> to vector<256x64xf32>
    %100 = arith.addf %97, %99 : vector<256x64xf32>
    %cst_80 = arith.constant 0.000000e+00 : f32
    %101 = vector.broadcast %cst_80 : f32 to vector<256x64xf32>
    %102 = arith.maximumf %100, %101 : vector<256x64xf32>
    %c0_81 = arith.constant 0 : index
    %c0_82 = arith.constant 0 : index
    %103 = vector.load %arg4[%c0_81, %c0_82] : memref<64x32xf32, #tpu.memory_space<vmem>>, vector<64x32xf32>
    %cst_83 = arith.constant dense<0.000000e+00> : vector<256x32xf32>
    %104 = tpu.matmul %102, %103, %cst_83 {dimension_numbers = #tpu.dot_dimension_numbers<[1], [0], [0], [1], [0, 0, 1, 1], [], []>} : vector<256x64xf32>, vector<64x32xf32>, vector<256x32xf32> -> vector<256x32xf32>
    %c0_84 = arith.constant 0 : index
    %c0_85 = arith.constant 0 : index
    %105 = vector.load %arg5[%c0_84, %c0_85] : memref<1x32xf32, #tpu.memory_space<vmem>>, vector<1x32xf32>
    %106 = vector.broadcast %105 : vector<1x32xf32> to vector<256x32xf32>
    %107 = arith.addf %104, %106 : vector<256x32xf32>
    %cst_86 = arith.constant 0.000000e+00 : f32
    %108 = vector.broadcast %cst_86 : f32 to vector<256x32xf32>
    %109 = arith.maximumf %107, %108 : vector<256x32xf32>
    %c0_87 = arith.constant 0 : index
    %c0_88 = arith.constant 0 : index
    %110 = vector.load %arg6[%c0_87, %c0_88] : memref<32x16xf32, #tpu.memory_space<vmem>>, vector<32x16xf32>
    %cst_89 = arith.constant dense<0.000000e+00> : vector<256x16xf32>
    %111 = tpu.matmul %109, %110, %cst_89 {dimension_numbers = #tpu.dot_dimension_numbers<[1], [0], [0], [1], [0, 0, 1, 1], [], []>} : vector<256x32xf32>, vector<32x16xf32>, vector<256x16xf32> -> vector<256x16xf32>
    %c0_90 = arith.constant 0 : index
    %c0_91 = arith.constant 0 : index
    %112 = vector.load %arg7[%c0_90, %c0_91] : memref<1x16xf32, #tpu.memory_space<vmem>>, vector<1x16xf32>
    %113 = vector.broadcast %112 : vector<1x16xf32> to vector<256x16xf32>
    %114 = arith.addf %111, %113 : vector<256x16xf32>
    %115 = arith.index_cast %93 : i32 to index
    %c0_92 = arith.constant 0 : index
    %116 = vector.load %arg14[%115, %c0_92] : memref<1024x16xf32, #tpu.memory_space<vmem>>, vector<256x16xf32>
    tpu.vector_store %arg14[%115, %c0_92], %114 {strides = array<i32>} : memref<1024x16xf32, #tpu.memory_space<vmem>>, vector<256x16xf32>,
    %c0_93 = arith.constant 0 : index
    %c0_94 = arith.constant 0 : index
    %117 = vector.load %arg8[%c0_93, %c0_94] : memref<16x32xf32, #tpu.memory_space<vmem>>, vector<16x32xf32>
    %cst_95 = arith.constant dense<0.000000e+00> : vector<256x32xf32>
    %118 = tpu.matmul %114, %117, %cst_95 {dimension_numbers = #tpu.dot_dimension_numbers<[1], [0], [0], [1], [0, 0, 1, 1], [], []>} : vector<256x16xf32>, vector<16x32xf32>, vector<256x32xf32> -> vector<256x32xf32>
    %c0_96 = arith.constant 0 : index
    %c0_97 = arith.constant 0 : index
    %119 = vector.load %arg9[%c0_96, %c0_97] : memref<1x32xf32, #tpu.memory_space<vmem>>, vector<1x32xf32>
    %120 = vector.broadcast %119 : vector<1x32xf32> to vector<256x32xf32>
    %121 = arith.addf %118, %120 : vector<256x32xf32>
    %cst_98 = arith.constant 0.000000e+00 : f32
    %122 = vector.broadcast %cst_98 : f32 to vector<256x32xf32>
    %123 = arith.maximumf %121, %122 : vector<256x32xf32>
    %c0_99 = arith.constant 0 : index
    %c0_100 = arith.constant 0 : index
    %124 = vector.load %arg10[%c0_99, %c0_100] : memref<32x64xf32, #tpu.memory_space<vmem>>, vector<32x64xf32>
    %cst_101 = arith.constant dense<0.000000e+00> : vector<256x64xf32>
    %125 = tpu.matmul %123, %124, %cst_101 {dimension_numbers = #tpu.dot_dimension_numbers<[1], [0], [0], [1], [0, 0, 1, 1], [], []>} : vector<256x32xf32>, vector<32x64xf32>, vector<256x64xf32> -> vector<256x64xf32>
    %c0_102 = arith.constant 0 : index
    %c0_103 = arith.constant 0 : index
    %126 = vector.load %arg11[%c0_102, %c0_103] : memref<1x64xf32, #tpu.memory_space<vmem>>, vector<1x64xf32>
    %127 = vector.broadcast %126 : vector<1x64xf32> to vector<256x64xf32>
    %128 = arith.addf %125, %127 : vector<256x64xf32>
    %cst_104 = arith.constant 0.000000e+00 : f32
    %129 = vector.broadcast %cst_104 : f32 to vector<256x64xf32>
    %130 = arith.maximumf %128, %129 : vector<256x64xf32>
    %c0_105 = arith.constant 0 : index
    %c0_106 = arith.constant 0 : index
    %131 = vector.load %arg12[%c0_105, %c0_106] : memref<64x3xf32, #tpu.memory_space<vmem>>, vector<64x3xf32>
    %cst_107 = arith.constant dense<0.000000e+00> : vector<256x3xf32>
    %132 = tpu.matmul %130, %131, %cst_107 {dimension_numbers = #tpu.dot_dimension_numbers<[1], [0], [0], [1], [0, 0, 1, 1], [], []>} : vector<256x64xf32>, vector<64x3xf32>, vector<256x3xf32> -> vector<256x3xf32>
    %c0_108 = arith.constant 0 : index
    %c0_109 = arith.constant 0 : index
    %133 = vector.load %arg13[%c0_108, %c0_109] : memref<1x3xf32, #tpu.memory_space<vmem>>, vector<1x3xf32>
    %134 = vector.broadcast %133 : vector<1x3xf32> to vector<256x3xf32>
    %135 = arith.addf %132, %134 : vector<256x3xf32>
    %136 = arith.index_cast %93 : i32 to index
    %c0_110 = arith.constant 0 : index
    %137 = vector.load %arg15[%136, %c0_110] : memref<1024x3xf32, #tpu.memory_space<vmem>>, vector<256x3xf32>
    tpu.vector_store %arg15[%136, %c0_110], %135 {strides = array<i32>} : memref<1024x3xf32, #tpu.memory_space<vmem>>, vector<256x3xf32>,
    %c3_i32 = arith.constant 3 : i32
    %c256_i32_111 = arith.constant 256 : i32
    %138 = arith.muli %c3_i32, %c256_i32_111 : i32
    %139 = tpu.assume_multiple %138, 256 : i32
    %140 = arith.index_cast %139 : i32 to index
    %c0_112 = arith.constant 0 : index
    %141 = vector.load %arg1[%140, %c0_112] : memref<1024x3xf32, #tpu.memory_space<vmem>>, vector<256x3xf32>
    %c0_113 = arith.constant 0 : index
    %c0_114 = arith.constant 0 : index
    %142 = vector.load %arg2[%c0_113, %c0_114] : memref<3x64xf32, #tpu.memory_space<vmem>>, vector<3x64xf32>
    %cst_115 = arith.constant dense<0.000000e+00> : vector<256x64xf32>
    %143 = tpu.matmul %141, %142, %cst_115 {dimension_numbers = #tpu.dot_dimension_numbers<[1], [0], [0], [1], [0, 0, 1, 1], [], []>} : vector<256x3xf32>, vector<3x64xf32>, vector<256x64xf32> -> vector<256x64xf32>
    %c0_116 = arith.constant 0 : index
    %c0_117 = arith.constant 0 : index
    %144 = vector.load %arg3[%c0_116, %c0_117] : memref<1x64xf32, #tpu.memory_space<vmem>>, vector<1x64xf32>
    %145 = vector.broadcast %144 : vector<1x64xf32> to vector<256x64xf32>
    %146 = arith.addf %143, %145 : vector<256x64xf32>
    %cst_118 = arith.constant 0.000000e+00 : f32
    %147 = vector.broadcast %cst_118 : f32 to vector<256x64xf32>
    %148 = arith.maximumf %146, %147 : vector<256x64xf32>
    %c0_119 = arith.constant 0 : index
    %c0_120 = arith.constant 0 : index
    %149 = vector.load %arg4[%c0_119, %c0_120] : memref<64x32xf32, #tpu.memory_space<vmem>>, vector<64x32xf32>
    %cst_121 = arith.constant dense<0.000000e+00> : vector<256x32xf32>
    %150 = tpu.matmul %148, %149, %cst_121 {dimension_numbers = #tpu.dot_dimension_numbers<[1], [0], [0], [1], [0, 0, 1, 1], [], []>} : vector<256x64xf32>, vector<64x32xf32>, vector<256x32xf32> -> vector<256x32xf32>
    %c0_122 = arith.constant 0 : index
    %c0_123 = arith.constant 0 : index
    %151 = vector.load %arg5[%c0_122, %c0_123] : memref<1x32xf32, #tpu.memory_space<vmem>>, vector<1x32xf32>
    %152 = vector.broadcast %151 : vector<1x32xf32> to vector<256x32xf32>
    %153 = arith.addf %150, %152 : vector<256x32xf32>
    %cst_124 = arith.constant 0.000000e+00 : f32
    %154 = vector.broadcast %cst_124 : f32 to vector<256x32xf32>
    %155 = arith.maximumf %153, %154 : vector<256x32xf32>
    %c0_125 = arith.constant 0 : index
    %c0_126 = arith.constant 0 : index
    %156 = vector.load %arg6[%c0_125, %c0_126] : memref<32x16xf32, #tpu.memory_space<vmem>>, vector<32x16xf32>
    %cst_127 = arith.constant dense<0.000000e+00> : vector<256x16xf32>
    %157 = tpu.matmul %155, %156, %cst_127 {dimension_numbers = #tpu.dot_dimension_numbers<[1], [0], [0], [1], [0, 0, 1, 1], [], []>} : vector<256x32xf32>, vector<32x16xf32>, vector<256x16xf32> -> vector<256x16xf32>
    %c0_128 = arith.constant 0 : index
    %c0_129 = arith.constant 0 : index
    %158 = vector.load %arg7[%c0_128, %c0_129] : memref<1x16xf32, #tpu.memory_space<vmem>>, vector<1x16xf32>
    %159 = vector.broadcast %158 : vector<1x16xf32> to vector<256x16xf32>
    %160 = arith.addf %157, %159 : vector<256x16xf32>
    %161 = arith.index_cast %139 : i32 to index
    %c0_130 = arith.constant 0 : index
    %162 = vector.load %arg14[%161, %c0_130] : memref<1024x16xf32, #tpu.memory_space<vmem>>, vector<256x16xf32>
    tpu.vector_store %arg14[%161, %c0_130], %160 {strides = array<i32>} : memref<1024x16xf32, #tpu.memory_space<vmem>>, vector<256x16xf32>,
    %c0_131 = arith.constant 0 : index
    %c0_132 = arith.constant 0 : index
    %163 = vector.load %arg8[%c0_131, %c0_132] : memref<16x32xf32, #tpu.memory_space<vmem>>, vector<16x32xf32>
    %cst_133 = arith.constant dense<0.000000e+00> : vector<256x32xf32>
    %164 = tpu.matmul %160, %163, %cst_133 {dimension_numbers = #tpu.dot_dimension_numbers<[1], [0], [0], [1], [0, 0, 1, 1], [], []>} : vector<256x16xf32>, vector<16x32xf32>, vector<256x32xf32> -> vector<256x32xf32>
    %c0_134 = arith.constant 0 : index
    %c0_135 = arith.constant 0 : index
    %165 = vector.load %arg9[%c0_134, %c0_135] : memref<1x32xf32, #tpu.memory_space<vmem>>, vector<1x32xf32>
    %166 = vector.broadcast %165 : vector<1x32xf32> to vector<256x32xf32>
    %167 = arith.addf %164, %166 : vector<256x32xf32>
    %cst_136 = arith.constant 0.000000e+00 : f32
    %168 = vector.broadcast %cst_136 : f32 to vector<256x32xf32>
    %169 = arith.maximumf %167, %168 : vector<256x32xf32>
    %c0_137 = arith.constant 0 : index
    %c0_138 = arith.constant 0 : index
    %170 = vector.load %arg10[%c0_137, %c0_138] : memref<32x64xf32, #tpu.memory_space<vmem>>, vector<32x64xf32>
    %cst_139 = arith.constant dense<0.000000e+00> : vector<256x64xf32>
    %171 = tpu.matmul %169, %170, %cst_139 {dimension_numbers = #tpu.dot_dimension_numbers<[1], [0], [0], [1], [0, 0, 1, 1], [], []>} : vector<256x32xf32>, vector<32x64xf32>, vector<256x64xf32> -> vector<256x64xf32>
    %c0_140 = arith.constant 0 : index
    %c0_141 = arith.constant 0 : index
    %172 = vector.load %arg11[%c0_140, %c0_141] : memref<1x64xf32, #tpu.memory_space<vmem>>, vector<1x64xf32>
    %173 = vector.broadcast %172 : vector<1x64xf32> to vector<256x64xf32>
    %174 = arith.addf %171, %173 : vector<256x64xf32>
    %cst_142 = arith.constant 0.000000e+00 : f32
    %175 = vector.broadcast %cst_142 : f32 to vector<256x64xf32>
    %176 = arith.maximumf %174, %175 : vector<256x64xf32>
    %c0_143 = arith.constant 0 : index
    %c0_144 = arith.constant 0 : index
    %177 = vector.load %arg12[%c0_143, %c0_144] : memref<64x3xf32, #tpu.memory_space<vmem>>, vector<64x3xf32>
    %cst_145 = arith.constant dense<0.000000e+00> : vector<256x3xf32>
    %178 = tpu.matmul %176, %177, %cst_145 {dimension_numbers = #tpu.dot_dimension_numbers<[1], [0], [0], [1], [0, 0, 1, 1], [], []>} : vector<256x64xf32>, vector<64x3xf32>, vector<256x3xf32> -> vector<256x3xf32>
    %c0_146 = arith.constant 0 : index
    %c0_147 = arith.constant 0 : index
    %179 = vector.load %arg13[%c0_146, %c0_147] : memref<1x3xf32, #tpu.memory_space<vmem>>, vector<1x3xf32>
    %180 = vector.broadcast %179 : vector<1x3xf32> to vector<256x3xf32>
    %181 = arith.addf %178, %180 : vector<256x3xf32>
    %182 = arith.index_cast %139 : i32 to index
    %c0_148 = arith.constant 0 : index
    %183 = vector.load %arg15[%182, %c0_148] : memref<1024x3xf32, #tpu.memory_space<vmem>>, vector<256x3xf32>
    tpu.vector_store %arg15[%182, %c0_148], %181 {strides = array<i32>} : memref<1024x3xf32, #tpu.memory_space<vmem>>, vector<256x3xf32>,
    %c4_i32 = arith.constant 4 : i32
    return
  }
  func.func @transform_0(%arg0: i32) -> (i32, i32) {
    %c0_i32 = arith.constant 0 : i32
    %c0_i32_0 = arith.constant 0 : i32
    return %arg0, %c0_i32 : i32, i32
  }
  func.func @transform_1(%arg0: i32) -> (i32, i32) {
    %c0_i32 = arith.constant 0 : i32
    %c0_i32_0 = arith.constant 0 : i32
    %c0_i32_1 = arith.constant 0 : i32
    return %c0_i32, %c0_i32_0 : i32, i32
  }
  func.func @transform_2(%arg0: i32) -> (i32, i32) {
    %c0_i32 = arith.constant 0 : i32
    %c0_i32_0 = arith.constant 0 : i32
    %c0_i32_1 = arith.constant 0 : i32
    return %c0_i32, %c0_i32_0 : i32, i32
  }
  func.func @transform_3(%arg0: i32) -> (i32, i32) {
    %c0_i32 = arith.constant 0 : i32
    %c0_i32_0 = arith.constant 0 : i32
    %c0_i32_1 = arith.constant 0 : i32
    return %c0_i32, %c0_i32_0 : i32, i32
  }
  func.func @transform_4(%arg0: i32) -> (i32, i32) {
    %c0_i32 = arith.constant 0 : i32
    %c0_i32_0 = arith.constant 0 : i32
    %c0_i32_1 = arith.constant 0 : i32
    return %c0_i32, %c0_i32_0 : i32, i32
  }
  func.func @transform_5(%arg0: i32) -> (i32, i32) {
    %c0_i32 = arith.constant 0 : i32
    %c0_i32_0 = arith.constant 0 : i32
    %c0_i32_1 = arith.constant 0 : i32
    return %c0_i32, %c0_i32_0 : i32, i32
  }
  func.func @transform_6(%arg0: i32) -> (i32, i32) {
    %c0_i32 = arith.constant 0 : i32
    %c0_i32_0 = arith.constant 0 : i32
    %c0_i32_1 = arith.constant 0 : i32
    return %c0_i32, %c0_i32_0 : i32, i32
  }
  func.func @transform_7(%arg0: i32) -> (i32, i32) {
    %c0_i32 = arith.constant 0 : i32
    %c0_i32_0 = arith.constant 0 : i32
    %c0_i32_1 = arith.constant 0 : i32
    return %c0_i32, %c0_i32_0 : i32, i32
  }
  func.func @transform_8(%arg0: i32) -> (i32, i32) {
    %c0_i32 = arith.constant 0 : i32
    %c0_i32_0 = arith.constant 0 : i32
    %c0_i32_1 = arith.constant 0 : i32
    return %c0_i32, %c0_i32_0 : i32, i32
  }
  func.func @transform_9(%arg0: i32) -> (i32, i32) {
    %c0_i32 = arith.constant 0 : i32
    %c0_i32_0 = arith.constant 0 : i32
    %c0_i32_1 = arith.constant 0 : i32
    return %c0_i32, %c0_i32_0 : i32, i32
  }
  func.func @transform_10(%arg0: i32) -> (i32, i32) {
    %c0_i32 = arith.constant 0 : i32
    %c0_i32_0 = arith.constant 0 : i32
    %c0_i32_1 = arith.constant 0 : i32
    return %c0_i32, %c0_i32_0 : i32, i32
  }
  func.func @transform_11(%arg0: i32) -> (i32, i32) {
    %c0_i32 = arith.constant 0 : i32
    %c0_i32_0 = arith.constant 0 : i32
    %c0_i32_1 = arith.constant 0 : i32
    return %c0_i32, %c0_i32_0 : i32, i32
  }
  func.func @transform_12(%arg0: i32) -> (i32, i32) {
    %c0_i32 = arith.constant 0 : i32
    %c0_i32_0 = arith.constant 0 : i32
    %c0_i32_1 = arith.constant 0 : i32
    return %c0_i32, %c0_i32_0 : i32, i32
  }
  func.func @transform_13(%arg0: i32) -> (i32, i32) {
    %c0_i32 = arith.constant 0 : i32
    %c0_i32_0 = arith.constant 0 : i32
    return %arg0, %c0_i32 : i32, i32
  }
  func.func @transform_14(%arg0: i32) -> (i32, i32) {
    %c0_i32 = arith.constant 0 : i32
    %c0_i32_0 = arith.constant 0 : i32
    return %arg0, %c0_i32 : i32, i32
  }
}

</mosaic_0001>

<llo_original>
// kernel: autoencoder_forward.1
$region0: #{autoencoder_forward.1}
  #allocation0 [shape = 'u32[]', space=smem, size = 0x4, offset = 0x4, fixed_abs, tag = 'smem constant byte address 0x4 - core index']
  #allocation1 [shape = 'u32[144,128]{1,0:T(1,128)}', space=vmem, size = 0x12000, scoped, tag = 'internal scratch']
  %s0 = inlined_call_operand.vmem [shape: f32[2048,3], index: 0, kind: input, shape index: {}]
  %s1 = inlined_call_operand.vmem [shape: f32[3,64], index: 1, kind: input, shape index: {}]
  %s2 = inlined_call_operand.vmem [shape: f32[1,64], index: 2, kind: input, shape index: {}]
  %s3 = inlined_call_operand.vmem [shape: f32[64,32], index: 3, kind: input, shape index: {}]
  %s4 = inlined_call_operand.vmem [shape: f32[1,32], index: 4, kind: input, shape index: {}]
  %s5 = inlined_call_operand.vmem [shape: f32[32,16], index: 5, kind: input, shape index: {}]
  %s6 = inlined_call_operand.vmem [shape: f32[1,16], index: 6, kind: input, shape index: {}]
  %s7 = inlined_call_operand.vmem [shape: f32[16,32], index: 7, kind: input, shape index: {}]
  %s8 = inlined_call_operand.vmem [shape: f32[1,32], index: 8, kind: input, shape index: {}]
  %s9 = inlined_call_operand.vmem [shape: f32[32,64], index: 9, kind: input, shape index: {}]
  %s10 = inlined_call_operand.vmem [shape: f32[1,64], index: 10, kind: input, shape index: {}]
  %s11 = inlined_call_operand.vmem [shape: f32[64,3], index: 11, kind: input, shape index: {}]
  %s12 = inlined_call_operand.vmem [shape: f32[1,3], index: 12, kind: input, shape index: {}]
  %s13 = inlined_call_operand.vmem [shape: f32[2048,16], index: 13, kind: output, shape index: {0}]
  %s14 = inlined_call_operand.vmem [shape: f32[2048,3], index: 14, kind: output, shape index: {1}]
  %15 = xla_tuple %s13, %s14
  %s16 = sld [smem:[#allocation0]]
  $region93: #{autoencoder_forward.1} parent=0
    _
  %s18 = ssub.s32 1, %s16
  %s19 = scalar_select 0, %s18, %s16
  loop: start=0, step=1, limit=4
  $region2: #{autoencoder_forward.1} parent=0 // loop_pre_header
    _
  $region3: #{autoencoder_forward.1} parent=0 // loop_header
    %s21 = sphi 0, %s25
    %p22 = scmp.ge.s32.totalorder %s21, 4
    %s31 = sphi 0, %s33
    %s34 = sphi 0, %s31
    %s35 = sphi 0, %s34
    %s51 = sphi 0, %s35
    %s55 = sphi 0, %s55
    %s57 = sphi 0, %s55
    %s58 = sphi 0, %s57
    %s72 = sphi 0, %s58
    %s76 = sphi 0, %s76
    %s78 = sphi 0, %s76
    %s79 = sphi 0, %s78
    %s93 = sphi 0, %s79
    %s97 = sphi 0, %s97
    %s99 = sphi 0, %s97
    %s100 = sphi 0, %s99
    %s114 = sphi 0, %s100
    %s118 = sphi 0, %s118
    %s120 = sphi 0, %s118
    %s121 = sphi 0, %s120
    %s135 = sphi 0, %s121
    %s139 = sphi 0, %s139
    %s141 = sphi 0, %s139
    %s142 = sphi 0, %s141
    %s156 = sphi 0, %s142
    %s160 = sphi 0, %s160
    %s162 = sphi 0, %s160
    %s163 = sphi 0, %s162
    %s177 = sphi 0, %s163
    %s181 = sphi 0, %s181
    %s183 = sphi 0, %s181
    %s184 = sphi 0, %s183
    %s198 = sphi 0, %s184
    %s202 = sphi 0, %s202
    %s204 = sphi 0, %s202
    %s205 = sphi 0, %s204
    %s219 = sphi 0, %s205
    %s223 = sphi 0, %s223
    %s225 = sphi 0, %s223
    %s226 = sphi 0, %s225
    %s240 = sphi 0, %s226
    %s244 = sphi 0, %s244
    %s246 = sphi 0, %s244
    %s247 = sphi 0, %s246
    %s261 = sphi 0, %s247
    %s265 = sphi 0, %s265
    %s267 = sphi 0, %s265
    %s268 = sphi 0, %s267
    %s282 = sphi 0, %s268
    %s286 = sphi 0, %s286
    %s288 = sphi 0, %s286
    %s289 = sphi 0, %s288
    %s303 = sphi 0, %s289
    %s309 = sphi 0, %s311
    %s312 = sphi 0, %s309
    %s313 = sphi 0, %s312
    %s329 = sphi 0, %s313
    %s335 = sphi 0, %s337
    %s338 = sphi 0, %s335
    %s339 = sphi 0, %s338
    %s355 = sphi 0, %s339
  $region4: #{autoencoder_forward.1} parent=0 // loop_header_branch
    %24 = sbr.rel (%p22) target = $region8
  $region5: #{autoencoder_forward.1} parent=0 // loop_body
    %s26 = ssub.s32 %s21, 1
    %s27 = ssub.s32 %s21, 2
    %s28 = sadd.s32 %s21, 1
    %s29 = ssub.s32 %s21, %s28
    %p30 = scmp.eq.s32.totalorder %s29, 0
    %s32 = sadd.s32 %s31, 1
    %s33 = scalar_select %p30, %s31, %s32
    %p36 = pneg %p30
    %p37 = scmp.eq.s32.totalorder %s21, 1
    %p38 = por %p36, %p37
    %p39 = scmp.ne.s32.totalorder %s31, %s34
    %p40 = scmp.eq.s32.totalorder %s21, 0
    %p41 = por %p39, %p40
    %p42 = scmp.ne.s32.totalorder %s31, %s34
    %p43 = scmp.eq.s32.totalorder %s26, 1
    %p44 = por %p42, %p43
    %p45 = scmp.ne.s32.totalorder %s34, %s35
    %p46 = scmp.eq.s32.totalorder %s26, 0
    %p47 = por %p45, %p46
    %p48 = scmp.ne.s32.totalorder %s34, %s35
    %p49 = scmp.eq.s32.totalorder %s27, 1
    %p50 = por %p48, %p49
    %p52 = scmp.ne.s32.totalorder %s35, %s51
    %p53 = scmp.eq.s32.totalorder %s27, 0
    %p54 = por %p52, %p53
    %s56 = sadd.s32 %s55, 1
    %p59 = scmp.eq.s32.totalorder %s21, 1
    %p60 = scmp.ne.s32.totalorder %s55, %s57
    %p61 = scmp.eq.s32.totalorder %s21, 0
    %p62 = por %p60, %p61
    %p63 = scmp.ne.s32.totalorder %s55, %s57
    %p64 = scmp.eq.s32.totalorder %s26, 1
    %p65 = por %p63, %p64
    %p66 = scmp.ne.s32.totalorder %s57, %s58
    %p67 = scmp.eq.s32.totalorder %s26, 0
    %p68 = por %p66, %p67
    %p69 = scmp.ne.s32.totalorder %s57, %s58
    %p70 = scmp.eq.s32.totalorder %s27, 1
    %p71 = por %p69, %p70
    %p73 = scmp.ne.s32.totalorder %s58, %s72
    %p74 = scmp.eq.s32.totalorder %s27, 0
    %p75 = por %p73, %p74
    %s77 = sadd.s32 %s76, 1
    %p80 = scmp.eq.s32.totalorder %s21, 1
    %p81 = scmp.ne.s32.totalorder %s76, %s78
    %p82 = scmp.eq.s32.totalorder %s21, 0
    %p83 = por %p81, %p82
    %p84 = scmp.ne.s32.totalorder %s76, %s78
    %p85 = scmp.eq.s32.totalorder %s26, 1
    %p86 = por %p84, %p85
    %p87 = scmp.ne.s32.totalorder %s78, %s79
    %p88 = scmp.eq.s32.totalorder %s26, 0
    %p89 = por %p87, %p88
    %p90 = scmp.ne.s32.totalorder %s78, %s79
    %p91 = scmp.eq.s32.totalorder %s27, 1
    %p92 = por %p90, %p91
    %p94 = scmp.ne.s32.totalorder %s79, %s93
    %p95 = scmp.eq.s32.totalorder %s27, 0
    %p96 = por %p94, %p95
    %s98 = sadd.s32 %s97, 1
    %p101 = scmp.eq.s32.totalorder %s21, 1
    %p102 = scmp.ne.s32.totalorder %s97, %s99
    %p103 = scmp.eq.s32.totalorder %s21, 0
    %p104 = por %p102, %p103
    %p105 = scmp.ne.s32.totalorder %s97, %s99
    %p106 = scmp.eq.s32.totalorder %s26, 1
    %p107 = por %p105, %p106
    %p108 = scmp.ne.s32.totalorder %s99, %s100
    %p109 = scmp.eq.s32.totalorder %s26, 0
    %p110 = por %p108, %p109
    %p111 = scmp.ne.s32.totalorder %s99, %s100
    %p112 = scmp.eq.s32.totalorder %s27, 1
    %p113 = por %p111, %p112
    %p115 = scmp.ne.s32.totalorder %s100, %s114
    %p116 = scmp.eq.s32.totalorder %s27, 0
    %p117 = por %p115, %p116
    %s119 = sadd.s32 %s118, 1
    %p122 = scmp.eq.s32.totalorder %s21, 1
    %p123 = scmp.ne.s32.totalorder %s118, %s120
    %p124 = scmp.eq.s32.totalorder %s21, 0
    %p125 = por %p123, %p124
    %p126 = scmp.ne.s32.totalorder %s118, %s120
    %p127 = scmp.eq.s32.totalorder %s26, 1
    %p128 = por %p126, %p127
    %p129 = scmp.ne.s32.totalorder %s120, %s121
    %p130 = scmp.eq.s32.totalorder %s26, 0
    %p131 = por %p129, %p130
    %p132 = scmp.ne.s32.totalorder %s120, %s121
    %p133 = scmp.eq.s32.totalorder %s27, 1
    %p134 = por %p132, %p133
    %p136 = scmp.ne.s32.totalorder %s121, %s135
    %p137 = scmp.eq.s32.totalorder %s27, 0
    %p138 = por %p136, %p137
    %s140 = sadd.s32 %s139, 1
    %p143 = scmp.eq.s32.totalorder %s21, 1
    %p144 = scmp.ne.s32.totalorder %s139, %s141
    %p145 = scmp.eq.s32.totalorder %s21, 0
    %p146 = por %p144, %p145
    %p147 = scmp.ne.s32.totalorder %s139, %s141
    %p148 = scmp.eq.s32.totalorder %s26, 1
    %p149 = por %p147, %p148
    %p150 = scmp.ne.s32.totalorder %s141, %s142
    %p151 = scmp.eq.s32.totalorder %s26, 0
    %p152 = por %p150, %p151
    %p153 = scmp.ne.s32.totalorder %s141, %s142
    %p154 = scmp.eq.s32.totalorder %s27, 1
    %p155 = por %p153, %p154
    %p157 = scmp.ne.s32.totalorder %s142, %s156
    %p158 = scmp.eq.s32.totalorder %s27, 0
    %p159 = por %p157, %p158
    %s161 = sadd.s32 %s160, 1
    %p164 = scmp.eq.s32.totalorder %s21, 1
    %p165 = scmp.ne.s32.totalorder %s160, %s162
    %p166 = scmp.eq.s32.totalorder %s21, 0
    %p167 = por %p165, %p166
    %p168 = scmp.ne.s32.totalorder %s160, %s162
    %p169 = scmp.eq.s32.totalorder %s26, 1
    %p170 = por %p168, %p169
    %p171 = scmp.ne.s32.totalorder %s162, %s163
    %p172 = scmp.eq.s32.totalorder %s26, 0
    %p173 = por %p171, %p172
    %p174 = scmp.ne.s32.totalorder %s162, %s163
    %p175 = scmp.eq.s32.totalorder %s27, 1
    %p176 = por %p174, %p175
    %p178 = scmp.ne.s32.totalorder %s163, %s177
    %p179 = scmp.eq.s32.totalorder %s27, 0
    %p180 = por %p178, %p179
    %s182 = sadd.s32 %s181, 1
    %p185 = scmp.eq.s32.totalorder %s21, 1
    %p186 = scmp.ne.s32.totalorder %s181, %s183
    %p187 = scmp.eq.s32.totalorder %s21, 0
    %p188 = por %p186, %p187
    %p189 = scmp.ne.s32.totalorder %s181, %s183
    %p190 = scmp.eq.s32.totalorder %s26, 1
    %p191 = por %p189, %p190
    %p192 = scmp.ne.s32.totalorder %s183, %s184
    %p193 = scmp.eq.s32.totalorder %s26, 0
    %p194 = por %p192, %p193
    %p195 = scmp.ne.s32.totalorder %s183, %s184
    %p196 = scmp.eq.s32.totalorder %s27, 1
    %p197 = por %p195, %p196
    %p199 = scmp.ne.s32.totalorder %s184, %s198
    %p200 = scmp.eq.s32.totalorder %s27, 0
    %p201 = por %p199, %p200
    %s203 = sadd.s32 %s202, 1
    %p206 = scmp.eq.s32.totalorder %s21, 1
    %p207 = scmp.ne.s32.totalorder %s202, %s204
    %p208 = scmp.eq.s32.totalorder %s21, 0
    %p209 = por %p207, %p208
    %p210 = scmp.ne.s32.totalorder %s202, %s204
    %p211 = scmp.eq.s32.totalorder %s26, 1
    %p212 = por %p210, %p211
    %p213 = scmp.ne.s32.totalorder %s204, %s205
    %p214 = scmp.eq.s32.totalorder %s26, 0
    %p215 = por %p213, %p214
    %p216 = scmp.ne.s32.totalorder %s204, %s205
    %p217 = scmp.eq.s32.totalorder %s27, 1
    %p218 = por %p216, %p217
    %p220 = scmp.ne.s32.totalorder %s205, %s219
    %p221 = scmp.eq.s32.totalorder %s27, 0
    %p222 = por %p220, %p221
    %s224 = sadd.s32 %s223, 1
    %p227 = scmp.eq.s32.totalorder %s21, 1
    %p228 = scmp.ne.s32.totalorder %s223, %s225
    %p229 = scmp.eq.s32.totalorder %s21, 0
    %p230 = por %p228, %p229
    %p231 = scmp.ne.s32.totalorder %s223, %s225
    %p232 = scmp.eq.s32.totalorder %s26, 1
    %p233 = por %p231, %p232
    %p234 = scmp.ne.s32.totalorder %s225, %s226
    %p235 = scmp.eq.s32.totalorder %s26, 0
    %p236 = por %p234, %p235
    %p237 = scmp.ne.s32.totalorder %s225, %s226
    %p238 = scmp.eq.s32.totalorder %s27, 1
    %p239 = por %p237, %p238
    %p241 = scmp.ne.s32.totalorder %s226, %s240
    %p242 = scmp.eq.s32.totalorder %s27, 0
    %p243 = por %p241, %p242
    %s245 = sadd.s32 %s244, 1
    %p248 = scmp.eq.s32.totalorder %s21, 1
    %p249 = scmp.ne.s32.totalorder %s244, %s246
    %p250 = scmp.eq.s32.totalorder %s21, 0
    %p251 = por %p249, %p250
    %p252 = scmp.ne.s32.totalorder %s244, %s246
    %p253 = scmp.eq.s32.totalorder %s26, 1
    %p254 = por %p252, %p253
    %p255 = scmp.ne.s32.totalorder %s246, %s247
    %p256 = scmp.eq.s32.totalorder %s26, 0
    %p257 = por %p255, %p256
    %p258 = scmp.ne.s32.totalorder %s246, %s247
    %p259 = scmp.eq.s32.totalorder %s27, 1
    %p260 = por %p258, %p259
    %p262 = scmp.ne.s32.totalorder %s247, %s261
    %p263 = scmp.eq.s32.totalorder %s27, 0
    %p264 = por %p262, %p263
    %s266 = sadd.s32 %s265, 1
    %p269 = scmp.eq.s32.totalorder %s21, 1
    %p270 = scmp.ne.s32.totalorder %s265, %s267
    %p271 = scmp.eq.s32.totalorder %s21, 0
    %p272 = por %p270, %p271
    %p273 = scmp.ne.s32.totalorder %s265, %s267
    %p274 = scmp.eq.s32.totalorder %s26, 1
    %p275 = por %p273, %p274
    %p276 = scmp.ne.s32.totalorder %s267, %s268
    %p277 = scmp.eq.s32.totalorder %s26, 0
    %p278 = por %p276, %p277
    %p279 = scmp.ne.s32.totalorder %s267, %s268
    %p280 = scmp.eq.s32.totalorder %s27, 1
    %p281 = por %p279, %p280
    %p283 = scmp.ne.s32.totalorder %s268, %s282
    %p284 = scmp.eq.s32.totalorder %s27, 0
    %p285 = por %p283, %p284
    %s287 = sadd.s32 %s286, 1
    %p290 = scmp.eq.s32.totalorder %s21, 1
    %p291 = scmp.ne.s32.totalorder %s286, %s288
    %p292 = scmp.eq.s32.totalorder %s21, 0
    %p293 = por %p291, %p292
    %p294 = scmp.ne.s32.totalorder %s286, %s288
    %p295 = scmp.eq.s32.totalorder %s26, 1
    %p296 = por %p294, %p295
    %p297 = scmp.ne.s32.totalorder %s288, %s289
    %p298 = scmp.eq.s32.totalorder %s26, 0
    %p299 = por %p297, %p298
    %p300 = scmp.ne.s32.totalorder %s288, %s289
    %p301 = scmp.eq.s32.totalorder %s27, 1
    %p302 = por %p300, %p301
    %p304 = scmp.ne.s32.totalorder %s289, %s303
    %p305 = scmp.eq.s32.totalorder %s27, 0
    %p306 = por %p304, %p305
    %s307 = ssub.s32 %s21, %s28
    %p308 = scmp.eq.s32.totalorder %s307, 0
    %s310 = sadd.s32 %s309, 1
    %s311 = scalar_select %p308, %s309, %s310
    %p314 = pneg %p308
    %p315 = scmp.eq.s32.totalorder %s21, 1
    %p316 = por %p314, %p315
    %p317 = scmp.ne.s32.totalorder %s309, %s312
    %p318 = scmp.eq.s32.totalorder %s21, 0
    %p319 = por %p317, %p318
    %p320 = scmp.ne.s32.totalorder %s309, %s312
    %p321 = scmp.eq.s32.totalorder %s26, 1
    %p322 = por %p320, %p321
    %p323 = scmp.ne.s32.totalorder %s312, %s313
    %p324 = scmp.eq.s32.totalorder %s26, 0
    %p325 = por %p323, %p324
    %p326 = scmp.ne.s32.totalorder %s312, %s313
    %p327 = scmp.eq.s32.totalorder %s27, 1
    %p328 = por %p326, %p327
    %p330 = scmp.ne.s32.totalorder %s313, %s329
    %p331 = scmp.eq.s32.totalorder %s27, 0
    %p332 = por %p330, %p331
    %s333 = ssub.s32 %s21, %s28
    %p334 = scmp.eq.s32.totalorder %s333, 0
    %s336 = sadd.s32 %s335, 1
    %s337 = scalar_select %p334, %s335, %s336
    %p340 = pneg %p334
    %p341 = scmp.eq.s32.totalorder %s21, 1
    %p342 = por %p340, %p341
    %p343 = scmp.ne.s32.totalorder %s335, %s338
    %p344 = scmp.eq.s32.totalorder %s21, 0
    %p345 = por %p343, %p344
    %p346 = scmp.ne.s32.totalorder %s335, %s338
    %p347 = scmp.eq.s32.totalorder %s26, 1
    %p348 = por %p346, %p347
    %p349 = scmp.ne.s32.totalorder %s338, %s339
    %p350 = scmp.eq.s32.totalorder %s26, 0
    %p351 = por %p349, %p350
    %p352 = scmp.ne.s32.totalorder %s338, %s339
    %p353 = scmp.eq.s32.totalorder %s27, 1
    %p354 = por %p352, %p353
    %p356 = scmp.ne.s32.totalorder %s339, %s355
    %p357 = scmp.eq.s32.totalorder %s27, 0
    %p358 = por %p356, %p357
    %p359 = scmp.le.s32.totalorder 1, %s21
    %p360 = scmp.lt.s32.totalorder %s21, 3
    %p361 = pnand %p359, %p360
    %p362 = pneg %p361
    // Predicated region
    $region9: #{autoencoder_forward.1} parent=5 // pred_check
      _
    $region10: #{autoencoder_forward.1} parent=5 // pred_check_branch
      %364 = sbr.rel (%p361) target = $region12
    $region11: #{autoencoder_forward.1} parent=5 // pred_region
      %s365 = ssub.s32 %s21, 1
      // Predicated region
      $region13: #{autoencoder_forward.1} parent=11 // pred_check
        %p366 = pneg %p68
      $region14: #{autoencoder_forward.1} parent=11 // pred_check_branch
        %368 = sbr.rel (%p366) target = $region16
      $region15: #{autoencoder_forward.1} parent=11 // pred_region
        _
      $region16: #{autoencoder_forward.1} parent=11 // pred_fallthru
        _
      // Predicated region
      $region17: #{autoencoder_forward.1} parent=11 // pred_check
        %p369 = pneg %p89
      $region18: #{autoencoder_forward.1} parent=11 // pred_check_branch
        %371 = sbr.rel (%p369) target = $region20
      $region19: #{autoencoder_forward.1} parent=11 // pred_region
        _
      $region20: #{autoencoder_forward.1} parent=11 // pred_fallthru
        _
      // Predicated region
      $region21: #{autoencoder_forward.1} parent=11 // pred_check
        %p372 = pneg %p110
      $region22: #{autoencoder_forward.1} parent=11 // pred_check_branch
        %374 = sbr.rel (%p372) target = $region24
      $region23: #{autoencoder_forward.1} parent=11 // pred_region
        _
      $region24: #{autoencoder_forward.1} parent=11 // pred_fallthru
        _
      // Predicated region
      $region25: #{autoencoder_forward.1} parent=11 // pred_check
        %p375 = pneg %p131
      $region26: #{autoencoder_forward.1} parent=11 // pred_check_branch
        %377 = sbr.rel (%p375) target = $region28
      $region27: #{autoencoder_forward.1} parent=11 // pred_region
        _
      $region28: #{autoencoder_forward.1} parent=11 // pred_fallthru
        _
      // Predicated region
      $region29: #{autoencoder_forward.1} parent=11 // pred_check
        %p378 = pneg %p152
      $region30: #{autoencoder_forward.1} parent=11 // pred_check_branch
        %380 = sbr.rel (%p378) target = $region32
      $region31: #{autoencoder_forward.1} parent=11 // pred_region
        _
      $region32: #{autoencoder_forward.1} parent=11 // pred_fallthru
        _
      // Predicated region
      $region33: #{autoencoder_forward.1} parent=11 // pred_check
        %p381 = pneg %p173
      $region34: #{autoencoder_forward.1} parent=11 // pred_check_branch
        %383 = sbr.rel (%p381) target = $region36
      $region35: #{autoencoder_forward.1} parent=11 // pred_region
        _
      $region36: #{autoencoder_forward.1} parent=11 // pred_fallthru
        _
      // Predicated region
      $region37: #{autoencoder_forward.1} parent=11 // pred_check
        %p384 = pneg %p194
      $region38: #{autoencoder_forward.1} parent=11 // pred_check_branch
        %386 = sbr.rel (%p384) target = $region40
      $region39: #{autoencoder_forward.1} parent=11 // pred_region
        _
      $region40: #{autoencoder_forward.1} parent=11 // pred_fallthru
        _
      // Predicated region
      $region41: #{autoencoder_forward.1} parent=11 // pred_check
        %p387 = pneg %p215
      $region42: #{autoencoder_forward.1} parent=11 // pred_check_branch
        %389 = sbr.rel (%p387) target = $region44
      $region43: #{autoencoder_forward.1} parent=11 // pred_region
        _
      $region44: #{autoencoder_forward.1} parent=11 // pred_fallthru
        _
      // Predicated region
      $region45: #{autoencoder_forward.1} parent=11 // pred_check
        %p390 = pneg %p236
      $region46: #{autoencoder_forward.1} parent=11 // pred_check_branch
        %392 = sbr.rel (%p390) target = $region48
      $region47: #{autoencoder_forward.1} parent=11 // pred_region
        _
      $region48: #{autoencoder_forward.1} parent=11 // pred_fallthru
        _
      // Predicated region
      $region49: #{autoencoder_forward.1} parent=11 // pred_check
        %p393 = pneg %p257
      $region50: #{autoencoder_forward.1} parent=11 // pred_check_branch
        %395 = sbr.rel (%p393) target = $region52
      $region51: #{autoencoder_forward.1} parent=11 // pred_region
        _
      $region52: #{autoencoder_forward.1} parent=11 // pred_fallthru
        _
      // Predicated region
      $region53: #{autoencoder_forward.1} parent=11 // pred_check
        %p396 = pneg %p278
      $region54: #{autoencoder_forward.1} parent=11 // pred_check_branch
        %398 = sbr.rel (%p396) target = $region56
      $region55: #{autoencoder_forward.1} parent=11 // pred_region
        _
      $region56: #{autoencoder_forward.1} parent=11 // pred_fallthru
        _
      // Predicated region
      $region57: #{autoencoder_forward.1} parent=11 // pred_check
        %p399 = pneg %p299
      $region58: #{autoencoder_forward.1} parent=11 // pred_check_branch
        %401 = sbr.rel (%p399) target = $region60
      $region59: #{autoencoder_forward.1} parent=11 // pred_region
        _
      $region60: #{autoencoder_forward.1} parent=11 // pred_fallthru
        _
    $region12: #{autoencoder_forward.1} parent=5 // pred_fallthru
      _
    %p402 = scmp.lt.s32.totalorder %s21, 2
    // Predicated region
    $region61: #{autoencoder_forward.1} parent=5 // pred_check
      %p403 = pneg %p402
    $region62: #{autoencoder_forward.1} parent=5 // pred_check_branch
      %405 = sbr.rel (%p403) target = $region64
    $region63: #{autoencoder_forward.1} parent=5 // pred_region
      // Predicated region
      $region65: #{autoencoder_forward.1} parent=63 // pred_check
        %p406 = pneg %p41
      $region66: #{autoencoder_forward.1} parent=63 // pred_check_branch
        %408 = sbr.rel (%p406) target = $region68
      $region67: #{autoencoder_forward.1} parent=63 // pred_region
        %s409 = smul.u32 128, %s21
        %p410 = scmp.lt.s32.totalorder %s409, 255
        %s411 = scalar_select %p410, %s409, 255
        %s412 = smul.addr %s411, 8
        %s413 = scalar_lea.vmem %s0, %s412
        %s414 = smul.u32 128, %s21
      $region68: #{autoencoder_forward.1} parent=63 // pred_fallthru
        _
    $region64: #{autoencoder_forward.1} parent=5 // pred_fallthru
      _
    %p415 = scmp.le.s32.totalorder 1, %s21
    %p416 = scmp.lt.s32.totalorder %s21, 3
    %p417 = pnand %p415, %p416
    %p418 = pneg %p417
    // Predicated region
    $region69: #{autoencoder_forward.1} parent=5 // pred_check
      _
    $region70: #{autoencoder_forward.1} parent=5 // pred_check_branch
      %420 = sbr.rel (%p417) target = $region72
    $region71: #{autoencoder_forward.1} parent=5 // pred_region
      %s421 = ssub.s32 %s21, 1
      %s422 = smul.u32 128, %s26
      %p423 = scmp.lt.s32.totalorder %s422, 255
      %s424 = scalar_select %p423, %s422, 255
      %s425 = smul.addr %s424, 8
      %s426 = scalar_lea.vmem %s0, %s425
      %p427 = pneg %p47
      %p428 = pneg %p44
      %p429 = pneg %p68
      %p430 = pneg %p65
      %p431 = pneg %p89
      %p432 = pneg %p86
      %p433 = pneg %p110
      %p434 = pneg %p107
      %p435 = pneg %p131
      %p436 = pneg %p128
      %p437 = pneg %p152
      %p438 = pneg %p149
      %p439 = pneg %p173
      %p440 = pneg %p170
      %p441 = pneg %p194
      %p442 = pneg %p191
      %p443 = pneg %p215
      %p444 = pneg %p212
      %p445 = pneg %p236
      %p446 = pneg %p233
      %p447 = pneg %p257
      %p448 = pneg %p254
      %p449 = pneg %p278
      %p450 = pneg %p275
      %p451 = pneg %p299
      %p452 = pneg %p296
      %p453 = pneg %p325
      %p454 = pneg %p322
      %s455 = smul.u32 128, %s26
      %p456 = scmp.lt.s32.totalorder %s455, 255
      %s457 = scalar_select %p456, %s455, 255
      %s458 = smul.addr %s457, 8
      %s459 = scalar_lea.vmem %s13, %s458
      %p460 = pneg %p351
      %p461 = pneg %p348
      %s462 = smul.u32 128, %s26
      %p463 = scmp.lt.s32.totalorder %s462, 255
      %s464 = scalar_select %p463, %s462, 255
      %s465 = smul.addr %s464, 8
      %s466 = scalar_lea.vmem %s14, %s465
      %s467 = smul.u32 128, %s26
      %p468 = scmp.lt.s32.totalorder %s467, 255
      %s469 = scalar_select %p468, %s467, 255
      %s470 = smul.addr %s469, 8
      %s471 = scalar_lea.vmem %s0, %s470
      %s472 = smul.u32 128, %s26
      %s473 = smul.u32 128, %s26
      %p474 = scmp.lt.s32.totalorder %s473, 255
      %s475 = scalar_select %p474, %s473, 255
      %s476 = smul.addr %s475, 8
      %s477 = scalar_lea.vmem %s13, %s476
      %s478 = smul.u32 128, %s26
      %s479 = smul.u32 128, %s26
      %p480 = scmp.lt.s32.totalorder %s479, 255
      %s481 = scalar_select %p480, %s479, 255
      %s482 = smul.addr %s481, 8
      %s483 = scalar_lea.vmem %s14, %s482
      %s484 = smul.u32 128, %s26
      %v485 = vld [vmem:[%s471] sm:$0xff]
      %v486 = vld [vmem:[%s471 + $0x8] sm:$0xff]
      %v487 = vld [vmem:[%s471 + $0x10] sm:$0xff]
      %v488 = vld [vmem:[%s471 + $0x18] sm:$0xff]
      %v489 = vld [vmem:[%s471 + $0x20] sm:$0xff]
      %v490 = vld [vmem:[%s471 + $0x28] sm:$0xff]
      %v491 = vld [vmem:[%s471 + $0x30] sm:$0xff]
      %v492 = vld [vmem:[%s471 + $0x38] sm:$0xff]
      %v493 = vld [vmem:[%s471 + $0x40] sm:$0xff]
      %v494 = vld [vmem:[%s471 + $0x48] sm:$0xff]
      %v495 = vld [vmem:[%s471 + $0x50] sm:$0xff]
      %v496 = vld [vmem:[%s471 + $0x58] sm:$0xff]
      %v497 = vld [vmem:[%s471 + $0x60] sm:$0xff]
      %v498 = vld [vmem:[%s471 + $0x68] sm:$0xff]
      %v499 = vld [vmem:[%s471 + $0x70] sm:$0xff]
      %v500 = vld [vmem:[%s471 + $0x78] sm:$0xff]
      %v501 = vld [vmem:[%s471 + $0x80] sm:$0xff]
      %v502 = vld [vmem:[%s471 + $0x88] sm:$0xff]
      %v503 = vld [vmem:[%s471 + $0x90] sm:$0xff]
      %v504 = vld [vmem:[%s471 + $0x98] sm:$0xff]
      %v505 = vld [vmem:[%s471 + $0xa0] sm:$0xff]
      %v506 = vld [vmem:[%s471 + $0xa8] sm:$0xff]
      %v507 = vld [vmem:[%s471 + $0xb0] sm:$0xff]
      %v508 = vld [vmem:[%s471 + $0xb8] sm:$0xff]
      %v509 = vld [vmem:[%s471 + $0xc0] sm:$0xff]
      %v510 = vld [vmem:[%s471 + $0xc8] sm:$0xff]
      %v511 = vld [vmem:[%s471 + $0xd0] sm:$0xff]
      %v512 = vld [vmem:[%s471 + $0xd8] sm:$0xff]
      %v513 = vld [vmem:[%s471 + $0xe0] sm:$0xff]
      %v514 = vld [vmem:[%s471 + $0xe8] sm:$0xff]
      %v515 = vld [vmem:[%s471 + $0xf0] sm:$0xff]
      %v516 = vld [vmem:[%s471 + $0xf8] sm:$0xff]
      %v517 = vld [vmem:[%s1] sm:$0x7]
      %v518 = vld [vmem:[%s2] sm:$0x1]
      %v520 = vlaneseq
      %v521 = vshrl.u32 %v520, 7
      %v522 = vsub.s32 0, %v521
      %v523 = vrot.slane %v518, %v522
      %vm525 = vcmask 23552
      %v527 = vsel %vm525, %v485, 0
      %v530 = vsel %vm525, %v486, 0
      %v533 = vsel %vm525, %v487, 0
      %v536 = vsel %vm525, %v488, 0
      %v539 = vsel %vm525, %v489, 0
      %v542 = vsel %vm525, %v490, 0
      %v545 = vsel %vm525, %v491, 0
      %v548 = vsel %vm525, %v492, 0
      %v551 = vsel %vm525, %v493, 0
      %v554 = vsel %vm525, %v494, 0
      %v557 = vsel %vm525, %v495, 0
      %v560 = vsel %vm525, %v496, 0
      %v563 = vsel %vm525, %v497, 0
      %v566 = vsel %vm525, %v498, 0
      %v569 = vsel %vm525, %v499, 0
      %v572 = vsel %vm525, %v500, 0
      %v575 = vsel %vm525, %v501, 0
      %v578 = vsel %vm525, %v502, 0
      %v581 = vsel %vm525, %v503, 0
      %v584 = vsel %vm525, %v504, 0
      %v587 = vsel %vm525, %v505, 0
      %v590 = vsel %vm525, %v506, 0
      %v593 = vsel %vm525, %v507, 0
      %v596 = vsel %vm525, %v508, 0
      %v599 = vsel %vm525, %v509, 0
      %v602 = vsel %vm525, %v510, 0
      %v605 = vsel %vm525, %v511, 0
      %v608 = vsel %vm525, %v512, 0
      %v611 = vsel %vm525, %v513, 0
      %v614 = vsel %vm525, %v514, 0
      %v617 = vsel %vm525, %v515, 0
      %v620 = vsel %vm525, %v516, 0
      %vm622 = vcmask 1042432
      %v624 = vsel %vm622, %v517, 0
      %626 = vmatprep.subr.mxu0 0.0
      %627 = vmatpush1.msra.mxu0 %v624
      %628 = vmatprep.subr.mxu0 0.0
      %629 = vmatpush1.msra.mxu0 0.0
      %630 = vmatprep.subr.mxu0 0.0
      %631 = vmatpush1.msra.mxu0 0.0
      %632 = vmatprep.subr.mxu0 0.0
      %633 = vmatpush1.msra.mxu0 0.0
      %634 = vmatprep.subr.mxu0 0.0
      %635 = vmatpush1.msra.mxu0 0.0
      %636 = vmatprep.subr.mxu0 0.0
      %637 = vmatpush1.msra.mxu0 0.0
      %638 = vmatprep.subr.mxu0 0.0
      %639 = vmatpush1.msra.mxu0 0.0
      %640 = vmatprep.subr.mxu0 0.0
      %641 = vmatpush1.msra.mxu0 0.0
      %642 = vmatprep.subr.mxu0 0.0
      %643 = vmatpush1.msra.mxu0 0.0
      %644 = vmatprep.subr.mxu0 0.0
      %645 = vmatpush1.msra.mxu0 0.0
      %646 = vmatprep.subr.mxu0 0.0
      %647 = vmatpush1.msra.mxu0 0.0
      %648 = vmatprep.subr.mxu0 0.0
      %649 = vmatpush1.msra.mxu0 0.0
      %650 = vmatprep.subr.mxu0 0.0
      %651 = vmatpush1.msra.mxu0 0.0
      %652 = vmatprep.subr.mxu0 0.0
      %653 = vmatpush1.msra.mxu0 0.0
      %654 = vmatprep.subr.mxu0 0.0
      %655 = vmatpush1.msra.mxu0 0.0
      %656 = vmatprep.subr.mxu0 0.0
      %657 = vmatpush1.msra.mxu0 0.0
      %658 = vmatprep.subr.mxu0 0.0
      %659 = vmatpush1.msra.mxu0 0.0
      %660 = vmatprep.subr.mxu0 0.0
      %661 = vmatpush1.msra.mxu0 0.0
      %662 = vmatprep.subr.mxu0 0.0
      %663 = vmatpush1.msra.mxu0 0.0
      %664 = vmatprep.subr.mxu0 0.0
      %665 = vmatpush1.msra.mxu0 0.0
      %666 = vmatprep.subr.mxu0 0.0
      %667 = vmatpush1.msra.mxu0 0.0
      %668 = vmatprep.subr.mxu0 0.0
      %669 = vmatpush1.msra.mxu0 0.0
      %670 = vmatprep.subr.mxu0 0.0
      %671 = vmatpush1.msra.mxu0 0.0
      %672 = vmatprep.subr.mxu0 0.0
      %673 = vmatpush1.msra.mxu0 0.0
      %674 = vmatprep.subr.mxu0 0.0
      %675 = vmatpush1.msra.mxu0 0.0
      %676 = vmatprep.subr.mxu0 0.0
      %677 = vmatpush1.msra.mxu0 0.0
      %678 = vmatprep.subr.mxu0 0.0
      %679 = vmatpush1.msra.mxu0 0.0
      %680 = vmatprep.subr.mxu0 0.0
      %681 = vmatpush1.msra.mxu0 0.0
      %682 = vmatprep.subr.mxu0 0.0
      %683 = vmatpush1.msra.mxu0 0.0
      %684 = vmatprep.subr.mxu0 0.0
      %685 = vmatpush1.msra.mxu0 0.0
      %686 = vmatprep.subr.mxu0 0.0
      %687 = vmatpush1.msra.mxu0 0.0
      %688 = vmatprep.subr.mxu0 0.0
      %689 = vmatpush1.msra.mxu0 0.0
      %690 = vmatprep.mubr.f32.mxu0 0.0
      %691 = vmatmul.mubr.f32.gmra.mrb[0].mxu0 %v527
      %v692 = vpop.f32.mrb[0].mxu0
      %v693 = vadd.f32 %v523, %v692
      %v694 = vpop.f32.mrb[0].mxu0
      %695 = vmatprep.mubr.f32.mxu0 0.0
      %696 = vmatmul.mubr.f32.gmra.mrb[0].mxu0 %v530
      %v697 = vpop.f32.mrb[0].mxu0
      %v698 = vadd.f32 %v523, %v697
      %v699 = vpop.f32.mrb[0].mxu0
      %700 = vmatprep.mubr.f32.mxu0 0.0
      %701 = vmatmul.mubr.f32.gmra.mrb[0].mxu0 %v533
      %v702 = vpop.f32.mrb[0].mxu0
      %v703 = vadd.f32 %v523, %v702
      %v704 = vpop.f32.mrb[0].mxu0
      %705 = vmatprep.mubr.f32.mxu0 0.0
      %706 = vmatmul.mubr.f32.gmra.mrb[0].mxu0 %v536
      %v707 = vpop.f32.mrb[0].mxu0
      %v708 = vadd.f32 %v523, %v707
      %v709 = vpop.f32.mrb[0].mxu0
      %710 = vmatprep.mubr.f32.mxu0 0.0
      %711 = vmatmul.mubr.f32.gmra.mrb[0].mxu0 %v539
      %v712 = vpop.f32.mrb[0].mxu0
      %v713 = vadd.f32 %v523, %v712
      %v714 = vpop.f32.mrb[0].mxu0
      %715 = vmatprep.mubr.f32.mxu0 0.0
      %716 = vmatmul.mubr.f32.gmra.mrb[0].mxu0 %v542
      %v717 = vpop.f32.mrb[0].mxu0
      %v718 = vadd.f32 %v523, %v717
      %v719 = vpop.f32.mrb[0].mxu0
      %720 = vmatprep.mubr.f32.mxu0 0.0
      %721 = vmatmul.mubr.f32.gmra.mrb[0].mxu0 %v545
      %v722 = vpop.f32.mrb[0].mxu0
      %v723 = vadd.f32 %v523, %v722
      %v724 = vpop.f32.mrb[0].mxu0
      %725 = vmatprep.mubr.f32.mxu0 0.0
      %726 = vmatmul.mubr.f32.gmra.mrb[0].mxu0 %v548
      %v727 = vpop.f32.mrb[0].mxu0
      %v728 = vadd.f32 %v523, %v727
      %v729 = vpop.f32.mrb[0].mxu0
      %730 = vmatprep.mubr.f32.mxu0 0.0
      %731 = vmatmul.mubr.f32.gmra.mrb[0].mxu0 %v551
      %v732 = vpop.f32.mrb[0].mxu0
      %v733 = vadd.f32 %v523, %v732
      %v734 = vpop.f32.mrb[0].mxu0
      %735 = vmatprep.mubr.f32.mxu0 0.0
      %736 = vmatmul.mubr.f32.gmra.mrb[0].mxu0 %v554
      %v737 = vpop.f32.mrb[0].mxu0
      %v738 = vadd.f32 %v523, %v737
      %v739 = vpop.f32.mrb[0].mxu0
      %740 = vmatprep.mubr.f32.mxu0 0.0
      %741 = vmatmul.mubr.f32.gmra.mrb[0].mxu0 %v557
      %v742 = vpop.f32.mrb[0].mxu0
      %v743 = vadd.f32 %v523, %v742
      %v744 = vpop.f32.mrb[0].mxu0
      %745 = vmatprep.mubr.f32.mxu0 0.0
      %746 = vmatmul.mubr.f32.gmra.mrb[0].mxu0 %v560
      %v747 = vpop.f32.mrb[0].mxu0
      %v748 = vadd.f32 %v523, %v747
      %v749 = vpop.f32.mrb[0].mxu0
      %750 = vmatprep.mubr.f32.mxu0 0.0
      %751 = vmatmul.mubr.f32.gmra.mrb[0].mxu0 %v563
      %v752 = vpop.f32.mrb[0].mxu0
      %v753 = vadd.f32 %v523, %v752
      %v754 = vpop.f32.mrb[0].mxu0
      %755 = vmatprep.mubr.f32.mxu0 0.0
      %756 = vmatmul.mubr.f32.gmra.mrb[0].mxu0 %v566
      %v757 = vpop.f32.mrb[0].mxu0
      %v758 = vadd.f32 %v523, %v757
      %v759 = vpop.f32.mrb[0].mxu0
      %760 = vmatprep.mubr.f32.mxu0 0.0
      %761 = vmatmul.mubr.f32.gmra.mrb[0].mxu0 %v569
      %v762 = vpop.f32.mrb[0].mxu0
      %v763 = vadd.f32 %v523, %v762
      %v764 = vpop.f32.mrb[0].mxu0
      %765 = vmatprep.mubr.f32.mxu0 0.0
      %766 = vmatmul.mubr.f32.gmra.mrb[0].mxu0 %v572
      %v767 = vpop.f32.mrb[0].mxu0
      %v768 = vadd.f32 %v523, %v767
      %v769 = vpop.f32.mrb[0].mxu0
      %770 = vmatprep.mubr.f32.mxu0 0.0
      %771 = vmatmul.mubr.f32.gmra.mrb[0].mxu0 %v575
      %v772 = vpop.f32.mrb[0].mxu0
      %v773 = vadd.f32 %v523, %v772
      %v774 = vpop.f32.mrb[0].mxu0
      %775 = vmatprep.mubr.f32.mxu0 0.0
      %776 = vmatmul.mubr.f32.gmra.mrb[0].mxu0 %v578
      %v777 = vpop.f32.mrb[0].mxu0
      %v778 = vadd.f32 %v523, %v777
      %v779 = vpop.f32.mrb[0].mxu0
      %780 = vmatprep.mubr.f32.mxu0 0.0
      %781 = vmatmul.mubr.f32.gmra.mrb[0].mxu0 %v581
      %v782 = vpop.f32.mrb[0].mxu0
      %v783 = vadd.f32 %v523, %v782
      %v784 = vpop.f32.mrb[0].mxu0
      %785 = vmatprep.mubr.f32.mxu0 0.0
      %786 = vmatmul.mubr.f32.gmra.mrb[0].mxu0 %v584
      %v787 = vpop.f32.mrb[0].mxu0
      %v788 = vadd.f32 %v523, %v787
      %v789 = vpop.f32.mrb[0].mxu0
      %790 = vmatprep.mubr.f32.mxu0 0.0
      %791 = vmatmul.mubr.f32.gmra.mrb[0].mxu0 %v587
      %v792 = vpop.f32.mrb[0].mxu0
      %v793 = vadd.f32 %v523, %v792
      %v794 = vpop.f32.mrb[0].mxu0
      %795 = vmatprep.mubr.f32.mxu0 0.0
      %796 = vmatmul.mubr.f32.gmra.mrb[0].mxu0 %v590
      %v797 = vpop.f32.mrb[0].mxu0
      %v798 = vadd.f32 %v523, %v797
      %v799 = vpop.f32.mrb[0].mxu0
      %800 = vmatprep.mubr.f32.mxu0 0.0
      %801 = vmatmul.mubr.f32.gmra.mrb[0].mxu0 %v593
      %v802 = vpop.f32.mrb[0].mxu0
      %v803 = vadd.f32 %v523, %v802
      %v804 = vpop.f32.mrb[0].mxu0
      %805 = vmatprep.mubr.f32.mxu0 0.0
      %806 = vmatmul.mubr.f32.gmra.mrb[0].mxu0 %v596
      %v807 = vpop.f32.mrb[0].mxu0
      %v808 = vadd.f32 %v523, %v807
      %v809 = vpop.f32.mrb[0].mxu0
      %810 = vmatprep.mubr.f32.mxu0 0.0
      %811 = vmatmul.mubr.f32.gmra.mrb[0].mxu0 %v599
      %v812 = vpop.f32.mrb[0].mxu0
      %v813 = vadd.f32 %v523, %v812
      %v814 = vpop.f32.mrb[0].mxu0
      %815 = vmatprep.mubr.f32.mxu0 0.0
      %816 = vmatmul.mubr.f32.gmra.mrb[0].mxu0 %v602
      %v817 = vpop.f32.mrb[0].mxu0
      %v818 = vadd.f32 %v523, %v817
      %v819 = vpop.f32.mrb[0].mxu0
      %820 = vmatprep.mubr.f32.mxu0 0.0
      %821 = vmatmul.mubr.f32.gmra.mrb[0].mxu0 %v605
      %v822 = vpop.f32.mrb[0].mxu0
      %v823 = vadd.f32 %v523, %v822
      %v824 = vpop.f32.mrb[0].mxu0
      %825 = vmatprep.mubr.f32.mxu0 0.0
      %826 = vmatmul.mubr.f32.gmra.mrb[0].mxu0 %v608
      %v827 = vpop.f32.mrb[0].mxu0
      %v828 = vadd.f32 %v523, %v827
      %v829 = vpop.f32.mrb[0].mxu0
      %830 = vmatprep.mubr.f32.mxu0 0.0
      %831 = vmatmul.mubr.f32.gmra.mrb[0].mxu0 %v611
      %v832 = vpop.f32.mrb[0].mxu0
      %v833 = vadd.f32 %v523, %v832
      %v834 = vpop.f32.mrb[0].mxu0
      %835 = vmatprep.mubr.f32.mxu0 0.0
      %836 = vmatmul.mubr.f32.gmra.mrb[0].mxu0 %v614
      %v837 = vpop.f32.mrb[0].mxu0
      %v838 = vadd.f32 %v523, %v837
      %v839 = vpop.f32.mrb[0].mxu0
      %840 = vmatprep.mubr.f32.mxu0 0.0
      %841 = vmatmul.mubr.f32.gmra.mrb[0].mxu0 %v617
      %v842 = vpop.f32.mrb[0].mxu0
      %v843 = vadd.f32 %v523, %v842
      %v844 = vpop.f32.mrb[0].mxu0
      %845 = vmatprep.mubr.f32.mxu0 0.0
      %846 = vmatmul.mubr.f32.gmra.mrb[0].mxu0 %v620
      %v847 = vpop.f32.mrb[0].mxu0
      %v848 = vadd.f32 %v523, %v847
      %v849 = vpop.f32.mrb[0].mxu0
      %850 = vdwg.mxu0
      %v851 = vmax.f32 %v693, 0.0
      %v852 = vmax.f32 %v698, 0.0
      %v853 = vmax.f32 %v703, 0.0
      %v854 = vmax.f32 %v708, 0.0
      %v855 = vmax.f32 %v713, 0.0
      %v856 = vmax.f32 %v718, 0.0
      %v857 = vmax.f32 %v723, 0.0
      %v858 = vmax.f32 %v728, 0.0
      %v859 = vmax.f32 %v733, 0.0
      %v860 = vmax.f32 %v738, 0.0
      %v861 = vmax.f32 %v743, 0.0
      %v862 = vmax.f32 %v748, 0.0
      %v863 = vmax.f32 %v753, 0.0
      %v864 = vmax.f32 %v758, 0.0
      %v865 = vmax.f32 %v763, 0.0
      %v866 = vmax.f32 %v768, 0.0
      %v867 = vmax.f32 %v773, 0.0
      %v868 = vmax.f32 %v778, 0.0
      %v869 = vmax.f32 %v783, 0.0
      %v870 = vmax.f32 %v788, 0.0
      %v871 = vmax.f32 %v793, 0.0
      %v872 = vmax.f32 %v798, 0.0
      %v873 = vmax.f32 %v803, 0.0
      %v874 = vmax.f32 %v808, 0.0
      %v875 = vmax.f32 %v813, 0.0
      %v876 = vmax.f32 %v818, 0.0
      %v877 = vmax.f32 %v823, 0.0
      %v878 = vmax.f32 %v828, 0.0
      %v879 = vmax.f32 %v833, 0.0
      %v880 = vmax.f32 %v838, 0.0
      %v881 = vmax.f32 %v843, 0.0
      %v882 = vmax.f32 %v848, 0.0
      %v883 = vld [vmem:[%s3] sm:$0xff]
      %v884 = vld [vmem:[%s3 + $0x8] sm:$0xff]
      %v885 = vld [vmem:[%s3 + $0x10] sm:$0xff]
      %v886 = vld [vmem:[%s3 + $0x18] sm:$0xff]
      %v887 = vld [vmem:[%s3 + $0x20] sm:$0xff]
      %v888 = vld [vmem:[%s3 + $0x28] sm:$0xff]
      %v889 = vld [vmem:[%s3 + $0x30] sm:$0xff]
      %v890 = vld [vmem:[%s3 + $0x38] sm:$0xff]
      %v891 = vld [vmem:[%s4] sm:$0x1]
      %v893 = vlaneseq
      %v894 = vshrl.u32 %v893, 7
      %v895 = vsub.s32 0, %v894
      %v896 = vrot.slane %v891, %v895
      %vm898 = vcmask 523264
      %v900 = vsel %vm898, %v851, 0
      %v903 = vsel %vm898, %v852, 0
      %v906 = vsel %vm898, %v853, 0
      %v909 = vsel %vm898, %v854, 0
      %v912 = vsel %vm898, %v855, 0
      %v915 = vsel %vm898, %v856, 0
      %v918 = vsel %vm898, %v857, 0
      %v921 = vsel %vm898, %v858, 0
      %v924 = vsel %vm898, %v859, 0
      %v927 = vsel %vm898, %v860, 0
      %v930 = vsel %vm898, %v861, 0
      %v933 = vsel %vm898, %v862, 0
      %v936 = vsel %vm898, %v863, 0
      %v939 = vsel %vm898, %v864, 0
      %v942 = vsel %vm898, %v865, 0
      %v945 = vsel %vm898, %v866, 0
      %v948 = vsel %vm898, %v867, 0
      %v951 = vsel %vm898, %v868, 0
      %v954 = vsel %vm898, %v869, 0
      %v957 = vsel %vm898, %v870, 0
      %v960 = vsel %vm898, %v871, 0
      %v963 = vsel %vm898, %v872, 0
      %v966 = vsel %vm898, %v873, 0
      %v969 = vsel %vm898, %v874, 0
      %v972 = vsel %vm898, %v875, 0
      %v975 = vsel %vm898, %v876, 0
      %v978 = vsel %vm898, %v877, 0
      %v981 = vsel %vm898, %v878, 0
      %v984 = vsel %vm898, %v879, 0
      %v987 = vsel %vm898, %v880, 0
      %v990 = vsel %vm898, %v881, 0
      %v993 = vsel %vm898, %v882, 0
      %995 = vmatprep.subr.mxu0 0.0
      %996 = vmatpush1.msra.mxu0 %v883
      %997 = vmatprep.subr.mxu0 0.0
      %998 = vmatpush1.msra.mxu0 %v884
      %999 = vmatprep.subr.mxu0 0.0
      %1000 = vmatpush1.msra.mxu0 %v885
      %1001 = vmatprep.subr.mxu0 0.0
      %1002 = vmatpush1.msra.mxu0 %v886
      %1003 = vmatprep.subr.mxu0 0.0
      %1004 = vmatpush1.msra.mxu0 %v887
      %1005 = vmatprep.subr.mxu0 0.0
      %1006 = vmatpush1.msra.mxu0 %v888
      %1007 = vmatprep.subr.mxu0 0.0
      %1008 = vmatpush1.msra.mxu0 %v889
      %1009 = vmatprep.subr.mxu0 0.0
      %1010 = vmatpush1.msra.mxu0 %v890
      %1011 = vmatprep.subr.mxu0 0.0
      %1012 = vmatpush1.msra.mxu0 0.0
      %1013 = vmatprep.subr.mxu0 0.0
      %1014 = vmatpush1.msra.mxu0 0.0
      %1015 = vmatprep.subr.mxu0 0.0
      %1016 = vmatpush1.msra.mxu0 0.0
      %1017 = vmatprep.subr.mxu0 0.0
      %1018 = vmatpush1.msra.mxu0 0.0
      %1019 = vmatprep.subr.mxu0 0.0
      %1020 = vmatpush1.msra.mxu0 0.0
      %1021 = vmatprep.subr.mxu0 0.0
      %1022 = vmatpush1.msra.mxu0 0.0
      %1023 = vmatprep.subr.mxu0 0.0
      %1024 = vmatpush1.msra.mxu0 0.0
      %1025 = vmatprep.subr.mxu0 0.0
      %1026 = vmatpush1.msra.mxu0 0.0
      %1027 = vmatprep.subr.mxu0 0.0
      %1028 = vmatpush1.msra.mxu0 0.0
      %1029 = vmatprep.subr.mxu0 0.0
      %1030 = vmatpush1.msra.mxu0 0.0
      %1031 = vmatprep.subr.mxu0 0.0
      %1032 = vmatpush1.msra.mxu0 0.0
      %1033 = vmatprep.subr.mxu0 0.0
      %1034 = vmatpush1.msra.mxu0 0.0
      %1035 = vmatprep.subr.mxu0 0.0
      %1036 = vmatpush1.msra.mxu0 0.0
      %1037 = vmatprep.subr.mxu0 0.0
      %1038 = vmatpush1.msra.mxu0 0.0
      %1039 = vmatprep.subr.mxu0 0.0
      %1040 = vmatpush1.msra.mxu0 0.0
      %1041 = vmatprep.subr.mxu0 0.0
      %1042 = vmatpush1.msra.mxu0 0.0
      %1043 = vmatprep.subr.mxu0 0.0
      %1044 = vmatpush1.msra.mxu0 0.0
      %1045 = vmatprep.subr.mxu0 0.0
      %1046 = vmatpush1.msra.mxu0 0.0
      %1047 = vmatprep.subr.mxu0 0.0
      %1048 = vmatpush1.msra.mxu0 0.0
      %1049 = vmatprep.subr.mxu0 0.0
      %1050 = vmatpush1.msra.mxu0 0.0
      %1051 = vmatprep.subr.mxu0 0.0
      %1052 = vmatpush1.msra.mxu0 0.0
      %1053 = vmatprep.subr.mxu0 0.0
      %1054 = vmatpush1.msra.mxu0 0.0
      %1055 = vmatprep.subr.mxu0 0.0
      %1056 = vmatpush1.msra.mxu0 0.0
      %1057 = vmatprep.subr.mxu0 0.0
      %1058 = vmatpush1.msra.mxu0 0.0
      %1059 = vmatprep.mubr.f32.mxu0 0.0
      %1060 = vmatmul.mubr.f32.gmra.mrb[0].mxu0 %v900
      %v1061 = vpop.f32.mrb[0].mxu0
      %v1062 = vadd.f32 %v896, %v1061
      %v1063 = vpop.f32.mrb[0].mxu0
      %1064 = vmatprep.mubr.f32.mxu0 0.0
      %1065 = vmatmul.mubr.f32.gmra.mrb[0].mxu0 %v903
      %v1066 = vpop.f32.mrb[0].mxu0
      %v1067 = vadd.f32 %v896, %v1066
      %v1068 = vpop.f32.mrb[0].mxu0
      %1069 = vmatprep.mubr.f32.mxu0 0.0
      %1070 = vmatmul.mubr.f32.gmra.mrb[0].mxu0 %v906
      %v1071 = vpop.f32.mrb[0].mxu0
      %v1072 = vadd.f32 %v896, %v1071
      %v1073 = vpop.f32.mrb[0].mxu0
      %1074 = vmatprep.mubr.f32.mxu0 0.0
      %1075 = vmatmul.mubr.f32.gmra.mrb[0].mxu0 %v909
      %v1076 = vpop.f32.mrb[0].mxu0
      %v1077 = vadd.f32 %v896, %v1076
      %v1078 = vpop.f32.mrb[0].mxu0
      %1079 = vmatprep.mubr.f32.mxu0 0.0
      %1080 = vmatmul.mubr.f32.gmra.mrb[0].mxu0 %v912
      %v1081 = vpop.f32.mrb[0].mxu0
      %v1082 = vadd.f32 %v896, %v1081
      %v1083 = vpop.f32.mrb[0].mxu0
      %1084 = vmatprep.mubr.f32.mxu0 0.0
      %1085 = vmatmul.mubr.f32.gmra.mrb[0].mxu0 %v915
      %v1086 = vpop.f32.mrb[0].mxu0
      %v1087 = vadd.f32 %v896, %v1086
      %v1088 = vpop.f32.mrb[0].mxu0
      %1089 = vmatprep.mubr.f32.mxu0 0.0
      %1090 = vmatmul.mubr.f32.gmra.mrb[0].mxu0 %v918
      %v1091 = vpop.f32.mrb[0].mxu0
      %v1092 = vadd.f32 %v896, %v1091
      %v1093 = vpop.f32.mrb[0].mxu0
      %1094 = vmatprep.mubr.f32.mxu0 0.0
      %1095 = vmatmul.mubr.f32.gmra.mrb[0].mxu0 %v921
      %v1096 = vpop.f32.mrb[0].mxu0
      %v1097 = vadd.f32 %v896, %v1096
      %v1098 = vpop.f32.mrb[0].mxu0
      %1099 = vmatprep.mubr.f32.mxu0 0.0
      %1100 = vmatmul.mubr.f32.gmra.mrb[0].mxu0 %v924
      %v1101 = vpop.f32.mrb[0].mxu0
      %v1102 = vadd.f32 %v896, %v1101
      %v1103 = vpop.f32.mrb[0].mxu0
      %1104 = vmatprep.mubr.f32.mxu0 0.0
      %1105 = vmatmul.mubr.f32.gmra.mrb[0].mxu0 %v927
      %v1106 = vpop.f32.mrb[0].mxu0
      %v1107 = vadd.f32 %v896, %v1106
      %v1108 = vpop.f32.mrb[0].mxu0
      %1109 = vmatprep.mubr.f32.mxu0 0.0
      %1110 = vmatmul.mubr.f32.gmra.mrb[0].mxu0 %v930
      %v1111 = vpop.f32.mrb[0].mxu0
      %v1112 = vadd.f32 %v896, %v1111
      %v1113 = vpop.f32.mrb[0].mxu0
      %1114 = vmatprep.mubr.f32.mxu0 0.0
      %1115 = vmatmul.mubr.f32.gmra.mrb[0].mxu0 %v933
      %v1116 = vpop.f32.mrb[0].mxu0
      %v1117 = vadd.f32 %v896, %v1116
      %v1118 = vpop.f32.mrb[0].mxu0
      %1119 = vmatprep.mubr.f32.mxu0 0.0
      %1120 = vmatmul.mubr.f32.gmra.mrb[0].mxu0 %v936
      %v1121 = vpop.f32.mrb[0].mxu0
      %v1122 = vadd.f32 %v896, %v1121
      %v1123 = vpop.f32.mrb[0].mxu0
      %1124 = vmatprep.mubr.f32.mxu0 0.0
      %1125 = vmatmul.mubr.f32.gmra.mrb[0].mxu0 %v939
      %v1126 = vpop.f32.mrb[0].mxu0
      %v1127 = vadd.f32 %v896, %v1126
      %v1128 = vpop.f32.mrb[0].mxu0
      %1129 = vmatprep.mubr.f32.mxu0 0.0
      %1130 = vmatmul.mubr.f32.gmra.mrb[0].mxu0 %v942
      %v1131 = vpop.f32.mrb[0].mxu0
      %v1132 = vadd.f32 %v896, %v1131
      %v1133 = vpop.f32.mrb[0].mxu0
      %1134 = vmatprep.mubr.f32.mxu0 0.0
      %1135 = vmatmul.mubr.f32.gmra.mrb[0].mxu0 %v945
      %v1136 = vpop.f32.mrb[0].mxu0
      %v1137 = vadd.f32 %v896, %v1136
      %v1138 = vpop.f32.mrb[0].mxu0
      %1139 = vmatprep.mubr.f32.mxu0 0.0
      %1140 = vmatmul.mubr.f32.gmra.mrb[0].mxu0 %v948
      %v1141 = vpop.f32.mrb[0].mxu0
      %v1142 = vadd.f32 %v896, %v1141
      %v1143 = vpop.f32.mrb[0].mxu0
      %1144 = vmatprep.mubr.f32.mxu0 0.0
      %1145 = vmatmul.mubr.f32.gmra.mrb[0].mxu0 %v951
      %v1146 = vpop.f32.mrb[0].mxu0
      %v1147 = vadd.f32 %v896, %v1146
      %v1148 = vpop.f32.mrb[0].mxu0
      %1149 = vmatprep.mubr.f32.mxu0 0.0
      %1150 = vmatmul.mubr.f32.gmra.mrb[0].mxu0 %v954
      %v1151 = vpop.f32.mrb[0].mxu0
      %v1152 = vadd.f32 %v896, %v1151
      %v1153 = vpop.f32.mrb[0].mxu0
      %1154 = vmatprep.mubr.f32.mxu0 0.0
      %1155 = vmatmul.mubr.f32.gmra.mrb[0].mxu0 %v957
      %v1156 = vpop.f32.mrb[0].mxu0
      %v1157 = vadd.f32 %v896, %v1156
      %v1158 = vpop.f32.mrb[0].mxu0
      %1159 = vmatprep.mubr.f32.mxu0 0.0
      %1160 = vmatmul.mubr.f32.gmra.mrb[0].mxu0 %v960
      %v1161 = vpop.f32.mrb[0].mxu0
      %v1162 = vadd.f32 %v896, %v1161
      %v1163 = vpop.f32.mrb[0].mxu0
      %1164 = vmatprep.mubr.f32.mxu0 0.0
      %1165 = vmatmul.mubr.f32.gmra.mrb[0].mxu0 %v963
      %v1166 = vpop.f32.mrb[0].mxu0
      %v1167 = vadd.f32 %v896, %v1166
      %v1168 = vpop.f32.mrb[0].mxu0
      %1169 = vmatprep.mubr.f32.mxu0 0.0
      %1170 = vmatmul.mubr.f32.gmra.mrb[0].mxu0 %v966
      %v1171 = vpop.f32.mrb[0].mxu0
      %v1172 = vadd.f32 %v896, %v1171
      %v1173 = vpop.f32.mrb[0].mxu0
      %1174 = vmatprep.mubr.f32.mxu0 0.0
      %1175 = vmatmul.mubr.f32.gmra.mrb[0].mxu0 %v969
      %v1176 = vpop.f32.mrb[0].mxu0
      %v1177 = vadd.f32 %v896, %v1176
      %v1178 = vpop.f32.mrb[0].mxu0
      %1179 = vmatprep.mubr.f32.mxu0 0.0
      %1180 = vmatmul.mubr.f32.gmra.mrb[0].mxu0 %v972
      %v1181 = vpop.f32.mrb[0].mxu0
      %v1182 = vadd.f32 %v896, %v1181
      %v1183 = vpop.f32.mrb[0].mxu0
      %1184 = vmatprep.mubr.f32.mxu0 0.0
      %1185 = vmatmul.mubr.f32.gmra.mrb[0].mxu0 %v975
      %v1186 = vpop.f32.mrb[0].mxu0
      %v1187 = vadd.f32 %v896, %v1186
      %v1188 = vpop.f32.mrb[0].mxu0
      %1189 = vmatprep.mubr.f32.mxu0 0.0
      %1190 = vmatmul.mubr.f32.gmra.mrb[0].mxu0 %v978
      %v1191 = vpop.f32.mrb[0].mxu0
      %v1192 = vadd.f32 %v896, %v1191
      %v1193 = vpop.f32.mrb[0].mxu0
      %1194 = vmatprep.mubr.f32.mxu0 0.0
      %1195 = vmatmul.mubr.f32.gmra.mrb[0].mxu0 %v981
      %v1196 = vpop.f32.mrb[0].mxu0
      %v1197 = vadd.f32 %v896, %v1196
      %v1198 = vpop.f32.mrb[0].mxu0
      %1199 = vmatprep.mubr.f32.mxu0 0.0
      %1200 = vmatmul.mubr.f32.gmra.mrb[0].mxu0 %v984
      %v1201 = vpop.f32.mrb[0].mxu0
      %v1202 = vadd.f32 %v896, %v1201
      %v1203 = vpop.f32.mrb[0].mxu0
      %1204 = vmatprep.mubr.f32.mxu0 0.0
      %1205 = vmatmul.mubr.f32.gmra.mrb[0].mxu0 %v987
      %v1206 = vpop.f32.mrb[0].mxu0
      %v1207 = vadd.f32 %v896, %v1206
      %v1208 = vpop.f32.mrb[0].mxu0
      %1209 = vmatprep.mubr.f32.mxu0 0.0
      %1210 = vmatmul.mubr.f32.gmra.mrb[0].mxu0 %v990
      %v1211 = vpop.f32.mrb[0].mxu0
      %v1212 = vadd.f32 %v896, %v1211
      %v1213 = vpop.f32.mrb[0].mxu0
      %1214 = vmatprep.mubr.f32.mxu0 0.0
      %1215 = vmatmul.mubr.f32.gmra.mrb[0].mxu0 %v993
      %v1216 = vpop.f32.mrb[0].mxu0
      %v1217 = vadd.f32 %v896, %v1216
      %v1218 = vpop.f32.mrb[0].mxu0
      %1219 = vdwg.mxu0
      %v1220 = vmax.f32 %v1062, 0.0
      %v1221 = vmax.f32 %v1067, 0.0
      %v1222 = vmax.f32 %v1072, 0.0
      %v1223 = vmax.f32 %v1077, 0.0
      %v1224 = vmax.f32 %v1082, 0.0
      %v1225 = vmax.f32 %v1087, 0.0
      %v1226 = vmax.f32 %v1092, 0.0
      %v1227 = vmax.f32 %v1097, 0.0
      %v1228 = vmax.f32 %v1102, 0.0
      %v1229 = vmax.f32 %v1107, 0.0
      %v1230 = vmax.f32 %v1112, 0.0
      %v1231 = vmax.f32 %v1117, 0.0
      %v1232 = vmax.f32 %v1122, 0.0
      %v1233 = vmax.f32 %v1127, 0.0
      %v1234 = vmax.f32 %v1132, 0.0
      %v1235 = vmax.f32 %v1137, 0.0
      %v1236 = vmax.f32 %v1142, 0.0
      %v1237 = vmax.f32 %v1147, 0.0
      %v1238 = vmax.f32 %v1152, 0.0
      %v1239 = vmax.f32 %v1157, 0.0
      %v1240 = vmax.f32 %v1162, 0.0
      %v1241 = vmax.f32 %v1167, 0.0
      %v1242 = vmax.f32 %v1172, 0.0
      %v1243 = vmax.f32 %v1177, 0.0
      %v1244 = vmax.f32 %v1182, 0.0
      %v1245 = vmax.f32 %v1187, 0.0
      %v1246 = vmax.f32 %v1192, 0.0
      %v1247 = vmax.f32 %v1197, 0.0
      %v1248 = vmax.f32 %v1202, 0.0
      %v1249 = vmax.f32 %v1207, 0.0
      %v1250 = vmax.f32 %v1212, 0.0
      %v1251 = vmax.f32 %v1217, 0.0
      %v1252 = vld [vmem:[%s5] sm:$0xff]
      %v1253 = vld [vmem:[%s5 + $0x8] sm:$0xff]
      %v1254 = vld [vmem:[%s5 + $0x10] sm:$0xff]
      %v1255 = vld [vmem:[%s5 + $0x18] sm:$0xff]
      %v1256 = vld [vmem:[%s6] sm:$0x1]
      %v1258 = vlaneseq
      %v1259 = vshrl.u32 %v1258, 7
      %v1260 = vsub.s32 0, %v1259
      %v1261 = vrot.slane %v1256, %v1260
      %vm1263 = vcmask 261120
      %v1265 = vsel %vm1263, %v1220, 0
      %v1268 = vsel %vm1263, %v1221, 0
      %v1271 = vsel %vm1263, %v1222, 0
      %v1274 = vsel %vm1263, %v1223, 0
      %v1277 = vsel %vm1263, %v1224, 0
      %v1280 = vsel %vm1263, %v1225, 0
      %v1283 = vsel %vm1263, %v1226, 0
      %v1286 = vsel %vm1263, %v1227, 0
      %v1289 = vsel %vm1263, %v1228, 0
      %v1292 = vsel %vm1263, %v1229, 0
      %v1295 = vsel %vm1263, %v1230, 0
      %v1298 = vsel %vm1263, %v1231, 0
      %v1301 = vsel %vm1263, %v1232, 0
      %v1304 = vsel %vm1263, %v1233, 0
      %v1307 = vsel %vm1263, %v1234, 0
      %v1310 = vsel %vm1263, %v1235, 0
      %v1313 = vsel %vm1263, %v1236, 0
      %v1316 = vsel %vm1263, %v1237, 0
      %v1319 = vsel %vm1263, %v1238, 0
      %v1322 = vsel %vm1263, %v1239, 0
      %v1325 = vsel %vm1263, %v1240, 0
      %v1328 = vsel %vm1263, %v1241, 0
      %v1331 = vsel %vm1263, %v1242, 0
      %v1334 = vsel %vm1263, %v1243, 0
      %v1337 = vsel %vm1263, %v1244, 0
      %v1340 = vsel %vm1263, %v1245, 0
      %v1343 = vsel %vm1263, %v1246, 0
      %v1346 = vsel %vm1263, %v1247, 0
      %v1349 = vsel %vm1263, %v1248, 0
      %v1352 = vsel %vm1263, %v1249, 0
      %v1355 = vsel %vm1263, %v1250, 0
      %v1358 = vsel %vm1263, %v1251, 0
      %1360 = vmatprep.subr.mxu0 0.0
      %1361 = vmatpush1.msra.mxu0 %v1252
      %1362 = vmatprep.subr.mxu0 0.0
      %1363 = vmatpush1.msra.mxu0 %v1253
      %1364 = vmatprep.subr.mxu0 0.0
      %1365 = vmatpush1.msra.mxu0 %v1254
      %1366 = vmatprep.subr.mxu0 0.0
      %1367 = vmatpush1.msra.mxu0 %v1255
      %1368 = vmatprep.subr.mxu0 0.0
      %1369 = vmatpush1.msra.mxu0 0.0
      %1370 = vmatprep.subr.mxu0 0.0
      %1371 = vmatpush1.msra.mxu0 0.0
      %1372 = vmatprep.subr.mxu0 0.0
      %1373 = vmatpush1.msra.mxu0 0.0
      %1374 = vmatprep.subr.mxu0 0.0
      %1375 = vmatpush1.msra.mxu0 0.0
      %1376 = vmatprep.subr.mxu0 0.0
      %1377 = vmatpush1.msra.mxu0 0.0
      %1378 = vmatprep.subr.mxu0 0.0
      %1379 = vmatpush1.msra.mxu0 0.0
      %1380 = vmatprep.subr.mxu0 0.0
      %1381 = vmatpush1.msra.mxu0 0.0
      %1382 = vmatprep.subr.mxu0 0.0
      %1383 = vmatpush1.msra.mxu0 0.0
      %1384 = vmatprep.subr.mxu0 0.0
      %1385 = vmatpush1.msra.mxu0 0.0
      %1386 = vmatprep.subr.mxu0 0.0
      %1387 = vmatpush1.msra.mxu0 0.0
      %1388 = vmatprep.subr.mxu0 0.0
      %1389 = vmatpush1.msra.mxu0 0.0
      %1390 = vmatprep.subr.mxu0 0.0
      %1391 = vmatpush1.msra.mxu0 0.0
      %1392 = vmatprep.subr.mxu0 0.0
      %1393 = vmatpush1.msra.mxu0 0.0
      %1394 = vmatprep.subr.mxu0 0.0
      %1395 = vmatpush1.msra.mxu0 0.0
      %1396 = vmatprep.subr.mxu0 0.0
      %1397 = vmatpush1.msra.mxu0 0.0
      %1398 = vmatprep.subr.mxu0 0.0
      %1399 = vmatpush1.msra.mxu0 0.0
      %1400 = vmatprep.subr.mxu0 0.0
      %1401 = vmatpush1.msra.mxu0 0.0
      %1402 = vmatprep.subr.mxu0 0.0
      %1403 = vmatpush1.msra.mxu0 0.0
      %1404 = vmatprep.subr.mxu0 0.0
      %1405 = vmatpush1.msra.mxu0 0.0
      %1406 = vmatprep.subr.mxu0 0.0
      %1407 = vmatpush1.msra.mxu0 0.0
      %1408 = vmatprep.subr.mxu0 0.0
      %1409 = vmatpush1.msra.mxu0 0.0
      %1410 = vmatprep.subr.mxu0 0.0
      %1411 = vmatpush1.msra.mxu0 0.0
      %1412 = vmatprep.subr.mxu0 0.0
      %1413 = vmatpush1.msra.mxu0 0.0
      %1414 = vmatprep.subr.mxu0 0.0
      %1415 = vmatpush1.msra.mxu0 0.0
      %1416 = vmatprep.subr.mxu0 0.0
      %1417 = vmatpush1.msra.mxu0 0.0
      %1418 = vmatprep.subr.mxu0 0.0
      %1419 = vmatpush1.msra.mxu0 0.0
      %1420 = vmatprep.subr.mxu0 0.0
      %1421 = vmatpush1.msra.mxu0 0.0
      %1422 = vmatprep.subr.mxu0 0.0
      %1423 = vmatpush1.msra.mxu0 0.0
      %1424 = vmatprep.mubr.f32.mxu0 0.0
      %1425 = vmatmul.mubr.f32.gmra.mrb[0].mxu0 %v1265
      %v1426 = vpop.f32.mrb[0].mxu0
      %v1427 = vadd.f32 %v1261, %v1426
      %v1428 = vpop.f32.mrb[0].mxu0
      %1429 = vmatprep.mubr.f32.mxu0 0.0
      %1430 = vmatmul.mubr.f32.gmra.mrb[0].mxu0 %v1268
      %v1431 = vpop.f32.mrb[0].mxu0
      %v1432 = vadd.f32 %v1261, %v1431
      %v1433 = vpop.f32.mrb[0].mxu0
      %1434 = vmatprep.mubr.f32.mxu0 0.0
      %1435 = vmatmul.mubr.f32.gmra.mrb[0].mxu0 %v1271
      %v1436 = vpop.f32.mrb[0].mxu0
      %v1437 = vadd.f32 %v1261, %v1436
      %v1438 = vpop.f32.mrb[0].mxu0
      %1439 = vmatprep.mubr.f32.mxu0 0.0
      %1440 = vmatmul.mubr.f32.gmra.mrb[0].mxu0 %v1274
      %v1441 = vpop.f32.mrb[0].mxu0
      %v1442 = vadd.f32 %v1261, %v1441
      %v1443 = vpop.f32.mrb[0].mxu0
      %1444 = vmatprep.mubr.f32.mxu0 0.0
      %1445 = vmatmul.mubr.f32.gmra.mrb[0].mxu0 %v1277
      %v1446 = vpop.f32.mrb[0].mxu0
      %v1447 = vadd.f32 %v1261, %v1446
      %v1448 = vpop.f32.mrb[0].mxu0
      %1449 = vmatprep.mubr.f32.mxu0 0.0
      %1450 = vmatmul.mubr.f32.gmra.mrb[0].mxu0 %v1280
      %v1451 = vpop.f32.mrb[0].mxu0
      %v1452 = vadd.f32 %v1261, %v1451
      %v1453 = vpop.f32.mrb[0].mxu0
      %1454 = vmatprep.mubr.f32.mxu0 0.0
      %1455 = vmatmul.mubr.f32.gmra.mrb[0].mxu0 %v1283
      %v1456 = vpop.f32.mrb[0].mxu0
      %v1457 = vadd.f32 %v1261, %v1456
      %v1458 = vpop.f32.mrb[0].mxu0
      %1459 = vmatprep.mubr.f32.mxu0 0.0
      %1460 = vmatmul.mubr.f32.gmra.mrb[0].mxu0 %v1286
      %v1461 = vpop.f32.mrb[0].mxu0
      %v1462 = vadd.f32 %v1261, %v1461
      %v1463 = vpop.f32.mrb[0].mxu0
      %1464 = vmatprep.mubr.f32.mxu0 0.0
      %1465 = vmatmul.mubr.f32.gmra.mrb[0].mxu0 %v1289
      %v1466 = vpop.f32.mrb[0].mxu0
      %v1467 = vadd.f32 %v1261, %v1466
      %v1468 = vpop.f32.mrb[0].mxu0
      %1469 = vmatprep.mubr.f32.mxu0 0.0
      %1470 = vmatmul.mubr.f32.gmra.mrb[0].mxu0 %v1292
      %v1471 = vpop.f32.mrb[0].mxu0
      %v1472 = vadd.f32 %v1261, %v1471
      %v1473 = vpop.f32.mrb[0].mxu0
      %1474 = vmatprep.mubr.f32.mxu0 0.0
      %1475 = vmatmul.mubr.f32.gmra.mrb[0].mxu0 %v1295
      %v1476 = vpop.f32.mrb[0].mxu0
      %v1477 = vadd.f32 %v1261, %v1476
      %v1478 = vpop.f32.mrb[0].mxu0
      %1479 = vmatprep.mubr.f32.mxu0 0.0
      %1480 = vmatmul.mubr.f32.gmra.mrb[0].mxu0 %v1298
      %v1481 = vpop.f32.mrb[0].mxu0
      %v1482 = vadd.f32 %v1261, %v1481
      %v1483 = vpop.f32.mrb[0].mxu0
      %1484 = vmatprep.mubr.f32.mxu0 0.0
      %1485 = vmatmul.mubr.f32.gmra.mrb[0].mxu0 %v1301
      %v1486 = vpop.f32.mrb[0].mxu0
      %v1487 = vadd.f32 %v1261, %v1486
      %v1488 = vpop.f32.mrb[0].mxu0
      %1489 = vmatprep.mubr.f32.mxu0 0.0
      %1490 = vmatmul.mubr.f32.gmra.mrb[0].mxu0 %v1304
      %v1491 = vpop.f32.mrb[0].mxu0
      %v1492 = vadd.f32 %v1261, %v1491
      %v1493 = vpop.f32.mrb[0].mxu0
      %1494 = vmatprep.mubr.f32.mxu0 0.0
      %1495 = vmatmul.mubr.f32.gmra.mrb[0].mxu0 %v1307
      %v1496 = vpop.f32.mrb[0].mxu0
      %v1497 = vadd.f32 %v1261, %v1496
      %v1498 = vpop.f32.mrb[0].mxu0
      %1499 = vmatprep.mubr.f32.mxu0 0.0
      %1500 = vmatmul.mubr.f32.gmra.mrb[0].mxu0 %v1310
      %v1501 = vpop.f32.mrb[0].mxu0
      %v1502 = vadd.f32 %v1261, %v1501
      %v1503 = vpop.f32.mrb[0].mxu0
      %1504 = vmatprep.mubr.f32.mxu0 0.0
      %1505 = vmatmul.mubr.f32.gmra.mrb[0].mxu0 %v1313
      %v1506 = vpop.f32.mrb[0].mxu0
      %v1507 = vadd.f32 %v1261, %v1506
      %v1508 = vpop.f32.mrb[0].mxu0
      %1509 = vmatprep.mubr.f32.mxu0 0.0
      %1510 = vmatmul.mubr.f32.gmra.mrb[0].mxu0 %v1316
      %v1511 = vpop.f32.mrb[0].mxu0
      %v1512 = vadd.f32 %v1261, %v1511
      %v1513 = vpop.f32.mrb[0].mxu0
      %1514 = vmatprep.mubr.f32.mxu0 0.0
      %1515 = vmatmul.mubr.f32.gmra.mrb[0].mxu0 %v1319
      %v1516 = vpop.f32.mrb[0].mxu0
      %v1517 = vadd.f32 %v1261, %v1516
      %v1518 = vpop.f32.mrb[0].mxu0
      %1519 = vmatprep.mubr.f32.mxu0 0.0
      %1520 = vmatmul.mubr.f32.gmra.mrb[0].mxu0 %v1322
      %v1521 = vpop.f32.mrb[0].mxu0
      %v1522 = vadd.f32 %v1261, %v1521
      %v1523 = vpop.f32.mrb[0].mxu0
      %1524 = vmatprep.mubr.f32.mxu0 0.0
      %1525 = vmatmul.mubr.f32.gmra.mrb[0].mxu0 %v1325
      %v1526 = vpop.f32.mrb[0].mxu0
      %v1527 = vadd.f32 %v1261, %v1526
      %v1528 = vpop.f32.mrb[0].mxu0
      %1529 = vmatprep.mubr.f32.mxu0 0.0
      %1530 = vmatmul.mubr.f32.gmra.mrb[0].mxu0 %v1328
      %v1531 = vpop.f32.mrb[0].mxu0
      %v1532 = vadd.f32 %v1261, %v1531
      %v1533 = vpop.f32.mrb[0].mxu0
      %1534 = vmatprep.mubr.f32.mxu0 0.0
      %1535 = vmatmul.mubr.f32.gmra.mrb[0].mxu0 %v1331
      %v1536 = vpop.f32.mrb[0].mxu0
      %v1537 = vadd.f32 %v1261, %v1536
      %v1538 = vpop.f32.mrb[0].mxu0
      %1539 = vmatprep.mubr.f32.mxu0 0.0
      %1540 = vmatmul.mubr.f32.gmra.mrb[0].mxu0 %v1334
      %v1541 = vpop.f32.mrb[0].mxu0
      %v1542 = vadd.f32 %v1261, %v1541
      %v1543 = vpop.f32.mrb[0].mxu0
      %1544 = vmatprep.mubr.f32.mxu0 0.0
      %1545 = vmatmul.mubr.f32.gmra.mrb[0].mxu0 %v1337
      %v1546 = vpop.f32.mrb[0].mxu0
      %v1547 = vadd.f32 %v1261, %v1546
      %v1548 = vpop.f32.mrb[0].mxu0
      %1549 = vmatprep.mubr.f32.mxu0 0.0
      %1550 = vmatmul.mubr.f32.gmra.mrb[0].mxu0 %v1340
      %v1551 = vpop.f32.mrb[0].mxu0
      %v1552 = vadd.f32 %v1261, %v1551
      %v1553 = vpop.f32.mrb[0].mxu0
      %1554 = vmatprep.mubr.f32.mxu0 0.0
      %1555 = vmatmul.mubr.f32.gmra.mrb[0].mxu0 %v1343
      %v1556 = vpop.f32.mrb[0].mxu0
      %v1557 = vadd.f32 %v1261, %v1556
      %v1558 = vpop.f32.mrb[0].mxu0
      %1559 = vmatprep.mubr.f32.mxu0 0.0
      %1560 = vmatmul.mubr.f32.gmra.mrb[0].mxu0 %v1346
      %v1561 = vpop.f32.mrb[0].mxu0
      %v1562 = vadd.f32 %v1261, %v1561
      %v1563 = vpop.f32.mrb[0].mxu0
      %1564 = vmatprep.mubr.f32.mxu0 0.0
      %1565 = vmatmul.mubr.f32.gmra.mrb[0].mxu0 %v1349
      %v1566 = vpop.f32.mrb[0].mxu0
      %v1567 = vadd.f32 %v1261, %v1566
      %v1568 = vpop.f32.mrb[0].mxu0
      %1569 = vmatprep.mubr.f32.mxu0 0.0
      %1570 = vmatmul.mubr.f32.gmra.mrb[0].mxu0 %v1352
      %v1571 = vpop.f32.mrb[0].mxu0
      %v1572 = vadd.f32 %v1261, %v1571
      %v1573 = vpop.f32.mrb[0].mxu0
      %1574 = vmatprep.mubr.f32.mxu0 0.0
      %1575 = vmatmul.mubr.f32.gmra.mrb[0].mxu0 %v1355
      %v1576 = vpop.f32.mrb[0].mxu0
      %v1577 = vadd.f32 %v1261, %v1576
      %v1578 = vpop.f32.mrb[0].mxu0
      %1579 = vmatprep.mubr.f32.mxu0 0.0
      %1580 = vmatmul.mubr.f32.gmra.mrb[0].mxu0 %v1358
      %v1581 = vpop.f32.mrb[0].mxu0
      %v1582 = vadd.f32 %v1261, %v1581
      %v1583 = vpop.f32.mrb[0].mxu0
      %1584 = vdwg.mxu0
      %vm1585 = vcmask 130048
      %1586 = vst.msk [vmem:[%s477] sm:$0xff] %vm1585, %v1427
      %1587 = vst.msk [vmem:[%s477 + $0x8] sm:$0xff] %vm1585, %v1432
      %1588 = vst.msk [vmem:[%s477 + $0x10] sm:$0xff] %vm1585, %v1437
      %1589 = vst.msk [vmem:[%s477 + $0x18] sm:$0xff] %vm1585, %v1442
      %1590 = vst.msk [vmem:[%s477 + $0x20] sm:$0xff] %vm1585, %v1447
      %1591 = vst.msk [vmem:[%s477 + $0x28] sm:$0xff] %vm1585, %v1452
      %1592 = vst.msk [vmem:[%s477 + $0x30] sm:$0xff] %vm1585, %v1457
      %1593 = vst.msk [vmem:[%s477 + $0x38] sm:$0xff] %vm1585, %v1462
      %1594 = vst.msk [vmem:[%s477 + $0x40] sm:$0xff] %vm1585, %v1467
      %1595 = vst.msk [vmem:[%s477 + $0x48] sm:$0xff] %vm1585, %v1472
      %1596 = vst.msk [vmem:[%s477 + $0x50] sm:$0xff] %vm1585, %v1477
      %1597 = vst.msk [vmem:[%s477 + $0x58] sm:$0xff] %vm1585, %v1482
      %1598 = vst.msk [vmem:[%s477 + $0x60] sm:$0xff] %vm1585, %v1487
      %1599 = vst.msk [vmem:[%s477 + $0x68] sm:$0xff] %vm1585, %v1492
      %1600 = vst.msk [vmem:[%s477 + $0x70] sm:$0xff] %vm1585, %v1497
      %1601 = vst.msk [vmem:[%s477 + $0x78] sm:$0xff] %vm1585, %v1502
      %1602 = vst.msk [vmem:[%s477 + $0x80] sm:$0xff] %vm1585, %v1507
      %1603 = vst.msk [vmem:[%s477 + $0x88] sm:$0xff] %vm1585, %v1512
      %1604 = vst.msk [vmem:[%s477 + $0x90] sm:$0xff] %vm1585, %v1517
      %1605 = vst.msk [vmem:[%s477 + $0x98] sm:$0xff] %vm1585, %v1522
      %1606 = vst.msk [vmem:[%s477 + $0xa0] sm:$0xff] %vm1585, %v1527
      %1607 = vst.msk [vmem:[%s477 + $0xa8] sm:$0xff] %vm1585, %v1532
      %1608 = vst.msk [vmem:[%s477 + $0xb0] sm:$0xff] %vm1585, %v1537
      %1609 = vst.msk [vmem:[%s477 + $0xb8] sm:$0xff] %vm1585, %v1542
      %1610 = vst.msk [vmem:[%s477 + $0xc0] sm:$0xff] %vm1585, %v1547
      %1611 = vst.msk [vmem:[%s477 + $0xc8] sm:$0xff] %vm1585, %v1552
      %1612 = vst.msk [vmem:[%s477 + $0xd0] sm:$0xff] %vm1585, %v1557
      %1613 = vst.msk [vmem:[%s477 + $0xd8] sm:$0xff] %vm1585, %v1562
      %1614 = vst.msk [vmem:[%s477 + $0xe0] sm:$0xff] %vm1585, %v1567
      %1615 = vst.msk [vmem:[%s477 + $0xe8] sm:$0xff] %vm1585, %v1572
      %1616 = vst.msk [vmem:[%s477 + $0xf0] sm:$0xff] %vm1585, %v1577
      %1617 = vst.msk [vmem:[%s477 + $0xf8] sm:$0xff] %vm1585, %v1582
      %v1618 = vld [vmem:[%s7] sm:$0xff]
      %v1619 = vld [vmem:[%s7 + $0x8] sm:$0xff]
      %v1620 = vld [vmem:[%s8] sm:$0x1]
      %v1622 = vlaneseq
      %v1623 = vshrl.u32 %v1622, 7
      %v1624 = vsub.s32 0, %v1623
      %v1625 = vrot.slane %v1620, %v1624
      %v1628 = vsel %vm1585, %v1427, 0
      %v1631 = vsel %vm1585, %v1432, 0
      %v1634 = vsel %vm1585, %v1437, 0
      %v1637 = vsel %vm1585, %v1442, 0
      %v1640 = vsel %vm1585, %v1447, 0
      %v1643 = vsel %vm1585, %v1452, 0
      %v1646 = vsel %vm1585, %v1457, 0
      %v1649 = vsel %vm1585, %v1462, 0
      %v1652 = vsel %vm1585, %v1467, 0
      %v1655 = vsel %vm1585, %v1472, 0
      %v1658 = vsel %vm1585, %v1477, 0
      %v1661 = vsel %vm1585, %v1482, 0
      %v1664 = vsel %vm1585, %v1487, 0
      %v1667 = vsel %vm1585, %v1492, 0
      %v1670 = vsel %vm1585, %v1497, 0
      %v1673 = vsel %vm1585, %v1502, 0
      %v1676 = vsel %vm1585, %v1507, 0
      %v1679 = vsel %vm1585, %v1512, 0
      %v1682 = vsel %vm1585, %v1517, 0
      %v1685 = vsel %vm1585, %v1522, 0
      %v1688 = vsel %vm1585, %v1527, 0
      %v1691 = vsel %vm1585, %v1532, 0
      %v1694 = vsel %vm1585, %v1537, 0
      %v1697 = vsel %vm1585, %v1542, 0
      %v1700 = vsel %vm1585, %v1547, 0
      %v1703 = vsel %vm1585, %v1552, 0
      %v1706 = vsel %vm1585, %v1557, 0
      %v1709 = vsel %vm1585, %v1562, 0
      %v1712 = vsel %vm1585, %v1567, 0
      %v1715 = vsel %vm1585, %v1572, 0
      %v1718 = vsel %vm1585, %v1577, 0
      %v1721 = vsel %vm1585, %v1582, 0
      %1723 = vmatprep.subr.mxu0 0.0
      %1724 = vmatpush1.msra.mxu0 %v1618
      %1725 = vmatprep.subr.mxu0 0.0
      %1726 = vmatpush1.msra.mxu0 %v1619
      %1727 = vmatprep.subr.mxu0 0.0
      %1728 = vmatpush1.msra.mxu0 0.0
      %1729 = vmatprep.subr.mxu0 0.0
      %1730 = vmatpush1.msra.mxu0 0.0
      %1731 = vmatprep.subr.mxu0 0.0
      %1732 = vmatpush1.msra.mxu0 0.0
      %1733 = vmatprep.subr.mxu0 0.0
      %1734 = vmatpush1.msra.mxu0 0.0
      %1735 = vmatprep.subr.mxu0 0.0
      %1736 = vmatpush1.msra.mxu0 0.0
      %1737 = vmatprep.subr.mxu0 0.0
      %1738 = vmatpush1.msra.mxu0 0.0
      %1739 = vmatprep.subr.mxu0 0.0
      %1740 = vmatpush1.msra.mxu0 0.0
      %1741 = vmatprep.subr.mxu0 0.0
      %1742 = vmatpush1.msra.mxu0 0.0
      %1743 = vmatprep.subr.mxu0 0.0
      %1744 = vmatpush1.msra.mxu0 0.0
      %1745 = vmatprep.subr.mxu0 0.0
      %1746 = vmatpush1.msra.mxu0 0.0
      %1747 = vmatprep.subr.mxu0 0.0
      %1748 = vmatpush1.msra.mxu0 0.0
      %1749 = vmatprep.subr.mxu0 0.0
      %1750 = vmatpush1.msra.mxu0 0.0
      %1751 = vmatprep.subr.mxu0 0.0
      %1752 = vmatpush1.msra.mxu0 0.0
      %1753 = vmatprep.subr.mxu0 0.0
      %1754 = vmatpush1.msra.mxu0 0.0
      %1755 = vmatprep.subr.mxu0 0.0
      %1756 = vmatpush1.msra.mxu0 0.0
      %1757 = vmatprep.subr.mxu0 0.0
      %1758 = vmatpush1.msra.mxu0 0.0
      %1759 = vmatprep.subr.mxu0 0.0
      %1760 = vmatpush1.msra.mxu0 0.0
      %1761 = vmatprep.subr.mxu0 0.0
      %1762 = vmatpush1.msra.mxu0 0.0
      %1763 = vmatprep.subr.mxu0 0.0
      %1764 = vmatpush1.msra.mxu0 0.0
      %1765 = vmatprep.subr.mxu0 0.0
      %1766 = vmatpush1.msra.mxu0 0.0
      %1767 = vmatprep.subr.mxu0 0.0
      %1768 = vmatpush1.msra.mxu0 0.0
      %1769 = vmatprep.subr.mxu0 0.0
      %1770 = vmatpush1.msra.mxu0 0.0
      %1771 = vmatprep.subr.mxu0 0.0
      %1772 = vmatpush1.msra.mxu0 0.0
      %1773 = vmatprep.subr.mxu0 0.0
      %1774 = vmatpush1.msra.mxu0 0.0
      %1775 = vmatprep.subr.mxu0 0.0
      %1776 = vmatpush1.msra.mxu0 0.0
      %1777 = vmatprep.subr.mxu0 0.0
      %1778 = vmatpush1.msra.mxu0 0.0
      %1779 = vmatprep.subr.mxu0 0.0
      %1780 = vmatpush1.msra.mxu0 0.0
      %1781 = vmatprep.subr.mxu0 0.0
      %1782 = vmatpush1.msra.mxu0 0.0
      %1783 = vmatprep.subr.mxu0 0.0
      %1784 = vmatpush1.msra.mxu0 0.0
      %1785 = vmatprep.subr.mxu0 0.0
      %1786 = vmatpush1.msra.mxu0 0.0
      %1787 = vmatprep.mubr.f32.mxu0 0.0
      %1788 = vmatmul.mubr.f32.gmra.mrb[0].mxu0 %v1628
      %v1789 = vpop.f32.mrb[0].mxu0
      %v1790 = vadd.f32 %v1625, %v1789
      %v1791 = vpop.f32.mrb[0].mxu0
      %1792 = vmatprep.mubr.f32.mxu0 0.0
      %1793 = vmatmul.mubr.f32.gmra.mrb[0].mxu0 %v1631
      %v1794 = vpop.f32.mrb[0].mxu0
      %v1795 = vadd.f32 %v1625, %v1794
      %v1796 = vpop.f32.mrb[0].mxu0
      %1797 = vmatprep.mubr.f32.mxu0 0.0
      %1798 = vmatmul.mubr.f32.gmra.mrb[0].mxu0 %v1634
      %v1799 = vpop.f32.mrb[0].mxu0
      %v1800 = vadd.f32 %v1625, %v1799
      %v1801 = vpop.f32.mrb[0].mxu0
      %1802 = vmatprep.mubr.f32.mxu0 0.0
      %1803 = vmatmul.mubr.f32.gmra.mrb[0].mxu0 %v1637
      %v1804 = vpop.f32.mrb[0].mxu0
      %v1805 = vadd.f32 %v1625, %v1804
      %v1806 = vpop.f32.mrb[0].mxu0
      %1807 = vmatprep.mubr.f32.mxu0 0.0
      %1808 = vmatmul.mubr.f32.gmra.mrb[0].mxu0 %v1640
      %v1809 = vpop.f32.mrb[0].mxu0
      %v1810 = vadd.f32 %v1625, %v1809
      %v1811 = vpop.f32.mrb[0].mxu0
      %1812 = vmatprep.mubr.f32.mxu0 0.0
      %1813 = vmatmul.mubr.f32.gmra.mrb[0].mxu0 %v1643
      %v1814 = vpop.f32.mrb[0].mxu0
      %v1815 = vadd.f32 %v1625, %v1814
      %v1816 = vpop.f32.mrb[0].mxu0
      %1817 = vmatprep.mubr.f32.mxu0 0.0
      %1818 = vmatmul.mubr.f32.gmra.mrb[0].mxu0 %v1646
      %v1819 = vpop.f32.mrb[0].mxu0
      %v1820 = vadd.f32 %v1625, %v1819
      %v1821 = vpop.f32.mrb[0].mxu0
      %1822 = vmatprep.mubr.f32.mxu0 0.0
      %1823 = vmatmul.mubr.f32.gmra.mrb[0].mxu0 %v1649
      %v1824 = vpop.f32.mrb[0].mxu0
      %v1825 = vadd.f32 %v1625, %v1824
      %v1826 = vpop.f32.mrb[0].mxu0
      %1827 = vmatprep.mubr.f32.mxu0 0.0
      %1828 = vmatmul.mubr.f32.gmra.mrb[0].mxu0 %v1652
      %v1829 = vpop.f32.mrb[0].mxu0
      %v1830 = vadd.f32 %v1625, %v1829
      %v1831 = vpop.f32.mrb[0].mxu0
      %1832 = vmatprep.mubr.f32.mxu0 0.0
      %1833 = vmatmul.mubr.f32.gmra.mrb[0].mxu0 %v1655
      %v1834 = vpop.f32.mrb[0].mxu0
      %v1835 = vadd.f32 %v1625, %v1834
      %v1836 = vpop.f32.mrb[0].mxu0
      %1837 = vmatprep.mubr.f32.mxu0 0.0
      %1838 = vmatmul.mubr.f32.gmra.mrb[0].mxu0 %v1658
      %v1839 = vpop.f32.mrb[0].mxu0
      %v1840 = vadd.f32 %v1625, %v1839
      %v1841 = vpop.f32.mrb[0].mxu0
      %1842 = vmatprep.mubr.f32.mxu0 0.0
      %1843 = vmatmul.mubr.f32.gmra.mrb[0].mxu0 %v1661
      %v1844 = vpop.f32.mrb[0].mxu0
      %v1845 = vadd.f32 %v1625, %v1844
      %v1846 = vpop.f32.mrb[0].mxu0
      %1847 = vmatprep.mubr.f32.mxu0 0.0
      %1848 = vmatmul.mubr.f32.gmra.mrb[0].mxu0 %v1664
      %v1849 = vpop.f32.mrb[0].mxu0
      %v1850 = vadd.f32 %v1625, %v1849
      %v1851 = vpop.f32.mrb[0].mxu0
      %1852 = vmatprep.mubr.f32.mxu0 0.0
      %1853 = vmatmul.mubr.f32.gmra.mrb[0].mxu0 %v1667
      %v1854 = vpop.f32.mrb[0].mxu0
      %v1855 = vadd.f32 %v1625, %v1854
      %v1856 = vpop.f32.mrb[0].mxu0
      %1857 = vmatprep.mubr.f32.mxu0 0.0
      %1858 = vmatmul.mubr.f32.gmra.mrb[0].mxu0 %v1670
      %v1859 = vpop.f32.mrb[0].mxu0
      %v1860 = vadd.f32 %v1625, %v1859
      %v1861 = vpop.f32.mrb[0].mxu0
      %1862 = vmatprep.mubr.f32.mxu0 0.0
      %1863 = vmatmul.mubr.f32.gmra.mrb[0].mxu0 %v1673
      %v1864 = vpop.f32.mrb[0].mxu0
      %v1865 = vadd.f32 %v1625, %v1864
      %v1866 = vpop.f32.mrb[0].mxu0
      %1867 = vmatprep.mubr.f32.mxu0 0.0
      %1868 = vmatmul.mubr.f32.gmra.mrb[0].mxu0 %v1676
      %v1869 = vpop.f32.mrb[0].mxu0
      %v1870 = vadd.f32 %v1625, %v1869
      %v1871 = vpop.f32.mrb[0].mxu0
      %1872 = vmatprep.mubr.f32.mxu0 0.0
      %1873 = vmatmul.mubr.f32.gmra.mrb[0].mxu0 %v1679
      %v1874 = vpop.f32.mrb[0].mxu0
      %v1875 = vadd.f32 %v1625, %v1874
      %v1876 = vpop.f32.mrb[0].mxu0
      %1877 = vmatprep.mubr.f32.mxu0 0.0
      %1878 = vmatmul.mubr.f32.gmra.mrb[0].mxu0 %v1682
      %v1879 = vpop.f32.mrb[0].mxu0
      %v1880 = vadd.f32 %v1625, %v1879
      %v1881 = vpop.f32.mrb[0].mxu0
      %1882 = vmatprep.mubr.f32.mxu0 0.0
      %1883 = vmatmul.mubr.f32.gmra.mrb[0].mxu0 %v1685
      %v1884 = vpop.f32.mrb[0].mxu0
      %v1885 = vadd.f32 %v1625, %v1884
      %v1886 = vpop.f32.mrb[0].mxu0
      %1887 = vmatprep.mubr.f32.mxu0 0.0
      %1888 = vmatmul.mubr.f32.gmra.mrb[0].mxu0 %v1688
      %v1889 = vpop.f32.mrb[0].mxu0
      %v1890 = vadd.f32 %v1625, %v1889
      %v1891 = vpop.f32.mrb[0].mxu0
      %1892 = vmatprep.mubr.f32.mxu0 0.0
      %1893 = vmatmul.mubr.f32.gmra.mrb[0].mxu0 %v1691
      %v1894 = vpop.f32.mrb[0].mxu0
      %v1895 = vadd.f32 %v1625, %v1894
      %v1896 = vpop.f32.mrb[0].mxu0
      %1897 = vmatprep.mubr.f32.mxu0 0.0
      %1898 = vmatmul.mubr.f32.gmra.mrb[0].mxu0 %v1694
      %v1899 = vpop.f32.mrb[0].mxu0
      %v1900 = vadd.f32 %v1625, %v1899
      %v1901 = vpop.f32.mrb[0].mxu0
      %1902 = vmatprep.mubr.f32.mxu0 0.0
      %1903 = vmatmul.mubr.f32.gmra.mrb[0].mxu0 %v1697
      %v1904 = vpop.f32.mrb[0].mxu0
      %v1905 = vadd.f32 %v1625, %v1904
      %v1906 = vpop.f32.mrb[0].mxu0
      %1907 = vmatprep.mubr.f32.mxu0 0.0
      %1908 = vmatmul.mubr.f32.gmra.mrb[0].mxu0 %v1700
      %v1909 = vpop.f32.mrb[0].mxu0
      %v1910 = vadd.f32 %v1625, %v1909
      %v1911 = vpop.f32.mrb[0].mxu0
      %1912 = vmatprep.mubr.f32.mxu0 0.0
      %1913 = vmatmul.mubr.f32.gmra.mrb[0].mxu0 %v1703
      %v1914 = vpop.f32.mrb[0].mxu0
      %v1915 = vadd.f32 %v1625, %v1914
      %v1916 = vpop.f32.mrb[0].mxu0
      %1917 = vmatprep.mubr.f32.mxu0 0.0
      %1918 = vmatmul.mubr.f32.gmra.mrb[0].mxu0 %v1706
      %v1919 = vpop.f32.mrb[0].mxu0
      %v1920 = vadd.f32 %v1625, %v1919
      %v1921 = vpop.f32.mrb[0].mxu0
      %1922 = vmatprep.mubr.f32.mxu0 0.0
      %1923 = vmatmul.mubr.f32.gmra.mrb[0].mxu0 %v1709
      %v1924 = vpop.f32.mrb[0].mxu0
      %v1925 = vadd.f32 %v1625, %v1924
      %v1926 = vpop.f32.mrb[0].mxu0
      %1927 = vmatprep.mubr.f32.mxu0 0.0
      %1928 = vmatmul.mubr.f32.gmra.mrb[0].mxu0 %v1712
      %v1929 = vpop.f32.mrb[0].mxu0
      %v1930 = vadd.f32 %v1625, %v1929
      %v1931 = vpop.f32.mrb[0].mxu0
      %1932 = vmatprep.mubr.f32.mxu0 0.0
      %1933 = vmatmul.mubr.f32.gmra.mrb[0].mxu0 %v1715
      %v1934 = vpop.f32.mrb[0].mxu0
      %v1935 = vadd.f32 %v1625, %v1934
      %v1936 = vpop.f32.mrb[0].mxu0
      %1937 = vmatprep.mubr.f32.mxu0 0.0
      %1938 = vmatmul.mubr.f32.gmra.mrb[0].mxu0 %v1718
      %v1939 = vpop.f32.mrb[0].mxu0
      %v1940 = vadd.f32 %v1625, %v1939
      %v1941 = vpop.f32.mrb[0].mxu0
      %1942 = vmatprep.mubr.f32.mxu0 0.0
      %1943 = vmatmul.mubr.f32.gmra.mrb[0].mxu0 %v1721
      %v1944 = vpop.f32.mrb[0].mxu0
      %v1945 = vadd.f32 %v1625, %v1944
      %v1946 = vpop.f32.mrb[0].mxu0
      %1947 = vdwg.mxu0
      %v1948 = vmax.f32 %v1790, 0.0
      %v1949 = vmax.f32 %v1795, 0.0
      %v1950 = vmax.f32 %v1800, 0.0
      %v1951 = vmax.f32 %v1805, 0.0
      %v1952 = vmax.f32 %v1810, 0.0
      %v1953 = vmax.f32 %v1815, 0.0
      %v1954 = vmax.f32 %v1820, 0.0
      %v1955 = vmax.f32 %v1825, 0.0
      %v1956 = vmax.f32 %v1830, 0.0
      %v1957 = vmax.f32 %v1835, 0.0
      %v1958 = vmax.f32 %v1840, 0.0
      %v1959 = vmax.f32 %v1845, 0.0
      %v1960 = vmax.f32 %v1850, 0.0
      %v1961 = vmax.f32 %v1855, 0.0
      %v1962 = vmax.f32 %v1860, 0.0
      %v1963 = vmax.f32 %v1865, 0.0
      %v1964 = vmax.f32 %v1870, 0.0
      %v1965 = vmax.f32 %v1875, 0.0
      %v1966 = vmax.f32 %v1880, 0.0
      %v1967 = vmax.f32 %v1885, 0.0
      %v1968 = vmax.f32 %v1890, 0.0
      %v1969 = vmax.f32 %v1895, 0.0
      %v1970 = vmax.f32 %v1900, 0.0
      %v1971 = vmax.f32 %v1905, 0.0
      %v1972 = vmax.f32 %v1910, 0.0
      %v1973 = vmax.f32 %v1915, 0.0
      %v1974 = vmax.f32 %v1920, 0.0
      %v1975 = vmax.f32 %v1925, 0.0
      %v1976 = vmax.f32 %v1930, 0.0
      %v1977 = vmax.f32 %v1935, 0.0
      %v1978 = vmax.f32 %v1940, 0.0
      %v1979 = vmax.f32 %v1945, 0.0
      %v1980 = vld [vmem:[%s9] sm:$0xff]
      %v1981 = vld [vmem:[%s9 + $0x8] sm:$0xff]
      %v1982 = vld [vmem:[%s9 + $0x10] sm:$0xff]
      %v1983 = vld [vmem:[%s9 + $0x18] sm:$0xff]
      %v1984 = vld [vmem:[%s10] sm:$0x1]
      %v1986 = vlaneseq
      %v1987 = vshrl.u32 %v1986, 7
      %v1988 = vsub.s32 0, %v1987
      %v1989 = vrot.slane %v1984, %v1988
      %v1992 = vsel %vm1263, %v1948, 0
      %v1995 = vsel %vm1263, %v1949, 0
      %v1998 = vsel %vm1263, %v1950, 0
      %v2001 = vsel %vm1263, %v1951, 0
      %v2004 = vsel %vm1263, %v1952, 0
      %v2007 = vsel %vm1263, %v1953, 0
      %v2010 = vsel %vm1263, %v1954, 0
      %v2013 = vsel %vm1263, %v1955, 0
      %v2016 = vsel %vm1263, %v1956, 0
      %v2019 = vsel %vm1263, %v1957, 0
      %v2022 = vsel %vm1263, %v1958, 0
      %v2025 = vsel %vm1263, %v1959, 0
      %v2028 = vsel %vm1263, %v1960, 0
      %v2031 = vsel %vm1263, %v1961, 0
      %v2034 = vsel %vm1263, %v1962, 0
      %v2037 = vsel %vm1263, %v1963, 0
      %v2040 = vsel %vm1263, %v1964, 0
      %v2043 = vsel %vm1263, %v1965, 0
      %v2046 = vsel %vm1263, %v1966, 0
      %v2049 = vsel %vm1263, %v1967, 0
      %v2052 = vsel %vm1263, %v1968, 0
      %v2055 = vsel %vm1263, %v1969, 0
      %v2058 = vsel %vm1263, %v1970, 0
      %v2061 = vsel %vm1263, %v1971, 0
      %v2064 = vsel %vm1263, %v1972, 0
      %v2067 = vsel %vm1263, %v1973, 0
      %v2070 = vsel %vm1263, %v1974, 0
      %v2073 = vsel %vm1263, %v1975, 0
      %v2076 = vsel %vm1263, %v1976, 0
      %v2079 = vsel %vm1263, %v1977, 0
      %v2082 = vsel %vm1263, %v1978, 0
      %v2085 = vsel %vm1263, %v1979, 0
      %2087 = vmatprep.subr.mxu0 0.0
      %2088 = vmatpush1.msra.mxu0 %v1980
      %2089 = vmatprep.subr.mxu0 0.0
      %2090 = vmatpush1.msra.mxu0 %v1981
      %2091 = vmatprep.subr.mxu0 0.0
      %2092 = vmatpush1.msra.mxu0 %v1982
      %2093 = vmatprep.subr.mxu0 0.0
      %2094 = vmatpush1.msra.mxu0 %v1983
      %2095 = vmatprep.subr.mxu0 0.0
      %2096 = vmatpush1.msra.mxu0 0.0
      %2097 = vmatprep.subr.mxu0 0.0
      %2098 = vmatpush1.msra.mxu0 0.0
      %2099 = vmatprep.subr.mxu0 0.0
      %2100 = vmatpush1.msra.mxu0 0.0
      %2101 = vmatprep.subr.mxu0 0.0
      %2102 = vmatpush1.msra.mxu0 0.0
      %2103 = vmatprep.subr.mxu0 0.0
      %2104 = vmatpush1.msra.mxu0 0.0
      %2105 = vmatprep.subr.mxu0 0.0
      %2106 = vmatpush1.msra.mxu0 0.0
      %2107 = vmatprep.subr.mxu0 0.0
      %2108 = vmatpush1.msra.mxu0 0.0
      %2109 = vmatprep.subr.mxu0 0.0
      %2110 = vmatpush1.msra.mxu0 0.0
      %2111 = vmatprep.subr.mxu0 0.0
      %2112 = vmatpush1.msra.mxu0 0.0
      %2113 = vmatprep.subr.mxu0 0.0
      %2114 = vmatpush1.msra.mxu0 0.0
      %2115 = vmatprep.subr.mxu0 0.0
      %2116 = vmatpush1.msra.mxu0 0.0
      %2117 = vmatprep.subr.mxu0 0.0
      %2118 = vmatpush1.msra.mxu0 0.0
      %2119 = vmatprep.subr.mxu0 0.0
      %2120 = vmatpush1.msra.mxu0 0.0
      %2121 = vmatprep.subr.mxu0 0.0
      %2122 = vmatpush1.msra.mxu0 0.0
      %2123 = vmatprep.subr.mxu0 0.0
      %2124 = vmatpush1.msra.mxu0 0.0
      %2125 = vmatprep.subr.mxu0 0.0
      %2126 = vmatpush1.msra.mxu0 0.0
      %2127 = vmatprep.subr.mxu0 0.0
      %2128 = vmatpush1.msra.mxu0 0.0
      %2129 = vmatprep.subr.mxu0 0.0
      %2130 = vmatpush1.msra.mxu0 0.0
      %2131 = vmatprep.subr.mxu0 0.0
      %2132 = vmatpush1.msra.mxu0 0.0
      %2133 = vmatprep.subr.mxu0 0.0
      %2134 = vmatpush1.msra.mxu0 0.0
      %2135 = vmatprep.subr.mxu0 0.0
      %2136 = vmatpush1.msra.mxu0 0.0
      %2137 = vmatprep.subr.mxu0 0.0
      %2138 = vmatpush1.msra.mxu0 0.0
      %2139 = vmatprep.subr.mxu0 0.0
      %2140 = vmatpush1.msra.mxu0 0.0
      %2141 = vmatprep.subr.mxu0 0.0
      %2142 = vmatpush1.msra.mxu0 0.0
      %2143 = vmatprep.subr.mxu0 0.0
      %2144 = vmatpush1.msra.mxu0 0.0
      %2145 = vmatprep.subr.mxu0 0.0
      %2146 = vmatpush1.msra.mxu0 0.0
      %2147 = vmatprep.subr.mxu0 0.0
      %2148 = vmatpush1.msra.mxu0 0.0
      %2149 = vmatprep.subr.mxu0 0.0
      %2150 = vmatpush1.msra.mxu0 0.0
      %2151 = vmatprep.mubr.f32.mxu0 0.0
      %2152 = vmatmul.mubr.f32.gmra.mrb[0].mxu0 %v1992
      %v2153 = vpop.f32.mrb[0].mxu0
      %v2154 = vadd.f32 %v1989, %v2153
      %v2155 = vpop.f32.mrb[0].mxu0
      %2156 = vmatprep.mubr.f32.mxu0 0.0
      %2157 = vmatmul.mubr.f32.gmra.mrb[0].mxu0 %v1995
      %v2158 = vpop.f32.mrb[0].mxu0
      %v2159 = vadd.f32 %v1989, %v2158
      %v2160 = vpop.f32.mrb[0].mxu0
      %2161 = vmatprep.mubr.f32.mxu0 0.0
      %2162 = vmatmul.mubr.f32.gmra.mrb[0].mxu0 %v1998
      %v2163 = vpop.f32.mrb[0].mxu0
      %v2164 = vadd.f32 %v1989, %v2163
      %v2165 = vpop.f32.mrb[0].mxu0
      %2166 = vmatprep.mubr.f32.mxu0 0.0
      %2167 = vmatmul.mubr.f32.gmra.mrb[0].mxu0 %v2001
      %v2168 = vpop.f32.mrb[0].mxu0
      %v2169 = vadd.f32 %v1989, %v2168
      %v2170 = vpop.f32.mrb[0].mxu0
      %2171 = vmatprep.mubr.f32.mxu0 0.0
      %2172 = vmatmul.mubr.f32.gmra.mrb[0].mxu0 %v2004
      %v2173 = vpop.f32.mrb[0].mxu0
      %v2174 = vadd.f32 %v1989, %v2173
      %v2175 = vpop.f32.mrb[0].mxu0
      %2176 = vmatprep.mubr.f32.mxu0 0.0
      %2177 = vmatmul.mubr.f32.gmra.mrb[0].mxu0 %v2007
      %v2178 = vpop.f32.mrb[0].mxu0
      %v2179 = vadd.f32 %v1989, %v2178
      %v2180 = vpop.f32.mrb[0].mxu0
      %2181 = vmatprep.mubr.f32.mxu0 0.0
      %2182 = vmatmul.mubr.f32.gmra.mrb[0].mxu0 %v2010
      %v2183 = vpop.f32.mrb[0].mxu0
      %v2184 = vadd.f32 %v1989, %v2183
      %v2185 = vpop.f32.mrb[0].mxu0
      %2186 = vmatprep.mubr.f32.mxu0 0.0
      %2187 = vmatmul.mubr.f32.gmra.mrb[0].mxu0 %v2013
      %v2188 = vpop.f32.mrb[0].mxu0
      %v2189 = vadd.f32 %v1989, %v2188
      %v2190 = vpop.f32.mrb[0].mxu0
      %2191 = vmatprep.mubr.f32.mxu0 0.0
      %2192 = vmatmul.mubr.f32.gmra.mrb[0].mxu0 %v2016
      %v2193 = vpop.f32.mrb[0].mxu0
      %v2194 = vadd.f32 %v1989, %v2193
      %v2195 = vpop.f32.mrb[0].mxu0
      %2196 = vmatprep.mubr.f32.mxu0 0.0
      %2197 = vmatmul.mubr.f32.gmra.mrb[0].mxu0 %v2019
      %v2198 = vpop.f32.mrb[0].mxu0
      %v2199 = vadd.f32 %v1989, %v2198
      %v2200 = vpop.f32.mrb[0].mxu0
      %2201 = vmatprep.mubr.f32.mxu0 0.0
      %2202 = vmatmul.mubr.f32.gmra.mrb[0].mxu0 %v2022
      %v2203 = vpop.f32.mrb[0].mxu0
      %v2204 = vadd.f32 %v1989, %v2203
      %v2205 = vpop.f32.mrb[0].mxu0
      %2206 = vmatprep.mubr.f32.mxu0 0.0
      %2207 = vmatmul.mubr.f32.gmra.mrb[0].mxu0 %v2025
      %v2208 = vpop.f32.mrb[0].mxu0
      %v2209 = vadd.f32 %v1989, %v2208
      %v2210 = vpop.f32.mrb[0].mxu0
      %2211 = vmatprep.mubr.f32.mxu0 0.0
      %2212 = vmatmul.mubr.f32.gmra.mrb[0].mxu0 %v2028
      %v2213 = vpop.f32.mrb[0].mxu0
      %v2214 = vadd.f32 %v1989, %v2213
      %v2215 = vpop.f32.mrb[0].mxu0
      %2216 = vmatprep.mubr.f32.mxu0 0.0
      %2217 = vmatmul.mubr.f32.gmra.mrb[0].mxu0 %v2031
      %v2218 = vpop.f32.mrb[0].mxu0
      %v2219 = vadd.f32 %v1989, %v2218
      %v2220 = vpop.f32.mrb[0].mxu0
      %2221 = vmatprep.mubr.f32.mxu0 0.0
      %2222 = vmatmul.mubr.f32.gmra.mrb[0].mxu0 %v2034
      %v2223 = vpop.f32.mrb[0].mxu0
      %v2224 = vadd.f32 %v1989, %v2223
      %v2225 = vpop.f32.mrb[0].mxu0
      %2226 = vmatprep.mubr.f32.mxu0 0.0
      %2227 = vmatmul.mubr.f32.gmra.mrb[0].mxu0 %v2037
      %v2228 = vpop.f32.mrb[0].mxu0
      %v2229 = vadd.f32 %v1989, %v2228
      %v2230 = vpop.f32.mrb[0].mxu0
      %2231 = vmatprep.mubr.f32.mxu0 0.0
      %2232 = vmatmul.mubr.f32.gmra.mrb[0].mxu0 %v2040
      %v2233 = vpop.f32.mrb[0].mxu0
      %v2234 = vadd.f32 %v1989, %v2233
      %v2235 = vpop.f32.mrb[0].mxu0
      %2236 = vmatprep.mubr.f32.mxu0 0.0
      %2237 = vmatmul.mubr.f32.gmra.mrb[0].mxu0 %v2043
      %v2238 = vpop.f32.mrb[0].mxu0
      %v2239 = vadd.f32 %v1989, %v2238
      %v2240 = vpop.f32.mrb[0].mxu0
      %2241 = vmatprep.mubr.f32.mxu0 0.0
      %2242 = vmatmul.mubr.f32.gmra.mrb[0].mxu0 %v2046
      %v2243 = vpop.f32.mrb[0].mxu0
      %v2244 = vadd.f32 %v1989, %v2243
      %v2245 = vpop.f32.mrb[0].mxu0
      %2246 = vmatprep.mubr.f32.mxu0 0.0
      %2247 = vmatmul.mubr.f32.gmra.mrb[0].mxu0 %v2049
      %v2248 = vpop.f32.mrb[0].mxu0
      %v2249 = vadd.f32 %v1989, %v2248
      %v2250 = vpop.f32.mrb[0].mxu0
      %2251 = vmatprep.mubr.f32.mxu0 0.0
      %2252 = vmatmul.mubr.f32.gmra.mrb[0].mxu0 %v2052
      %v2253 = vpop.f32.mrb[0].mxu0
      %v2254 = vadd.f32 %v1989, %v2253
      %v2255 = vpop.f32.mrb[0].mxu0
      %2256 = vmatprep.mubr.f32.mxu0 0.0
      %2257 = vmatmul.mubr.f32.gmra.mrb[0].mxu0 %v2055
      %v2258 = vpop.f32.mrb[0].mxu0
      %v2259 = vadd.f32 %v1989, %v2258
      %v2260 = vpop.f32.mrb[0].mxu0
      %2261 = vmatprep.mubr.f32.mxu0 0.0
      %2262 = vmatmul.mubr.f32.gmra.mrb[0].mxu0 %v2058
      %v2263 = vpop.f32.mrb[0].mxu0
      %v2264 = vadd.f32 %v1989, %v2263
      %v2265 = vpop.f32.mrb[0].mxu0
      %2266 = vmatprep.mubr.f32.mxu0 0.0
      %2267 = vmatmul.mubr.f32.gmra.mrb[0].mxu0 %v2061
      %v2268 = vpop.f32.mrb[0].mxu0
      %v2269 = vadd.f32 %v1989, %v2268
      %v2270 = vpop.f32.mrb[0].mxu0
      %2271 = vmatprep.mubr.f32.mxu0 0.0
      %2272 = vmatmul.mubr.f32.gmra.mrb[0].mxu0 %v2064
      %v2273 = vpop.f32.mrb[0].mxu0
      %v2274 = vadd.f32 %v1989, %v2273
      %v2275 = vpop.f32.mrb[0].mxu0
      %2276 = vmatprep.mubr.f32.mxu0 0.0
      %2277 = vmatmul.mubr.f32.gmra.mrb[0].mxu0 %v2067
      %v2278 = vpop.f32.mrb[0].mxu0
      %v2279 = vadd.f32 %v1989, %v2278
      %v2280 = vpop.f32.mrb[0].mxu0
      %2281 = vmatprep.mubr.f32.mxu0 0.0
      %2282 = vmatmul.mubr.f32.gmra.mrb[0].mxu0 %v2070
      %v2283 = vpop.f32.mrb[0].mxu0
      %v2284 = vadd.f32 %v1989, %v2283
      %v2285 = vpop.f32.mrb[0].mxu0
      %2286 = vmatprep.mubr.f32.mxu0 0.0
      %2287 = vmatmul.mubr.f32.gmra.mrb[0].mxu0 %v2073
      %v2288 = vpop.f32.mrb[0].mxu0
      %v2289 = vadd.f32 %v1989, %v2288
      %v2290 = vpop.f32.mrb[0].mxu0
      %2291 = vmatprep.mubr.f32.mxu0 0.0
      %2292 = vmatmul.mubr.f32.gmra.mrb[0].mxu0 %v2076
      %v2293 = vpop.f32.mrb[0].mxu0
      %v2294 = vadd.f32 %v1989, %v2293
      %v2295 = vpop.f32.mrb[0].mxu0
      %2296 = vmatprep.mubr.f32.mxu0 0.0
      %2297 = vmatmul.mubr.f32.gmra.mrb[0].mxu0 %v2079
      %v2298 = vpop.f32.mrb[0].mxu0
      %v2299 = vadd.f32 %v1989, %v2298
      %v2300 = vpop.f32.mrb[0].mxu0
      %2301 = vmatprep.mubr.f32.mxu0 0.0
      %2302 = vmatmul.mubr.f32.gmra.mrb[0].mxu0 %v2082
      %v2303 = vpop.f32.mrb[0].mxu0
      %v2304 = vadd.f32 %v1989, %v2303
      %v2305 = vpop.f32.mrb[0].mxu0
      %2306 = vmatprep.mubr.f32.mxu0 0.0
      %2307 = vmatmul.mubr.f32.gmra.mrb[0].mxu0 %v2085
      %v2308 = vpop.f32.mrb[0].mxu0
      %v2309 = vadd.f32 %v1989, %v2308
      %v2310 = vpop.f32.mrb[0].mxu0
      %2311 = vdwg.mxu0
      %v2312 = vmax.f32 %v2154, 0.0
      %v2313 = vmax.f32 %v2159, 0.0
      %v2314 = vmax.f32 %v2164, 0.0
      %v2315 = vmax.f32 %v2169, 0.0
      %v2316 = vmax.f32 %v2174, 0.0
      %v2317 = vmax.f32 %v2179, 0.0
      %v2318 = vmax.f32 %v2184, 0.0
      %v2319 = vmax.f32 %v2189, 0.0
      %v2320 = vmax.f32 %v2194, 0.0
      %v2321 = vmax.f32 %v2199, 0.0
      %v2322 = vmax.f32 %v2204, 0.0
      %v2323 = vmax.f32 %v2209, 0.0
      %v2324 = vmax.f32 %v2214, 0.0
      %v2325 = vmax.f32 %v2219, 0.0
      %v2326 = vmax.f32 %v2224, 0.0
      %v2327 = vmax.f32 %v2229, 0.0
      %v2328 = vmax.f32 %v2234, 0.0
      %v2329 = vmax.f32 %v2239, 0.0
      %v2330 = vmax.f32 %v2244, 0.0
      %v2331 = vmax.f32 %v2249, 0.0
      %v2332 = vmax.f32 %v2254, 0.0
      %v2333 = vmax.f32 %v2259, 0.0
      %v2334 = vmax.f32 %v2264, 0.0
      %v2335 = vmax.f32 %v2269, 0.0
      %v2336 = vmax.f32 %v2274, 0.0
      %v2337 = vmax.f32 %v2279, 0.0
      %v2338 = vmax.f32 %v2284, 0.0
      %v2339 = vmax.f32 %v2289, 0.0
      %v2340 = vmax.f32 %v2294, 0.0
      %v2341 = vmax.f32 %v2299, 0.0
      %v2342 = vmax.f32 %v2304, 0.0
      %v2343 = vmax.f32 %v2309, 0.0
      %v2344 = vld [vmem:[%s11] sm:$0xff]
      %v2345 = vld [vmem:[%s11 + $0x8] sm:$0xff]
      %v2346 = vld [vmem:[%s11 + $0x10] sm:$0xff]
      %v2347 = vld [vmem:[%s11 + $0x18] sm:$0xff]
      %v2348 = vld [vmem:[%s11 + $0x20] sm:$0xff]
      %v2349 = vld [vmem:[%s11 + $0x28] sm:$0xff]
      %v2350 = vld [vmem:[%s11 + $0x30] sm:$0xff]
      %v2351 = vld [vmem:[%s11 + $0x38] sm:$0xff]
      %v2352 = vld [vmem:[%s12] sm:$0x1]
      %v2354 = vlaneseq
      %v2355 = vshrl.u32 %v2354, 7
      %v2356 = vsub.s32 0, %v2355
      %v2357 = vrot.slane %v2352, %v2356
      %v2360 = vsel %vm898, %v2312, 0
      %v2363 = vsel %vm898, %v2313, 0
      %v2366 = vsel %vm898, %v2314, 0
      %v2369 = vsel %vm898, %v2315, 0
      %v2372 = vsel %vm898, %v2316, 0
      %v2375 = vsel %vm898, %v2317, 0
      %v2378 = vsel %vm898, %v2318, 0
      %v2381 = vsel %vm898, %v2319, 0
      %v2384 = vsel %vm898, %v2320, 0
      %v2387 = vsel %vm898, %v2321, 0
      %v2390 = vsel %vm898, %v2322, 0
      %v2393 = vsel %vm898, %v2323, 0
      %v2396 = vsel %vm898, %v2324, 0
      %v2399 = vsel %vm898, %v2325, 0
      %v2402 = vsel %vm898, %v2326, 0
      %v2405 = vsel %vm898, %v2327, 0
      %v2408 = vsel %vm898, %v2328, 0
      %v2411 = vsel %vm898, %v2329, 0
      %v2414 = vsel %vm898, %v2330, 0
      %v2417 = vsel %vm898, %v2331, 0
      %v2420 = vsel %vm898, %v2332, 0
      %v2423 = vsel %vm898, %v2333, 0
      %v2426 = vsel %vm898, %v2334, 0
      %v2429 = vsel %vm898, %v2335, 0
      %v2432 = vsel %vm898, %v2336, 0
      %v2435 = vsel %vm898, %v2337, 0
      %v2438 = vsel %vm898, %v2338, 0
      %v2441 = vsel %vm898, %v2339, 0
      %v2444 = vsel %vm898, %v2340, 0
      %v2447 = vsel %vm898, %v2341, 0
      %v2450 = vsel %vm898, %v2342, 0
      %v2453 = vsel %vm898, %v2343, 0
      %2455 = vmatprep.subr.mxu0 0.0
      %2456 = vmatpush1.msra.mxu0 %v2344
      %2457 = vmatprep.subr.mxu0 0.0
      %2458 = vmatpush1.msra.mxu0 %v2345
      %2459 = vmatprep.subr.mxu0 0.0
      %2460 = vmatpush1.msra.mxu0 %v2346
      %2461 = vmatprep.subr.mxu0 0.0
      %2462 = vmatpush1.msra.mxu0 %v2347
      %2463 = vmatprep.subr.mxu0 0.0
      %2464 = vmatpush1.msra.mxu0 %v2348
      %2465 = vmatprep.subr.mxu0 0.0
      %2466 = vmatpush1.msra.mxu0 %v2349
      %2467 = vmatprep.subr.mxu0 0.0
      %2468 = vmatpush1.msra.mxu0 %v2350
      %2469 = vmatprep.subr.mxu0 0.0
      %2470 = vmatpush1.msra.mxu0 %v2351
      %2471 = vmatprep.subr.mxu0 0.0
      %2472 = vmatpush1.msra.mxu0 0.0
      %2473 = vmatprep.subr.mxu0 0.0
      %2474 = vmatpush1.msra.mxu0 0.0
      %2475 = vmatprep.subr.mxu0 0.0
      %2476 = vmatpush1.msra.mxu0 0.0
      %2477 = vmatprep.subr.mxu0 0.0
      %2478 = vmatpush1.msra.mxu0 0.0
      %2479 = vmatprep.subr.mxu0 0.0
      %2480 = vmatpush1.msra.mxu0 0.0
      %2481 = vmatprep.subr.mxu0 0.0
      %2482 = vmatpush1.msra.mxu0 0.0
      %2483 = vmatprep.subr.mxu0 0.0
      %2484 = vmatpush1.msra.mxu0 0.0
      %2485 = vmatprep.subr.mxu0 0.0
      %2486 = vmatpush1.msra.mxu0 0.0
      %2487 = vmatprep.subr.mxu0 0.0
      %2488 = vmatpush1.msra.mxu0 0.0
      %2489 = vmatprep.subr.mxu0 0.0
      %2490 = vmatpush1.msra.mxu0 0.0
      %2491 = vmatprep.subr.mxu0 0.0
      %2492 = vmatpush1.msra.mxu0 0.0
      %2493 = vmatprep.subr.mxu0 0.0
      %2494 = vmatpush1.msra.mxu0 0.0
      %2495 = vmatprep.subr.mxu0 0.0
      %2496 = vmatpush1.msra.mxu0 0.0
      %2497 = vmatprep.subr.mxu0 0.0
      %2498 = vmatpush1.msra.mxu0 0.0
      %2499 = vmatprep.subr.mxu0 0.0
      %2500 = vmatpush1.msra.mxu0 0.0
      %2501 = vmatprep.subr.mxu0 0.0
      %2502 = vmatpush1.msra.mxu0 0.0
      %2503 = vmatprep.subr.mxu0 0.0
      %2504 = vmatpush1.msra.mxu0 0.0
      %2505 = vmatprep.subr.mxu0 0.0
      %2506 = vmatpush1.msra.mxu0 0.0
      %2507 = vmatprep.subr.mxu0 0.0
      %2508 = vmatpush1.msra.mxu0 0.0
      %2509 = vmatprep.subr.mxu0 0.0
      %2510 = vmatpush1.msra.mxu0 0.0
      %2511 = vmatprep.subr.mxu0 0.0
      %2512 = vmatpush1.msra.mxu0 0.0
      %2513 = vmatprep.subr.mxu0 0.0
      %2514 = vmatpush1.msra.mxu0 0.0
      %2515 = vmatprep.subr.mxu0 0.0
      %2516 = vmatpush1.msra.mxu0 0.0
      %2517 = vmatprep.subr.mxu0 0.0
      %2518 = vmatpush1.msra.mxu0 0.0
      %2519 = vmatprep.mubr.f32.mxu0 0.0
      %2520 = vmatmul.mubr.f32.gmra.mrb[0].mxu0 %v2360
      %v2521 = vpop.f32.mrb[0].mxu0
      %v2522 = vadd.f32 %v2357, %v2521
      %v2523 = vpop.f32.mrb[0].mxu0
      %2524 = vmatprep.mubr.f32.mxu0 0.0
      %2525 = vmatmul.mubr.f32.gmra.mrb[0].mxu0 %v2363
      %v2526 = vpop.f32.mrb[0].mxu0
      %v2527 = vadd.f32 %v2357, %v2526
      %v2528 = vpop.f32.mrb[0].mxu0
      %2529 = vmatprep.mubr.f32.mxu0 0.0
      %2530 = vmatmul.mubr.f32.gmra.mrb[0].mxu0 %v2366
      %v2531 = vpop.f32.mrb[0].mxu0
      %v2532 = vadd.f32 %v2357, %v2531
      %v2533 = vpop.f32.mrb[0].mxu0
      %2534 = vmatprep.mubr.f32.mxu0 0.0
      %2535 = vmatmul.mubr.f32.gmra.mrb[0].mxu0 %v2369
      %v2536 = vpop.f32.mrb[0].mxu0
      %v2537 = vadd.f32 %v2357, %v2536
      %v2538 = vpop.f32.mrb[0].mxu0
      %2539 = vmatprep.mubr.f32.mxu0 0.0
      %2540 = vmatmul.mubr.f32.gmra.mrb[0].mxu0 %v2372
      %v2541 = vpop.f32.mrb[0].mxu0
      %v2542 = vadd.f32 %v2357, %v2541
      %v2543 = vpop.f32.mrb[0].mxu0
      %2544 = vmatprep.mubr.f32.mxu0 0.0
      %2545 = vmatmul.mubr.f32.gmra.mrb[0].mxu0 %v2375
      %v2546 = vpop.f32.mrb[0].mxu0
      %v2547 = vadd.f32 %v2357, %v2546
      %v2548 = vpop.f32.mrb[0].mxu0
      %2549 = vmatprep.mubr.f32.mxu0 0.0
      %2550 = vmatmul.mubr.f32.gmra.mrb[0].mxu0 %v2378
      %v2551 = vpop.f32.mrb[0].mxu0
      %v2552 = vadd.f32 %v2357, %v2551
      %v2553 = vpop.f32.mrb[0].mxu0
      %2554 = vmatprep.mubr.f32.mxu0 0.0
      %2555 = vmatmul.mubr.f32.gmra.mrb[0].mxu0 %v2381
      %v2556 = vpop.f32.mrb[0].mxu0
      %v2557 = vadd.f32 %v2357, %v2556
      %v2558 = vpop.f32.mrb[0].mxu0
      %2559 = vmatprep.mubr.f32.mxu0 0.0
      %2560 = vmatmul.mubr.f32.gmra.mrb[0].mxu0 %v2384
      %v2561 = vpop.f32.mrb[0].mxu0
      %v2562 = vadd.f32 %v2357, %v2561
      %v2563 = vpop.f32.mrb[0].mxu0
      %2564 = vmatprep.mubr.f32.mxu0 0.0
      %2565 = vmatmul.mubr.f32.gmra.mrb[0].mxu0 %v2387
      %v2566 = vpop.f32.mrb[0].mxu0
      %v2567 = vadd.f32 %v2357, %v2566
      %v2568 = vpop.f32.mrb[0].mxu0
      %2569 = vmatprep.mubr.f32.mxu0 0.0
      %2570 = vmatmul.mubr.f32.gmra.mrb[0].mxu0 %v2390
      %v2571 = vpop.f32.mrb[0].mxu0
      %v2572 = vadd.f32 %v2357, %v2571
      %v2573 = vpop.f32.mrb[0].mxu0
      %2574 = vmatprep.mubr.f32.mxu0 0.0
      %2575 = vmatmul.mubr.f32.gmra.mrb[0].mxu0 %v2393
      %v2576 = vpop.f32.mrb[0].mxu0
      %v2577 = vadd.f32 %v2357, %v2576
      %v2578 = vpop.f32.mrb[0].mxu0
      %2579 = vmatprep.mubr.f32.mxu0 0.0
      %2580 = vmatmul.mubr.f32.gmra.mrb[0].mxu0 %v2396
      %v2581 = vpop.f32.mrb[0].mxu0
      %v2582 = vadd.f32 %v2357, %v2581
      %v2583 = vpop.f32.mrb[0].mxu0
      %2584 = vmatprep.mubr.f32.mxu0 0.0
      %2585 = vmatmul.mubr.f32.gmra.mrb[0].mxu0 %v2399
      %v2586 = vpop.f32.mrb[0].mxu0
      %v2587 = vadd.f32 %v2357, %v2586
      %v2588 = vpop.f32.mrb[0].mxu0
      %2589 = vmatprep.mubr.f32.mxu0 0.0
      %2590 = vmatmul.mubr.f32.gmra.mrb[0].mxu0 %v2402
      %v2591 = vpop.f32.mrb[0].mxu0
      %v2592 = vadd.f32 %v2357, %v2591
      %v2593 = vpop.f32.mrb[0].mxu0
      %2594 = vmatprep.mubr.f32.mxu0 0.0
      %2595 = vmatmul.mubr.f32.gmra.mrb[0].mxu0 %v2405
      %v2596 = vpop.f32.mrb[0].mxu0
      %v2597 = vadd.f32 %v2357, %v2596
      %v2598 = vpop.f32.mrb[0].mxu0
      %2599 = vmatprep.mubr.f32.mxu0 0.0
      %2600 = vmatmul.mubr.f32.gmra.mrb[0].mxu0 %v2408
      %v2601 = vpop.f32.mrb[0].mxu0
      %v2602 = vadd.f32 %v2357, %v2601
      %v2603 = vpop.f32.mrb[0].mxu0
      %2604 = vmatprep.mubr.f32.mxu0 0.0
      %2605 = vmatmul.mubr.f32.gmra.mrb[0].mxu0 %v2411
      %v2606 = vpop.f32.mrb[0].mxu0
      %v2607 = vadd.f32 %v2357, %v2606
      %v2608 = vpop.f32.mrb[0].mxu0
      %2609 = vmatprep.mubr.f32.mxu0 0.0
      %2610 = vmatmul.mubr.f32.gmra.mrb[0].mxu0 %v2414
      %v2611 = vpop.f32.mrb[0].mxu0
      %v2612 = vadd.f32 %v2357, %v2611
      %v2613 = vpop.f32.mrb[0].mxu0
      %2614 = vmatprep.mubr.f32.mxu0 0.0
      %2615 = vmatmul.mubr.f32.gmra.mrb[0].mxu0 %v2417
      %v2616 = vpop.f32.mrb[0].mxu0
      %v2617 = vadd.f32 %v2357, %v2616
      %v2618 = vpop.f32.mrb[0].mxu0
      %2619 = vmatprep.mubr.f32.mxu0 0.0
      %2620 = vmatmul.mubr.f32.gmra.mrb[0].mxu0 %v2420
      %v2621 = vpop.f32.mrb[0].mxu0
      %v2622 = vadd.f32 %v2357, %v2621
      %v2623 = vpop.f32.mrb[0].mxu0
      %2624 = vmatprep.mubr.f32.mxu0 0.0
      %2625 = vmatmul.mubr.f32.gmra.mrb[0].mxu0 %v2423
      %v2626 = vpop.f32.mrb[0].mxu0
      %v2627 = vadd.f32 %v2357, %v2626
      %v2628 = vpop.f32.mrb[0].mxu0
      %2629 = vmatprep.mubr.f32.mxu0 0.0
      %2630 = vmatmul.mubr.f32.gmra.mrb[0].mxu0 %v2426
      %v2631 = vpop.f32.mrb[0].mxu0
      %v2632 = vadd.f32 %v2357, %v2631
      %v2633 = vpop.f32.mrb[0].mxu0
      %2634 = vmatprep.mubr.f32.mxu0 0.0
      %2635 = vmatmul.mubr.f32.gmra.mrb[0].mxu0 %v2429
      %v2636 = vpop.f32.mrb[0].mxu0
      %v2637 = vadd.f32 %v2357, %v2636
      %v2638 = vpop.f32.mrb[0].mxu0
      %2639 = vmatprep.mubr.f32.mxu0 0.0
      %2640 = vmatmul.mubr.f32.gmra.mrb[0].mxu0 %v2432
      %v2641 = vpop.f32.mrb[0].mxu0
      %v2642 = vadd.f32 %v2357, %v2641
      %v2643 = vpop.f32.mrb[0].mxu0
      %2644 = vmatprep.mubr.f32.mxu0 0.0
      %2645 = vmatmul.mubr.f32.gmra.mrb[0].mxu0 %v2435
      %v2646 = vpop.f32.mrb[0].mxu0
      %v2647 = vadd.f32 %v2357, %v2646
      %v2648 = vpop.f32.mrb[0].mxu0
      %2649 = vmatprep.mubr.f32.mxu0 0.0
      %2650 = vmatmul.mubr.f32.gmra.mrb[0].mxu0 %v2438
      %v2651 = vpop.f32.mrb[0].mxu0
      %v2652 = vadd.f32 %v2357, %v2651
      %v2653 = vpop.f32.mrb[0].mxu0
      %2654 = vmatprep.mubr.f32.mxu0 0.0
      %2655 = vmatmul.mubr.f32.gmra.mrb[0].mxu0 %v2441
      %v2656 = vpop.f32.mrb[0].mxu0
      %v2657 = vadd.f32 %v2357, %v2656
      %v2658 = vpop.f32.mrb[0].mxu0
      %2659 = vmatprep.mubr.f32.mxu0 0.0
      %2660 = vmatmul.mubr.f32.gmra.mrb[0].mxu0 %v2444
      %v2661 = vpop.f32.mrb[0].mxu0
      %v2662 = vadd.f32 %v2357, %v2661
      %v2663 = vpop.f32.mrb[0].mxu0
      %2664 = vmatprep.mubr.f32.mxu0 0.0
      %2665 = vmatmul.mubr.f32.gmra.mrb[0].mxu0 %v2447
      %v2666 = vpop.f32.mrb[0].mxu0
      %v2667 = vadd.f32 %v2357, %v2666
      %v2668 = vpop.f32.mrb[0].mxu0
      %2669 = vmatprep.mubr.f32.mxu0 0.0
      %2670 = vmatmul.mubr.f32.gmra.mrb[0].mxu0 %v2450
      %v2671 = vpop.f32.mrb[0].mxu0
      %v2672 = vadd.f32 %v2357, %v2671
      %v2673 = vpop.f32.mrb[0].mxu0
      %2674 = vmatprep.mubr.f32.mxu0 0.0
      %2675 = vmatmul.mubr.f32.gmra.mrb[0].mxu0 %v2453
      %v2676 = vpop.f32.mrb[0].mxu0
      %v2677 = vadd.f32 %v2357, %v2676
      %v2678 = vpop.f32.mrb[0].mxu0
      %2679 = vdwg.mxu0
      %2680 = vst.msk [vmem:[%s483] sm:$0xff] %vm525, %v2522
      %2681 = vst.msk [vmem:[%s483 + $0x8] sm:$0xff] %vm525, %v2527
      %2682 = vst.msk [vmem:[%s483 + $0x10] sm:$0xff] %vm525, %v2532
      %2683 = vst.msk [vmem:[%s483 + $0x18] sm:$0xff] %vm525, %v2537
      %2684 = vst.msk [vmem:[%s483 + $0x20] sm:$0xff] %vm525, %v2542
      %2685 = vst.msk [vmem:[%s483 + $0x28] sm:$0xff] %vm525, %v2547
      %2686 = vst.msk [vmem:[%s483 + $0x30] sm:$0xff] %vm525, %v2552
      %2687 = vst.msk [vmem:[%s483 + $0x38] sm:$0xff] %vm525, %v2557
      %2688 = vst.msk [vmem:[%s483 + $0x40] sm:$0xff] %vm525, %v2562
      %2689 = vst.msk [vmem:[%s483 + $0x48] sm:$0xff] %vm525, %v2567
      %2690 = vst.msk [vmem:[%s483 + $0x50] sm:$0xff] %vm525, %v2572
      %2691 = vst.msk [vmem:[%s483 + $0x58] sm:$0xff] %vm525, %v2577
      %2692 = vst.msk [vmem:[%s483 + $0x60] sm:$0xff] %vm525, %v2582
      %2693 = vst.msk [vmem:[%s483 + $0x68] sm:$0xff] %vm525, %v2587
      %2694 = vst.msk [vmem:[%s483 + $0x70] sm:$0xff] %vm525, %v2592
      %2695 = vst.msk [vmem:[%s483 + $0x78] sm:$0xff] %vm525, %v2597
      %2696 = vst.msk [vmem:[%s483 + $0x80] sm:$0xff] %vm525, %v2602
      %2697 = vst.msk [vmem:[%s483 + $0x88] sm:$0xff] %vm525, %v2607
      %2698 = vst.msk [vmem:[%s483 + $0x90] sm:$0xff] %vm525, %v2612
      %2699 = vst.msk [vmem:[%s483 + $0x98] sm:$0xff] %vm525, %v2617
      %2700 = vst.msk [vmem:[%s483 + $0xa0] sm:$0xff] %vm525, %v2622
      %2701 = vst.msk [vmem:[%s483 + $0xa8] sm:$0xff] %vm525, %v2627
      %2702 = vst.msk [vmem:[%s483 + $0xb0] sm:$0xff] %vm525, %v2632
      %2703 = vst.msk [vmem:[%s483 + $0xb8] sm:$0xff] %vm525, %v2637
      %2704 = vst.msk [vmem:[%s483 + $0xc0] sm:$0xff] %vm525, %v2642
      %2705 = vst.msk [vmem:[%s483 + $0xc8] sm:$0xff] %vm525, %v2647
      %2706 = vst.msk [vmem:[%s483 + $0xd0] sm:$0xff] %vm525, %v2652
      %2707 = vst.msk [vmem:[%s483 + $0xd8] sm:$0xff] %vm525, %v2657
      %2708 = vst.msk [vmem:[%s483 + $0xe0] sm:$0xff] %vm525, %v2662
      %2709 = vst.msk [vmem:[%s483 + $0xe8] sm:$0xff] %vm525, %v2667
      %2710 = vst.msk [vmem:[%s483 + $0xf0] sm:$0xff] %vm525, %v2672
      %2711 = vst.msk [vmem:[%s483 + $0xf8] sm:$0xff] %vm525, %v2677
      %s2712 = scalar_lea.vmem %s471, 256
      %v2713 = vld [vmem:[%s2712] sm:$0xff]
      %v2714 = vld [vmem:[%s2712 + $0x8] sm:$0xff]
      %v2715 = vld [vmem:[%s2712 + $0x10] sm:$0xff]
      %v2716 = vld [vmem:[%s2712 + $0x18] sm:$0xff]
      %v2717 = vld [vmem:[%s2712 + $0x20] sm:$0xff]
      %v2718 = vld [vmem:[%s2712 + $0x28] sm:$0xff]
      %v2719 = vld [vmem:[%s2712 + $0x30] sm:$0xff]
      %v2720 = vld [vmem:[%s2712 + $0x38] sm:$0xff]
      %v2721 = vld [vmem:[%s2712 + $0x40] sm:$0xff]
      %v2722 = vld [vmem:[%s2712 + $0x48] sm:$0xff]
      %v2723 = vld [vmem:[%s2712 + $0x50] sm:$0xff]
      %v2724 = vld [vmem:[%s2712 + $0x58] sm:$0xff]
      %v2725 = vld [vmem:[%s2712 + $0x60] sm:$0xff]
      %v2726 = vld [vmem:[%s2712 + $0x68] sm:$0xff]
      %v2727 = vld [vmem:[%s2712 + $0x70] sm:$0xff]
      %v2728 = vld [vmem:[%s2712 + $0x78] sm:$0xff]
      %v2729 = vld [vmem:[%s2712 + $0x80] sm:$0xff]
      %v2730 = vld [vmem:[%s2712 + $0x88] sm:$0xff]
      %v2731 = vld [vmem:[%s2712 + $0x90] sm:$0xff]
      %v2732 = vld [vmem:[%s2712 + $0x98] sm:$0xff]
      %v2733 = vld [vmem:[%s2712 + $0xa0] sm:$0xff]
      %v2734 = vld [vmem:[%s2712 + $0xa8] sm:$0xff]
      %v2735 = vld [vmem:[%s2712 + $0xb0] sm:$0xff]
      %v2736 = vld [vmem:[%s2712 + $0xb8] sm:$0xff]
      %v2737 = vld [vmem:[%s2712 + $0xc0] sm:$0xff]
      %v2738 = vld [vmem:[%s2712 + $0xc8] sm:$0xff]
      %v2739 = vld [vmem:[%s2712 + $0xd0] sm:$0xff]
      %v2740 = vld [vmem:[%s2712 + $0xd8] sm:$0xff]
      %v2741 = vld [vmem:[%s2712 + $0xe0] sm:$0xff]
      %v2742 = vld [vmem:[%s2712 + $0xe8] sm:$0xff]
      %v2743 = vld [vmem:[%s2712 + $0xf0] sm:$0xff]
      %v2744 = vld [vmem:[%s2712 + $0xf8] sm:$0xff]
      %v2745 = vld [vmem:[%s1] sm:$0x7]
      %v2746 = vld [vmem:[%s2] sm:$0x1]
      %v2748 = vlaneseq
      %v2749 = vshrl.u32 %v2748, 7
      %v2750 = vsub.s32 0, %v2749
      %v2751 = vrot.slane %v2746, %v2750
      %v2754 = vsel %vm525, %v2713, 0
      %v2757 = vsel %vm525, %v2714, 0
      %v2760 = vsel %vm525, %v2715, 0
      %v2763 = vsel %vm525, %v2716, 0
      %v2766 = vsel %vm525, %v2717, 0
      %v2769 = vsel %vm525, %v2718, 0
      %v2772 = vsel %vm525, %v2719, 0
      %v2775 = vsel %vm525, %v2720, 0
      %v2778 = vsel %vm525, %v2721, 0
      %v2781 = vsel %vm525, %v2722, 0
      %v2784 = vsel %vm525, %v2723, 0
      %v2787 = vsel %vm525, %v2724, 0
      %v2790 = vsel %vm525, %v2725, 0
      %v2793 = vsel %vm525, %v2726, 0
      %v2796 = vsel %vm525, %v2727, 0
      %v2799 = vsel %vm525, %v2728, 0
      %v2802 = vsel %vm525, %v2729, 0
      %v2805 = vsel %vm525, %v2730, 0
      %v2808 = vsel %vm525, %v2731, 0
      %v2811 = vsel %vm525, %v2732, 0
      %v2814 = vsel %vm525, %v2733, 0
      %v2817 = vsel %vm525, %v2734, 0
      %v2820 = vsel %vm525, %v2735, 0
      %v2823 = vsel %vm525, %v2736, 0
      %v2826 = vsel %vm525, %v2737, 0
      %v2829 = vsel %vm525, %v2738, 0
      %v2832 = vsel %vm525, %v2739, 0
      %v2835 = vsel %vm525, %v2740, 0
      %v2838 = vsel %vm525, %v2741, 0
      %v2841 = vsel %vm525, %v2742, 0
      %v2844 = vsel %vm525, %v2743, 0
      %v2847 = vsel %vm525, %v2744, 0
      %v2850 = vsel %vm622, %v2745, 0
      %2852 = vmatprep.subr.mxu0 0.0
      %2853 = vmatpush1.msra.mxu0 %v2850
      %2854 = vmatprep.subr.mxu0 0.0
      %2855 = vmatpush1.msra.mxu0 0.0
      %2856 = vmatprep.subr.mxu0 0.0
      %2857 = vmatpush1.msra.mxu0 0.0
      %2858 = vmatprep.subr.mxu0 0.0
      %2859 = vmatpush1.msra.mxu0 0.0
      %2860 = vmatprep.subr.mxu0 0.0
      %2861 = vmatpush1.msra.mxu0 0.0
      %2862 = vmatprep.subr.mxu0 0.0
      %2863 = vmatpush1.msra.mxu0 0.0
      %2864 = vmatprep.subr.mxu0 0.0
      %2865 = vmatpush1.msra.mxu0 0.0
      %2866 = vmatprep.subr.mxu0 0.0
      %2867 = vmatpush1.msra.mxu0 0.0
      %2868 = vmatprep.subr.mxu0 0.0
      %2869 = vmatpush1.msra.mxu0 0.0
      %2870 = vmatprep.subr.mxu0 0.0
      %2871 = vmatpush1.msra.mxu0 0.0
      %2872 = vmatprep.subr.mxu0 0.0
      %2873 = vmatpush1.msra.mxu0 0.0
      %2874 = vmatprep.subr.mxu0 0.0
      %2875 = vmatpush1.msra.mxu0 0.0
      %2876 = vmatprep.subr.mxu0 0.0
      %2877 = vmatpush1.msra.mxu0 0.0
      %2878 = vmatprep.subr.mxu0 0.0
      %2879 = vmatpush1.msra.mxu0 0.0
      %2880 = vmatprep.subr.mxu0 0.0
      %2881 = vmatpush1.msra.mxu0 0.0
      %2882 = vmatprep.subr.mxu0 0.0
      %2883 = vmatpush1.msra.mxu0 0.0
      %2884 = vmatprep.subr.mxu0 0.0
      %2885 = vmatpush1.msra.mxu0 0.0
      %2886 = vmatprep.subr.mxu0 0.0
      %2887 = vmatpush1.msra.mxu0 0.0
      %2888 = vmatprep.subr.mxu0 0.0
      %2889 = vmatpush1.msra.mxu0 0.0
      %2890 = vmatprep.subr.mxu0 0.0
      %2891 = vmatpush1.msra.mxu0 0.0
      %2892 = vmatprep.subr.mxu0 0.0
      %2893 = vmatpush1.msra.mxu0 0.0
      %2894 = vmatprep.subr.mxu0 0.0
      %2895 = vmatpush1.msra.mxu0 0.0
      %2896 = vmatprep.subr.mxu0 0.0
      %2897 = vmatpush1.msra.mxu0 0.0
      %2898 = vmatprep.subr.mxu0 0.0
      %2899 = vmatpush1.msra.mxu0 0.0
      %2900 = vmatprep.subr.mxu0 0.0
      %2901 = vmatpush1.msra.mxu0 0.0
      %2902 = vmatprep.subr.mxu0 0.0
      %2903 = vmatpush1.msra.mxu0 0.0
      %2904 = vmatprep.subr.mxu0 0.0
      %2905 = vmatpush1.msra.mxu0 0.0
      %2906 = vmatprep.subr.mxu0 0.0
      %2907 = vmatpush1.msra.mxu0 0.0
      %2908 = vmatprep.subr.mxu0 0.0
      %2909 = vmatpush1.msra.mxu0 0.0
      %2910 = vmatprep.subr.mxu0 0.0
      %2911 = vmatpush1.msra.mxu0 0.0
      %2912 = vmatprep.subr.mxu0 0.0
      %2913 = vmatpush1.msra.mxu0 0.0
      %2914 = vmatprep.subr.mxu0 0.0
      %2915 = vmatpush1.msra.mxu0 0.0
      %2916 = vmatprep.mubr.f32.mxu0 0.0
      %2917 = vmatmul.mubr.f32.gmra.mrb[0].mxu0 %v2754
      %v2918 = vpop.f32.mrb[0].mxu0
      %v2919 = vadd.f32 %v2751, %v2918
      %v2920 = vpop.f32.mrb[0].mxu0
      %2921 = vmatprep.mubr.f32.mxu0 0.0
      %2922 = vmatmul.mubr.f32.gmra.mrb[0].mxu0 %v2757
      %v2923 = vpop.f32.mrb[0].mxu0
      %v2924 = vadd.f32 %v2751, %v2923
      %v2925 = vpop.f32.mrb[0].mxu0
      %2926 = vmatprep.mubr.f32.mxu0 0.0
      %2927 = vmatmul.mubr.f32.gmra.mrb[0].mxu0 %v2760
      %v2928 = vpop.f32.mrb[0].mxu0
      %v2929 = vadd.f32 %v2751, %v2928
      %v2930 = vpop.f32.mrb[0].mxu0
      %2931 = vmatprep.mubr.f32.mxu0 0.0
      %2932 = vmatmul.mubr.f32.gmra.mrb[0].mxu0 %v2763
      %v2933 = vpop.f32.mrb[0].mxu0
      %v2934 = vadd.f32 %v2751, %v2933
      %v2935 = vpop.f32.mrb[0].mxu0
      %2936 = vmatprep.mubr.f32.mxu0 0.0
      %2937 = vmatmul.mubr.f32.gmra.mrb[0].mxu0 %v2766
      %v2938 = vpop.f32.mrb[0].mxu0
      %v2939 = vadd.f32 %v2751, %v2938
      %v2940 = vpop.f32.mrb[0].mxu0
      %2941 = vmatprep.mubr.f32.mxu0 0.0
      %2942 = vmatmul.mubr.f32.gmra.mrb[0].mxu0 %v2769
      %v2943 = vpop.f32.mrb[0].mxu0
      %v2944 = vadd.f32 %v2751, %v2943
      %v2945 = vpop.f32.mrb[0].mxu0
      %2946 = vmatprep.mubr.f32.mxu0 0.0
      %2947 = vmatmul.mubr.f32.gmra.mrb[0].mxu0 %v2772
      %v2948 = vpop.f32.mrb[0].mxu0
      %v2949 = vadd.f32 %v2751, %v2948
      %v2950 = vpop.f32.mrb[0].mxu0
      %2951 = vmatprep.mubr.f32.mxu0 0.0
      %2952 = vmatmul.mubr.f32.gmra.mrb[0].mxu0 %v2775
      %v2953 = vpop.f32.mrb[0].mxu0
      %v2954 = vadd.f32 %v2751, %v2953
      %v2955 = vpop.f32.mrb[0].mxu0
      %2956 = vmatprep.mubr.f32.mxu0 0.0
      %2957 = vmatmul.mubr.f32.gmra.mrb[0].mxu0 %v2778
      %v2958 = vpop.f32.mrb[0].mxu0
      %v2959 = vadd.f32 %v2751, %v2958
      %v2960 = vpop.f32.mrb[0].mxu0
      %2961 = vmatprep.mubr.f32.mxu0 0.0
      %2962 = vmatmul.mubr.f32.gmra.mrb[0].mxu0 %v2781
      %v2963 = vpop.f32.mrb[0].mxu0
      %v2964 = vadd.f32 %v2751, %v2963
      %v2965 = vpop.f32.mrb[0].mxu0
      %2966 = vmatprep.mubr.f32.mxu0 0.0
      %2967 = vmatmul.mubr.f32.gmra.mrb[0].mxu0 %v2784
      %v2968 = vpop.f32.mrb[0].mxu0
      %v2969 = vadd.f32 %v2751, %v2968
      %v2970 = vpop.f32.mrb[0].mxu0
      %2971 = vmatprep.mubr.f32.mxu0 0.0
      %2972 = vmatmul.mubr.f32.gmra.mrb[0].mxu0 %v2787
      %v2973 = vpop.f32.mrb[0].mxu0
      %v2974 = vadd.f32 %v2751, %v2973
      %v2975 = vpop.f32.mrb[0].mxu0
      %2976 = vmatprep.mubr.f32.mxu0 0.0
      %2977 = vmatmul.mubr.f32.gmra.mrb[0].mxu0 %v2790
      %v2978 = vpop.f32.mrb[0].mxu0
      %v2979 = vadd.f32 %v2751, %v2978
      %v2980 = vpop.f32.mrb[0].mxu0
      %2981 = vmatprep.mubr.f32.mxu0 0.0
      %2982 = vmatmul.mubr.f32.gmra.mrb[0].mxu0 %v2793
      %v2983 = vpop.f32.mrb[0].mxu0
      %v2984 = vadd.f32 %v2751, %v2983
      %v2985 = vpop.f32.mrb[0].mxu0
      %2986 = vmatprep.mubr.f32.mxu0 0.0
      %2987 = vmatmul.mubr.f32.gmra.mrb[0].mxu0 %v2796
      %v2988 = vpop.f32.mrb[0].mxu0
      %v2989 = vadd.f32 %v2751, %v2988
      %v2990 = vpop.f32.mrb[0].mxu0
      %2991 = vmatprep.mubr.f32.mxu0 0.0
      %2992 = vmatmul.mubr.f32.gmra.mrb[0].mxu0 %v2799
      %v2993 = vpop.f32.mrb[0].mxu0
      %v2994 = vadd.f32 %v2751, %v2993
      %v2995 = vpop.f32.mrb[0].mxu0
      %2996 = vmatprep.mubr.f32.mxu0 0.0
      %2997 = vmatmul.mubr.f32.gmra.mrb[0].mxu0 %v2802
      %v2998 = vpop.f32.mrb[0].mxu0
      %v2999 = vadd.f32 %v2751, %v2998
      %v3000 = vpop.f32.mrb[0].mxu0
      %3001 = vmatprep.mubr.f32.mxu0 0.0
      %3002 = vmatmul.mubr.f32.gmra.mrb[0].mxu0 %v2805
      %v3003 = vpop.f32.mrb[0].mxu0
      %v3004 = vadd.f32 %v2751, %v3003
      %v3005 = vpop.f32.mrb[0].mxu0
      %3006 = vmatprep.mubr.f32.mxu0 0.0
      %3007 = vmatmul.mubr.f32.gmra.mrb[0].mxu0 %v2808
      %v3008 = vpop.f32.mrb[0].mxu0
      %v3009 = vadd.f32 %v2751, %v3008
      %v3010 = vpop.f32.mrb[0].mxu0
      %3011 = vmatprep.mubr.f32.mxu0 0.0
      %3012 = vmatmul.mubr.f32.gmra.mrb[0].mxu0 %v2811
      %v3013 = vpop.f32.mrb[0].mxu0
      %v3014 = vadd.f32 %v2751, %v3013
      %v3015 = vpop.f32.mrb[0].mxu0
      %3016 = vmatprep.mubr.f32.mxu0 0.0
      %3017 = vmatmul.mubr.f32.gmra.mrb[0].mxu0 %v2814
      %v3018 = vpop.f32.mrb[0].mxu0
      %v3019 = vadd.f32 %v2751, %v3018
      %v3020 = vpop.f32.mrb[0].mxu0
      %3021 = vmatprep.mubr.f32.mxu0 0.0
      %3022 = vmatmul.mubr.f32.gmra.mrb[0].mxu0 %v2817
      %v3023 = vpop.f32.mrb[0].mxu0
      %v3024 = vadd.f32 %v2751, %v3023
      %v3025 = vpop.f32.mrb[0].mxu0
      %3026 = vmatprep.mubr.f32.mxu0 0.0
      %3027 = vmatmul.mubr.f32.gmra.mrb[0].mxu0 %v2820
      %v3028 = vpop.f32.mrb[0].mxu0
      %v3029 = vadd.f32 %v2751, %v3028
      %v3030 = vpop.f32.mrb[0].mxu0
      %3031 = vmatprep.mubr.f32.mxu0 0.0
      %3032 = vmatmul.mubr.f32.gmra.mrb[0].mxu0 %v2823
      %v3033 = vpop.f32.mrb[0].mxu0
      %v3034 = vadd.f32 %v2751, %v3033
      %v3035 = vpop.f32.mrb[0].mxu0
      %3036 = vmatprep.mubr.f32.mxu0 0.0
      %3037 = vmatmul.mubr.f32.gmra.mrb[0].mxu0 %v2826
      %v3038 = vpop.f32.mrb[0].mxu0
      %v3039 = vadd.f32 %v2751, %v3038
      %v3040 = vpop.f32.mrb[0].mxu0
      %3041 = vmatprep.mubr.f32.mxu0 0.0
      %3042 = vmatmul.mubr.f32.gmra.mrb[0].mxu0 %v2829
      %v3043 = vpop.f32.mrb[0].mxu0
      %v3044 = vadd.f32 %v2751, %v3043
      %v3045 = vpop.f32.mrb[0].mxu0
      %3046 = vmatprep.mubr.f32.mxu0 0.0
      %3047 = vmatmul.mubr.f32.gmra.mrb[0].mxu0 %v2832
      %v3048 = vpop.f32.mrb[0].mxu0
      %v3049 = vadd.f32 %v2751, %v3048
      %v3050 = vpop.f32.mrb[0].mxu0
      %3051 = vmatprep.mubr.f32.mxu0 0.0
      %3052 = vmatmul.mubr.f32.gmra.mrb[0].mxu0 %v2835
      %v3053 = vpop.f32.mrb[0].mxu0
      %v3054 = vadd.f32 %v2751, %v3053
      %v3055 = vpop.f32.mrb[0].mxu0
      %3056 = vmatprep.mubr.f32.mxu0 0.0
      %3057 = vmatmul.mubr.f32.gmra.mrb[0].mxu0 %v2838
      %v3058 = vpop.f32.mrb[0].mxu0
      %v3059 = vadd.f32 %v2751, %v3058
      %v3060 = vpop.f32.mrb[0].mxu0
      %3061 = vmatprep.mubr.f32.mxu0 0.0
      %3062 = vmatmul.mubr.f32.gmra.mrb[0].mxu0 %v2841
      %v3063 = vpop.f32.mrb[0].mxu0
      %v3064 = vadd.f32 %v2751, %v3063
      %v3065 = vpop.f32.mrb[0].mxu0
      %3066 = vmatprep.mubr.f32.mxu0 0.0
      %3067 = vmatmul.mubr.f32.gmra.mrb[0].mxu0 %v2844
      %v3068 = vpop.f32.mrb[0].mxu0
      %v3069 = vadd.f32 %v2751, %v3068
      %v3070 = vpop.f32.mrb[0].mxu0
      %3071 = vmatprep.mubr.f32.mxu0 0.0
      %3072 = vmatmul.mubr.f32.gmra.mrb[0].mxu0 %v2847
      %v3073 = vpop.f32.mrb[0].mxu0
      %v3074 = vadd.f32 %v2751, %v3073
      %v3075 = vpop.f32.mrb[0].mxu0
      %3076 = vdwg.mxu0
      %v3077 = vmax.f32 %v2919, 0.0
      %v3078 = vmax.f32 %v2924, 0.0
      %v3079 = vmax.f32 %v2929, 0.0
      %v3080 = vmax.f32 %v2934, 0.0
      %v3081 = vmax.f32 %v2939, 0.0
      %v3082 = vmax.f32 %v2944, 0.0
      %v3083 = vmax.f32 %v2949, 0.0
      %v3084 = vmax.f32 %v2954, 0.0
      %v3085 = vmax.f32 %v2959, 0.0
      %v3086 = vmax.f32 %v2964, 0.0
      %v3087 = vmax.f32 %v2969, 0.0
      %v3088 = vmax.f32 %v2974, 0.0
      %v3089 = vmax.f32 %v2979, 0.0
      %v3090 = vmax.f32 %v2984, 0.0
      %v3091 = vmax.f32 %v2989, 0.0
      %v3092 = vmax.f32 %v2994, 0.0
      %v3093 = vmax.f32 %v2999, 0.0
      %v3094 = vmax.f32 %v3004, 0.0
      %v3095 = vmax.f32 %v3009, 0.0
      %v3096 = vmax.f32 %v3014, 0.0
      %v3097 = vmax.f32 %v3019, 0.0
      %v3098 = vmax.f32 %v3024, 0.0
      %v3099 = vmax.f32 %v3029, 0.0
      %v3100 = vmax.f32 %v3034, 0.0
      %v3101 = vmax.f32 %v3039, 0.0
      %v3102 = vmax.f32 %v3044, 0.0
      %v3103 = vmax.f32 %v3049, 0.0
      %v3104 = vmax.f32 %v3054, 0.0
      %v3105 = vmax.f32 %v3059, 0.0
      %v3106 = vmax.f32 %v3064, 0.0
      %v3107 = vmax.f32 %v3069, 0.0
      %v3108 = vmax.f32 %v3074, 0.0
      %v3109 = vld [vmem:[%s3] sm:$0xff]
      %v3110 = vld [vmem:[%s3 + $0x8] sm:$0xff]
      %v3111 = vld [vmem:[%s3 + $0x10] sm:$0xff]
      %v3112 = vld [vmem:[%s3 + $0x18] sm:$0xff]
      %v3113 = vld [vmem:[%s3 + $0x20] sm:$0xff]
      %v3114 = vld [vmem:[%s3 + $0x28] sm:$0xff]
      %v3115 = vld [vmem:[%s3 + $0x30] sm:$0xff]
      %v3116 = vld [vmem:[%s3 + $0x38] sm:$0xff]
      %v3117 = vld [vmem:[%s4] sm:$0x1]
      %v3119 = vlaneseq
      %v3120 = vshrl.u32 %v3119, 7
      %v3121 = vsub.s32 0, %v3120
      %v3122 = vrot.slane %v3117, %v3121
      %v3125 = vsel %vm898, %v3077, 0
      %v3128 = vsel %vm898, %v3078, 0
      %v3131 = vsel %vm898, %v3079, 0
      %v3134 = vsel %vm898, %v3080, 0
      %v3137 = vsel %vm898, %v3081, 0
      %v3140 = vsel %vm898, %v3082, 0
      %v3143 = vsel %vm898, %v3083, 0
      %v3146 = vsel %vm898, %v3084, 0
      %v3149 = vsel %vm898, %v3085, 0
      %v3152 = vsel %vm898, %v3086, 0
      %v3155 = vsel %vm898, %v3087, 0
      %v3158 = vsel %vm898, %v3088, 0
      %v3161 = vsel %vm898, %v3089, 0
      %v3164 = vsel %vm898, %v3090, 0
      %v3167 = vsel %vm898, %v3091, 0
      %v3170 = vsel %vm898, %v3092, 0
      %v3173 = vsel %vm898, %v3093, 0
      %v3176 = vsel %vm898, %v3094, 0
      %v3179 = vsel %vm898, %v3095, 0
      %v3182 = vsel %vm898, %v3096, 0
      %v3185 = vsel %vm898, %v3097, 0
      %v3188 = vsel %vm898, %v3098, 0
      %v3191 = vsel %vm898, %v3099, 0
      %v3194 = vsel %vm898, %v3100, 0
      %v3197 = vsel %vm898, %v3101, 0
      %v3200 = vsel %vm898, %v3102, 0
      %v3203 = vsel %vm898, %v3103, 0
      %v3206 = vsel %vm898, %v3104, 0
      %v3209 = vsel %vm898, %v3105, 0
      %v3212 = vsel %vm898, %v3106, 0
      %v3215 = vsel %vm898, %v3107, 0
      %v3218 = vsel %vm898, %v3108, 0
      %3220 = vmatprep.subr.mxu0 0.0
      %3221 = vmatpush1.msra.mxu0 %v3109
      %3222 = vmatprep.subr.mxu0 0.0
      %3223 = vmatpush1.msra.mxu0 %v3110
      %3224 = vmatprep.subr.mxu0 0.0
      %3225 = vmatpush1.msra.mxu0 %v3111
      %3226 = vmatprep.subr.mxu0 0.0
      %3227 = vmatpush1.msra.mxu0 %v3112
      %3228 = vmatprep.subr.mxu0 0.0
      %3229 = vmatpush1.msra.mxu0 %v3113
      %3230 = vmatprep.subr.mxu0 0.0
      %3231 = vmatpush1.msra.mxu0 %v3114
      %3232 = vmatprep.subr.mxu0 0.0
      %3233 = vmatpush1.msra.mxu0 %v3115
      %3234 = vmatprep.subr.mxu0 0.0
      %3235 = vmatpush1.msra.mxu0 %v3116
      %3236 = vmatprep.subr.mxu0 0.0
      %3237 = vmatpush1.msra.mxu0 0.0
      %3238 = vmatprep.subr.mxu0 0.0
      %3239 = vmatpush1.msra.mxu0 0.0
      %3240 = vmatprep.subr.mxu0 0.0
      %3241 = vmatpush1.msra.mxu0 0.0
      %3242 = vmatprep.subr.mxu0 0.0
      %3243 = vmatpush1.msra.mxu0 0.0
      %3244 = vmatprep.subr.mxu0 0.0
      %3245 = vmatpush1.msra.mxu0 0.0
      %3246 = vmatprep.subr.mxu0 0.0
      %3247 = vmatpush1.msra.mxu0 0.0
      %3248 = vmatprep.subr.mxu0 0.0
      %3249 = vmatpush1.msra.mxu0 0.0
      %3250 = vmatprep.subr.mxu0 0.0
      %3251 = vmatpush1.msra.mxu0 0.0
      %3252 = vmatprep.subr.mxu0 0.0
      %3253 = vmatpush1.msra.mxu0 0.0
      %3254 = vmatprep.subr.mxu0 0.0
      %3255 = vmatpush1.msra.mxu0 0.0
      %3256 = vmatprep.subr.mxu0 0.0
      %3257 = vmatpush1.msra.mxu0 0.0
      %3258 = vmatprep.subr.mxu0 0.0
      %3259 = vmatpush1.msra.mxu0 0.0
      %3260 = vmatprep.subr.mxu0 0.0
      %3261 = vmatpush1.msra.mxu0 0.0
      %3262 = vmatprep.subr.mxu0 0.0
      %3263 = vmatpush1.msra.mxu0 0.0
      %3264 = vmatprep.subr.mxu0 0.0
      %3265 = vmatpush1.msra.mxu0 0.0
      %3266 = vmatprep.subr.mxu0 0.0
      %3267 = vmatpush1.msra.mxu0 0.0
      %3268 = vmatprep.subr.mxu0 0.0
      %3269 = vmatpush1.msra.mxu0 0.0
      %3270 = vmatprep.subr.mxu0 0.0
      %3271 = vmatpush1.msra.mxu0 0.0
      %3272 = vmatprep.subr.mxu0 0.0
      %3273 = vmatpush1.msra.mxu0 0.0
      %3274 = vmatprep.subr.mxu0 0.0
      %3275 = vmatpush1.msra.mxu0 0.0
      %3276 = vmatprep.subr.mxu0 0.0
      %3277 = vmatpush1.msra.mxu0 0.0
      %3278 = vmatprep.subr.mxu0 0.0
      %3279 = vmatpush1.msra.mxu0 0.0
      %3280 = vmatprep.subr.mxu0 0.0
      %3281 = vmatpush1.msra.mxu0 0.0
      %3282 = vmatprep.subr.mxu0 0.0
      %3283 = vmatpush1.msra.mxu0 0.0
      %3284 = vmatprep.mubr.f32.mxu0 0.0
      %3285 = vmatmul.mubr.f32.gmra.mrb[0].mxu0 %v3125
      %v3286 = vpop.f32.mrb[0].mxu0
      %v3287 = vadd.f32 %v3122, %v3286
      %v3288 = vpop.f32.mrb[0].mxu0
      %3289 = vmatprep.mubr.f32.mxu0 0.0
      %3290 = vmatmul.mubr.f32.gmra.mrb[0].mxu0 %v3128
      %v3291 = vpop.f32.mrb[0].mxu0
      %v3292 = vadd.f32 %v3122, %v3291
      %v3293 = vpop.f32.mrb[0].mxu0
      %3294 = vmatprep.mubr.f32.mxu0 0.0
      %3295 = vmatmul.mubr.f32.gmra.mrb[0].mxu0 %v3131
      %v3296 = vpop.f32.mrb[0].mxu0
      %v3297 = vadd.f32 %v3122, %v3296
      %v3298 = vpop.f32.mrb[0].mxu0
      %3299 = vmatprep.mubr.f32.mxu0 0.0
      %3300 = vmatmul.mubr.f32.gmra.mrb[0].mxu0 %v3134
      %v3301 = vpop.f32.mrb[0].mxu0
      %v3302 = vadd.f32 %v3122, %v3301
      %v3303 = vpop.f32.mrb[0].mxu0
      %3304 = vmatprep.mubr.f32.mxu0 0.0
      %3305 = vmatmul.mubr.f32.gmra.mrb[0].mxu0 %v3137
      %v3306 = vpop.f32.mrb[0].mxu0
      %v3307 = vadd.f32 %v3122, %v3306
      %v3308 = vpop.f32.mrb[0].mxu0
      %3309 = vmatprep.mubr.f32.mxu0 0.0
      %3310 = vmatmul.mubr.f32.gmra.mrb[0].mxu0 %v3140
      %v3311 = vpop.f32.mrb[0].mxu0
      %v3312 = vadd.f32 %v3122, %v3311
      %v3313 = vpop.f32.mrb[0].mxu0
      %3314 = vmatprep.mubr.f32.mxu0 0.0
      %3315 = vmatmul.mubr.f32.gmra.mrb[0].mxu0 %v3143
      %v3316 = vpop.f32.mrb[0].mxu0
      %v3317 = vadd.f32 %v3122, %v3316
      %v3318 = vpop.f32.mrb[0].mxu0
      %3319 = vmatprep.mubr.f32.mxu0 0.0
      %3320 = vmatmul.mubr.f32.gmra.mrb[0].mxu0 %v3146
      %v3321 = vpop.f32.mrb[0].mxu0
      %v3322 = vadd.f32 %v3122, %v3321
      %v3323 = vpop.f32.mrb[0].mxu0
      %3324 = vmatprep.mubr.f32.mxu0 0.0
      %3325 = vmatmul.mubr.f32.gmra.mrb[0].mxu0 %v3149
      %v3326 = vpop.f32.mrb[0].mxu0
      %v3327 = vadd.f32 %v3122, %v3326
      %v3328 = vpop.f32.mrb[0].mxu0
      %3329 = vmatprep.mubr.f32.mxu0 0.0
      %3330 = vmatmul.mubr.f32.gmra.mrb[0].mxu0 %v3152
      %v3331 = vpop.f32.mrb[0].mxu0
      %v3332 = vadd.f32 %v3122, %v3331
      %v3333 = vpop.f32.mrb[0].mxu0
      %3334 = vmatprep.mubr.f32.mxu0 0.0
      %3335 = vmatmul.mubr.f32.gmra.mrb[0].mxu0 %v3155
      %v3336 = vpop.f32.mrb[0].mxu0
      %v3337 = vadd.f32 %v3122, %v3336
      %v3338 = vpop.f32.mrb[0].mxu0
      %3339 = vmatprep.mubr.f32.mxu0 0.0
      %3340 = vmatmul.mubr.f32.gmra.mrb[0].mxu0 %v3158
      %v3341 = vpop.f32.mrb[0].mxu0
      %v3342 = vadd.f32 %v3122, %v3341
      %v3343 = vpop.f32.mrb[0].mxu0
      %3344 = vmatprep.mubr.f32.mxu0 0.0
      %3345 = vmatmul.mubr.f32.gmra.mrb[0].mxu0 %v3161
      %v3346 = vpop.f32.mrb[0].mxu0
      %v3347 = vadd.f32 %v3122, %v3346
      %v3348 = vpop.f32.mrb[0].mxu0
      %3349 = vmatprep.mubr.f32.mxu0 0.0
      %3350 = vmatmul.mubr.f32.gmra.mrb[0].mxu0 %v3164
      %v3351 = vpop.f32.mrb[0].mxu0
      %v3352 = vadd.f32 %v3122, %v3351
      %v3353 = vpop.f32.mrb[0].mxu0
      %3354 = vmatprep.mubr.f32.mxu0 0.0
      %3355 = vmatmul.mubr.f32.gmra.mrb[0].mxu0 %v3167
      %v3356 = vpop.f32.mrb[0].mxu0
      %v3357 = vadd.f32 %v3122, %v3356
      %v3358 = vpop.f32.mrb[0].mxu0
      %3359 = vmatprep.mubr.f32.mxu0 0.0
      %3360 = vmatmul.mubr.f32.gmra.mrb[0].mxu0 %v3170
      %v3361 = vpop.f32.mrb[0].mxu0
      %v3362 = vadd.f32 %v3122, %v3361
      %v3363 = vpop.f32.mrb[0].mxu0
      %3364 = vmatprep.mubr.f32.mxu0 0.0
      %3365 = vmatmul.mubr.f32.gmra.mrb[0].mxu0 %v3173
      %v3366 = vpop.f32.mrb[0].mxu0
      %v3367 = vadd.f32 %v3122, %v3366
      %v3368 = vpop.f32.mrb[0].mxu0
      %3369 = vmatprep.mubr.f32.mxu0 0.0
      %3370 = vmatmul.mubr.f32.gmra.mrb[0].mxu0 %v3176
      %v3371 = vpop.f32.mrb[0].mxu0
      %v3372 = vadd.f32 %v3122, %v3371
      %v3373 = vpop.f32.mrb[0].mxu0
      %3374 = vmatprep.mubr.f32.mxu0 0.0
      %3375 = vmatmul.mubr.f32.gmra.mrb[0].mxu0 %v3179
      %v3376 = vpop.f32.mrb[0].mxu0
      %v3377 = vadd.f32 %v3122, %v3376
      %v3378 = vpop.f32.mrb[0].mxu0
      %3379 = vmatprep.mubr.f32.mxu0 0.0
      %3380 = vmatmul.mubr.f32.gmra.mrb[0].mxu0 %v3182
      %v3381 = vpop.f32.mrb[0].mxu0
      %v3382 = vadd.f32 %v3122, %v3381
      %v3383 = vpop.f32.mrb[0].mxu0
      %3384 = vmatprep.mubr.f32.mxu0 0.0
      %3385 = vmatmul.mubr.f32.gmra.mrb[0].mxu0 %v3185
      %v3386 = vpop.f32.mrb[0].mxu0
      %v3387 = vadd.f32 %v3122, %v3386
      %v3388 = vpop.f32.mrb[0].mxu0
      %3389 = vmatprep.mubr.f32.mxu0 0.0
      %3390 = vmatmul.mubr.f32.gmra.mrb[0].mxu0 %v3188
      %v3391 = vpop.f32.mrb[0].mxu0
      %v3392 = vadd.f32 %v3122, %v3391
      %v3393 = vpop.f32.mrb[0].mxu0
      %3394 = vmatprep.mubr.f32.mxu0 0.0
      %3395 = vmatmul.mubr.f32.gmra.mrb[0].mxu0 %v3191
      %v3396 = vpop.f32.mrb[0].mxu0
      %v3397 = vadd.f32 %v3122, %v3396
      %v3398 = vpop.f32.mrb[0].mxu0
      %3399 = vmatprep.mubr.f32.mxu0 0.0
      %3400 = vmatmul.mubr.f32.gmra.mrb[0].mxu0 %v3194
      %v3401 = vpop.f32.mrb[0].mxu0
      %v3402 = vadd.f32 %v3122, %v3401
      %v3403 = vpop.f32.mrb[0].mxu0
      %3404 = vmatprep.mubr.f32.mxu0 0.0
      %3405 = vmatmul.mubr.f32.gmra.mrb[0].mxu0 %v3197
      %v3406 = vpop.f32.mrb[0].mxu0
      %v3407 = vadd.f32 %v3122, %v3406
      %v3408 = vpop.f32.mrb[0].mxu0
      %3409 = vmatprep.mubr.f32.mxu0 0.0
      %3410 = vmatmul.mubr.f32.gmra.mrb[0].mxu0 %v3200
      %v3411 = vpop.f32.mrb[0].mxu0
      %v3412 = vadd.f32 %v3122, %v3411
      %v3413 = vpop.f32.mrb[0].mxu0
      %3414 = vmatprep.mubr.f32.mxu0 0.0
      %3415 = vmatmul.mubr.f32.gmra.mrb[0].mxu0 %v3203
      %v3416 = vpop.f32.mrb[0].mxu0
      %v3417 = vadd.f32 %v3122, %v3416
      %v3418 = vpop.f32.mrb[0].mxu0
      %3419 = vmatprep.mubr.f32.mxu0 0.0
      %3420 = vmatmul.mubr.f32.gmra.mrb[0].mxu0 %v3206
      %v3421 = vpop.f32.mrb[0].mxu0
      %v3422 = vadd.f32 %v3122, %v3421
      %v3423 = vpop.f32.mrb[0].mxu0
      %3424 = vmatprep.mubr.f32.mxu0 0.0
      %3425 = vmatmul.mubr.f32.gmra.mrb[0].mxu0 %v3209
      %v3426 = vpop.f32.mrb[0].mxu0
      %v3427 = vadd.f32 %v3122, %v3426
      %v3428 = vpop.f32.mrb[0].mxu0
      %3429 = vmatprep.mubr.f32.mxu0 0.0
      %3430 = vmatmul.mubr.f32.gmra.mrb[0].mxu0 %v3212
      %v3431 = vpop.f32.mrb[0].mxu0
      %v3432 = vadd.f32 %v3122, %v3431
      %v3433 = vpop.f32.mrb[0].mxu0
      %3434 = vmatprep.mubr.f32.mxu0 0.0
      %3435 = vmatmul.mubr.f32.gmra.mrb[0].mxu0 %v3215
      %v3436 = vpop.f32.mrb[0].mxu0
      %v3437 = vadd.f32 %v3122, %v3436
      %v3438 = vpop.f32.mrb[0].mxu0
      %3439 = vmatprep.mubr.f32.mxu0 0.0
      %3440 = vmatmul.mubr.f32.gmra.mrb[0].mxu0 %v3218
      %v3441 = vpop.f32.mrb[0].mxu0
      %v3442 = vadd.f32 %v3122, %v3441
      %v3443 = vpop.f32.mrb[0].mxu0
      %3444 = vdwg.mxu0
      %v3445 = vmax.f32 %v3287, 0.0
      %v3446 = vmax.f32 %v3292, 0.0
      %v3447 = vmax.f32 %v3297, 0.0
      %v3448 = vmax.f32 %v3302, 0.0
      %v3449 = vmax.f32 %v3307, 0.0
      %v3450 = vmax.f32 %v3312, 0.0
      %v3451 = vmax.f32 %v3317, 0.0
      %v3452 = vmax.f32 %v3322, 0.0
      %v3453 = vmax.f32 %v3327, 0.0
      %v3454 = vmax.f32 %v3332, 0.0
      %v3455 = vmax.f32 %v3337, 0.0
      %v3456 = vmax.f32 %v3342, 0.0
      %v3457 = vmax.f32 %v3347, 0.0
      %v3458 = vmax.f32 %v3352, 0.0
      %v3459 = vmax.f32 %v3357, 0.0
      %v3460 = vmax.f32 %v3362, 0.0
      %v3461 = vmax.f32 %v3367, 0.0
      %v3462 = vmax.f32 %v3372, 0.0
      %v3463 = vmax.f32 %v3377, 0.0
      %v3464 = vmax.f32 %v3382, 0.0
      %v3465 = vmax.f32 %v3387, 0.0
      %v3466 = vmax.f32 %v3392, 0.0
      %v3467 = vmax.f32 %v3397, 0.0
      %v3468 = vmax.f32 %v3402, 0.0
      %v3469 = vmax.f32 %v3407, 0.0
      %v3470 = vmax.f32 %v3412, 0.0
      %v3471 = vmax.f32 %v3417, 0.0
      %v3472 = vmax.f32 %v3422, 0.0
      %v3473 = vmax.f32 %v3427, 0.0
      %v3474 = vmax.f32 %v3432, 0.0
      %v3475 = vmax.f32 %v3437, 0.0
      %v3476 = vmax.f32 %v3442, 0.0
      %v3477 = vld [vmem:[%s5] sm:$0xff]
      %v3478 = vld [vmem:[%s5 + $0x8] sm:$0xff]
      %v3479 = vld [vmem:[%s5 + $0x10] sm:$0xff]
      %v3480 = vld [vmem:[%s5 + $0x18] sm:$0xff]
      %v3481 = vld [vmem:[%s6] sm:$0x1]
      %v3483 = vlaneseq
      %v3484 = vshrl.u32 %v3483, 7
      %v3485 = vsub.s32 0, %v3484
      %v3486 = vrot.slane %v3481, %v3485
      %v3489 = vsel %vm1263, %v3445, 0
      %v3492 = vsel %vm1263, %v3446, 0
      %v3495 = vsel %vm1263, %v3447, 0
      %v3498 = vsel %vm1263, %v3448, 0
      %v3501 = vsel %vm1263, %v3449, 0
      %v3504 = vsel %vm1263, %v3450, 0
      %v3507 = vsel %vm1263, %v3451, 0
      %v3510 = vsel %vm1263, %v3452, 0
      %v3513 = vsel %vm1263, %v3453, 0
      %v3516 = vsel %vm1263, %v3454, 0
      %v3519 = vsel %vm1263, %v3455, 0
      %v3522 = vsel %vm1263, %v3456, 0
      %v3525 = vsel %vm1263, %v3457, 0
      %v3528 = vsel %vm1263, %v3458, 0
      %v3531 = vsel %vm1263, %v3459, 0
      %v3534 = vsel %vm1263, %v3460, 0
      %v3537 = vsel %vm1263, %v3461, 0
      %v3540 = vsel %vm1263, %v3462, 0
      %v3543 = vsel %vm1263, %v3463, 0
      %v3546 = vsel %vm1263, %v3464, 0
      %v3549 = vsel %vm1263, %v3465, 0
      %v3552 = vsel %vm1263, %v3466, 0
      %v3555 = vsel %vm1263, %v3467, 0
      %v3558 = vsel %vm1263, %v3468, 0
      %v3561 = vsel %vm1263, %v3469, 0
      %v3564 = vsel %vm1263, %v3470, 0
      %v3567 = vsel %vm1263, %v3471, 0
      %v3570 = vsel %vm1263, %v3472, 0
      %v3573 = vsel %vm1263, %v3473, 0
      %v3576 = vsel %vm1263, %v3474, 0
      %v3579 = vsel %vm1263, %v3475, 0
      %v3582 = vsel %vm1263, %v3476, 0
      %3584 = vmatprep.subr.mxu0 0.0
      %3585 = vmatpush1.msra.mxu0 %v3477
      %3586 = vmatprep.subr.mxu0 0.0
      %3587 = vmatpush1.msra.mxu0 %v3478
      %3588 = vmatprep.subr.mxu0 0.0
      %3589 = vmatpush1.msra.mxu0 %v3479
      %3590 = vmatprep.subr.mxu0 0.0
      %3591 = vmatpush1.msra.mxu0 %v3480
      %3592 = vmatprep.subr.mxu0 0.0
      %3593 = vmatpush1.msra.mxu0 0.0
      %3594 = vmatprep.subr.mxu0 0.0
      %3595 = vmatpush1.msra.mxu0 0.0
      %3596 = vmatprep.subr.mxu0 0.0
      %3597 = vmatpush1.msra.mxu0 0.0
      %3598 = vmatprep.subr.mxu0 0.0
      %3599 = vmatpush1.msra.mxu0 0.0
      %3600 = vmatprep.subr.mxu0 0.0
      %3601 = vmatpush1.msra.mxu0 0.0
      %3602 = vmatprep.subr.mxu0 0.0
      %3603 = vmatpush1.msra.mxu0 0.0
      %3604 = vmatprep.subr.mxu0 0.0
      %3605 = vmatpush1.msra.mxu0 0.0
      %3606 = vmatprep.subr.mxu0 0.0
      %3607 = vmatpush1.msra.mxu0 0.0
      %3608 = vmatprep.subr.mxu0 0.0
      %3609 = vmatpush1.msra.mxu0 0.0
      %3610 = vmatprep.subr.mxu0 0.0
      %3611 = vmatpush1.msra.mxu0 0.0
      %3612 = vmatprep.subr.mxu0 0.0
      %3613 = vmatpush1.msra.mxu0 0.0
      %3614 = vmatprep.subr.mxu0 0.0
      %3615 = vmatpush1.msra.mxu0 0.0
      %3616 = vmatprep.subr.mxu0 0.0
      %3617 = vmatpush1.msra.mxu0 0.0
      %3618 = vmatprep.subr.mxu0 0.0
      %3619 = vmatpush1.msra.mxu0 0.0
      %3620 = vmatprep.subr.mxu0 0.0
      %3621 = vmatpush1.msra.mxu0 0.0
      %3622 = vmatprep.subr.mxu0 0.0
      %3623 = vmatpush1.msra.mxu0 0.0
      %3624 = vmatprep.subr.mxu0 0.0
      %3625 = vmatpush1.msra.mxu0 0.0
      %3626 = vmatprep.subr.mxu0 0.0
      %3627 = vmatpush1.msra.mxu0 0.0
      %3628 = vmatprep.subr.mxu0 0.0
      %3629 = vmatpush1.msra.mxu0 0.0
      %3630 = vmatprep.subr.mxu0 0.0
      %3631 = vmatpush1.msra.mxu0 0.0
      %3632 = vmatprep.subr.mxu0 0.0
      %3633 = vmatpush1.msra.mxu0 0.0
      %3634 = vmatprep.subr.mxu0 0.0
      %3635 = vmatpush1.msra.mxu0 0.0
      %3636 = vmatprep.subr.mxu0 0.0
      %3637 = vmatpush1.msra.mxu0 0.0
      %3638 = vmatprep.subr.mxu0 0.0
      %3639 = vmatpush1.msra.mxu0 0.0
      %3640 = vmatprep.subr.mxu0 0.0
      %3641 = vmatpush1.msra.mxu0 0.0
      %3642 = vmatprep.subr.mxu0 0.0
      %3643 = vmatpush1.msra.mxu0 0.0
      %3644 = vmatprep.subr.mxu0 0.0
      %3645 = vmatpush1.msra.mxu0 0.0
      %3646 = vmatprep.subr.mxu0 0.0
      %3647 = vmatpush1.msra.mxu0 0.0
      %3648 = vmatprep.mubr.f32.mxu0 0.0
      %3649 = vmatmul.mubr.f32.gmra.mrb[0].mxu0 %v3489
      %v3650 = vpop.f32.mrb[0].mxu0
      %v3651 = vadd.f32 %v3486, %v3650
      %v3652 = vpop.f32.mrb[0].mxu0
      %3653 = vmatprep.mubr.f32.mxu0 0.0
      %3654 = vmatmul.mubr.f32.gmra.mrb[0].mxu0 %v3492
      %v3655 = vpop.f32.mrb[0].mxu0
      %v3656 = vadd.f32 %v3486, %v3655
      %v3657 = vpop.f32.mrb[0].mxu0
      %3658 = vmatprep.mubr.f32.mxu0 0.0
      %3659 = vmatmul.mubr.f32.gmra.mrb[0].mxu0 %v3495
      %v3660 = vpop.f32.mrb[0].mxu0
      %v3661 = vadd.f32 %v3486, %v3660
      %v3662 = vpop.f32.mrb[0].mxu0
      %3663 = vmatprep.mubr.f32.mxu0 0.0
      %3664 = vmatmul.mubr.f32.gmra.mrb[0].mxu0 %v3498
      %v3665 = vpop.f32.mrb[0].mxu0
      %v3666 = vadd.f32 %v3486, %v3665
      %v3667 = vpop.f32.mrb[0].mxu0
      %3668 = vmatprep.mubr.f32.mxu0 0.0
      %3669 = vmatmul.mubr.f32.gmra.mrb[0].mxu0 %v3501
      %v3670 = vpop.f32.mrb[0].mxu0
      %v3671 = vadd.f32 %v3486, %v3670
      %v3672 = vpop.f32.mrb[0].mxu0
      %3673 = vmatprep.mubr.f32.mxu0 0.0
      %3674 = vmatmul.mubr.f32.gmra.mrb[0].mxu0 %v3504
      %v3675 = vpop.f32.mrb[0].mxu0
      %v3676 = vadd.f32 %v3486, %v3675
      %v3677 = vpop.f32.mrb[0].mxu0
      %3678 = vmatprep.mubr.f32.mxu0 0.0
      %3679 = vmatmul.mubr.f32.gmra.mrb[0].mxu0 %v3507
      %v3680 = vpop.f32.mrb[0].mxu0
      %v3681 = vadd.f32 %v3486, %v3680
      %v3682 = vpop.f32.mrb[0].mxu0
      %3683 = vmatprep.mubr.f32.mxu0 0.0
      %3684 = vmatmul.mubr.f32.gmra.mrb[0].mxu0 %v3510
      %v3685 = vpop.f32.mrb[0].mxu0
      %v3686 = vadd.f32 %v3486, %v3685
      %v3687 = vpop.f32.mrb[0].mxu0
      %3688 = vmatprep.mubr.f32.mxu0 0.0
      %3689 = vmatmul.mubr.f32.gmra.mrb[0].mxu0 %v3513
      %v3690 = vpop.f32.mrb[0].mxu0
      %v3691 = vadd.f32 %v3486, %v3690
      %v3692 = vpop.f32.mrb[0].mxu0
      %3693 = vmatprep.mubr.f32.mxu0 0.0
      %3694 = vmatmul.mubr.f32.gmra.mrb[0].mxu0 %v3516
      %v3695 = vpop.f32.mrb[0].mxu0
      %v3696 = vadd.f32 %v3486, %v3695
      %v3697 = vpop.f32.mrb[0].mxu0
      %3698 = vmatprep.mubr.f32.mxu0 0.0
      %3699 = vmatmul.mubr.f32.gmra.mrb[0].mxu0 %v3519
      %v3700 = vpop.f32.mrb[0].mxu0
      %v3701 = vadd.f32 %v3486, %v3700
      %v3702 = vpop.f32.mrb[0].mxu0
      %3703 = vmatprep.mubr.f32.mxu0 0.0
      %3704 = vmatmul.mubr.f32.gmra.mrb[0].mxu0 %v3522
      %v3705 = vpop.f32.mrb[0].mxu0
      %v3706 = vadd.f32 %v3486, %v3705
      %v3707 = vpop.f32.mrb[0].mxu0
      %3708 = vmatprep.mubr.f32.mxu0 0.0
      %3709 = vmatmul.mubr.f32.gmra.mrb[0].mxu0 %v3525
      %v3710 = vpop.f32.mrb[0].mxu0
      %v3711 = vadd.f32 %v3486, %v3710
      %v3712 = vpop.f32.mrb[0].mxu0
      %3713 = vmatprep.mubr.f32.mxu0 0.0
      %3714 = vmatmul.mubr.f32.gmra.mrb[0].mxu0 %v3528
      %v3715 = vpop.f32.mrb[0].mxu0
      %v3716 = vadd.f32 %v3486, %v3715
      %v3717 = vpop.f32.mrb[0].mxu0
      %3718 = vmatprep.mubr.f32.mxu0 0.0
      %3719 = vmatmul.mubr.f32.gmra.mrb[0].mxu0 %v3531
      %v3720 = vpop.f32.mrb[0].mxu0
      %v3721 = vadd.f32 %v3486, %v3720
      %v3722 = vpop.f32.mrb[0].mxu0
      %3723 = vmatprep.mubr.f32.mxu0 0.0
      %3724 = vmatmul.mubr.f32.gmra.mrb[0].mxu0 %v3534
      %v3725 = vpop.f32.mrb[0].mxu0
      %v3726 = vadd.f32 %v3486, %v3725
      %v3727 = vpop.f32.mrb[0].mxu0
      %3728 = vmatprep.mubr.f32.mxu0 0.0
      %3729 = vmatmul.mubr.f32.gmra.mrb[0].mxu0 %v3537
      %v3730 = vpop.f32.mrb[0].mxu0
      %v3731 = vadd.f32 %v3486, %v3730
      %v3732 = vpop.f32.mrb[0].mxu0
      %3733 = vmatprep.mubr.f32.mxu0 0.0
      %3734 = vmatmul.mubr.f32.gmra.mrb[0].mxu0 %v3540
      %v3735 = vpop.f32.mrb[0].mxu0
      %v3736 = vadd.f32 %v3486, %v3735
      %v3737 = vpop.f32.mrb[0].mxu0
      %3738 = vmatprep.mubr.f32.mxu0 0.0
      %3739 = vmatmul.mubr.f32.gmra.mrb[0].mxu0 %v3543
      %v3740 = vpop.f32.mrb[0].mxu0
      %v3741 = vadd.f32 %v3486, %v3740
      %v3742 = vpop.f32.mrb[0].mxu0
      %3743 = vmatprep.mubr.f32.mxu0 0.0
      %3744 = vmatmul.mubr.f32.gmra.mrb[0].mxu0 %v3546
      %v3745 = vpop.f32.mrb[0].mxu0
      %v3746 = vadd.f32 %v3486, %v3745
      %v3747 = vpop.f32.mrb[0].mxu0
      %3748 = vmatprep.mubr.f32.mxu0 0.0
      %3749 = vmatmul.mubr.f32.gmra.mrb[0].mxu0 %v3549
      %v3750 = vpop.f32.mrb[0].mxu0
      %v3751 = vadd.f32 %v3486, %v3750
      %v3752 = vpop.f32.mrb[0].mxu0
      %3753 = vmatprep.mubr.f32.mxu0 0.0
      %3754 = vmatmul.mubr.f32.gmra.mrb[0].mxu0 %v3552
      %v3755 = vpop.f32.mrb[0].mxu0
      %v3756 = vadd.f32 %v3486, %v3755
      %v3757 = vpop.f32.mrb[0].mxu0
      %3758 = vmatprep.mubr.f32.mxu0 0.0
      %3759 = vmatmul.mubr.f32.gmra.mrb[0].mxu0 %v3555
      %v3760 = vpop.f32.mrb[0].mxu0
      %v3761 = vadd.f32 %v3486, %v3760
      %v3762 = vpop.f32.mrb[0].mxu0
      %3763 = vmatprep.mubr.f32.mxu0 0.0
      %3764 = vmatmul.mubr.f32.gmra.mrb[0].mxu0 %v3558
      %v3765 = vpop.f32.mrb[0].mxu0
      %v3766 = vadd.f32 %v3486, %v3765
      %v3767 = vpop.f32.mrb[0].mxu0
      %3768 = vmatprep.mubr.f32.mxu0 0.0
      %3769 = vmatmul.mubr.f32.gmra.mrb[0].mxu0 %v3561
      %v3770 = vpop.f32.mrb[0].mxu0
      %v3771 = vadd.f32 %v3486, %v3770
      %v3772 = vpop.f32.mrb[0].mxu0
      %3773 = vmatprep.mubr.f32.mxu0 0.0
      %3774 = vmatmul.mubr.f32.gmra.mrb[0].mxu0 %v3564
      %v3775 = vpop.f32.mrb[0].mxu0
      %v3776 = vadd.f32 %v3486, %v3775
      %v3777 = vpop.f32.mrb[0].mxu0
      %3778 = vmatprep.mubr.f32.mxu0 0.0
      %3779 = vmatmul.mubr.f32.gmra.mrb[0].mxu0 %v3567
      %v3780 = vpop.f32.mrb[0].mxu0
      %v3781 = vadd.f32 %v3486, %v3780
      %v3782 = vpop.f32.mrb[0].mxu0
      %3783 = vmatprep.mubr.f32.mxu0 0.0
      %3784 = vmatmul.mubr.f32.gmra.mrb[0].mxu0 %v3570
      %v3785 = vpop.f32.mrb[0].mxu0
      %v3786 = vadd.f32 %v3486, %v3785
      %v3787 = vpop.f32.mrb[0].mxu0
      %3788 = vmatprep.mubr.f32.mxu0 0.0
      %3789 = vmatmul.mubr.f32.gmra.mrb[0].mxu0 %v3573
      %v3790 = vpop.f32.mrb[0].mxu0
      %v3791 = vadd.f32 %v3486, %v3790
      %v3792 = vpop.f32.mrb[0].mxu0
      %3793 = vmatprep.mubr.f32.mxu0 0.0
      %3794 = vmatmul.mubr.f32.gmra.mrb[0].mxu0 %v3576
      %v3795 = vpop.f32.mrb[0].mxu0
      %v3796 = vadd.f32 %v3486, %v3795
      %v3797 = vpop.f32.mrb[0].mxu0
      %3798 = vmatprep.mubr.f32.mxu0 0.0
      %3799 = vmatmul.mubr.f32.gmra.mrb[0].mxu0 %v3579
      %v3800 = vpop.f32.mrb[0].mxu0
      %v3801 = vadd.f32 %v3486, %v3800
      %v3802 = vpop.f32.mrb[0].mxu0
      %3803 = vmatprep.mubr.f32.mxu0 0.0
      %3804 = vmatmul.mubr.f32.gmra.mrb[0].mxu0 %v3582
      %v3805 = vpop.f32.mrb[0].mxu0
      %v3806 = vadd.f32 %v3486, %v3805
      %v3807 = vpop.f32.mrb[0].mxu0
      %3808 = vdwg.mxu0
      %s3809 = scalar_lea.vmem %s477, 256
      %3810 = vst.msk [vmem:[%s3809] sm:$0xff] %vm1585, %v3651
      %3811 = vst.msk [vmem:[%s3809 + $0x8] sm:$0xff] %vm1585, %v3656
      %3812 = vst.msk [vmem:[%s3809 + $0x10] sm:$0xff] %vm1585, %v3661
      %3813 = vst.msk [vmem:[%s3809 + $0x18] sm:$0xff] %vm1585, %v3666
      %3814 = vst.msk [vmem:[%s3809 + $0x20] sm:$0xff] %vm1585, %v3671
      %3815 = vst.msk [vmem:[%s3809 + $0x28] sm:$0xff] %vm1585, %v3676
      %3816 = vst.msk [vmem:[%s3809 + $0x30] sm:$0xff] %vm1585, %v3681
      %3817 = vst.msk [vmem:[%s3809 + $0x38] sm:$0xff] %vm1585, %v3686
      %3818 = vst.msk [vmem:[%s3809 + $0x40] sm:$0xff] %vm1585, %v3691
      %3819 = vst.msk [vmem:[%s3809 + $0x48] sm:$0xff] %vm1585, %v3696
      %3820 = vst.msk [vmem:[%s3809 + $0x50] sm:$0xff] %vm1585, %v3701
      %3821 = vst.msk [vmem:[%s3809 + $0x58] sm:$0xff] %vm1585, %v3706
      %3822 = vst.msk [vmem:[%s3809 + $0x60] sm:$0xff] %vm1585, %v3711
      %3823 = vst.msk [vmem:[%s3809 + $0x68] sm:$0xff] %vm1585, %v3716
      %3824 = vst.msk [vmem:[%s3809 + $0x70] sm:$0xff] %vm1585, %v3721
      %3825 = vst.msk [vmem:[%s3809 + $0x78] sm:$0xff] %vm1585, %v3726
      %3826 = vst.msk [vmem:[%s3809 + $0x80] sm:$0xff] %vm1585, %v3731
      %3827 = vst.msk [vmem:[%s3809 + $0x88] sm:$0xff] %vm1585, %v3736
      %3828 = vst.msk [vmem:[%s3809 + $0x90] sm:$0xff] %vm1585, %v3741
      %3829 = vst.msk [vmem:[%s3809 + $0x98] sm:$0xff] %vm1585, %v3746
      %3830 = vst.msk [vmem:[%s3809 + $0xa0] sm:$0xff] %vm1585, %v3751
      %3831 = vst.msk [vmem:[%s3809 + $0xa8] sm:$0xff] %vm1585, %v3756
      %3832 = vst.msk [vmem:[%s3809 + $0xb0] sm:$0xff] %vm1585, %v3761
      %3833 = vst.msk [vmem:[%s3809 + $0xb8] sm:$0xff] %vm1585, %v3766
      %3834 = vst.msk [vmem:[%s3809 + $0xc0] sm:$0xff] %vm1585, %v3771
      %3835 = vst.msk [vmem:[%s3809 + $0xc8] sm:$0xff] %vm1585, %v3776
      %3836 = vst.msk [vmem:[%s3809 + $0xd0] sm:$0xff] %vm1585, %v3781
      %3837 = vst.msk [vmem:[%s3809 + $0xd8] sm:$0xff] %vm1585, %v3786
      %3838 = vst.msk [vmem:[%s3809 + $0xe0] sm:$0xff] %vm1585, %v3791
      %3839 = vst.msk [vmem:[%s3809 + $0xe8] sm:$0xff] %vm1585, %v3796
      %3840 = vst.msk [vmem:[%s3809 + $0xf0] sm:$0xff] %vm1585, %v3801
      %3841 = vst.msk [vmem:[%s3809 + $0xf8] sm:$0xff] %vm1585, %v3806
      %v3842 = vld [vmem:[%s7] sm:$0xff]
      %v3843 = vld [vmem:[%s7 + $0x8] sm:$0xff]
      %v3844 = vld [vmem:[%s8] sm:$0x1]
      %v3846 = vlaneseq
      %v3847 = vshrl.u32 %v3846, 7
      %v3848 = vsub.s32 0, %v3847
      %v3849 = vrot.slane %v3844, %v3848
      %v3852 = vsel %vm1585, %v3651, 0
      %v3855 = vsel %vm1585, %v3656, 0
      %v3858 = vsel %vm1585, %v3661, 0
      %v3861 = vsel %vm1585, %v3666, 0
      %v3864 = vsel %vm1585, %v3671, 0
      %v3867 = vsel %vm1585, %v3676, 0
      %v3870 = vsel %vm1585, %v3681, 0
      %v3873 = vsel %vm1585, %v3686, 0
      %v3876 = vsel %vm1585, %v3691, 0
      %v3879 = vsel %vm1585, %v3696, 0
      %v3882 = vsel %vm1585, %v3701, 0
      %v3885 = vsel %vm1585, %v3706, 0
      %v3888 = vsel %vm1585, %v3711, 0
      %v3891 = vsel %vm1585, %v3716, 0
      %v3894 = vsel %vm1585, %v3721, 0
      %v3897 = vsel %vm1585, %v3726, 0
      %v3900 = vsel %vm1585, %v3731, 0
      %v3903 = vsel %vm1585, %v3736, 0
      %v3906 = vsel %vm1585, %v3741, 0
      %v3909 = vsel %vm1585, %v3746, 0
      %v3912 = vsel %vm1585, %v3751, 0
      %v3915 = vsel %vm1585, %v3756, 0
      %v3918 = vsel %vm1585, %v3761, 0
      %v3921 = vsel %vm1585, %v3766, 0
      %v3924 = vsel %vm1585, %v3771, 0
      %v3927 = vsel %vm1585, %v3776, 0
      %v3930 = vsel %vm1585, %v3781, 0
      %v3933 = vsel %vm1585, %v3786, 0
      %v3936 = vsel %vm1585, %v3791, 0
      %v3939 = vsel %vm1585, %v3796, 0
      %v3942 = vsel %vm1585, %v3801, 0
      %v3945 = vsel %vm1585, %v3806, 0
      %3947 = vmatprep.subr.mxu0 0.0
      %3948 = vmatpush1.msra.mxu0 %v3842
      %3949 = vmatprep.subr.mxu0 0.0
      %3950 = vmatpush1.msra.mxu0 %v3843
      %3951 = vmatprep.subr.mxu0 0.0
      %3952 = vmatpush1.msra.mxu0 0.0
      %3953 = vmatprep.subr.mxu0 0.0
      %3954 = vmatpush1.msra.mxu0 0.0
      %3955 = vmatprep.subr.mxu0 0.0
      %3956 = vmatpush1.msra.mxu0 0.0
      %3957 = vmatprep.subr.mxu0 0.0
      %3958 = vmatpush1.msra.mxu0 0.0
      %3959 = vmatprep.subr.mxu0 0.0
      %3960 = vmatpush1.msra.mxu0 0.0
      %3961 = vmatprep.subr.mxu0 0.0
      %3962 = vmatpush1.msra.mxu0 0.0
      %3963 = vmatprep.subr.mxu0 0.0
      %3964 = vmatpush1.msra.mxu0 0.0
      %3965 = vmatprep.subr.mxu0 0.0
      %3966 = vmatpush1.msra.mxu0 0.0
      %3967 = vmatprep.subr.mxu0 0.0
      %3968 = vmatpush1.msra.mxu0 0.0
      %3969 = vmatprep.subr.mxu0 0.0
      %3970 = vmatpush1.msra.mxu0 0.0
      %3971 = vmatprep.subr.mxu0 0.0
      %3972 = vmatpush1.msra.mxu0 0.0
      %3973 = vmatprep.subr.mxu0 0.0
      %3974 = vmatpush1.msra.mxu0 0.0
      %3975 = vmatprep.subr.mxu0 0.0
      %3976 = vmatpush1.msra.mxu0 0.0
      %3977 = vmatprep.subr.mxu0 0.0
      %3978 = vmatpush1.msra.mxu0 0.0
      %3979 = vmatprep.subr.mxu0 0.0
      %3980 = vmatpush1.msra.mxu0 0.0
      %3981 = vmatprep.subr.mxu0 0.0
      %3982 = vmatpush1.msra.mxu0 0.0
      %3983 = vmatprep.subr.mxu0 0.0
      %3984 = vmatpush1.msra.mxu0 0.0
      %3985 = vmatprep.subr.mxu0 0.0
      %3986 = vmatpush1.msra.mxu0 0.0
      %3987 = vmatprep.subr.mxu0 0.0
      %3988 = vmatpush1.msra.mxu0 0.0
      %3989 = vmatprep.subr.mxu0 0.0
      %3990 = vmatpush1.msra.mxu0 0.0
      %3991 = vmatprep.subr.mxu0 0.0
      %3992 = vmatpush1.msra.mxu0 0.0
      %3993 = vmatprep.subr.mxu0 0.0
      %3994 = vmatpush1.msra.mxu0 0.0
      %3995 = vmatprep.subr.mxu0 0.0
      %3996 = vmatpush1.msra.mxu0 0.0
      %3997 = vmatprep.subr.mxu0 0.0
      %3998 = vmatpush1.msra.mxu0 0.0
      %3999 = vmatprep.subr.mxu0 0.0
      %4000 = vmatpush1.msra.mxu0 0.0
      %4001 = vmatprep.subr.mxu0 0.0
      %4002 = vmatpush1.msra.mxu0 0.0
      %4003 = vmatprep.subr.mxu0 0.0
      %4004 = vmatpush1.msra.mxu0 0.0
      %4005 = vmatprep.subr.mxu0 0.0
      %4006 = vmatpush1.msra.mxu0 0.0
      %4007 = vmatprep.subr.mxu0 0.0
      %4008 = vmatpush1.msra.mxu0 0.0
      %4009 = vmatprep.subr.mxu0 0.0
      %4010 = vmatpush1.msra.mxu0 0.0
      %4011 = vmatprep.mubr.f32.mxu0 0.0
      %4012 = vmatmul.mubr.f32.gmra.mrb[0].mxu0 %v3852
      %v4013 = vpop.f32.mrb[0].mxu0
      %v4014 = vadd.f32 %v3849, %v4013
      %v4015 = vpop.f32.mrb[0].mxu0
      %4016 = vmatprep.mubr.f32.mxu0 0.0
      %4017 = vmatmul.mubr.f32.gmra.mrb[0].mxu0 %v3855
      %v4018 = vpop.f32.mrb[0].mxu0
      %v4019 = vadd.f32 %v3849, %v4018
      %v4020 = vpop.f32.mrb[0].mxu0
      %4021 = vmatprep.mubr.f32.mxu0 0.0
      %4022 = vmatmul.mubr.f32.gmra.mrb[0].mxu0 %v3858
      %v4023 = vpop.f32.mrb[0].mxu0
      %v4024 = vadd.f32 %v3849, %v4023
      %v4025 = vpop.f32.mrb[0].mxu0
      %4026 = vmatprep.mubr.f32.mxu0 0.0
      %4027 = vmatmul.mubr.f32.gmra.mrb[0].mxu0 %v3861
      %v4028 = vpop.f32.mrb[0].mxu0
      %v4029 = vadd.f32 %v3849, %v4028
      %v4030 = vpop.f32.mrb[0].mxu0
      %4031 = vmatprep.mubr.f32.mxu0 0.0
      %4032 = vmatmul.mubr.f32.gmra.mrb[0].mxu0 %v3864
      %v4033 = vpop.f32.mrb[0].mxu0
      %v4034 = vadd.f32 %v3849, %v4033
      %v4035 = vpop.f32.mrb[0].mxu0
      %4036 = vmatprep.mubr.f32.mxu0 0.0
      %4037 = vmatmul.mubr.f32.gmra.mrb[0].mxu0 %v3867
      %v4038 = vpop.f32.mrb[0].mxu0
      %v4039 = vadd.f32 %v3849, %v4038
      %v4040 = vpop.f32.mrb[0].mxu0
      %4041 = vmatprep.mubr.f32.mxu0 0.0
      %4042 = vmatmul.mubr.f32.gmra.mrb[0].mxu0 %v3870
      %v4043 = vpop.f32.mrb[0].mxu0
      %v4044 = vadd.f32 %v3849, %v4043
      %v4045 = vpop.f32.mrb[0].mxu0
      %4046 = vmatprep.mubr.f32.mxu0 0.0
      %4047 = vmatmul.mubr.f32.gmra.mrb[0].mxu0 %v3873
      %v4048 = vpop.f32.mrb[0].mxu0
      %v4049 = vadd.f32 %v3849, %v4048
      %v4050 = vpop.f32.mrb[0].mxu0
      %4051 = vmatprep.mubr.f32.mxu0 0.0
      %4052 = vmatmul.mubr.f32.gmra.mrb[0].mxu0 %v3876
      %v4053 = vpop.f32.mrb[0].mxu0
      %v4054 = vadd.f32 %v3849, %v4053
      %v4055 = vpop.f32.mrb[0].mxu0
      %4056 = vmatprep.mubr.f32.mxu0 0.0
      %4057 = vmatmul.mubr.f32.gmra.mrb[0].mxu0 %v3879
      %v4058 = vpop.f32.mrb[0].mxu0
      %v4059 = vadd.f32 %v3849, %v4058
      %v4060 = vpop.f32.mrb[0].mxu0
      %4061 = vmatprep.mubr.f32.mxu0 0.0
      %4062 = vmatmul.mubr.f32.gmra.mrb[0].mxu0 %v3882
      %v4063 = vpop.f32.mrb[0].mxu0
      %v4064 = vadd.f32 %v3849, %v4063
      %v4065 = vpop.f32.mrb[0].mxu0
      %4066 = vmatprep.mubr.f32.mxu0 0.0
      %4067 = vmatmul.mubr.f32.gmra.mrb[0].mxu0 %v3885
      %v4068 = vpop.f32.mrb[0].mxu0
      %v4069 = vadd.f32 %v3849, %v4068
      %v4070 = vpop.f32.mrb[0].mxu0
      %4071 = vmatprep.mubr.f32.mxu0 0.0
      %4072 = vmatmul.mubr.f32.gmra.mrb[0].mxu0 %v3888
      %v4073 = vpop.f32.mrb[0].mxu0
      %v4074 = vadd.f32 %v3849, %v4073
      %v4075 = vpop.f32.mrb[0].mxu0
      %4076 = vmatprep.mubr.f32.mxu0 0.0
      %4077 = vmatmul.mubr.f32.gmra.mrb[0].mxu0 %v3891
      %v4078 = vpop.f32.mrb[0].mxu0
      %v4079 = vadd.f32 %v3849, %v4078
      %v4080 = vpop.f32.mrb[0].mxu0
      %4081 = vmatprep.mubr.f32.mxu0 0.0
      %4082 = vmatmul.mubr.f32.gmra.mrb[0].mxu0 %v3894
      %v4083 = vpop.f32.mrb[0].mxu0
      %v4084 = vadd.f32 %v3849, %v4083
      %v4085 = vpop.f32.mrb[0].mxu0
      %4086 = vmatprep.mubr.f32.mxu0 0.0
      %4087 = vmatmul.mubr.f32.gmra.mrb[0].mxu0 %v3897
      %v4088 = vpop.f32.mrb[0].mxu0
      %v4089 = vadd.f32 %v3849, %v4088
      %v4090 = vpop.f32.mrb[0].mxu0
      %4091 = vmatprep.mubr.f32.mxu0 0.0
      %4092 = vmatmul.mubr.f32.gmra.mrb[0].mxu0 %v3900
      %v4093 = vpop.f32.mrb[0].mxu0
      %v4094 = vadd.f32 %v3849, %v4093
      %v4095 = vpop.f32.mrb[0].mxu0
      %4096 = vmatprep.mubr.f32.mxu0 0.0
      %4097 = vmatmul.mubr.f32.gmra.mrb[0].mxu0 %v3903
      %v4098 = vpop.f32.mrb[0].mxu0
      %v4099 = vadd.f32 %v3849, %v4098
      %v4100 = vpop.f32.mrb[0].mxu0
      %4101 = vmatprep.mubr.f32.mxu0 0.0
      %4102 = vmatmul.mubr.f32.gmra.mrb[0].mxu0 %v3906
      %v4103 = vpop.f32.mrb[0].mxu0
      %v4104 = vadd.f32 %v3849, %v4103
      %v4105 = vpop.f32.mrb[0].mxu0
      %4106 = vmatprep.mubr.f32.mxu0 0.0
      %4107 = vmatmul.mubr.f32.gmra.mrb[0].mxu0 %v3909
      %v4108 = vpop.f32.mrb[0].mxu0
      %v4109 = vadd.f32 %v3849, %v4108
      %v4110 = vpop.f32.mrb[0].mxu0
      %4111 = vmatprep.mubr.f32.mxu0 0.0
      %4112 = vmatmul.mubr.f32.gmra.mrb[0].mxu0 %v3912
      %v4113 = vpop.f32.mrb[0].mxu0
      %v4114 = vadd.f32 %v3849, %v4113
      %v4115 = vpop.f32.mrb[0].mxu0
      %4116 = vmatprep.mubr.f32.mxu0 0.0
      %4117 = vmatmul.mubr.f32.gmra.mrb[0].mxu0 %v3915
      %v4118 = vpop.f32.mrb[0].mxu0
      %v4119 = vadd.f32 %v3849, %v4118
      %v4120 = vpop.f32.mrb[0].mxu0
      %4121 = vmatprep.mubr.f32.mxu0 0.0
      %4122 = vmatmul.mubr.f32.gmra.mrb[0].mxu0 %v3918
      %v4123 = vpop.f32.mrb[0].mxu0
      %v4124 = vadd.f32 %v3849, %v4123
      %v4125 = vpop.f32.mrb[0].mxu0
      %4126 = vmatprep.mubr.f32.mxu0 0.0
      %4127 = vmatmul.mubr.f32.gmra.mrb[0].mxu0 %v3921
      %v4128 = vpop.f32.mrb[0].mxu0
      %v4129 = vadd.f32 %v3849, %v4128
      %v4130 = vpop.f32.mrb[0].mxu0
      %4131 = vmatprep.mubr.f32.mxu0 0.0
      %4132 = vmatmul.mubr.f32.gmra.mrb[0].mxu0 %v3924
      %v4133 = vpop.f32.mrb[0].mxu0
      %v4134 = vadd.f32 %v3849, %v4133
      %v4135 = vpop.f32.mrb[0].mxu0
      %4136 = vmatprep.mubr.f32.mxu0 0.0
      %4137 = vmatmul.mubr.f32.gmra.mrb[0].mxu0 %v3927
      %v4138 = vpop.f32.mrb[0].mxu0
      %v4139 = vadd.f32 %v3849, %v4138
      %v4140 = vpop.f32.mrb[0].mxu0
      %4141 = vmatprep.mubr.f32.mxu0 0.0
      %4142 = vmatmul.mubr.f32.gmra.mrb[0].mxu0 %v3930
      %v4143 = vpop.f32.mrb[0].mxu0
      %v4144 = vadd.f32 %v3849, %v4143
      %v4145 = vpop.f32.mrb[0].mxu0
      %4146 = vmatprep.mubr.f32.mxu0 0.0
      %4147 = vmatmul.mubr.f32.gmra.mrb[0].mxu0 %v3933
      %v4148 = vpop.f32.mrb[0].mxu0
      %v4149 = vadd.f32 %v3849, %v4148
      %v4150 = vpop.f32.mrb[0].mxu0
      %4151 = vmatprep.mubr.f32.mxu0 0.0
      %4152 = vmatmul.mubr.f32.gmra.mrb[0].mxu0 %v3936
      %v4153 = vpop.f32.mrb[0].mxu0
      %v4154 = vadd.f32 %v3849, %v4153
      %v4155 = vpop.f32.mrb[0].mxu0
      %4156 = vmatprep.mubr.f32.mxu0 0.0
      %4157 = vmatmul.mubr.f32.gmra.mrb[0].mxu0 %v3939
      %v4158 = vpop.f32.mrb[0].mxu0
      %v4159 = vadd.f32 %v3849, %v4158
      %v4160 = vpop.f32.mrb[0].mxu0
      %4161 = vmatprep.mubr.f32.mxu0 0.0
      %4162 = vmatmul.mubr.f32.gmra.mrb[0].mxu0 %v3942
      %v4163 = vpop.f32.mrb[0].mxu0
      %v4164 = vadd.f32 %v3849, %v4163
      %v4165 = vpop.f32.mrb[0].mxu0
      %4166 = vmatprep.mubr.f32.mxu0 0.0
      %4167 = vmatmul.mubr.f32.gmra.mrb[0].mxu0 %v3945
      %v4168 = vpop.f32.mrb[0].mxu0
      %v4169 = vadd.f32 %v3849, %v4168
      %v4170 = vpop.f32.mrb[0].mxu0
      %4171 = vdwg.mxu0
      %v4172 = vmax.f32 %v4014, 0.0
      %v4173 = vmax.f32 %v4019, 0.0
      %v4174 = vmax.f32 %v4024, 0.0
      %v4175 = vmax.f32 %v4029, 0.0
      %v4176 = vmax.f32 %v4034, 0.0
      %v4177 = vmax.f32 %v4039, 0.0
      %v4178 = vmax.f32 %v4044, 0.0
      %v4179 = vmax.f32 %v4049, 0.0
      %v4180 = vmax.f32 %v4054, 0.0
      %v4181 = vmax.f32 %v4059, 0.0
      %v4182 = vmax.f32 %v4064, 0.0
      %v4183 = vmax.f32 %v4069, 0.0
      %v4184 = vmax.f32 %v4074, 0.0
      %v4185 = vmax.f32 %v4079, 0.0
      %v4186 = vmax.f32 %v4084, 0.0
      %v4187 = vmax.f32 %v4089, 0.0
      %v4188 = vmax.f32 %v4094, 0.0
      %v4189 = vmax.f32 %v4099, 0.0
      %v4190 = vmax.f32 %v4104, 0.0
      %v4191 = vmax.f32 %v4109, 0.0
      %v4192 = vmax.f32 %v4114, 0.0
      %v4193 = vmax.f32 %v4119, 0.0
      %v4194 = vmax.f32 %v4124, 0.0
      %v4195 = vmax.f32 %v4129, 0.0
      %v4196 = vmax.f32 %v4134, 0.0
      %v4197 = vmax.f32 %v4139, 0.0
      %v4198 = vmax.f32 %v4144, 0.0
      %v4199 = vmax.f32 %v4149, 0.0
      %v4200 = vmax.f32 %v4154, 0.0
      %v4201 = vmax.f32 %v4159, 0.0
      %v4202 = vmax.f32 %v4164, 0.0
      %v4203 = vmax.f32 %v4169, 0.0
      %v4204 = vld [vmem:[%s9] sm:$0xff]
      %v4205 = vld [vmem:[%s9 + $0x8] sm:$0xff]
      %v4206 = vld [vmem:[%s9 + $0x10] sm:$0xff]
      %v4207 = vld [vmem:[%s9 + $0x18] sm:$0xff]
      %v4208 = vld [vmem:[%s10] sm:$0x1]
      %v4210 = vlaneseq
      %v4211 = vshrl.u32 %v4210, 7
      %v4212 = vsub.s32 0, %v4211
      %v4213 = vrot.slane %v4208, %v4212
      %v4216 = vsel %vm1263, %v4172, 0
      %v4219 = vsel %vm1263, %v4173, 0
      %v4222 = vsel %vm1263, %v4174, 0
      %v4225 = vsel %vm1263, %v4175, 0
      %v4228 = vsel %vm1263, %v4176, 0
      %v4231 = vsel %vm1263, %v4177, 0
      %v4234 = vsel %vm1263, %v4178, 0
      %v4237 = vsel %vm1263, %v4179, 0
      %v4240 = vsel %vm1263, %v4180, 0
      %v4243 = vsel %vm1263, %v4181, 0
      %v4246 = vsel %vm1263, %v4182, 0
      %v4249 = vsel %vm1263, %v4183, 0
      %v4252 = vsel %vm1263, %v4184, 0
      %v4255 = vsel %vm1263, %v4185, 0
      %v4258 = vsel %vm1263, %v4186, 0
      %v4261 = vsel %vm1263, %v4187, 0
      %v4264 = vsel %vm1263, %v4188, 0
      %v4267 = vsel %vm1263, %v4189, 0
      %v4270 = vsel %vm1263, %v4190, 0
      %v4273 = vsel %vm1263, %v4191, 0
      %v4276 = vsel %vm1263, %v4192, 0
      %v4279 = vsel %vm1263, %v4193, 0
      %v4282 = vsel %vm1263, %v4194, 0
      %v4285 = vsel %vm1263, %v4195, 0
      %v4288 = vsel %vm1263, %v4196, 0
      %v4291 = vsel %vm1263, %v4197, 0
      %v4294 = vsel %vm1263, %v4198, 0
      %v4297 = vsel %vm1263, %v4199, 0
      %v4300 = vsel %vm1263, %v4200, 0
      %v4303 = vsel %vm1263, %v4201, 0
      %v4306 = vsel %vm1263, %v4202, 0
      %v4309 = vsel %vm1263, %v4203, 0
      %4311 = vmatprep.subr.mxu0 0.0
      %4312 = vmatpush1.msra.mxu0 %v4204
      %4313 = vmatprep.subr.mxu0 0.0
      %4314 = vmatpush1.msra.mxu0 %v4205
      %4315 = vmatprep.subr.mxu0 0.0
      %4316 = vmatpush1.msra.mxu0 %v4206
      %4317 = vmatprep.subr.mxu0 0.0
      %4318 = vmatpush1.msra.mxu0 %v4207
      %4319 = vmatprep.subr.mxu0 0.0
      %4320 = vmatpush1.msra.mxu0 0.0
      %4321 = vmatprep.subr.mxu0 0.0
      %4322 = vmatpush1.msra.mxu0 0.0
      %4323 = vmatprep.subr.mxu0 0.0
      %4324 = vmatpush1.msra.mxu0 0.0
      %4325 = vmatprep.subr.mxu0 0.0
      %4326 = vmatpush1.msra.mxu0 0.0
      %4327 = vmatprep.subr.mxu0 0.0
      %4328 = vmatpush1.msra.mxu0 0.0
      %4329 = vmatprep.subr.mxu0 0.0
      %4330 = vmatpush1.msra.mxu0 0.0
      %4331 = vmatprep.subr.mxu0 0.0
      %4332 = vmatpush1.msra.mxu0 0.0
      %4333 = vmatprep.subr.mxu0 0.0
      %4334 = vmatpush1.msra.mxu0 0.0
      %4335 = vmatprep.subr.mxu0 0.0
      %4336 = vmatpush1.msra.mxu0 0.0
      %4337 = vmatprep.subr.mxu0 0.0
      %4338 = vmatpush1.msra.mxu0 0.0
      %4339 = vmatprep.subr.mxu0 0.0
      %4340 = vmatpush1.msra.mxu0 0.0
      %4341 = vmatprep.subr.mxu0 0.0
      %4342 = vmatpush1.msra.mxu0 0.0
      %4343 = vmatprep.subr.mxu0 0.0
      %4344 = vmatpush1.msra.mxu0 0.0
      %4345 = vmatprep.subr.mxu0 0.0
      %4346 = vmatpush1.msra.mxu0 0.0
      %4347 = vmatprep.subr.mxu0 0.0
      %4348 = vmatpush1.msra.mxu0 0.0
      %4349 = vmatprep.subr.mxu0 0.0
      %4350 = vmatpush1.msra.mxu0 0.0
      %4351 = vmatprep.subr.mxu0 0.0
      %4352 = vmatpush1.msra.mxu0 0.0
      %4353 = vmatprep.subr.mxu0 0.0
      %4354 = vmatpush1.msra.mxu0 0.0
      %4355 = vmatprep.subr.mxu0 0.0
      %4356 = vmatpush1.msra.mxu0 0.0
      %4357 = vmatprep.subr.mxu0 0.0
      %4358 = vmatpush1.msra.mxu0 0.0
      %4359 = vmatprep.subr.mxu0 0.0
      %4360 = vmatpush1.msra.mxu0 0.0
      %4361 = vmatprep.subr.mxu0 0.0
      %4362 = vmatpush1.msra.mxu0 0.0
      %4363 = vmatprep.subr.mxu0 0.0
      %4364 = vmatpush1.msra.mxu0 0.0
      %4365 = vmatprep.subr.mxu0 0.0
      %4366 = vmatpush1.msra.mxu0 0.0
      %4367 = vmatprep.subr.mxu0 0.0
      %4368 = vmatpush1.msra.mxu0 0.0
      %4369 = vmatprep.subr.mxu0 0.0
      %4370 = vmatpush1.msra.mxu0 0.0
      %4371 = vmatprep.subr.mxu0 0.0
      %4372 = vmatpush1.msra.mxu0 0.0
      %4373 = vmatprep.subr.mxu0 0.0
      %4374 = vmatpush1.msra.mxu0 0.0
      %4375 = vmatprep.mubr.f32.mxu0 0.0
      %4376 = vmatmul.mubr.f32.gmra.mrb[0].mxu0 %v4216
      %v4377 = vpop.f32.mrb[0].mxu0
      %v4378 = vadd.f32 %v4213, %v4377
      %v4379 = vpop.f32.mrb[0].mxu0
      %4380 = vmatprep.mubr.f32.mxu0 0.0
      %4381 = vmatmul.mubr.f32.gmra.mrb[0].mxu0 %v4219
      %v4382 = vpop.f32.mrb[0].mxu0
      %v4383 = vadd.f32 %v4213, %v4382
      %v4384 = vpop.f32.mrb[0].mxu0
      %4385 = vmatprep.mubr.f32.mxu0 0.0
      %4386 = vmatmul.mubr.f32.gmra.mrb[0].mxu0 %v4222
      %v4387 = vpop.f32.mrb[0].mxu0
      %v4388 = vadd.f32 %v4213, %v4387
      %v4389 = vpop.f32.mrb[0].mxu0
      %4390 = vmatprep.mubr.f32.mxu0 0.0
      %4391 = vmatmul.mubr.f32.gmra.mrb[0].mxu0 %v4225
      %v4392 = vpop.f32.mrb[0].mxu0
      %v4393 = vadd.f32 %v4213, %v4392
      %v4394 = vpop.f32.mrb[0].mxu0
      %4395 = vmatprep.mubr.f32.mxu0 0.0
      %4396 = vmatmul.mubr.f32.gmra.mrb[0].mxu0 %v4228
      %v4397 = vpop.f32.mrb[0].mxu0
      %v4398 = vadd.f32 %v4213, %v4397
      %v4399 = vpop.f32.mrb[0].mxu0
      %4400 = vmatprep.mubr.f32.mxu0 0.0
      %4401 = vmatmul.mubr.f32.gmra.mrb[0].mxu0 %v4231
      %v4402 = vpop.f32.mrb[0].mxu0
      %v4403 = vadd.f32 %v4213, %v4402
      %v4404 = vpop.f32.mrb[0].mxu0
      %4405 = vmatprep.mubr.f32.mxu0 0.0
      %4406 = vmatmul.mubr.f32.gmra.mrb[0].mxu0 %v4234
      %v4407 = vpop.f32.mrb[0].mxu0
      %v4408 = vadd.f32 %v4213, %v4407
      %v4409 = vpop.f32.mrb[0].mxu0
      %4410 = vmatprep.mubr.f32.mxu0 0.0
      %4411 = vmatmul.mubr.f32.gmra.mrb[0].mxu0 %v4237
      %v4412 = vpop.f32.mrb[0].mxu0
      %v4413 = vadd.f32 %v4213, %v4412
      %v4414 = vpop.f32.mrb[0].mxu0
      %4415 = vmatprep.mubr.f32.mxu0 0.0
      %4416 = vmatmul.mubr.f32.gmra.mrb[0].mxu0 %v4240
      %v4417 = vpop.f32.mrb[0].mxu0
      %v4418 = vadd.f32 %v4213, %v4417
      %v4419 = vpop.f32.mrb[0].mxu0
      %4420 = vmatprep.mubr.f32.mxu0 0.0
      %4421 = vmatmul.mubr.f32.gmra.mrb[0].mxu0 %v4243
      %v4422 = vpop.f32.mrb[0].mxu0
      %v4423 = vadd.f32 %v4213, %v4422
      %v4424 = vpop.f32.mrb[0].mxu0
      %4425 = vmatprep.mubr.f32.mxu0 0.0
      %4426 = vmatmul.mubr.f32.gmra.mrb[0].mxu0 %v4246
      %v4427 = vpop.f32.mrb[0].mxu0
      %v4428 = vadd.f32 %v4213, %v4427
      %v4429 = vpop.f32.mrb[0].mxu0
      %4430 = vmatprep.mubr.f32.mxu0 0.0
      %4431 = vmatmul.mubr.f32.gmra.mrb[0].mxu0 %v4249
      %v4432 = vpop.f32.mrb[0].mxu0
      %v4433 = vadd.f32 %v4213, %v4432
      %v4434 = vpop.f32.mrb[0].mxu0
      %4435 = vmatprep.mubr.f32.mxu0 0.0
      %4436 = vmatmul.mubr.f32.gmra.mrb[0].mxu0 %v4252
      %v4437 = vpop.f32.mrb[0].mxu0
      %v4438 = vadd.f32 %v4213, %v4437
      %v4439 = vpop.f32.mrb[0].mxu0
      %4440 = vmatprep.mubr.f32.mxu0 0.0
      %4441 = vmatmul.mubr.f32.gmra.mrb[0].mxu0 %v4255
      %v4442 = vpop.f32.mrb[0].mxu0
      %v4443 = vadd.f32 %v4213, %v4442
      %v4444 = vpop.f32.mrb[0].mxu0
      %4445 = vmatprep.mubr.f32.mxu0 0.0
      %4446 = vmatmul.mubr.f32.gmra.mrb[0].mxu0 %v4258
      %v4447 = vpop.f32.mrb[0].mxu0
      %v4448 = vadd.f32 %v4213, %v4447
      %v4449 = vpop.f32.mrb[0].mxu0
      %4450 = vmatprep.mubr.f32.mxu0 0.0
      %4451 = vmatmul.mubr.f32.gmra.mrb[0].mxu0 %v4261
      %v4452 = vpop.f32.mrb[0].mxu0
      %v4453 = vadd.f32 %v4213, %v4452
      %v4454 = vpop.f32.mrb[0].mxu0
      %4455 = vmatprep.mubr.f32.mxu0 0.0
      %4456 = vmatmul.mubr.f32.gmra.mrb[0].mxu0 %v4264
      %v4457 = vpop.f32.mrb[0].mxu0
      %v4458 = vadd.f32 %v4213, %v4457
      %v4459 = vpop.f32.mrb[0].mxu0
      %4460 = vmatprep.mubr.f32.mxu0 0.0
      %4461 = vmatmul.mubr.f32.gmra.mrb[0].mxu0 %v4267
      %v4462 = vpop.f32.mrb[0].mxu0
      %v4463 = vadd.f32 %v4213, %v4462
      %v4464 = vpop.f32.mrb[0].mxu0
      %4465 = vmatprep.mubr.f32.mxu0 0.0
      %4466 = vmatmul.mubr.f32.gmra.mrb[0].mxu0 %v4270
      %v4467 = vpop.f32.mrb[0].mxu0
      %v4468 = vadd.f32 %v4213, %v4467
      %v4469 = vpop.f32.mrb[0].mxu0
      %4470 = vmatprep.mubr.f32.mxu0 0.0
      %4471 = vmatmul.mubr.f32.gmra.mrb[0].mxu0 %v4273
      %v4472 = vpop.f32.mrb[0].mxu0
      %v4473 = vadd.f32 %v4213, %v4472
      %v4474 = vpop.f32.mrb[0].mxu0
      %4475 = vmatprep.mubr.f32.mxu0 0.0
      %4476 = vmatmul.mubr.f32.gmra.mrb[0].mxu0 %v4276
      %v4477 = vpop.f32.mrb[0].mxu0
      %v4478 = vadd.f32 %v4213, %v4477
      %v4479 = vpop.f32.mrb[0].mxu0
      %4480 = vmatprep.mubr.f32.mxu0 0.0
      %4481 = vmatmul.mubr.f32.gmra.mrb[0].mxu0 %v4279
      %v4482 = vpop.f32.mrb[0].mxu0
      %v4483 = vadd.f32 %v4213, %v4482
      %v4484 = vpop.f32.mrb[0].mxu0
      %4485 = vmatprep.mubr.f32.mxu0 0.0
      %4486 = vmatmul.mubr.f32.gmra.mrb[0].mxu0 %v4282
      %v4487 = vpop.f32.mrb[0].mxu0
      %v4488 = vadd.f32 %v4213, %v4487
      %v4489 = vpop.f32.mrb[0].mxu0
      %4490 = vmatprep.mubr.f32.mxu0 0.0
      %4491 = vmatmul.mubr.f32.gmra.mrb[0].mxu0 %v4285
      %v4492 = vpop.f32.mrb[0].mxu0
      %v4493 = vadd.f32 %v4213, %v4492
      %v4494 = vpop.f32.mrb[0].mxu0
      %4495 = vmatprep.mubr.f32.mxu0 0.0
      %4496 = vmatmul.mubr.f32.gmra.mrb[0].mxu0 %v4288
      %v4497 = vpop.f32.mrb[0].mxu0
      %v4498 = vadd.f32 %v4213, %v4497
      %v4499 = vpop.f32.mrb[0].mxu0
      %4500 = vmatprep.mubr.f32.mxu0 0.0
      %4501 = vmatmul.mubr.f32.gmra.mrb[0].mxu0 %v4291
      %v4502 = vpop.f32.mrb[0].mxu0
      %v4503 = vadd.f32 %v4213, %v4502
      %v4504 = vpop.f32.mrb[0].mxu0
      %4505 = vmatprep.mubr.f32.mxu0 0.0
      %4506 = vmatmul.mubr.f32.gmra.mrb[0].mxu0 %v4294
      %v4507 = vpop.f32.mrb[0].mxu0
      %v4508 = vadd.f32 %v4213, %v4507
      %v4509 = vpop.f32.mrb[0].mxu0
      %4510 = vmatprep.mubr.f32.mxu0 0.0
      %4511 = vmatmul.mubr.f32.gmra.mrb[0].mxu0 %v4297
      %v4512 = vpop.f32.mrb[0].mxu0
      %v4513 = vadd.f32 %v4213, %v4512
      %v4514 = vpop.f32.mrb[0].mxu0
      %4515 = vmatprep.mubr.f32.mxu0 0.0
      %4516 = vmatmul.mubr.f32.gmra.mrb[0].mxu0 %v4300
      %v4517 = vpop.f32.mrb[0].mxu0
      %v4518 = vadd.f32 %v4213, %v4517
      %v4519 = vpop.f32.mrb[0].mxu0
      %4520 = vmatprep.mubr.f32.mxu0 0.0
      %4521 = vmatmul.mubr.f32.gmra.mrb[0].mxu0 %v4303
      %v4522 = vpop.f32.mrb[0].mxu0
      %v4523 = vadd.f32 %v4213, %v4522
      %v4524 = vpop.f32.mrb[0].mxu0
      %4525 = vmatprep.mubr.f32.mxu0 0.0
      %4526 = vmatmul.mubr.f32.gmra.mrb[0].mxu0 %v4306
      %v4527 = vpop.f32.mrb[0].mxu0
      %v4528 = vadd.f32 %v4213, %v4527
      %v4529 = vpop.f32.mrb[0].mxu0
      %4530 = vmatprep.mubr.f32.mxu0 0.0
      %4531 = vmatmul.mubr.f32.gmra.mrb[0].mxu0 %v4309
      %v4532 = vpop.f32.mrb[0].mxu0
      %v4533 = vadd.f32 %v4213, %v4532
      %v4534 = vpop.f32.mrb[0].mxu0
      %4535 = vdwg.mxu0
      %v4536 = vmax.f32 %v4378, 0.0
      %v4537 = vmax.f32 %v4383, 0.0
      %v4538 = vmax.f32 %v4388, 0.0
      %v4539 = vmax.f32 %v4393, 0.0
      %v4540 = vmax.f32 %v4398, 0.0
      %v4541 = vmax.f32 %v4403, 0.0
      %v4542 = vmax.f32 %v4408, 0.0
      %v4543 = vmax.f32 %v4413, 0.0
      %v4544 = vmax.f32 %v4418, 0.0
      %v4545 = vmax.f32 %v4423, 0.0
      %v4546 = vmax.f32 %v4428, 0.0
      %v4547 = vmax.f32 %v4433, 0.0
      %v4548 = vmax.f32 %v4438, 0.0
      %v4549 = vmax.f32 %v4443, 0.0
      %v4550 = vmax.f32 %v4448, 0.0
      %v4551 = vmax.f32 %v4453, 0.0
      %v4552 = vmax.f32 %v4458, 0.0
      %v4553 = vmax.f32 %v4463, 0.0
      %v4554 = vmax.f32 %v4468, 0.0
      %v4555 = vmax.f32 %v4473, 0.0
      %v4556 = vmax.f32 %v4478, 0.0
      %v4557 = vmax.f32 %v4483, 0.0
      %v4558 = vmax.f32 %v4488, 0.0
      %v4559 = vmax.f32 %v4493, 0.0
      %v4560 = vmax.f32 %v4498, 0.0
      %v4561 = vmax.f32 %v4503, 0.0
      %v4562 = vmax.f32 %v4508, 0.0
      %v4563 = vmax.f32 %v4513, 0.0
      %v4564 = vmax.f32 %v4518, 0.0
      %v4565 = vmax.f32 %v4523, 0.0
      %v4566 = vmax.f32 %v4528, 0.0
      %v4567 = vmax.f32 %v4533, 0.0
      %v4568 = vld [vmem:[%s11] sm:$0xff]
      %v4569 = vld [vmem:[%s11 + $0x8] sm:$0xff]
      %v4570 = vld [vmem:[%s11 + $0x10] sm:$0xff]
      %v4571 = vld [vmem:[%s11 + $0x18] sm:$0xff]
      %v4572 = vld [vmem:[%s11 + $0x20] sm:$0xff]
      %v4573 = vld [vmem:[%s11 + $0x28] sm:$0xff]
      %v4574 = vld [vmem:[%s11 + $0x30] sm:$0xff]
      %v4575 = vld [vmem:[%s11 + $0x38] sm:$0xff]
      %v4576 = vld [vmem:[%s12] sm:$0x1]
      %v4578 = vlaneseq
      %v4579 = vshrl.u32 %v4578, 7
      %v4580 = vsub.s32 0, %v4579
      %v4581 = vrot.slane %v4576, %v4580
      %v4584 = vsel %vm898, %v4536, 0
      %v4587 = vsel %vm898, %v4537, 0
      %v4590 = vsel %vm898, %v4538, 0
      %v4593 = vsel %vm898, %v4539, 0
      %v4596 = vsel %vm898, %v4540, 0
      %v4599 = vsel %vm898, %v4541, 0
      %v4602 = vsel %vm898, %v4542, 0
      %v4605 = vsel %vm898, %v4543, 0
      %v4608 = vsel %vm898, %v4544, 0
      %v4611 = vsel %vm898, %v4545, 0
      %v4614 = vsel %vm898, %v4546, 0
      %v4617 = vsel %vm898, %v4547, 0
      %v4620 = vsel %vm898, %v4548, 0
      %v4623 = vsel %vm898, %v4549, 0
      %v4626 = vsel %vm898, %v4550, 0
      %v4629 = vsel %vm898, %v4551, 0
      %v4632 = vsel %vm898, %v4552, 0
      %v4635 = vsel %vm898, %v4553, 0
      %v4638 = vsel %vm898, %v4554, 0
      %v4641 = vsel %vm898, %v4555, 0
      %v4644 = vsel %vm898, %v4556, 0
      %v4647 = vsel %vm898, %v4557, 0
      %v4650 = vsel %vm898, %v4558, 0
      %v4653 = vsel %vm898, %v4559, 0
      %v4656 = vsel %vm898, %v4560, 0
      %v4659 = vsel %vm898, %v4561, 0
      %v4662 = vsel %vm898, %v4562, 0
      %v4665 = vsel %vm898, %v4563, 0
      %v4668 = vsel %vm898, %v4564, 0
      %v4671 = vsel %vm898, %v4565, 0
      %v4674 = vsel %vm898, %v4566, 0
      %v4677 = vsel %vm898, %v4567, 0
      %4679 = vmatprep.subr.mxu0 0.0
      %4680 = vmatpush1.msra.mxu0 %v4568
      %4681 = vmatprep.subr.mxu0 0.0
      %4682 = vmatpush1.msra.mxu0 %v4569
      %4683 = vmatprep.subr.mxu0 0.0
      %4684 = vmatpush1.msra.mxu0 %v4570
      %4685 = vmatprep.subr.mxu0 0.0
      %4686 = vmatpush1.msra.mxu0 %v4571
      %4687 = vmatprep.subr.mxu0 0.0
      %4688 = vmatpush1.msra.mxu0 %v4572
      %4689 = vmatprep.subr.mxu0 0.0
      %4690 = vmatpush1.msra.mxu0 %v4573
      %4691 = vmatprep.subr.mxu0 0.0
      %4692 = vmatpush1.msra.mxu0 %v4574
      %4693 = vmatprep.subr.mxu0 0.0
      %4694 = vmatpush1.msra.mxu0 %v4575
      %4695 = vmatprep.subr.mxu0 0.0
      %4696 = vmatpush1.msra.mxu0 0.0
      %4697 = vmatprep.subr.mxu0 0.0
      %4698 = vmatpush1.msra.mxu0 0.0
      %4699 = vmatprep.subr.mxu0 0.0
      %4700 = vmatpush1.msra.mxu0 0.0
      %4701 = vmatprep.subr.mxu0 0.0
      %4702 = vmatpush1.msra.mxu0 0.0
      %4703 = vmatprep.subr.mxu0 0.0
      %4704 = vmatpush1.msra.mxu0 0.0
      %4705 = vmatprep.subr.mxu0 0.0
      %4706 = vmatpush1.msra.mxu0 0.0
      %4707 = vmatprep.subr.mxu0 0.0
      %4708 = vmatpush1.msra.mxu0 0.0
      %4709 = vmatprep.subr.mxu0 0.0
      %4710 = vmatpush1.msra.mxu0 0.0
      %4711 = vmatprep.subr.mxu0 0.0
      %4712 = vmatpush1.msra.mxu0 0.0
      %4713 = vmatprep.subr.mxu0 0.0
      %4714 = vmatpush1.msra.mxu0 0.0
      %4715 = vmatprep.subr.mxu0 0.0
      %4716 = vmatpush1.msra.mxu0 0.0
      %4717 = vmatprep.subr.mxu0 0.0
      %4718 = vmatpush1.msra.mxu0 0.0
      %4719 = vmatprep.subr.mxu0 0.0
      %4720 = vmatpush1.msra.mxu0 0.0
      %4721 = vmatprep.subr.mxu0 0.0
      %4722 = vmatpush1.msra.mxu0 0.0
      %4723 = vmatprep.subr.mxu0 0.0
      %4724 = vmatpush1.msra.mxu0 0.0
      %4725 = vmatprep.subr.mxu0 0.0
      %4726 = vmatpush1.msra.mxu0 0.0
      %4727 = vmatprep.subr.mxu0 0.0
      %4728 = vmatpush1.msra.mxu0 0.0
      %4729 = vmatprep.subr.mxu0 0.0
      %4730 = vmatpush1.msra.mxu0 0.0
      %4731 = vmatprep.subr.mxu0 0.0
      %4732 = vmatpush1.msra.mxu0 0.0
      %4733 = vmatprep.subr.mxu0 0.0
      %4734 = vmatpush1.msra.mxu0 0.0
      %4735 = vmatprep.subr.mxu0 0.0
      %4736 = vmatpush1.msra.mxu0 0.0
      %4737 = vmatprep.subr.mxu0 0.0
      %4738 = vmatpush1.msra.mxu0 0.0
      %4739 = vmatprep.subr.mxu0 0.0
      %4740 = vmatpush1.msra.mxu0 0.0
      %4741 = vmatprep.subr.mxu0 0.0
      %4742 = vmatpush1.msra.mxu0 0.0
      %4743 = vmatprep.mubr.f32.mxu0 0.0
      %4744 = vmatmul.mubr.f32.gmra.mrb[0].mxu0 %v4584
      %v4745 = vpop.f32.mrb[0].mxu0
      %v4746 = vadd.f32 %v4581, %v4745
      %v4747 = vpop.f32.mrb[0].mxu0
      %4748 = vmatprep.mubr.f32.mxu0 0.0
      %4749 = vmatmul.mubr.f32.gmra.mrb[0].mxu0 %v4587
      %v4750 = vpop.f32.mrb[0].mxu0
      %v4751 = vadd.f32 %v4581, %v4750
      %v4752 = vpop.f32.mrb[0].mxu0
      %4753 = vmatprep.mubr.f32.mxu0 0.0
      %4754 = vmatmul.mubr.f32.gmra.mrb[0].mxu0 %v4590
      %v4755 = vpop.f32.mrb[0].mxu0
      %v4756 = vadd.f32 %v4581, %v4755
      %v4757 = vpop.f32.mrb[0].mxu0
      %4758 = vmatprep.mubr.f32.mxu0 0.0
      %4759 = vmatmul.mubr.f32.gmra.mrb[0].mxu0 %v4593
      %v4760 = vpop.f32.mrb[0].mxu0
      %v4761 = vadd.f32 %v4581, %v4760
      %v4762 = vpop.f32.mrb[0].mxu0
      %4763 = vmatprep.mubr.f32.mxu0 0.0
      %4764 = vmatmul.mubr.f32.gmra.mrb[0].mxu0 %v4596
      %v4765 = vpop.f32.mrb[0].mxu0
      %v4766 = vadd.f32 %v4581, %v4765
      %v4767 = vpop.f32.mrb[0].mxu0
      %4768 = vmatprep.mubr.f32.mxu0 0.0
      %4769 = vmatmul.mubr.f32.gmra.mrb[0].mxu0 %v4599
      %v4770 = vpop.f32.mrb[0].mxu0
      %v4771 = vadd.f32 %v4581, %v4770
      %v4772 = vpop.f32.mrb[0].mxu0
      %4773 = vmatprep.mubr.f32.mxu0 0.0
      %4774 = vmatmul.mubr.f32.gmra.mrb[0].mxu0 %v4602
      %v4775 = vpop.f32.mrb[0].mxu0
      %v4776 = vadd.f32 %v4581, %v4775
      %v4777 = vpop.f32.mrb[0].mxu0
      %4778 = vmatprep.mubr.f32.mxu0 0.0
      %4779 = vmatmul.mubr.f32.gmra.mrb[0].mxu0 %v4605
      %v4780 = vpop.f32.mrb[0].mxu0
      %v4781 = vadd.f32 %v4581, %v4780
      %v4782 = vpop.f32.mrb[0].mxu0
      %4783 = vmatprep.mubr.f32.mxu0 0.0
      %4784 = vmatmul.mubr.f32.gmra.mrb[0].mxu0 %v4608
      %v4785 = vpop.f32.mrb[0].mxu0
      %v4786 = vadd.f32 %v4581, %v4785
      %v4787 = vpop.f32.mrb[0].mxu0
      %4788 = vmatprep.mubr.f32.mxu0 0.0
      %4789 = vmatmul.mubr.f32.gmra.mrb[0].mxu0 %v4611
      %v4790 = vpop.f32.mrb[0].mxu0
      %v4791 = vadd.f32 %v4581, %v4790
      %v4792 = vpop.f32.mrb[0].mxu0
      %4793 = vmatprep.mubr.f32.mxu0 0.0
      %4794 = vmatmul.mubr.f32.gmra.mrb[0].mxu0 %v4614
      %v4795 = vpop.f32.mrb[0].mxu0
      %v4796 = vadd.f32 %v4581, %v4795
      %v4797 = vpop.f32.mrb[0].mxu0
      %4798 = vmatprep.mubr.f32.mxu0 0.0
      %4799 = vmatmul.mubr.f32.gmra.mrb[0].mxu0 %v4617
      %v4800 = vpop.f32.mrb[0].mxu0
      %v4801 = vadd.f32 %v4581, %v4800
      %v4802 = vpop.f32.mrb[0].mxu0
      %4803 = vmatprep.mubr.f32.mxu0 0.0
      %4804 = vmatmul.mubr.f32.gmra.mrb[0].mxu0 %v4620
      %v4805 = vpop.f32.mrb[0].mxu0
      %v4806 = vadd.f32 %v4581, %v4805
      %v4807 = vpop.f32.mrb[0].mxu0
      %4808 = vmatprep.mubr.f32.mxu0 0.0
      %4809 = vmatmul.mubr.f32.gmra.mrb[0].mxu0 %v4623
      %v4810 = vpop.f32.mrb[0].mxu0
      %v4811 = vadd.f32 %v4581, %v4810
      %v4812 = vpop.f32.mrb[0].mxu0
      %4813 = vmatprep.mubr.f32.mxu0 0.0
      %4814 = vmatmul.mubr.f32.gmra.mrb[0].mxu0 %v4626
      %v4815 = vpop.f32.mrb[0].mxu0
      %v4816 = vadd.f32 %v4581, %v4815
      %v4817 = vpop.f32.mrb[0].mxu0
      %4818 = vmatprep.mubr.f32.mxu0 0.0
      %4819 = vmatmul.mubr.f32.gmra.mrb[0].mxu0 %v4629
      %v4820 = vpop.f32.mrb[0].mxu0
      %v4821 = vadd.f32 %v4581, %v4820
      %v4822 = vpop.f32.mrb[0].mxu0
      %4823 = vmatprep.mubr.f32.mxu0 0.0
      %4824 = vmatmul.mubr.f32.gmra.mrb[0].mxu0 %v4632
      %v4825 = vpop.f32.mrb[0].mxu0
      %v4826 = vadd.f32 %v4581, %v4825
      %v4827 = vpop.f32.mrb[0].mxu0
      %4828 = vmatprep.mubr.f32.mxu0 0.0
      %4829 = vmatmul.mubr.f32.gmra.mrb[0].mxu0 %v4635
      %v4830 = vpop.f32.mrb[0].mxu0
      %v4831 = vadd.f32 %v4581, %v4830
      %v4832 = vpop.f32.mrb[0].mxu0
      %4833 = vmatprep.mubr.f32.mxu0 0.0
      %4834 = vmatmul.mubr.f32.gmra.mrb[0].mxu0 %v4638
      %v4835 = vpop.f32.mrb[0].mxu0
      %v4836 = vadd.f32 %v4581, %v4835
      %v4837 = vpop.f32.mrb[0].mxu0
      %4838 = vmatprep.mubr.f32.mxu0 0.0
      %4839 = vmatmul.mubr.f32.gmra.mrb[0].mxu0 %v4641
      %v4840 = vpop.f32.mrb[0].mxu0
      %v4841 = vadd.f32 %v4581, %v4840
      %v4842 = vpop.f32.mrb[0].mxu0
      %4843 = vmatprep.mubr.f32.mxu0 0.0
      %4844 = vmatmul.mubr.f32.gmra.mrb[0].mxu0 %v4644
      %v4845 = vpop.f32.mrb[0].mxu0
      %v4846 = vadd.f32 %v4581, %v4845
      %v4847 = vpop.f32.mrb[0].mxu0
      %4848 = vmatprep.mubr.f32.mxu0 0.0
      %4849 = vmatmul.mubr.f32.gmra.mrb[0].mxu0 %v4647
      %v4850 = vpop.f32.mrb[0].mxu0
      %v4851 = vadd.f32 %v4581, %v4850
      %v4852 = vpop.f32.mrb[0].mxu0
      %4853 = vmatprep.mubr.f32.mxu0 0.0
      %4854 = vmatmul.mubr.f32.gmra.mrb[0].mxu0 %v4650
      %v4855 = vpop.f32.mrb[0].mxu0
      %v4856 = vadd.f32 %v4581, %v4855
      %v4857 = vpop.f32.mrb[0].mxu0
      %4858 = vmatprep.mubr.f32.mxu0 0.0
      %4859 = vmatmul.mubr.f32.gmra.mrb[0].mxu0 %v4653
      %v4860 = vpop.f32.mrb[0].mxu0
      %v4861 = vadd.f32 %v4581, %v4860
      %v4862 = vpop.f32.mrb[0].mxu0
      %4863 = vmatprep.mubr.f32.mxu0 0.0
      %4864 = vmatmul.mubr.f32.gmra.mrb[0].mxu0 %v4656
      %v4865 = vpop.f32.mrb[0].mxu0
      %v4866 = vadd.f32 %v4581, %v4865
      %v4867 = vpop.f32.mrb[0].mxu0
      %4868 = vmatprep.mubr.f32.mxu0 0.0
      %4869 = vmatmul.mubr.f32.gmra.mrb[0].mxu0 %v4659
      %v4870 = vpop.f32.mrb[0].mxu0
      %v4871 = vadd.f32 %v4581, %v4870
      %v4872 = vpop.f32.mrb[0].mxu0
      %4873 = vmatprep.mubr.f32.mxu0 0.0
      %4874 = vmatmul.mubr.f32.gmra.mrb[0].mxu0 %v4662
      %v4875 = vpop.f32.mrb[0].mxu0
      %v4876 = vadd.f32 %v4581, %v4875
      %v4877 = vpop.f32.mrb[0].mxu0
      %4878 = vmatprep.mubr.f32.mxu0 0.0
      %4879 = vmatmul.mubr.f32.gmra.mrb[0].mxu0 %v4665
      %v4880 = vpop.f32.mrb[0].mxu0
      %v4881 = vadd.f32 %v4581, %v4880
      %v4882 = vpop.f32.mrb[0].mxu0
      %4883 = vmatprep.mubr.f32.mxu0 0.0
      %4884 = vmatmul.mubr.f32.gmra.mrb[0].mxu0 %v4668
      %v4885 = vpop.f32.mrb[0].mxu0
      %v4886 = vadd.f32 %v4581, %v4885
      %v4887 = vpop.f32.mrb[0].mxu0
      %4888 = vmatprep.mubr.f32.mxu0 0.0
      %4889 = vmatmul.mubr.f32.gmra.mrb[0].mxu0 %v4671
      %v4890 = vpop.f32.mrb[0].mxu0
      %v4891 = vadd.f32 %v4581, %v4890
      %v4892 = vpop.f32.mrb[0].mxu0
      %4893 = vmatprep.mubr.f32.mxu0 0.0
      %4894 = vmatmul.mubr.f32.gmra.mrb[0].mxu0 %v4674
      %v4895 = vpop.f32.mrb[0].mxu0
      %v4896 = vadd.f32 %v4581, %v4895
      %v4897 = vpop.f32.mrb[0].mxu0
      %4898 = vmatprep.mubr.f32.mxu0 0.0
      %4899 = vmatmul.mubr.f32.gmra.mrb[0].mxu0 %v4677
      %v4900 = vpop.f32.mrb[0].mxu0
      %v4901 = vadd.f32 %v4581, %v4900
      %v4902 = vpop.f32.mrb[0].mxu0
      %4903 = vdwg.mxu0
      %s4904 = scalar_lea.vmem %s483, 256
      %4905 = vst.msk [vmem:[%s4904] sm:$0xff] %vm525, %v4746
      %4906 = vst.msk [vmem:[%s4904 + $0x8] sm:$0xff] %vm525, %v4751
      %4907 = vst.msk [vmem:[%s4904 + $0x10] sm:$0xff] %vm525, %v4756
      %4908 = vst.msk [vmem:[%s4904 + $0x18] sm:$0xff] %vm525, %v4761
      %4909 = vst.msk [vmem:[%s4904 + $0x20] sm:$0xff] %vm525, %v4766
      %4910 = vst.msk [vmem:[%s4904 + $0x28] sm:$0xff] %vm525, %v4771
      %4911 = vst.msk [vmem:[%s4904 + $0x30] sm:$0xff] %vm525, %v4776
      %4912 = vst.msk [vmem:[%s4904 + $0x38] sm:$0xff] %vm525, %v4781
      %4913 = vst.msk [vmem:[%s4904 + $0x40] sm:$0xff] %vm525, %v4786
      %4914 = vst.msk [vmem:[%s4904 + $0x48] sm:$0xff] %vm525, %v4791
      %4915 = vst.msk [vmem:[%s4904 + $0x50] sm:$0xff] %vm525, %v4796
      %4916 = vst.msk [vmem:[%s4904 + $0x58] sm:$0xff] %vm525, %v4801
      %4917 = vst.msk [vmem:[%s4904 + $0x60] sm:$0xff] %vm525, %v4806
      %4918 = vst.msk [vmem:[%s4904 + $0x68] sm:$0xff] %vm525, %v4811
      %4919 = vst.msk [vmem:[%s4904 + $0x70] sm:$0xff] %vm525, %v4816
      %4920 = vst.msk [vmem:[%s4904 + $0x78] sm:$0xff] %vm525, %v4821
      %4921 = vst.msk [vmem:[%s4904 + $0x80] sm:$0xff] %vm525, %v4826
      %4922 = vst.msk [vmem:[%s4904 + $0x88] sm:$0xff] %vm525, %v4831
      %4923 = vst.msk [vmem:[%s4904 + $0x90] sm:$0xff] %vm525, %v4836
      %4924 = vst.msk [vmem:[%s4904 + $0x98] sm:$0xff] %vm525, %v4841
      %4925 = vst.msk [vmem:[%s4904 + $0xa0] sm:$0xff] %vm525, %v4846
      %4926 = vst.msk [vmem:[%s4904 + $0xa8] sm:$0xff] %vm525, %v4851
      %4927 = vst.msk [vmem:[%s4904 + $0xb0] sm:$0xff] %vm525, %v4856
      %4928 = vst.msk [vmem:[%s4904 + $0xb8] sm:$0xff] %vm525, %v4861
      %4929 = vst.msk [vmem:[%s4904 + $0xc0] sm:$0xff] %vm525, %v4866
      %4930 = vst.msk [vmem:[%s4904 + $0xc8] sm:$0xff] %vm525, %v4871
      %4931 = vst.msk [vmem:[%s4904 + $0xd0] sm:$0xff] %vm525, %v4876
      %4932 = vst.msk [vmem:[%s4904 + $0xd8] sm:$0xff] %vm525, %v4881
      %4933 = vst.msk [vmem:[%s4904 + $0xe0] sm:$0xff] %vm525, %v4886
      %4934 = vst.msk [vmem:[%s4904 + $0xe8] sm:$0xff] %vm525, %v4891
      %4935 = vst.msk [vmem:[%s4904 + $0xf0] sm:$0xff] %vm525, %v4896
      %4936 = vst.msk [vmem:[%s4904 + $0xf8] sm:$0xff] %vm525, %v4901
      %s4937 = scalar_lea.vmem %s471, 512
      %v4938 = vld [vmem:[%s4937] sm:$0xff]
      %v4939 = vld [vmem:[%s4937 + $0x8] sm:$0xff]
      %v4940 = vld [vmem:[%s4937 + $0x10] sm:$0xff]
      %v4941 = vld [vmem:[%s4937 + $0x18] sm:$0xff]
      %v4942 = vld [vmem:[%s4937 + $0x20] sm:$0xff]
      %v4943 = vld [vmem:[%s4937 + $0x28] sm:$0xff]
      %v4944 = vld [vmem:[%s4937 + $0x30] sm:$0xff]
      %v4945 = vld [vmem:[%s4937 + $0x38] sm:$0xff]
      %v4946 = vld [vmem:[%s4937 + $0x40] sm:$0xff]
      %v4947 = vld [vmem:[%s4937 + $0x48] sm:$0xff]
      %v4948 = vld [vmem:[%s4937 + $0x50] sm:$0xff]
      %v4949 = vld [vmem:[%s4937 + $0x58] sm:$0xff]
      %v4950 = vld [vmem:[%s4937 + $0x60] sm:$0xff]
      %v4951 = vld [vmem:[%s4937 + $0x68] sm:$0xff]
      %v4952 = vld [vmem:[%s4937 + $0x70] sm:$0xff]
      %v4953 = vld [vmem:[%s4937 + $0x78] sm:$0xff]
      %v4954 = vld [vmem:[%s4937 + $0x80] sm:$0xff]
      %v4955 = vld [vmem:[%s4937 + $0x88] sm:$0xff]
      %v4956 = vld [vmem:[%s4937 + $0x90] sm:$0xff]
      %v4957 = vld [vmem:[%s4937 + $0x98] sm:$0xff]
      %v4958 = vld [vmem:[%s4937 + $0xa0] sm:$0xff]
      %v4959 = vld [vmem:[%s4937 + $0xa8] sm:$0xff]
      %v4960 = vld [vmem:[%s4937 + $0xb0] sm:$0xff]
      %v4961 = vld [vmem:[%s4937 + $0xb8] sm:$0xff]
      %v4962 = vld [vmem:[%s4937 + $0xc0] sm:$0xff]
      %v4963 = vld [vmem:[%s4937 + $0xc8] sm:$0xff]
      %v4964 = vld [vmem:[%s4937 + $0xd0] sm:$0xff]
      %v4965 = vld [vmem:[%s4937 + $0xd8] sm:$0xff]
      %v4966 = vld [vmem:[%s4937 + $0xe0] sm:$0xff]
      %v4967 = vld [vmem:[%s4937 + $0xe8] sm:$0xff]
      %v4968 = vld [vmem:[%s4937 + $0xf0] sm:$0xff]
      %v4969 = vld [vmem:[%s4937 + $0xf8] sm:$0xff]
      %v4970 = vld [vmem:[%s1] sm:$0x7]
      %v4971 = vld [vmem:[%s2] sm:$0x1]
      %v4973 = vlaneseq
      %v4974 = vshrl.u32 %v4973, 7
      %v4975 = vsub.s32 0, %v4974
      %v4976 = vrot.slane %v4971, %v4975
      %v4979 = vsel %vm525, %v4938, 0
      %v4982 = vsel %vm525, %v4939, 0
      %v4985 = vsel %vm525, %v4940, 0
      %v4988 = vsel %vm525, %v4941, 0
      %v4991 = vsel %vm525, %v4942, 0
      %v4994 = vsel %vm525, %v4943, 0
      %v4997 = vsel %vm525, %v4944, 0
      %v5000 = vsel %vm525, %v4945, 0
      %v5003 = vsel %vm525, %v4946, 0
      %v5006 = vsel %vm525, %v4947, 0
      %v5009 = vsel %vm525, %v4948, 0
      %v5012 = vsel %vm525, %v4949, 0
      %v5015 = vsel %vm525, %v4950, 0
      %v5018 = vsel %vm525, %v4951, 0
      %v5021 = vsel %vm525, %v4952, 0
      %v5024 = vsel %vm525, %v4953, 0
      %v5027 = vsel %vm525, %v4954, 0
      %v5030 = vsel %vm525, %v4955, 0
      %v5033 = vsel %vm525, %v4956, 0
      %v5036 = vsel %vm525, %v4957, 0
      %v5039 = vsel %vm525, %v4958, 0
      %v5042 = vsel %vm525, %v4959, 0
      %v5045 = vsel %vm525, %v4960, 0
      %v5048 = vsel %vm525, %v4961, 0
      %v5051 = vsel %vm525, %v4962, 0
      %v5054 = vsel %vm525, %v4963, 0
      %v5057 = vsel %vm525, %v4964, 0
      %v5060 = vsel %vm525, %v4965, 0
      %v5063 = vsel %vm525, %v4966, 0
      %v5066 = vsel %vm525, %v4967, 0
      %v5069 = vsel %vm525, %v4968, 0
      %v5072 = vsel %vm525, %v4969, 0
      %v5075 = vsel %vm622, %v4970, 0
      %5077 = vmatprep.subr.mxu0 0.0
      %5078 = vmatpush1.msra.mxu0 %v5075
      %5079 = vmatprep.subr.mxu0 0.0
      %5080 = vmatpush1.msra.mxu0 0.0
      %5081 = vmatprep.subr.mxu0 0.0
      %5082 = vmatpush1.msra.mxu0 0.0
      %5083 = vmatprep.subr.mxu0 0.0
      %5084 = vmatpush1.msra.mxu0 0.0
      %5085 = vmatprep.subr.mxu0 0.0
      %5086 = vmatpush1.msra.mxu0 0.0
      %5087 = vmatprep.subr.mxu0 0.0
      %5088 = vmatpush1.msra.mxu0 0.0
      %5089 = vmatprep.subr.mxu0 0.0
      %5090 = vmatpush1.msra.mxu0 0.0
      %5091 = vmatprep.subr.mxu0 0.0
      %5092 = vmatpush1.msra.mxu0 0.0
      %5093 = vmatprep.subr.mxu0 0.0
      %5094 = vmatpush1.msra.mxu0 0.0
      %5095 = vmatprep.subr.mxu0 0.0
      %5096 = vmatpush1.msra.mxu0 0.0
      %5097 = vmatprep.subr.mxu0 0.0
      %5098 = vmatpush1.msra.mxu0 0.0
      %5099 = vmatprep.subr.mxu0 0.0
      %5100 = vmatpush1.msra.mxu0 0.0
      %5101 = vmatprep.subr.mxu0 0.0
      %5102 = vmatpush1.msra.mxu0 0.0
      %5103 = vmatprep.subr.mxu0 0.0
      %5104 = vmatpush1.msra.mxu0 0.0
      %5105 = vmatprep.subr.mxu0 0.0
      %5106 = vmatpush1.msra.mxu0 0.0
      %5107 = vmatprep.subr.mxu0 0.0
      %5108 = vmatpush1.msra.mxu0 0.0
      %5109 = vmatprep.subr.mxu0 0.0
      %5110 = vmatpush1.msra.mxu0 0.0
      %5111 = vmatprep.subr.mxu0 0.0
      %5112 = vmatpush1.msra.mxu0 0.0
      %5113 = vmatprep.subr.mxu0 0.0
      %5114 = vmatpush1.msra.mxu0 0.0
      %5115 = vmatprep.subr.mxu0 0.0
      %5116 = vmatpush1.msra.mxu0 0.0
      %5117 = vmatprep.subr.mxu0 0.0
      %5118 = vmatpush1.msra.mxu0 0.0
      %5119 = vmatprep.subr.mxu0 0.0
      %5120 = vmatpush1.msra.mxu0 0.0
      %5121 = vmatprep.subr.mxu0 0.0
      %5122 = vmatpush1.msra.mxu0 0.0
      %5123 = vmatprep.subr.mxu0 0.0
      %5124 = vmatpush1.msra.mxu0 0.0
      %5125 = vmatprep.subr.mxu0 0.0
      %5126 = vmatpush1.msra.mxu0 0.0
      %5127 = vmatprep.subr.mxu0 0.0
      %5128 = vmatpush1.msra.mxu0 0.0
      %5129 = vmatprep.subr.mxu0 0.0
      %5130 = vmatpush1.msra.mxu0 0.0
      %5131 = vmatprep.subr.mxu0 0.0
      %5132 = vmatpush1.msra.mxu0 0.0
      %5133 = vmatprep.subr.mxu0 0.0
      %5134 = vmatpush1.msra.mxu0 0.0
      %5135 = vmatprep.subr.mxu0 0.0
      %5136 = vmatpush1.msra.mxu0 0.0
      %5137 = vmatprep.subr.mxu0 0.0
      %5138 = vmatpush1.msra.mxu0 0.0
      %5139 = vmatprep.subr.mxu0 0.0
      %5140 = vmatpush1.msra.mxu0 0.0
      %5141 = vmatprep.mubr.f32.mxu0 0.0
      %5142 = vmatmul.mubr.f32.gmra.mrb[0].mxu0 %v4979
      %v5143 = vpop.f32.mrb[0].mxu0
      %v5144 = vadd.f32 %v4976, %v5143
      %v5145 = vpop.f32.mrb[0].mxu0
      %5146 = vmatprep.mubr.f32.mxu0 0.0
      %5147 = vmatmul.mubr.f32.gmra.mrb[0].mxu0 %v4982
      %v5148 = vpop.f32.mrb[0].mxu0
      %v5149 = vadd.f32 %v4976, %v5148
      %v5150 = vpop.f32.mrb[0].mxu0
      %5151 = vmatprep.mubr.f32.mxu0 0.0
      %5152 = vmatmul.mubr.f32.gmra.mrb[0].mxu0 %v4985
      %v5153 = vpop.f32.mrb[0].mxu0
      %v5154 = vadd.f32 %v4976, %v5153
      %v5155 = vpop.f32.mrb[0].mxu0
      %5156 = vmatprep.mubr.f32.mxu0 0.0
      %5157 = vmatmul.mubr.f32.gmra.mrb[0].mxu0 %v4988
      %v5158 = vpop.f32.mrb[0].mxu0
      %v5159 = vadd.f32 %v4976, %v5158
      %v5160 = vpop.f32.mrb[0].mxu0
      %5161 = vmatprep.mubr.f32.mxu0 0.0
      %5162 = vmatmul.mubr.f32.gmra.mrb[0].mxu0 %v4991
      %v5163 = vpop.f32.mrb[0].mxu0
      %v5164 = vadd.f32 %v4976, %v5163
      %v5165 = vpop.f32.mrb[0].mxu0
      %5166 = vmatprep.mubr.f32.mxu0 0.0
      %5167 = vmatmul.mubr.f32.gmra.mrb[0].mxu0 %v4994
      %v5168 = vpop.f32.mrb[0].mxu0
      %v5169 = vadd.f32 %v4976, %v5168
      %v5170 = vpop.f32.mrb[0].mxu0
      %5171 = vmatprep.mubr.f32.mxu0 0.0
      %5172 = vmatmul.mubr.f32.gmra.mrb[0].mxu0 %v4997
      %v5173 = vpop.f32.mrb[0].mxu0
      %v5174 = vadd.f32 %v4976, %v5173
      %v5175 = vpop.f32.mrb[0].mxu0
      %5176 = vmatprep.mubr.f32.mxu0 0.0
      %5177 = vmatmul.mubr.f32.gmra.mrb[0].mxu0 %v5000
      %v5178 = vpop.f32.mrb[0].mxu0
      %v5179 = vadd.f32 %v4976, %v5178
      %v5180 = vpop.f32.mrb[0].mxu0
      %5181 = vmatprep.mubr.f32.mxu0 0.0
      %5182 = vmatmul.mubr.f32.gmra.mrb[0].mxu0 %v5003
      %v5183 = vpop.f32.mrb[0].mxu0
      %v5184 = vadd.f32 %v4976, %v5183
      %v5185 = vpop.f32.mrb[0].mxu0
      %5186 = vmatprep.mubr.f32.mxu0 0.0
      %5187 = vmatmul.mubr.f32.gmra.mrb[0].mxu0 %v5006
      %v5188 = vpop.f32.mrb[0].mxu0
      %v5189 = vadd.f32 %v4976, %v5188
      %v5190 = vpop.f32.mrb[0].mxu0
      %5191 = vmatprep.mubr.f32.mxu0 0.0
      %5192 = vmatmul.mubr.f32.gmra.mrb[0].mxu0 %v5009
      %v5193 = vpop.f32.mrb[0].mxu0
      %v5194 = vadd.f32 %v4976, %v5193
      %v5195 = vpop.f32.mrb[0].mxu0
      %5196 = vmatprep.mubr.f32.mxu0 0.0
      %5197 = vmatmul.mubr.f32.gmra.mrb[0].mxu0 %v5012
      %v5198 = vpop.f32.mrb[0].mxu0
      %v5199 = vadd.f32 %v4976, %v5198
      %v5200 = vpop.f32.mrb[0].mxu0
      %5201 = vmatprep.mubr.f32.mxu0 0.0
      %5202 = vmatmul.mubr.f32.gmra.mrb[0].mxu0 %v5015
      %v5203 = vpop.f32.mrb[0].mxu0
      %v5204 = vadd.f32 %v4976, %v5203
      %v5205 = vpop.f32.mrb[0].mxu0
      %5206 = vmatprep.mubr.f32.mxu0 0.0
      %5207 = vmatmul.mubr.f32.gmra.mrb[0].mxu0 %v5018
      %v5208 = vpop.f32.mrb[0].mxu0
      %v5209 = vadd.f32 %v4976, %v5208
      %v5210 = vpop.f32.mrb[0].mxu0
      %5211 = vmatprep.mubr.f32.mxu0 0.0
      %5212 = vmatmul.mubr.f32.gmra.mrb[0].mxu0 %v5021
      %v5213 = vpop.f32.mrb[0].mxu0
      %v5214 = vadd.f32 %v4976, %v5213
      %v5215 = vpop.f32.mrb[0].mxu0
      %5216 = vmatprep.mubr.f32.mxu0 0.0
      %5217 = vmatmul.mubr.f32.gmra.mrb[0].mxu0 %v5024
      %v5218 = vpop.f32.mrb[0].mxu0
      %v5219 = vadd.f32 %v4976, %v5218
      %v5220 = vpop.f32.mrb[0].mxu0
      %5221 = vmatprep.mubr.f32.mxu0 0.0
      %5222 = vmatmul.mubr.f32.gmra.mrb[0].mxu0 %v5027
      %v5223 = vpop.f32.mrb[0].mxu0
      %v5224 = vadd.f32 %v4976, %v5223
      %v5225 = vpop.f32.mrb[0].mxu0
      %5226 = vmatprep.mubr.f32.mxu0 0.0
      %5227 = vmatmul.mubr.f32.gmra.mrb[0].mxu0 %v5030
      %v5228 = vpop.f32.mrb[0].mxu0
      %v5229 = vadd.f32 %v4976, %v5228
      %v5230 = vpop.f32.mrb[0].mxu0
      %5231 = vmatprep.mubr.f32.mxu0 0.0
      %5232 = vmatmul.mubr.f32.gmra.mrb[0].mxu0 %v5033
      %v5233 = vpop.f32.mrb[0].mxu0
      %v5234 = vadd.f32 %v4976, %v5233
      %v5235 = vpop.f32.mrb[0].mxu0
      %5236 = vmatprep.mubr.f32.mxu0 0.0
      %5237 = vmatmul.mubr.f32.gmra.mrb[0].mxu0 %v5036
      %v5238 = vpop.f32.mrb[0].mxu0
      %v5239 = vadd.f32 %v4976, %v5238
      %v5240 = vpop.f32.mrb[0].mxu0
      %5241 = vmatprep.mubr.f32.mxu0 0.0
      %5242 = vmatmul.mubr.f32.gmra.mrb[0].mxu0 %v5039
      %v5243 = vpop.f32.mrb[0].mxu0
      %v5244 = vadd.f32 %v4976, %v5243
      %v5245 = vpop.f32.mrb[0].mxu0
      %5246 = vmatprep.mubr.f32.mxu0 0.0
      %5247 = vmatmul.mubr.f32.gmra.mrb[0].mxu0 %v5042
      %v5248 = vpop.f32.mrb[0].mxu0
      %v5249 = vadd.f32 %v4976, %v5248
      %v5250 = vpop.f32.mrb[0].mxu0
      %5251 = vmatprep.mubr.f32.mxu0 0.0
      %5252 = vmatmul.mubr.f32.gmra.mrb[0].mxu0 %v5045
      %v5253 = vpop.f32.mrb[0].mxu0
      %v5254 = vadd.f32 %v4976, %v5253
      %v5255 = vpop.f32.mrb[0].mxu0
      %5256 = vmatprep.mubr.f32.mxu0 0.0
      %5257 = vmatmul.mubr.f32.gmra.mrb[0].mxu0 %v5048
      %v5258 = vpop.f32.mrb[0].mxu0
      %v5259 = vadd.f32 %v4976, %v5258
      %v5260 = vpop.f32.mrb[0].mxu0
      %5261 = vmatprep.mubr.f32.mxu0 0.0
      %5262 = vmatmul.mubr.f32.gmra.mrb[0].mxu0 %v5051
      %v5263 = vpop.f32.mrb[0].mxu0
      %v5264 = vadd.f32 %v4976, %v5263
      %v5265 = vpop.f32.mrb[0].mxu0
      %5266 = vmatprep.mubr.f32.mxu0 0.0
      %5267 = vmatmul.mubr.f32.gmra.mrb[0].mxu0 %v5054
      %v5268 = vpop.f32.mrb[0].mxu0
      %v5269 = vadd.f32 %v4976, %v5268
      %v5270 = vpop.f32.mrb[0].mxu0
      %5271 = vmatprep.mubr.f32.mxu0 0.0
      %5272 = vmatmul.mubr.f32.gmra.mrb[0].mxu0 %v5057
      %v5273 = vpop.f32.mrb[0].mxu0
      %v5274 = vadd.f32 %v4976, %v5273
      %v5275 = vpop.f32.mrb[0].mxu0
      %5276 = vmatprep.mubr.f32.mxu0 0.0
      %5277 = vmatmul.mubr.f32.gmra.mrb[0].mxu0 %v5060
      %v5278 = vpop.f32.mrb[0].mxu0
      %v5279 = vadd.f32 %v4976, %v5278
      %v5280 = vpop.f32.mrb[0].mxu0
      %5281 = vmatprep.mubr.f32.mxu0 0.0
      %5282 = vmatmul.mubr.f32.gmra.mrb[0].mxu0 %v5063
      %v5283 = vpop.f32.mrb[0].mxu0
      %v5284 = vadd.f32 %v4976, %v5283
      %v5285 = vpop.f32.mrb[0].mxu0
      %5286 = vmatprep.mubr.f32.mxu0 0.0
      %5287 = vmatmul.mubr.f32.gmra.mrb[0].mxu0 %v5066
      %v5288 = vpop.f32.mrb[0].mxu0
      %v5289 = vadd.f32 %v4976, %v5288
      %v5290 = vpop.f32.mrb[0].mxu0
      %5291 = vmatprep.mubr.f32.mxu0 0.0
      %5292 = vmatmul.mubr.f32.gmra.mrb[0].mxu0 %v5069
      %v5293 = vpop.f32.mrb[0].mxu0
      %v5294 = vadd.f32 %v4976, %v5293
      %v5295 = vpop.f32.mrb[0].mxu0
      %5296 = vmatprep.mubr.f32.mxu0 0.0
      %5297 = vmatmul.mubr.f32.gmra.mrb[0].mxu0 %v5072
      %v5298 = vpop.f32.mrb[0].mxu0
      %v5299 = vadd.f32 %v4976, %v5298
      %v5300 = vpop.f32.mrb[0].mxu0
      %5301 = vdwg.mxu0
      %v5302 = vmax.f32 %v5144, 0.0
      %v5303 = vmax.f32 %v5149, 0.0
      %v5304 = vmax.f32 %v5154, 0.0
      %v5305 = vmax.f32 %v5159, 0.0
      %v5306 = vmax.f32 %v5164, 0.0
      %v5307 = vmax.f32 %v5169, 0.0
      %v5308 = vmax.f32 %v5174, 0.0
      %v5309 = vmax.f32 %v5179, 0.0
      %v5310 = vmax.f32 %v5184, 0.0
      %v5311 = vmax.f32 %v5189, 0.0
      %v5312 = vmax.f32 %v5194, 0.0
      %v5313 = vmax.f32 %v5199, 0.0
      %v5314 = vmax.f32 %v5204, 0.0
      %v5315 = vmax.f32 %v5209, 0.0
      %v5316 = vmax.f32 %v5214, 0.0
      %v5317 = vmax.f32 %v5219, 0.0
      %v5318 = vmax.f32 %v5224, 0.0
      %v5319 = vmax.f32 %v5229, 0.0
      %v5320 = vmax.f32 %v5234, 0.0
      %v5321 = vmax.f32 %v5239, 0.0
      %v5322 = vmax.f32 %v5244, 0.0
      %v5323 = vmax.f32 %v5249, 0.0
      %v5324 = vmax.f32 %v5254, 0.0
      %v5325 = vmax.f32 %v5259, 0.0
      %v5326 = vmax.f32 %v5264, 0.0
      %v5327 = vmax.f32 %v5269, 0.0
      %v5328 = vmax.f32 %v5274, 0.0
      %v5329 = vmax.f32 %v5279, 0.0
      %v5330 = vmax.f32 %v5284, 0.0
      %v5331 = vmax.f32 %v5289, 0.0
      %v5332 = vmax.f32 %v5294, 0.0
      %v5333 = vmax.f32 %v5299, 0.0
      %v5334 = vld [vmem:[%s3] sm:$0xff]
      %v5335 = vld [vmem:[%s3 + $0x8] sm:$0xff]
      %v5336 = vld [vmem:[%s3 + $0x10] sm:$0xff]
      %v5337 = vld [vmem:[%s3 + $0x18] sm:$0xff]
      %v5338 = vld [vmem:[%s3 + $0x20] sm:$0xff]
      %v5339 = vld [vmem:[%s3 + $0x28] sm:$0xff]
      %v5340 = vld [vmem:[%s3 + $0x30] sm:$0xff]
      %v5341 = vld [vmem:[%s3 + $0x38] sm:$0xff]
      %v5342 = vld [vmem:[%s4] sm:$0x1]
      %v5344 = vlaneseq
      %v5345 = vshrl.u32 %v5344, 7
      %v5346 = vsub.s32 0, %v5345
      %v5347 = vrot.slane %v5342, %v5346
      %v5350 = vsel %vm898, %v5302, 0
      %v5353 = vsel %vm898, %v5303, 0
      %v5356 = vsel %vm898, %v5304, 0
      %v5359 = vsel %vm898, %v5305, 0
      %v5362 = vsel %vm898, %v5306, 0
      %v5365 = vsel %vm898, %v5307, 0
      %v5368 = vsel %vm898, %v5308, 0
      %v5371 = vsel %vm898, %v5309, 0
      %v5374 = vsel %vm898, %v5310, 0
      %v5377 = vsel %vm898, %v5311, 0
      %v5380 = vsel %vm898, %v5312, 0
      %v5383 = vsel %vm898, %v5313, 0
      %v5386 = vsel %vm898, %v5314, 0
      %v5389 = vsel %vm898, %v5315, 0
      %v5392 = vsel %vm898, %v5316, 0
      %v5395 = vsel %vm898, %v5317, 0
      %v5398 = vsel %vm898, %v5318, 0
      %v5401 = vsel %vm898, %v5319, 0
      %v5404 = vsel %vm898, %v5320, 0
      %v5407 = vsel %vm898, %v5321, 0
      %v5410 = vsel %vm898, %v5322, 0
      %v5413 = vsel %vm898, %v5323, 0
      %v5416 = vsel %vm898, %v5324, 0
      %v5419 = vsel %vm898, %v5325, 0
      %v5422 = vsel %vm898, %v5326, 0
      %v5425 = vsel %vm898, %v5327, 0
      %v5428 = vsel %vm898, %v5328, 0
      %v5431 = vsel %vm898, %v5329, 0
      %v5434 = vsel %vm898, %v5330, 0
      %v5437 = vsel %vm898, %v5331, 0
      %v5440 = vsel %vm898, %v5332, 0
      %v5443 = vsel %vm898, %v5333, 0
      %5445 = vmatprep.subr.mxu0 0.0
      %5446 = vmatpush1.msra.mxu0 %v5334
      %5447 = vmatprep.subr.mxu0 0.0
      %5448 = vmatpush1.msra.mxu0 %v5335
      %5449 = vmatprep.subr.mxu0 0.0
      %5450 = vmatpush1.msra.mxu0 %v5336
      %5451 = vmatprep.subr.mxu0 0.0
      %5452 = vmatpush1.msra.mxu0 %v5337
      %5453 = vmatprep.subr.mxu0 0.0
      %5454 = vmatpush1.msra.mxu0 %v5338
      %5455 = vmatprep.subr.mxu0 0.0
      %5456 = vmatpush1.msra.mxu0 %v5339
      %5457 = vmatprep.subr.mxu0 0.0
      %5458 = vmatpush1.msra.mxu0 %v5340
      %5459 = vmatprep.subr.mxu0 0.0
      %5460 = vmatpush1.msra.mxu0 %v5341
      %5461 = vmatprep.subr.mxu0 0.0
      %5462 = vmatpush1.msra.mxu0 0.0
      %5463 = vmatprep.subr.mxu0 0.0
      %5464 = vmatpush1.msra.mxu0 0.0
      %5465 = vmatprep.subr.mxu0 0.0
      %5466 = vmatpush1.msra.mxu0 0.0
      %5467 = vmatprep.subr.mxu0 0.0
      %5468 = vmatpush1.msra.mxu0 0.0
      %5469 = vmatprep.subr.mxu0 0.0
      %5470 = vmatpush1.msra.mxu0 0.0
      %5471 = vmatprep.subr.mxu0 0.0
      %5472 = vmatpush1.msra.mxu0 0.0
      %5473 = vmatprep.subr.mxu0 0.0
      %5474 = vmatpush1.msra.mxu0 0.0
      %5475 = vmatprep.subr.mxu0 0.0
      %5476 = vmatpush1.msra.mxu0 0.0
      %5477 = vmatprep.subr.mxu0 0.0
      %5478 = vmatpush1.msra.mxu0 0.0
      %5479 = vmatprep.subr.mxu0 0.0
      %5480 = vmatpush1.msra.mxu0 0.0
      %5481 = vmatprep.subr.mxu0 0.0
      %5482 = vmatpush1.msra.mxu0 0.0
      %5483 = vmatprep.subr.mxu0 0.0
      %5484 = vmatpush1.msra.mxu0 0.0
      %5485 = vmatprep.subr.mxu0 0.0
      %5486 = vmatpush1.msra.mxu0 0.0
      %5487 = vmatprep.subr.mxu0 0.0
      %5488 = vmatpush1.msra.mxu0 0.0
      %5489 = vmatprep.subr.mxu0 0.0
      %5490 = vmatpush1.msra.mxu0 0.0
      %5491 = vmatprep.subr.mxu0 0.0
      %5492 = vmatpush1.msra.mxu0 0.0
      %5493 = vmatprep.subr.mxu0 0.0
      %5494 = vmatpush1.msra.mxu0 0.0
      %5495 = vmatprep.subr.mxu0 0.0
      %5496 = vmatpush1.msra.mxu0 0.0
      %5497 = vmatprep.subr.mxu0 0.0
      %5498 = vmatpush1.msra.mxu0 0.0
      %5499 = vmatprep.subr.mxu0 0.0
      %5500 = vmatpush1.msra.mxu0 0.0
      %5501 = vmatprep.subr.mxu0 0.0
      %5502 = vmatpush1.msra.mxu0 0.0
      %5503 = vmatprep.subr.mxu0 0.0
      %5504 = vmatpush1.msra.mxu0 0.0
      %5505 = vmatprep.subr.mxu0 0.0
      %5506 = vmatpush1.msra.mxu0 0.0
      %5507 = vmatprep.subr.mxu0 0.0
      %5508 = vmatpush1.msra.mxu0 0.0
      %5509 = vmatprep.mubr.f32.mxu0 0.0
      %5510 = vmatmul.mubr.f32.gmra.mrb[0].mxu0 %v5350
      %v5511 = vpop.f32.mrb[0].mxu0
      %v5512 = vadd.f32 %v5347, %v5511
      %v5513 = vpop.f32.mrb[0].mxu0
      %5514 = vmatprep.mubr.f32.mxu0 0.0
      %5515 = vmatmul.mubr.f32.gmra.mrb[0].mxu0 %v5353
      %v5516 = vpop.f32.mrb[0].mxu0
      %v5517 = vadd.f32 %v5347, %v5516
      %v5518 = vpop.f32.mrb[0].mxu0
      %5519 = vmatprep.mubr.f32.mxu0 0.0
      %5520 = vmatmul.mubr.f32.gmra.mrb[0].mxu0 %v5356
      %v5521 = vpop.f32.mrb[0].mxu0
      %v5522 = vadd.f32 %v5347, %v5521
      %v5523 = vpop.f32.mrb[0].mxu0
      %5524 = vmatprep.mubr.f32.mxu0 0.0
      %5525 = vmatmul.mubr.f32.gmra.mrb[0].mxu0 %v5359
      %v5526 = vpop.f32.mrb[0].mxu0
      %v5527 = vadd.f32 %v5347, %v5526
      %v5528 = vpop.f32.mrb[0].mxu0
      %5529 = vmatprep.mubr.f32.mxu0 0.0
      %5530 = vmatmul.mubr.f32.gmra.mrb[0].mxu0 %v5362
      %v5531 = vpop.f32.mrb[0].mxu0
      %v5532 = vadd.f32 %v5347, %v5531
      %v5533 = vpop.f32.mrb[0].mxu0
      %5534 = vmatprep.mubr.f32.mxu0 0.0
      %5535 = vmatmul.mubr.f32.gmra.mrb[0].mxu0 %v5365
      %v5536 = vpop.f32.mrb[0].mxu0
      %v5537 = vadd.f32 %v5347, %v5536
      %v5538 = vpop.f32.mrb[0].mxu0
      %5539 = vmatprep.mubr.f32.mxu0 0.0
      %5540 = vmatmul.mubr.f32.gmra.mrb[0].mxu0 %v5368
      %v5541 = vpop.f32.mrb[0].mxu0
      %v5542 = vadd.f32 %v5347, %v5541
      %v5543 = vpop.f32.mrb[0].mxu0
      %5544 = vmatprep.mubr.f32.mxu0 0.0
      %5545 = vmatmul.mubr.f32.gmra.mrb[0].mxu0 %v5371
      %v5546 = vpop.f32.mrb[0].mxu0
      %v5547 = vadd.f32 %v5347, %v5546
      %v5548 = vpop.f32.mrb[0].mxu0
      %5549 = vmatprep.mubr.f32.mxu0 0.0
      %5550 = vmatmul.mubr.f32.gmra.mrb[0].mxu0 %v5374
      %v5551 = vpop.f32.mrb[0].mxu0
      %v5552 = vadd.f32 %v5347, %v5551
      %v5553 = vpop.f32.mrb[0].mxu0
      %5554 = vmatprep.mubr.f32.mxu0 0.0
      %5555 = vmatmul.mubr.f32.gmra.mrb[0].mxu0 %v5377
      %v5556 = vpop.f32.mrb[0].mxu0
      %v5557 = vadd.f32 %v5347, %v5556
      %v5558 = vpop.f32.mrb[0].mxu0
      %5559 = vmatprep.mubr.f32.mxu0 0.0
      %5560 = vmatmul.mubr.f32.gmra.mrb[0].mxu0 %v5380
      %v5561 = vpop.f32.mrb[0].mxu0
      %v5562 = vadd.f32 %v5347, %v5561
      %v5563 = vpop.f32.mrb[0].mxu0
      %5564 = vmatprep.mubr.f32.mxu0 0.0
      %5565 = vmatmul.mubr.f32.gmra.mrb[0].mxu0 %v5383
      %v5566 = vpop.f32.mrb[0].mxu0
      %v5567 = vadd.f32 %v5347, %v5566
      %v5568 = vpop.f32.mrb[0].mxu0
      %5569 = vmatprep.mubr.f32.mxu0 0.0
      %5570 = vmatmul.mubr.f32.gmra.mrb[0].mxu0 %v5386
      %v5571 = vpop.f32.mrb[0].mxu0
      %v5572 = vadd.f32 %v5347, %v5571
      %v5573 = vpop.f32.mrb[0].mxu0
      %5574 = vmatprep.mubr.f32.mxu0 0.0
      %5575 = vmatmul.mubr.f32.gmra.mrb[0].mxu0 %v5389
      %v5576 = vpop.f32.mrb[0].mxu0
      %v5577 = vadd.f32 %v5347, %v5576
      %v5578 = vpop.f32.mrb[0].mxu0
      %5579 = vmatprep.mubr.f32.mxu0 0.0
      %5580 = vmatmul.mubr.f32.gmra.mrb[0].mxu0 %v5392
      %v5581 = vpop.f32.mrb[0].mxu0
      %v5582 = vadd.f32 %v5347, %v5581
      %v5583 = vpop.f32.mrb[0].mxu0
      %5584 = vmatprep.mubr.f32.mxu0 0.0
      %5585 = vmatmul.mubr.f32.gmra.mrb[0].mxu0 %v5395
      %v5586 = vpop.f32.mrb[0].mxu0
      %v5587 = vadd.f32 %v5347, %v5586
      %v5588 = vpop.f32.mrb[0].mxu0
      %5589 = vmatprep.mubr.f32.mxu0 0.0
      %5590 = vmatmul.mubr.f32.gmra.mrb[0].mxu0 %v5398
      %v5591 = vpop.f32.mrb[0].mxu0
      %v5592 = vadd.f32 %v5347, %v5591
      %v5593 = vpop.f32.mrb[0].mxu0
      %5594 = vmatprep.mubr.f32.mxu0 0.0
      %5595 = vmatmul.mubr.f32.gmra.mrb[0].mxu0 %v5401
      %v5596 = vpop.f32.mrb[0].mxu0
      %v5597 = vadd.f32 %v5347, %v5596
      %v5598 = vpop.f32.mrb[0].mxu0
      %5599 = vmatprep.mubr.f32.mxu0 0.0
      %5600 = vmatmul.mubr.f32.gmra.mrb[0].mxu0 %v5404
      %v5601 = vpop.f32.mrb[0].mxu0
      %v5602 = vadd.f32 %v5347, %v5601
      %v5603 = vpop.f32.mrb[0].mxu0
      %5604 = vmatprep.mubr.f32.mxu0 0.0
      %5605 = vmatmul.mubr.f32.gmra.mrb[0].mxu0 %v5407
      %v5606 = vpop.f32.mrb[0].mxu0
      %v5607 = vadd.f32 %v5347, %v5606
      %v5608 = vpop.f32.mrb[0].mxu0
      %5609 = vmatprep.mubr.f32.mxu0 0.0
      %5610 = vmatmul.mubr.f32.gmra.mrb[0].mxu0 %v5410
      %v5611 = vpop.f32.mrb[0].mxu0
      %v5612 = vadd.f32 %v5347, %v5611
      %v5613 = vpop.f32.mrb[0].mxu0
      %5614 = vmatprep.mubr.f32.mxu0 0.0
      %5615 = vmatmul.mubr.f32.gmra.mrb[0].mxu0 %v5413
      %v5616 = vpop.f32.mrb[0].mxu0
      %v5617 = vadd.f32 %v5347, %v5616
      %v5618 = vpop.f32.mrb[0].mxu0
      %5619 = vmatprep.mubr.f32.mxu0 0.0
      %5620 = vmatmul.mubr.f32.gmra.mrb[0].mxu0 %v5416
      %v5621 = vpop.f32.mrb[0].mxu0
      %v5622 = vadd.f32 %v5347, %v5621
      %v5623 = vpop.f32.mrb[0].mxu0
      %5624 = vmatprep.mubr.f32.mxu0 0.0
      %5625 = vmatmul.mubr.f32.gmra.mrb[0].mxu0 %v5419
      %v5626 = vpop.f32.mrb[0].mxu0
      %v5627 = vadd.f32 %v5347, %v5626
      %v5628 = vpop.f32.mrb[0].mxu0
      %5629 = vmatprep.mubr.f32.mxu0 0.0
      %5630 = vmatmul.mubr.f32.gmra.mrb[0].mxu0 %v5422
      %v5631 = vpop.f32.mrb[0].mxu0
      %v5632 = vadd.f32 %v5347, %v5631
      %v5633 = vpop.f32.mrb[0].mxu0
      %5634 = vmatprep.mubr.f32.mxu0 0.0
      %5635 = vmatmul.mubr.f32.gmra.mrb[0].mxu0 %v5425
      %v5636 = vpop.f32.mrb[0].mxu0
      %v5637 = vadd.f32 %v5347, %v5636
      %v5638 = vpop.f32.mrb[0].mxu0
      %5639 = vmatprep.mubr.f32.mxu0 0.0
      %5640 = vmatmul.mubr.f32.gmra.mrb[0].mxu0 %v5428
      %v5641 = vpop.f32.mrb[0].mxu0
      %v5642 = vadd.f32 %v5347, %v5641
      %v5643 = vpop.f32.mrb[0].mxu0
      %5644 = vmatprep.mubr.f32.mxu0 0.0
      %5645 = vmatmul.mubr.f32.gmra.mrb[0].mxu0 %v5431
      %v5646 = vpop.f32.mrb[0].mxu0
      %v5647 = vadd.f32 %v5347, %v5646
      %v5648 = vpop.f32.mrb[0].mxu0
      %5649 = vmatprep.mubr.f32.mxu0 0.0
      %5650 = vmatmul.mubr.f32.gmra.mrb[0].mxu0 %v5434
      %v5651 = vpop.f32.mrb[0].mxu0
      %v5652 = vadd.f32 %v5347, %v5651
      %v5653 = vpop.f32.mrb[0].mxu0
      %5654 = vmatprep.mubr.f32.mxu0 0.0
      %5655 = vmatmul.mubr.f32.gmra.mrb[0].mxu0 %v5437
      %v5656 = vpop.f32.mrb[0].mxu0
      %v5657 = vadd.f32 %v5347, %v5656
      %v5658 = vpop.f32.mrb[0].mxu0
      %5659 = vmatprep.mubr.f32.mxu0 0.0
      %5660 = vmatmul.mubr.f32.gmra.mrb[0].mxu0 %v5440
      %v5661 = vpop.f32.mrb[0].mxu0
      %v5662 = vadd.f32 %v5347, %v5661
      %v5663 = vpop.f32.mrb[0].mxu0
      %5664 = vmatprep.mubr.f32.mxu0 0.0
      %5665 = vmatmul.mubr.f32.gmra.mrb[0].mxu0 %v5443
      %v5666 = vpop.f32.mrb[0].mxu0
      %v5667 = vadd.f32 %v5347, %v5666
      %v5668 = vpop.f32.mrb[0].mxu0
      %5669 = vdwg.mxu0
      %v5670 = vmax.f32 %v5512, 0.0
      %v5671 = vmax.f32 %v5517, 0.0
      %v5672 = vmax.f32 %v5522, 0.0
      %v5673 = vmax.f32 %v5527, 0.0
      %v5674 = vmax.f32 %v5532, 0.0
      %v5675 = vmax.f32 %v5537, 0.0
      %v5676 = vmax.f32 %v5542, 0.0
      %v5677 = vmax.f32 %v5547, 0.0
      %v5678 = vmax.f32 %v5552, 0.0
      %v5679 = vmax.f32 %v5557, 0.0
      %v5680 = vmax.f32 %v5562, 0.0
      %v5681 = vmax.f32 %v5567, 0.0
      %v5682 = vmax.f32 %v5572, 0.0
      %v5683 = vmax.f32 %v5577, 0.0
      %v5684 = vmax.f32 %v5582, 0.0
      %v5685 = vmax.f32 %v5587, 0.0
      %v5686 = vmax.f32 %v5592, 0.0
      %v5687 = vmax.f32 %v5597, 0.0
      %v5688 = vmax.f32 %v5602, 0.0
      %v5689 = vmax.f32 %v5607, 0.0
      %v5690 = vmax.f32 %v5612, 0.0
      %v5691 = vmax.f32 %v5617, 0.0
      %v5692 = vmax.f32 %v5622, 0.0
      %v5693 = vmax.f32 %v5627, 0.0
      %v5694 = vmax.f32 %v5632, 0.0
      %v5695 = vmax.f32 %v5637, 0.0
      %v5696 = vmax.f32 %v5642, 0.0
      %v5697 = vmax.f32 %v5647, 0.0
      %v5698 = vmax.f32 %v5652, 0.0
      %v5699 = vmax.f32 %v5657, 0.0
      %v5700 = vmax.f32 %v5662, 0.0
      %v5701 = vmax.f32 %v5667, 0.0
      %v5702 = vld [vmem:[%s5] sm:$0xff]
      %v5703 = vld [vmem:[%s5 + $0x8] sm:$0xff]
      %v5704 = vld [vmem:[%s5 + $0x10] sm:$0xff]
      %v5705 = vld [vmem:[%s5 + $0x18] sm:$0xff]
      %v5706 = vld [vmem:[%s6] sm:$0x1]
      %v5708 = vlaneseq
      %v5709 = vshrl.u32 %v5708, 7
      %v5710 = vsub.s32 0, %v5709
      %v5711 = vrot.slane %v5706, %v5710
      %v5714 = vsel %vm1263, %v5670, 0
      %v5717 = vsel %vm1263, %v5671, 0
      %v5720 = vsel %vm1263, %v5672, 0
      %v5723 = vsel %vm1263, %v5673, 0
      %v5726 = vsel %vm1263, %v5674, 0
      %v5729 = vsel %vm1263, %v5675, 0
      %v5732 = vsel %vm1263, %v5676, 0
      %v5735 = vsel %vm1263, %v5677, 0
      %v5738 = vsel %vm1263, %v5678, 0
      %v5741 = vsel %vm1263, %v5679, 0
      %v5744 = vsel %vm1263, %v5680, 0
      %v5747 = vsel %vm1263, %v5681, 0
      %v5750 = vsel %vm1263, %v5682, 0
      %v5753 = vsel %vm1263, %v5683, 0
      %v5756 = vsel %vm1263, %v5684, 0
      %v5759 = vsel %vm1263, %v5685, 0
      %v5762 = vsel %vm1263, %v5686, 0
      %v5765 = vsel %vm1263, %v5687, 0
      %v5768 = vsel %vm1263, %v5688, 0
      %v5771 = vsel %vm1263, %v5689, 0
      %v5774 = vsel %vm1263, %v5690, 0
      %v5777 = vsel %vm1263, %v5691, 0
      %v5780 = vsel %vm1263, %v5692, 0
      %v5783 = vsel %vm1263, %v5693, 0
      %v5786 = vsel %vm1263, %v5694, 0
      %v5789 = vsel %vm1263, %v5695, 0
      %v5792 = vsel %vm1263, %v5696, 0
      %v5795 = vsel %vm1263, %v5697, 0
      %v5798 = vsel %vm1263, %v5698, 0
      %v5801 = vsel %vm1263, %v5699, 0
      %v5804 = vsel %vm1263, %v5700, 0
      %v5807 = vsel %vm1263, %v5701, 0
      %5809 = vmatprep.subr.mxu0 0.0
      %5810 = vmatpush1.msra.mxu0 %v5702
      %5811 = vmatprep.subr.mxu0 0.0
      %5812 = vmatpush1.msra.mxu0 %v5703
      %5813 = vmatprep.subr.mxu0 0.0
      %5814 = vmatpush1.msra.mxu0 %v5704
      %5815 = vmatprep.subr.mxu0 0.0
      %5816 = vmatpush1.msra.mxu0 %v5705
      %5817 = vmatprep.subr.mxu0 0.0
      %5818 = vmatpush1.msra.mxu0 0.0
      %5819 = vmatprep.subr.mxu0 0.0
      %5820 = vmatpush1.msra.mxu0 0.0
      %5821 = vmatprep.subr.mxu0 0.0
      %5822 = vmatpush1.msra.mxu0 0.0
      %5823 = vmatprep.subr.mxu0 0.0
      %5824 = vmatpush1.msra.mxu0 0.0
      %5825 = vmatprep.subr.mxu0 0.0
      %5826 = vmatpush1.msra.mxu0 0.0
      %5827 = vmatprep.subr.mxu0 0.0
      %5828 = vmatpush1.msra.mxu0 0.0
      %5829 = vmatprep.subr.mxu0 0.0
      %5830 = vmatpush1.msra.mxu0 0.0
      %5831 = vmatprep.subr.mxu0 0.0
      %5832 = vmatpush1.msra.mxu0 0.0
      %5833 = vmatprep.subr.mxu0 0.0
      %5834 = vmatpush1.msra.mxu0 0.0
      %5835 = vmatprep.subr.mxu0 0.0
      %5836 = vmatpush1.msra.mxu0 0.0
      %5837 = vmatprep.subr.mxu0 0.0
      %5838 = vmatpush1.msra.mxu0 0.0
      %5839 = vmatprep.subr.mxu0 0.0
      %5840 = vmatpush1.msra.mxu0 0.0
      %5841 = vmatprep.subr.mxu0 0.0
      %5842 = vmatpush1.msra.mxu0 0.0
      %5843 = vmatprep.subr.mxu0 0.0
      %5844 = vmatpush1.msra.mxu0 0.0
      %5845 = vmatprep.subr.mxu0 0.0
      %5846 = vmatpush1.msra.mxu0 0.0
      %5847 = vmatprep.subr.mxu0 0.0
      %5848 = vmatpush1.msra.mxu0 0.0
      %5849 = vmatprep.subr.mxu0 0.0
      %5850 = vmatpush1.msra.mxu0 0.0
      %5851 = vmatprep.subr.mxu0 0.0
      %5852 = vmatpush1.msra.mxu0 0.0
      %5853 = vmatprep.subr.mxu0 0.0
      %5854 = vmatpush1.msra.mxu0 0.0
      %5855 = vmatprep.subr.mxu0 0.0
      %5856 = vmatpush1.msra.mxu0 0.0
      %5857 = vmatprep.subr.mxu0 0.0
      %5858 = vmatpush1.msra.mxu0 0.0
      %5859 = vmatprep.subr.mxu0 0.0
      %5860 = vmatpush1.msra.mxu0 0.0
      %5861 = vmatprep.subr.mxu0 0.0
      %5862 = vmatpush1.msra.mxu0 0.0
      %5863 = vmatprep.subr.mxu0 0.0
      %5864 = vmatpush1.msra.mxu0 0.0
      %5865 = vmatprep.subr.mxu0 0.0
      %5866 = vmatpush1.msra.mxu0 0.0
      %5867 = vmatprep.subr.mxu0 0.0
      %5868 = vmatpush1.msra.mxu0 0.0
      %5869 = vmatprep.subr.mxu0 0.0
      %5870 = vmatpush1.msra.mxu0 0.0
      %5871 = vmatprep.subr.mxu0 0.0
      %5872 = vmatpush1.msra.mxu0 0.0
      %5873 = vmatprep.mubr.f32.mxu0 0.0
      %5874 = vmatmul.mubr.f32.gmra.mrb[0].mxu0 %v5714
      %v5875 = vpop.f32.mrb[0].mxu0
      %v5876 = vadd.f32 %v5711, %v5875
      %v5877 = vpop.f32.mrb[0].mxu0
      %5878 = vmatprep.mubr.f32.mxu0 0.0
      %5879 = vmatmul.mubr.f32.gmra.mrb[0].mxu0 %v5717
      %v5880 = vpop.f32.mrb[0].mxu0
      %v5881 = vadd.f32 %v5711, %v5880
      %v5882 = vpop.f32.mrb[0].mxu0
      %5883 = vmatprep.mubr.f32.mxu0 0.0
      %5884 = vmatmul.mubr.f32.gmra.mrb[0].mxu0 %v5720
      %v5885 = vpop.f32.mrb[0].mxu0
      %v5886 = vadd.f32 %v5711, %v5885
      %v5887 = vpop.f32.mrb[0].mxu0
      %5888 = vmatprep.mubr.f32.mxu0 0.0
      %5889 = vmatmul.mubr.f32.gmra.mrb[0].mxu0 %v5723
      %v5890 = vpop.f32.mrb[0].mxu0
      %v5891 = vadd.f32 %v5711, %v5890
      %v5892 = vpop.f32.mrb[0].mxu0
      %5893 = vmatprep.mubr.f32.mxu0 0.0
      %5894 = vmatmul.mubr.f32.gmra.mrb[0].mxu0 %v5726
      %v5895 = vpop.f32.mrb[0].mxu0
      %v5896 = vadd.f32 %v5711, %v5895
      %v5897 = vpop.f32.mrb[0].mxu0
      %5898 = vmatprep.mubr.f32.mxu0 0.0
      %5899 = vmatmul.mubr.f32.gmra.mrb[0].mxu0 %v5729
      %v5900 = vpop.f32.mrb[0].mxu0
      %v5901 = vadd.f32 %v5711, %v5900
      %v5902 = vpop.f32.mrb[0].mxu0
      %5903 = vmatprep.mubr.f32.mxu0 0.0
      %5904 = vmatmul.mubr.f32.gmra.mrb[0].mxu0 %v5732
      %v5905 = vpop.f32.mrb[0].mxu0
      %v5906 = vadd.f32 %v5711, %v5905
      %v5907 = vpop.f32.mrb[0].mxu0
      %5908 = vmatprep.mubr.f32.mxu0 0.0
      %5909 = vmatmul.mubr.f32.gmra.mrb[0].mxu0 %v5735
      %v5910 = vpop.f32.mrb[0].mxu0
      %v5911 = vadd.f32 %v5711, %v5910
      %v5912 = vpop.f32.mrb[0].mxu0
      %5913 = vmatprep.mubr.f32.mxu0 0.0
      %5914 = vmatmul.mubr.f32.gmra.mrb[0].mxu0 %v5738
      %v5915 = vpop.f32.mrb[0].mxu0
      %v5916 = vadd.f32 %v5711, %v5915
      %v5917 = vpop.f32.mrb[0].mxu0
      %5918 = vmatprep.mubr.f32.mxu0 0.0
      %5919 = vmatmul.mubr.f32.gmra.mrb[0].mxu0 %v5741
      %v5920 = vpop.f32.mrb[0].mxu0
      %v5921 = vadd.f32 %v5711, %v5920
      %v5922 = vpop.f32.mrb[0].mxu0
      %5923 = vmatprep.mubr.f32.mxu0 0.0
      %5924 = vmatmul.mubr.f32.gmra.mrb[0].mxu0 %v5744
      %v5925 = vpop.f32.mrb[0].mxu0
      %v5926 = vadd.f32 %v5711, %v5925
      %v5927 = vpop.f32.mrb[0].mxu0
      %5928 = vmatprep.mubr.f32.mxu0 0.0
      %5929 = vmatmul.mubr.f32.gmra.mrb[0].mxu0 %v5747
      %v5930 = vpop.f32.mrb[0].mxu0
      %v5931 = vadd.f32 %v5711, %v5930
      %v5932 = vpop.f32.mrb[0].mxu0
      %5933 = vmatprep.mubr.f32.mxu0 0.0
      %5934 = vmatmul.mubr.f32.gmra.mrb[0].mxu0 %v5750
      %v5935 = vpop.f32.mrb[0].mxu0
      %v5936 = vadd.f32 %v5711, %v5935
      %v5937 = vpop.f32.mrb[0].mxu0
      %5938 = vmatprep.mubr.f32.mxu0 0.0
      %5939 = vmatmul.mubr.f32.gmra.mrb[0].mxu0 %v5753
      %v5940 = vpop.f32.mrb[0].mxu0
      %v5941 = vadd.f32 %v5711, %v5940
      %v5942 = vpop.f32.mrb[0].mxu0
      %5943 = vmatprep.mubr.f32.mxu0 0.0
      %5944 = vmatmul.mubr.f32.gmra.mrb[0].mxu0 %v5756
      %v5945 = vpop.f32.mrb[0].mxu0
      %v5946 = vadd.f32 %v5711, %v5945
      %v5947 = vpop.f32.mrb[0].mxu0
      %5948 = vmatprep.mubr.f32.mxu0 0.0
      %5949 = vmatmul.mubr.f32.gmra.mrb[0].mxu0 %v5759
      %v5950 = vpop.f32.mrb[0].mxu0
      %v5951 = vadd.f32 %v5711, %v5950
      %v5952 = vpop.f32.mrb[0].mxu0
      %5953 = vmatprep.mubr.f32.mxu0 0.0
      %5954 = vmatmul.mubr.f32.gmra.mrb[0].mxu0 %v5762
      %v5955 = vpop.f32.mrb[0].mxu0
      %v5956 = vadd.f32 %v5711, %v5955
      %v5957 = vpop.f32.mrb[0].mxu0
      %5958 = vmatprep.mubr.f32.mxu0 0.0
      %5959 = vmatmul.mubr.f32.gmra.mrb[0].mxu0 %v5765
      %v5960 = vpop.f32.mrb[0].mxu0
      %v5961 = vadd.f32 %v5711, %v5960
      %v5962 = vpop.f32.mrb[0].mxu0
      %5963 = vmatprep.mubr.f32.mxu0 0.0
      %5964 = vmatmul.mubr.f32.gmra.mrb[0].mxu0 %v5768
      %v5965 = vpop.f32.mrb[0].mxu0
      %v5966 = vadd.f32 %v5711, %v5965
      %v5967 = vpop.f32.mrb[0].mxu0
      %5968 = vmatprep.mubr.f32.mxu0 0.0
      %5969 = vmatmul.mubr.f32.gmra.mrb[0].mxu0 %v5771
      %v5970 = vpop.f32.mrb[0].mxu0
      %v5971 = vadd.f32 %v5711, %v5970
      %v5972 = vpop.f32.mrb[0].mxu0
      %5973 = vmatprep.mubr.f32.mxu0 0.0
      %5974 = vmatmul.mubr.f32.gmra.mrb[0].mxu0 %v5774
      %v5975 = vpop.f32.mrb[0].mxu0
      %v5976 = vadd.f32 %v5711, %v5975
      %v5977 = vpop.f32.mrb[0].mxu0
      %5978 = vmatprep.mubr.f32.mxu0 0.0
      %5979 = vmatmul.mubr.f32.gmra.mrb[0].mxu0 %v5777
      %v5980 = vpop.f32.mrb[0].mxu0
      %v5981 = vadd.f32 %v5711, %v5980
      %v5982 = vpop.f32.mrb[0].mxu0
      %5983 = vmatprep.mubr.f32.mxu0 0.0
      %5984 = vmatmul.mubr.f32.gmra.mrb[0].mxu0 %v5780
      %v5985 = vpop.f32.mrb[0].mxu0
      %v5986 = vadd.f32 %v5711, %v5985
      %v5987 = vpop.f32.mrb[0].mxu0
      %5988 = vmatprep.mubr.f32.mxu0 0.0
      %5989 = vmatmul.mubr.f32.gmra.mrb[0].mxu0 %v5783
      %v5990 = vpop.f32.mrb[0].mxu0
      %v5991 = vadd.f32 %v5711, %v5990
      %v5992 = vpop.f32.mrb[0].mxu0
      %5993 = vmatprep.mubr.f32.mxu0 0.0
      %5994 = vmatmul.mubr.f32.gmra.mrb[0].mxu0 %v5786
      %v5995 = vpop.f32.mrb[0].mxu0
      %v5996 = vadd.f32 %v5711, %v5995
      %v5997 = vpop.f32.mrb[0].mxu0
      %5998 = vmatprep.mubr.f32.mxu0 0.0
      %5999 = vmatmul.mubr.f32.gmra.mrb[0].mxu0 %v5789
      %v6000 = vpop.f32.mrb[0].mxu0
      %v6001 = vadd.f32 %v5711, %v6000
      %v6002 = vpop.f32.mrb[0].mxu0
      %6003 = vmatprep.mubr.f32.mxu0 0.0
      %6004 = vmatmul.mubr.f32.gmra.mrb[0].mxu0 %v5792
      %v6005 = vpop.f32.mrb[0].mxu0
      %v6006 = vadd.f32 %v5711, %v6005
      %v6007 = vpop.f32.mrb[0].mxu0
      %6008 = vmatprep.mubr.f32.mxu0 0.0
      %6009 = vmatmul.mubr.f32.gmra.mrb[0].mxu0 %v5795
      %v6010 = vpop.f32.mrb[0].mxu0
      %v6011 = vadd.f32 %v5711, %v6010
      %v6012 = vpop.f32.mrb[0].mxu0
      %6013 = vmatprep.mubr.f32.mxu0 0.0
      %6014 = vmatmul.mubr.f32.gmra.mrb[0].mxu0 %v5798
      %v6015 = vpop.f32.mrb[0].mxu0
      %v6016 = vadd.f32 %v5711, %v6015
      %v6017 = vpop.f32.mrb[0].mxu0
      %6018 = vmatprep.mubr.f32.mxu0 0.0
      %6019 = vmatmul.mubr.f32.gmra.mrb[0].mxu0 %v5801
      %v6020 = vpop.f32.mrb[0].mxu0
      %v6021 = vadd.f32 %v5711, %v6020
      %v6022 = vpop.f32.mrb[0].mxu0
      %6023 = vmatprep.mubr.f32.mxu0 0.0
      %6024 = vmatmul.mubr.f32.gmra.mrb[0].mxu0 %v5804
      %v6025 = vpop.f32.mrb[0].mxu0
      %v6026 = vadd.f32 %v5711, %v6025
      %v6027 = vpop.f32.mrb[0].mxu0
      %6028 = vmatprep.mubr.f32.mxu0 0.0
      %6029 = vmatmul.mubr.f32.gmra.mrb[0].mxu0 %v5807
      %v6030 = vpop.f32.mrb[0].mxu0
      %v6031 = vadd.f32 %v5711, %v6030
      %v6032 = vpop.f32.mrb[0].mxu0
      %6033 = vdwg.mxu0
      %s6034 = scalar_lea.vmem %s477, 512
      %6035 = vst.msk [vmem:[%s6034] sm:$0xff] %vm1585, %v5876
      %6036 = vst.msk [vmem:[%s6034 + $0x8] sm:$0xff] %vm1585, %v5881
      %6037 = vst.msk [vmem:[%s6034 + $0x10] sm:$0xff] %vm1585, %v5886
      %6038 = vst.msk [vmem:[%s6034 + $0x18] sm:$0xff] %vm1585, %v5891
      %6039 = vst.msk [vmem:[%s6034 + $0x20] sm:$0xff] %vm1585, %v5896
      %6040 = vst.msk [vmem:[%s6034 + $0x28] sm:$0xff] %vm1585, %v5901
      %6041 = vst.msk [vmem:[%s6034 + $0x30] sm:$0xff] %vm1585, %v5906
      %6042 = vst.msk [vmem:[%s6034 + $0x38] sm:$0xff] %vm1585, %v5911
      %6043 = vst.msk [vmem:[%s6034 + $0x40] sm:$0xff] %vm1585, %v5916
      %6044 = vst.msk [vmem:[%s6034 + $0x48] sm:$0xff] %vm1585, %v5921
      %6045 = vst.msk [vmem:[%s6034 + $0x50] sm:$0xff] %vm1585, %v5926
      %6046 = vst.msk [vmem:[%s6034 + $0x58] sm:$0xff] %vm1585, %v5931
      %6047 = vst.msk [vmem:[%s6034 + $0x60] sm:$0xff] %vm1585, %v5936
      %6048 = vst.msk [vmem:[%s6034 + $0x68] sm:$0xff] %vm1585, %v5941
      %6049 = vst.msk [vmem:[%s6034 + $0x70] sm:$0xff] %vm1585, %v5946
      %6050 = vst.msk [vmem:[%s6034 + $0x78] sm:$0xff] %vm1585, %v5951
      %6051 = vst.msk [vmem:[%s6034 + $0x80] sm:$0xff] %vm1585, %v5956
      %6052 = vst.msk [vmem:[%s6034 + $0x88] sm:$0xff] %vm1585, %v5961
      %6053 = vst.msk [vmem:[%s6034 + $0x90] sm:$0xff] %vm1585, %v5966
      %6054 = vst.msk [vmem:[%s6034 + $0x98] sm:$0xff] %vm1585, %v5971
      %6055 = vst.msk [vmem:[%s6034 + $0xa0] sm:$0xff] %vm1585, %v5976
      %6056 = vst.msk [vmem:[%s6034 + $0xa8] sm:$0xff] %vm1585, %v5981
      %6057 = vst.msk [vmem:[%s6034 + $0xb0] sm:$0xff] %vm1585, %v5986
      %6058 = vst.msk [vmem:[%s6034 + $0xb8] sm:$0xff] %vm1585, %v5991
      %6059 = vst.msk [vmem:[%s6034 + $0xc0] sm:$0xff] %vm1585, %v5996
      %6060 = vst.msk [vmem:[%s6034 + $0xc8] sm:$0xff] %vm1585, %v6001
      %6061 = vst.msk [vmem:[%s6034 + $0xd0] sm:$0xff] %vm1585, %v6006
      %6062 = vst.msk [vmem:[%s6034 + $0xd8] sm:$0xff] %vm1585, %v6011
      %6063 = vst.msk [vmem:[%s6034 + $0xe0] sm:$0xff] %vm1585, %v6016
      %6064 = vst.msk [vmem:[%s6034 + $0xe8] sm:$0xff] %vm1585, %v6021
      %6065 = vst.msk [vmem:[%s6034 + $0xf0] sm:$0xff] %vm1585, %v6026
      %6066 = vst.msk [vmem:[%s6034 + $0xf8] sm:$0xff] %vm1585, %v6031
      %v6067 = vld [vmem:[%s7] sm:$0xff]
      %v6068 = vld [vmem:[%s7 + $0x8] sm:$0xff]
      %v6069 = vld [vmem:[%s8] sm:$0x1]
      %v6071 = vlaneseq
      %v6072 = vshrl.u32 %v6071, 7
      %v6073 = vsub.s32 0, %v6072
      %v6074 = vrot.slane %v6069, %v6073
      %v6077 = vsel %vm1585, %v5876, 0
      %v6080 = vsel %vm1585, %v5881, 0
      %v6083 = vsel %vm1585, %v5886, 0
      %v6086 = vsel %vm1585, %v5891, 0
      %v6089 = vsel %vm1585, %v5896, 0
      %v6092 = vsel %vm1585, %v5901, 0
      %v6095 = vsel %vm1585, %v5906, 0
      %v6098 = vsel %vm1585, %v5911, 0
      %v6101 = vsel %vm1585, %v5916, 0
      %v6104 = vsel %vm1585, %v5921, 0
      %v6107 = vsel %vm1585, %v5926, 0
      %v6110 = vsel %vm1585, %v5931, 0
      %v6113 = vsel %vm1585, %v5936, 0
      %v6116 = vsel %vm1585, %v5941, 0
      %v6119 = vsel %vm1585, %v5946, 0
      %v6122 = vsel %vm1585, %v5951, 0
      %v6125 = vsel %vm1585, %v5956, 0
      %v6128 = vsel %vm1585, %v5961, 0
      %v6131 = vsel %vm1585, %v5966, 0
      %v6134 = vsel %vm1585, %v5971, 0
      %v6137 = vsel %vm1585, %v5976, 0
      %v6140 = vsel %vm1585, %v5981, 0
      %v6143 = vsel %vm1585, %v5986, 0
      %v6146 = vsel %vm1585, %v5991, 0
      %v6149 = vsel %vm1585, %v5996, 0
      %v6152 = vsel %vm1585, %v6001, 0
      %v6155 = vsel %vm1585, %v6006, 0
      %v6158 = vsel %vm1585, %v6011, 0
      %v6161 = vsel %vm1585, %v6016, 0
      %v6164 = vsel %vm1585, %v6021, 0
      %v6167 = vsel %vm1585, %v6026, 0
      %v6170 = vsel %vm1585, %v6031, 0
      %6172 = vmatprep.subr.mxu0 0.0
      %6173 = vmatpush1.msra.mxu0 %v6067
      %6174 = vmatprep.subr.mxu0 0.0
      %6175 = vmatpush1.msra.mxu0 %v6068
      %6176 = vmatprep.subr.mxu0 0.0
      %6177 = vmatpush1.msra.mxu0 0.0
      %6178 = vmatprep.subr.mxu0 0.0
      %6179 = vmatpush1.msra.mxu0 0.0
      %6180 = vmatprep.subr.mxu0 0.0
      %6181 = vmatpush1.msra.mxu0 0.0
      %6182 = vmatprep.subr.mxu0 0.0
      %6183 = vmatpush1.msra.mxu0 0.0
      %6184 = vmatprep.subr.mxu0 0.0
      %6185 = vmatpush1.msra.mxu0 0.0
      %6186 = vmatprep.subr.mxu0 0.0
      %6187 = vmatpush1.msra.mxu0 0.0
      %6188 = vmatprep.subr.mxu0 0.0
      %6189 = vmatpush1.msra.mxu0 0.0
      %6190 = vmatprep.subr.mxu0 0.0
      %6191 = vmatpush1.msra.mxu0 0.0
      %6192 = vmatprep.subr.mxu0 0.0
      %6193 = vmatpush1.msra.mxu0 0.0
      %6194 = vmatprep.subr.mxu0 0.0
      %6195 = vmatpush1.msra.mxu0 0.0
      %6196 = vmatprep.subr.mxu0 0.0
      %6197 = vmatpush1.msra.mxu0 0.0
      %6198 = vmatprep.subr.mxu0 0.0
      %6199 = vmatpush1.msra.mxu0 0.0
      %6200 = vmatprep.subr.mxu0 0.0
      %6201 = vmatpush1.msra.mxu0 0.0
      %6202 = vmatprep.subr.mxu0 0.0
      %6203 = vmatpush1.msra.mxu0 0.0
      %6204 = vmatprep.subr.mxu0 0.0
      %6205 = vmatpush1.msra.mxu0 0.0
      %6206 = vmatprep.subr.mxu0 0.0
      %6207 = vmatpush1.msra.mxu0 0.0
      %6208 = vmatprep.subr.mxu0 0.0
      %6209 = vmatpush1.msra.mxu0 0.0
      %6210 = vmatprep.subr.mxu0 0.0
      %6211 = vmatpush1.msra.mxu0 0.0
      %6212 = vmatprep.subr.mxu0 0.0
      %6213 = vmatpush1.msra.mxu0 0.0
      %6214 = vmatprep.subr.mxu0 0.0
      %6215 = vmatpush1.msra.mxu0 0.0
      %6216 = vmatprep.subr.mxu0 0.0
      %6217 = vmatpush1.msra.mxu0 0.0
      %6218 = vmatprep.subr.mxu0 0.0
      %6219 = vmatpush1.msra.mxu0 0.0
      %6220 = vmatprep.subr.mxu0 0.0
      %6221 = vmatpush1.msra.mxu0 0.0
      %6222 = vmatprep.subr.mxu0 0.0
      %6223 = vmatpush1.msra.mxu0 0.0
      %6224 = vmatprep.subr.mxu0 0.0
      %6225 = vmatpush1.msra.mxu0 0.0
      %6226 = vmatprep.subr.mxu0 0.0
      %6227 = vmatpush1.msra.mxu0 0.0
      %6228 = vmatprep.subr.mxu0 0.0
      %6229 = vmatpush1.msra.mxu0 0.0
      %6230 = vmatprep.subr.mxu0 0.0
      %6231 = vmatpush1.msra.mxu0 0.0
      %6232 = vmatprep.subr.mxu0 0.0
      %6233 = vmatpush1.msra.mxu0 0.0
      %6234 = vmatprep.subr.mxu0 0.0
      %6235 = vmatpush1.msra.mxu0 0.0
      %6236 = vmatprep.mubr.f32.mxu0 0.0
      %6237 = vmatmul.mubr.f32.gmra.mrb[0].mxu0 %v6077
      %v6238 = vpop.f32.mrb[0].mxu0
      %v6239 = vadd.f32 %v6074, %v6238
      %v6240 = vpop.f32.mrb[0].mxu0
      %6241 = vmatprep.mubr.f32.mxu0 0.0
      %6242 = vmatmul.mubr.f32.gmra.mrb[0].mxu0 %v6080
      %v6243 = vpop.f32.mrb[0].mxu0
      %v6244 = vadd.f32 %v6074, %v6243
      %v6245 = vpop.f32.mrb[0].mxu0
      %6246 = vmatprep.mubr.f32.mxu0 0.0
      %6247 = vmatmul.mubr.f32.gmra.mrb[0].mxu0 %v6083
      %v6248 = vpop.f32.mrb[0].mxu0
      %v6249 = vadd.f32 %v6074, %v6248
      %v6250 = vpop.f32.mrb[0].mxu0
      %6251 = vmatprep.mubr.f32.mxu0 0.0
      %6252 = vmatmul.mubr.f32.gmra.mrb[0].mxu0 %v6086
      %v6253 = vpop.f32.mrb[0].mxu0
      %v6254 = vadd.f32 %v6074, %v6253
      %v6255 = vpop.f32.mrb[0].mxu0
      %6256 = vmatprep.mubr.f32.mxu0 0.0
      %6257 = vmatmul.mubr.f32.gmra.mrb[0].mxu0 %v6089
      %v6258 = vpop.f32.mrb[0].mxu0
      %v6259 = vadd.f32 %v6074, %v6258
      %v6260 = vpop.f32.mrb[0].mxu0
      %6261 = vmatprep.mubr.f32.mxu0 0.0
      %6262 = vmatmul.mubr.f32.gmra.mrb[0].mxu0 %v6092
      %v6263 = vpop.f32.mrb[0].mxu0
      %v6264 = vadd.f32 %v6074, %v6263
      %v6265 = vpop.f32.mrb[0].mxu0
      %6266 = vmatprep.mubr.f32.mxu0 0.0
      %6267 = vmatmul.mubr.f32.gmra.mrb[0].mxu0 %v6095
      %v6268 = vpop.f32.mrb[0].mxu0
      %v6269 = vadd.f32 %v6074, %v6268
      %v6270 = vpop.f32.mrb[0].mxu0
      %6271 = vmatprep.mubr.f32.mxu0 0.0
      %6272 = vmatmul.mubr.f32.gmra.mrb[0].mxu0 %v6098
      %v6273 = vpop.f32.mrb[0].mxu0
      %v6274 = vadd.f32 %v6074, %v6273
      %v6275 = vpop.f32.mrb[0].mxu0
      %6276 = vmatprep.mubr.f32.mxu0 0.0
      %6277 = vmatmul.mubr.f32.gmra.mrb[0].mxu0 %v6101
      %v6278 = vpop.f32.mrb[0].mxu0
      %v6279 = vadd.f32 %v6074, %v6278
      %v6280 = vpop.f32.mrb[0].mxu0
      %6281 = vmatprep.mubr.f32.mxu0 0.0
      %6282 = vmatmul.mubr.f32.gmra.mrb[0].mxu0 %v6104
      %v6283 = vpop.f32.mrb[0].mxu0
      %v6284 = vadd.f32 %v6074, %v6283
      %v6285 = vpop.f32.mrb[0].mxu0
      %6286 = vmatprep.mubr.f32.mxu0 0.0
      %6287 = vmatmul.mubr.f32.gmra.mrb[0].mxu0 %v6107
      %v6288 = vpop.f32.mrb[0].mxu0
      %v6289 = vadd.f32 %v6074, %v6288
      %v6290 = vpop.f32.mrb[0].mxu0
      %6291 = vmatprep.mubr.f32.mxu0 0.0
      %6292 = vmatmul.mubr.f32.gmra.mrb[0].mxu0 %v6110
      %v6293 = vpop.f32.mrb[0].mxu0
      %v6294 = vadd.f32 %v6074, %v6293
      %v6295 = vpop.f32.mrb[0].mxu0
      %6296 = vmatprep.mubr.f32.mxu0 0.0
      %6297 = vmatmul.mubr.f32.gmra.mrb[0].mxu0 %v6113
      %v6298 = vpop.f32.mrb[0].mxu0
      %v6299 = vadd.f32 %v6074, %v6298
      %v6300 = vpop.f32.mrb[0].mxu0
      %6301 = vmatprep.mubr.f32.mxu0 0.0
      %6302 = vmatmul.mubr.f32.gmra.mrb[0].mxu0 %v6116
      %v6303 = vpop.f32.mrb[0].mxu0
      %v6304 = vadd.f32 %v6074, %v6303
      %v6305 = vpop.f32.mrb[0].mxu0
      %6306 = vmatprep.mubr.f32.mxu0 0.0
      %6307 = vmatmul.mubr.f32.gmra.mrb[0].mxu0 %v6119
      %v6308 = vpop.f32.mrb[0].mxu0
      %v6309 = vadd.f32 %v6074, %v6308
      %v6310 = vpop.f32.mrb[0].mxu0
      %6311 = vmatprep.mubr.f32.mxu0 0.0
      %6312 = vmatmul.mubr.f32.gmra.mrb[0].mxu0 %v6122
      %v6313 = vpop.f32.mrb[0].mxu0
      %v6314 = vadd.f32 %v6074, %v6313
      %v6315 = vpop.f32.mrb[0].mxu0
      %6316 = vmatprep.mubr.f32.mxu0 0.0
      %6317 = vmatmul.mubr.f32.gmra.mrb[0].mxu0 %v6125
      %v6318 = vpop.f32.mrb[0].mxu0
      %v6319 = vadd.f32 %v6074, %v6318
      %v6320 = vpop.f32.mrb[0].mxu0
      %6321 = vmatprep.mubr.f32.mxu0 0.0
      %6322 = vmatmul.mubr.f32.gmra.mrb[0].mxu0 %v6128
      %v6323 = vpop.f32.mrb[0].mxu0
      %v6324 = vadd.f32 %v6074, %v6323
      %v6325 = vpop.f32.mrb[0].mxu0
      %6326 = vmatprep.mubr.f32.mxu0 0.0
      %6327 = vmatmul.mubr.f32.gmra.mrb[0].mxu0 %v6131
      %v6328 = vpop.f32.mrb[0].mxu0
      %v6329 = vadd.f32 %v6074, %v6328
      %v6330 = vpop.f32.mrb[0].mxu0
      %6331 = vmatprep.mubr.f32.mxu0 0.0
      %6332 = vmatmul.mubr.f32.gmra.mrb[0].mxu0 %v6134
      %v6333 = vpop.f32.mrb[0].mxu0
      %v6334 = vadd.f32 %v6074, %v6333
      %v6335 = vpop.f32.mrb[0].mxu0
      %6336 = vmatprep.mubr.f32.mxu0 0.0
      %6337 = vmatmul.mubr.f32.gmra.mrb[0].mxu0 %v6137
      %v6338 = vpop.f32.mrb[0].mxu0
      %v6339 = vadd.f32 %v6074, %v6338
      %v6340 = vpop.f32.mrb[0].mxu0
      %6341 = vmatprep.mubr.f32.mxu0 0.0
      %6342 = vmatmul.mubr.f32.gmra.mrb[0].mxu0 %v6140
      %v6343 = vpop.f32.mrb[0].mxu0
      %v6344 = vadd.f32 %v6074, %v6343
      %v6345 = vpop.f32.mrb[0].mxu0
      %6346 = vmatprep.mubr.f32.mxu0 0.0
      %6347 = vmatmul.mubr.f32.gmra.mrb[0].mxu0 %v6143
      %v6348 = vpop.f32.mrb[0].mxu0
      %v6349 = vadd.f32 %v6074, %v6348
      %v6350 = vpop.f32.mrb[0].mxu0
      %6351 = vmatprep.mubr.f32.mxu0 0.0
      %6352 = vmatmul.mubr.f32.gmra.mrb[0].mxu0 %v6146
      %v6353 = vpop.f32.mrb[0].mxu0
      %v6354 = vadd.f32 %v6074, %v6353
      %v6355 = vpop.f32.mrb[0].mxu0
      %6356 = vmatprep.mubr.f32.mxu0 0.0
      %6357 = vmatmul.mubr.f32.gmra.mrb[0].mxu0 %v6149
      %v6358 = vpop.f32.mrb[0].mxu0
      %v6359 = vadd.f32 %v6074, %v6358
      %v6360 = vpop.f32.mrb[0].mxu0
      %6361 = vmatprep.mubr.f32.mxu0 0.0
      %6362 = vmatmul.mubr.f32.gmra.mrb[0].mxu0 %v6152
      %v6363 = vpop.f32.mrb[0].mxu0
      %v6364 = vadd.f32 %v6074, %v6363
      %v6365 = vpop.f32.mrb[0].mxu0
      %6366 = vmatprep.mubr.f32.mxu0 0.0
      %6367 = vmatmul.mubr.f32.gmra.mrb[0].mxu0 %v6155
      %v6368 = vpop.f32.mrb[0].mxu0
      %v6369 = vadd.f32 %v6074, %v6368
      %v6370 = vpop.f32.mrb[0].mxu0
      %6371 = vmatprep.mubr.f32.mxu0 0.0
      %6372 = vmatmul.mubr.f32.gmra.mrb[0].mxu0 %v6158
      %v6373 = vpop.f32.mrb[0].mxu0
      %v6374 = vadd.f32 %v6074, %v6373
      %v6375 = vpop.f32.mrb[0].mxu0
      %6376 = vmatprep.mubr.f32.mxu0 0.0
      %6377 = vmatmul.mubr.f32.gmra.mrb[0].mxu0 %v6161
      %v6378 = vpop.f32.mrb[0].mxu0
      %v6379 = vadd.f32 %v6074, %v6378
      %v6380 = vpop.f32.mrb[0].mxu0
      %6381 = vmatprep.mubr.f32.mxu0 0.0
      %6382 = vmatmul.mubr.f32.gmra.mrb[0].mxu0 %v6164
      %v6383 = vpop.f32.mrb[0].mxu0
      %v6384 = vadd.f32 %v6074, %v6383
      %v6385 = vpop.f32.mrb[0].mxu0
      %6386 = vmatprep.mubr.f32.mxu0 0.0
      %6387 = vmatmul.mubr.f32.gmra.mrb[0].mxu0 %v6167
      %v6388 = vpop.f32.mrb[0].mxu0
      %v6389 = vadd.f32 %v6074, %v6388
      %v6390 = vpop.f32.mrb[0].mxu0
      %6391 = vmatprep.mubr.f32.mxu0 0.0
      %6392 = vmatmul.mubr.f32.gmra.mrb[0].mxu0 %v6170
      %v6393 = vpop.f32.mrb[0].mxu0
      %v6394 = vadd.f32 %v6074, %v6393
      %v6395 = vpop.f32.mrb[0].mxu0
      %6396 = vdwg.mxu0
      %v6397 = vmax.f32 %v6239, 0.0
      %v6398 = vmax.f32 %v6244, 0.0
      %v6399 = vmax.f32 %v6249, 0.0
      %v6400 = vmax.f32 %v6254, 0.0
      %v6401 = vmax.f32 %v6259, 0.0
      %v6402 = vmax.f32 %v6264, 0.0
      %v6403 = vmax.f32 %v6269, 0.0
      %v6404 = vmax.f32 %v6274, 0.0
      %v6405 = vmax.f32 %v6279, 0.0
      %v6406 = vmax.f32 %v6284, 0.0
      %v6407 = vmax.f32 %v6289, 0.0
      %v6408 = vmax.f32 %v6294, 0.0
      %v6409 = vmax.f32 %v6299, 0.0
      %v6410 = vmax.f32 %v6304, 0.0
      %v6411 = vmax.f32 %v6309, 0.0
      %v6412 = vmax.f32 %v6314, 0.0
      %v6413 = vmax.f32 %v6319, 0.0
      %v6414 = vmax.f32 %v6324, 0.0
      %v6415 = vmax.f32 %v6329, 0.0
      %v6416 = vmax.f32 %v6334, 0.0
      %v6417 = vmax.f32 %v6339, 0.0
      %v6418 = vmax.f32 %v6344, 0.0
      %v6419 = vmax.f32 %v6349, 0.0
      %v6420 = vmax.f32 %v6354, 0.0
      %v6421 = vmax.f32 %v6359, 0.0
      %v6422 = vmax.f32 %v6364, 0.0
      %v6423 = vmax.f32 %v6369, 0.0
      %v6424 = vmax.f32 %v6374, 0.0
      %v6425 = vmax.f32 %v6379, 0.0
      %v6426 = vmax.f32 %v6384, 0.0
      %v6427 = vmax.f32 %v6389, 0.0
      %v6428 = vmax.f32 %v6394, 0.0
      %v6429 = vld [vmem:[%s9] sm:$0xff]
      %v6430 = vld [vmem:[%s9 + $0x8] sm:$0xff]
      %v6431 = vld [vmem:[%s9 + $0x10] sm:$0xff]
      %v6432 = vld [vmem:[%s9 + $0x18] sm:$0xff]
      %v6433 = vld [vmem:[%s10] sm:$0x1]
      %v6435 = vlaneseq
      %v6436 = vshrl.u32 %v6435, 7
      %v6437 = vsub.s32 0, %v6436
      %v6438 = vrot.slane %v6433, %v6437
      %v6441 = vsel %vm1263, %v6397, 0
      %v6444 = vsel %vm1263, %v6398, 0
      %v6447 = vsel %vm1263, %v6399, 0
      %v6450 = vsel %vm1263, %v6400, 0
      %v6453 = vsel %vm1263, %v6401, 0
      %v6456 = vsel %vm1263, %v6402, 0
      %v6459 = vsel %vm1263, %v6403, 0
      %v6462 = vsel %vm1263, %v6404, 0
      %v6465 = vsel %vm1263, %v6405, 0
      %v6468 = vsel %vm1263, %v6406, 0
      %v6471 = vsel %vm1263, %v6407, 0
      %v6474 = vsel %vm1263, %v6408, 0
      %v6477 = vsel %vm1263, %v6409, 0
      %v6480 = vsel %vm1263, %v6410, 0
      %v6483 = vsel %vm1263, %v6411, 0
      %v6486 = vsel %vm1263, %v6412, 0
      %v6489 = vsel %vm1263, %v6413, 0
      %v6492 = vsel %vm1263, %v6414, 0
      %v6495 = vsel %vm1263, %v6415, 0
      %v6498 = vsel %vm1263, %v6416, 0
      %v6501 = vsel %vm1263, %v6417, 0
      %v6504 = vsel %vm1263, %v6418, 0
      %v6507 = vsel %vm1263, %v6419, 0
      %v6510 = vsel %vm1263, %v6420, 0
      %v6513 = vsel %vm1263, %v6421, 0
      %v6516 = vsel %vm1263, %v6422, 0
      %v6519 = vsel %vm1263, %v6423, 0
      %v6522 = vsel %vm1263, %v6424, 0
      %v6525 = vsel %vm1263, %v6425, 0
      %v6528 = vsel %vm1263, %v6426, 0
      %v6531 = vsel %vm1263, %v6427, 0
      %v6534 = vsel %vm1263, %v6428, 0
      %6536 = vmatprep.subr.mxu0 0.0
      %6537 = vmatpush1.msra.mxu0 %v6429
      %6538 = vmatprep.subr.mxu0 0.0
      %6539 = vmatpush1.msra.mxu0 %v6430
      %6540 = vmatprep.subr.mxu0 0.0
      %6541 = vmatpush1.msra.mxu0 %v6431
      %6542 = vmatprep.subr.mxu0 0.0
      %6543 = vmatpush1.msra.mxu0 %v6432
      %6544 = vmatprep.subr.mxu0 0.0
      %6545 = vmatpush1.msra.mxu0 0.0
      %6546 = vmatprep.subr.mxu0 0.0
      %6547 = vmatpush1.msra.mxu0 0.0
      %6548 = vmatprep.subr.mxu0 0.0
      %6549 = vmatpush1.msra.mxu0 0.0
      %6550 = vmatprep.subr.mxu0 0.0
      %6551 = vmatpush1.msra.mxu0 0.0
      %6552 = vmatprep.subr.mxu0 0.0
      %6553 = vmatpush1.msra.mxu0 0.0
      %6554 = vmatprep.subr.mxu0 0.0
      %6555 = vmatpush1.msra.mxu0 0.0
      %6556 = vmatprep.subr.mxu0 0.0
      %6557 = vmatpush1.msra.mxu0 0.0
      %6558 = vmatprep.subr.mxu0 0.0
      %6559 = vmatpush1.msra.mxu0 0.0
      %6560 = vmatprep.subr.mxu0 0.0
      %6561 = vmatpush1.msra.mxu0 0.0
      %6562 = vmatprep.subr.mxu0 0.0
      %6563 = vmatpush1.msra.mxu0 0.0
      %6564 = vmatprep.subr.mxu0 0.0
      %6565 = vmatpush1.msra.mxu0 0.0
      %6566 = vmatprep.subr.mxu0 0.0
      %6567 = vmatpush1.msra.mxu0 0.0
      %6568 = vmatprep.subr.mxu0 0.0
      %6569 = vmatpush1.msra.mxu0 0.0
      %6570 = vmatprep.subr.mxu0 0.0
      %6571 = vmatpush1.msra.mxu0 0.0
      %6572 = vmatprep.subr.mxu0 0.0
      %6573 = vmatpush1.msra.mxu0 0.0
      %6574 = vmatprep.subr.mxu0 0.0
      %6575 = vmatpush1.msra.mxu0 0.0
      %6576 = vmatprep.subr.mxu0 0.0
      %6577 = vmatpush1.msra.mxu0 0.0
      %6578 = vmatprep.subr.mxu0 0.0
      %6579 = vmatpush1.msra.mxu0 0.0
      %6580 = vmatprep.subr.mxu0 0.0
      %6581 = vmatpush1.msra.mxu0 0.0
      %6582 = vmatprep.subr.mxu0 0.0
      %6583 = vmatpush1.msra.mxu0 0.0
      %6584 = vmatprep.subr.mxu0 0.0
      %6585 = vmatpush1.msra.mxu0 0.0
      %6586 = vmatprep.subr.mxu0 0.0
      %6587 = vmatpush1.msra.mxu0 0.0
      %6588 = vmatprep.subr.mxu0 0.0
      %6589 = vmatpush1.msra.mxu0 0.0
      %6590 = vmatprep.subr.mxu0 0.0
      %6591 = vmatpush1.msra.mxu0 0.0
      %6592 = vmatprep.subr.mxu0 0.0
      %6593 = vmatpush1.msra.mxu0 0.0
      %6594 = vmatprep.subr.mxu0 0.0
      %6595 = vmatpush1.msra.mxu0 0.0
      %6596 = vmatprep.subr.mxu0 0.0
      %6597 = vmatpush1.msra.mxu0 0.0
      %6598 = vmatprep.subr.mxu0 0.0
      %6599 = vmatpush1.msra.mxu0 0.0
      %6600 = vmatprep.mubr.f32.mxu0 0.0
      %6601 = vmatmul.mubr.f32.gmra.mrb[0].mxu0 %v6441
      %v6602 = vpop.f32.mrb[0].mxu0
      %v6603 = vadd.f32 %v6438, %v6602
      %v6604 = vpop.f32.mrb[0].mxu0
      %6605 = vmatprep.mubr.f32.mxu0 0.0
      %6606 = vmatmul.mubr.f32.gmra.mrb[0].mxu0 %v6444
      %v6607 = vpop.f32.mrb[0].mxu0
      %v6608 = vadd.f32 %v6438, %v6607
      %v6609 = vpop.f32.mrb[0].mxu0
      %6610 = vmatprep.mubr.f32.mxu0 0.0
      %6611 = vmatmul.mubr.f32.gmra.mrb[0].mxu0 %v6447
      %v6612 = vpop.f32.mrb[0].mxu0
      %v6613 = vadd.f32 %v6438, %v6612
      %v6614 = vpop.f32.mrb[0].mxu0
      %6615 = vmatprep.mubr.f32.mxu0 0.0
      %6616 = vmatmul.mubr.f32.gmra.mrb[0].mxu0 %v6450
      %v6617 = vpop.f32.mrb[0].mxu0
      %v6618 = vadd.f32 %v6438, %v6617
      %v6619 = vpop.f32.mrb[0].mxu0
      %6620 = vmatprep.mubr.f32.mxu0 0.0
      %6621 = vmatmul.mubr.f32.gmra.mrb[0].mxu0 %v6453
      %v6622 = vpop.f32.mrb[0].mxu0
      %v6623 = vadd.f32 %v6438, %v6622
      %v6624 = vpop.f32.mrb[0].mxu0
      %6625 = vmatprep.mubr.f32.mxu0 0.0
      %6626 = vmatmul.mubr.f32.gmra.mrb[0].mxu0 %v6456
      %v6627 = vpop.f32.mrb[0].mxu0
      %v6628 = vadd.f32 %v6438, %v6627
      %v6629 = vpop.f32.mrb[0].mxu0
      %6630 = vmatprep.mubr.f32.mxu0 0.0
      %6631 = vmatmul.mubr.f32.gmra.mrb[0].mxu0 %v6459
      %v6632 = vpop.f32.mrb[0].mxu0
      %v6633 = vadd.f32 %v6438, %v6632
      %v6634 = vpop.f32.mrb[0].mxu0
      %6635 = vmatprep.mubr.f32.mxu0 0.0
      %6636 = vmatmul.mubr.f32.gmra.mrb[0].mxu0 %v6462
      %v6637 = vpop.f32.mrb[0].mxu0
      %v6638 = vadd.f32 %v6438, %v6637
      %v6639 = vpop.f32.mrb[0].mxu0
      %6640 = vmatprep.mubr.f32.mxu0 0.0
      %6641 = vmatmul.mubr.f32.gmra.mrb[0].mxu0 %v6465
      %v6642 = vpop.f32.mrb[0].mxu0
      %v6643 = vadd.f32 %v6438, %v6642
      %v6644 = vpop.f32.mrb[0].mxu0
      %6645 = vmatprep.mubr.f32.mxu0 0.0
      %6646 = vmatmul.mubr.f32.gmra.mrb[0].mxu0 %v6468
      %v6647 = vpop.f32.mrb[0].mxu0
      %v6648 = vadd.f32 %v6438, %v6647
      %v6649 = vpop.f32.mrb[0].mxu0
      %6650 = vmatprep.mubr.f32.mxu0 0.0
      %6651 = vmatmul.mubr.f32.gmra.mrb[0].mxu0 %v6471
      %v6652 = vpop.f32.mrb[0].mxu0
      %v6653 = vadd.f32 %v6438, %v6652
      %v6654 = vpop.f32.mrb[0].mxu0
      %6655 = vmatprep.mubr.f32.mxu0 0.0
      %6656 = vmatmul.mubr.f32.gmra.mrb[0].mxu0 %v6474
      %v6657 = vpop.f32.mrb[0].mxu0
      %v6658 = vadd.f32 %v6438, %v6657
      %v6659 = vpop.f32.mrb[0].mxu0
      %6660 = vmatprep.mubr.f32.mxu0 0.0
      %6661 = vmatmul.mubr.f32.gmra.mrb[0].mxu0 %v6477
      %v6662 = vpop.f32.mrb[0].mxu0
      %v6663 = vadd.f32 %v6438, %v6662
      %v6664 = vpop.f32.mrb[0].mxu0
      %6665 = vmatprep.mubr.f32.mxu0 0.0
      %6666 = vmatmul.mubr.f32.gmra.mrb[0].mxu0 %v6480
      %v6667 = vpop.f32.mrb[0].mxu0
      %v6668 = vadd.f32 %v6438, %v6667
      %v6669 = vpop.f32.mrb[0].mxu0
      %6670 = vmatprep.mubr.f32.mxu0 0.0
      %6671 = vmatmul.mubr.f32.gmra.mrb[0].mxu0 %v6483
      %v6672 = vpop.f32.mrb[0].mxu0
      %v6673 = vadd.f32 %v6438, %v6672
      %v6674 = vpop.f32.mrb[0].mxu0
      %6675 = vmatprep.mubr.f32.mxu0 0.0
      %6676 = vmatmul.mubr.f32.gmra.mrb[0].mxu0 %v6486
      %v6677 = vpop.f32.mrb[0].mxu0
      %v6678 = vadd.f32 %v6438, %v6677
      %v6679 = vpop.f32.mrb[0].mxu0
      %6680 = vmatprep.mubr.f32.mxu0 0.0
      %6681 = vmatmul.mubr.f32.gmra.mrb[0].mxu0 %v6489
      %v6682 = vpop.f32.mrb[0].mxu0
      %v6683 = vadd.f32 %v6438, %v6682
      %v6684 = vpop.f32.mrb[0].mxu0
      %6685 = vmatprep.mubr.f32.mxu0 0.0
      %6686 = vmatmul.mubr.f32.gmra.mrb[0].mxu0 %v6492
      %v6687 = vpop.f32.mrb[0].mxu0
      %v6688 = vadd.f32 %v6438, %v6687
      %v6689 = vpop.f32.mrb[0].mxu0
      %6690 = vmatprep.mubr.f32.mxu0 0.0
      %6691 = vmatmul.mubr.f32.gmra.mrb[0].mxu0 %v6495
      %v6692 = vpop.f32.mrb[0].mxu0
      %v6693 = vadd.f32 %v6438, %v6692
      %v6694 = vpop.f32.mrb[0].mxu0
      %6695 = vmatprep.mubr.f32.mxu0 0.0
      %6696 = vmatmul.mubr.f32.gmra.mrb[0].mxu0 %v6498
      %v6697 = vpop.f32.mrb[0].mxu0
      %v6698 = vadd.f32 %v6438, %v6697
      %v6699 = vpop.f32.mrb[0].mxu0
      %6700 = vmatprep.mubr.f32.mxu0 0.0
      %6701 = vmatmul.mubr.f32.gmra.mrb[0].mxu0 %v6501
      %v6702 = vpop.f32.mrb[0].mxu0
      %v6703 = vadd.f32 %v6438, %v6702
      %v6704 = vpop.f32.mrb[0].mxu0
      %6705 = vmatprep.mubr.f32.mxu0 0.0
      %6706 = vmatmul.mubr.f32.gmra.mrb[0].mxu0 %v6504
      %v6707 = vpop.f32.mrb[0].mxu0
      %v6708 = vadd.f32 %v6438, %v6707
      %v6709 = vpop.f32.mrb[0].mxu0
      %6710 = vmatprep.mubr.f32.mxu0 0.0
      %6711 = vmatmul.mubr.f32.gmra.mrb[0].mxu0 %v6507
      %v6712 = vpop.f32.mrb[0].mxu0
      %v6713 = vadd.f32 %v6438, %v6712
      %v6714 = vpop.f32.mrb[0].mxu0
      %6715 = vmatprep.mubr.f32.mxu0 0.0
      %6716 = vmatmul.mubr.f32.gmra.mrb[0].mxu0 %v6510
      %v6717 = vpop.f32.mrb[0].mxu0
      %v6718 = vadd.f32 %v6438, %v6717
      %v6719 = vpop.f32.mrb[0].mxu0
      %6720 = vmatprep.mubr.f32.mxu0 0.0
      %6721 = vmatmul.mubr.f32.gmra.mrb[0].mxu0 %v6513
      %v6722 = vpop.f32.mrb[0].mxu0
      %v6723 = vadd.f32 %v6438, %v6722
      %v6724 = vpop.f32.mrb[0].mxu0
      %6725 = vmatprep.mubr.f32.mxu0 0.0
      %6726 = vmatmul.mubr.f32.gmra.mrb[0].mxu0 %v6516
      %v6727 = vpop.f32.mrb[0].mxu0
      %v6728 = vadd.f32 %v6438, %v6727
      %v6729 = vpop.f32.mrb[0].mxu0
      %6730 = vmatprep.mubr.f32.mxu0 0.0
      %6731 = vmatmul.mubr.f32.gmra.mrb[0].mxu0 %v6519
      %v6732 = vpop.f32.mrb[0].mxu0
      %v6733 = vadd.f32 %v6438, %v6732
      %v6734 = vpop.f32.mrb[0].mxu0
      %6735 = vmatprep.mubr.f32.mxu0 0.0
      %6736 = vmatmul.mubr.f32.gmra.mrb[0].mxu0 %v6522
      %v6737 = vpop.f32.mrb[0].mxu0
      %v6738 = vadd.f32 %v6438, %v6737
      %v6739 = vpop.f32.mrb[0].mxu0
      %6740 = vmatprep.mubr.f32.mxu0 0.0
      %6741 = vmatmul.mubr.f32.gmra.mrb[0].mxu0 %v6525
      %v6742 = vpop.f32.mrb[0].mxu0
      %v6743 = vadd.f32 %v6438, %v6742
      %v6744 = vpop.f32.mrb[0].mxu0
      %6745 = vmatprep.mubr.f32.mxu0 0.0
      %6746 = vmatmul.mubr.f32.gmra.mrb[0].mxu0 %v6528
      %v6747 = vpop.f32.mrb[0].mxu0
      %v6748 = vadd.f32 %v6438, %v6747
      %v6749 = vpop.f32.mrb[0].mxu0
      %6750 = vmatprep.mubr.f32.mxu0 0.0
      %6751 = vmatmul.mubr.f32.gmra.mrb[0].mxu0 %v6531
      %v6752 = vpop.f32.mrb[0].mxu0
      %v6753 = vadd.f32 %v6438, %v6752
      %v6754 = vpop.f32.mrb[0].mxu0
      %6755 = vmatprep.mubr.f32.mxu0 0.0
      %6756 = vmatmul.mubr.f32.gmra.mrb[0].mxu0 %v6534
      %v6757 = vpop.f32.mrb[0].mxu0
      %v6758 = vadd.f32 %v6438, %v6757
      %v6759 = vpop.f32.mrb[0].mxu0
      %6760 = vdwg.mxu0
      %v6761 = vmax.f32 %v6603, 0.0
      %v6762 = vmax.f32 %v6608, 0.0
      %v6763 = vmax.f32 %v6613, 0.0
      %v6764 = vmax.f32 %v6618, 0.0
      %v6765 = vmax.f32 %v6623, 0.0
      %v6766 = vmax.f32 %v6628, 0.0
      %v6767 = vmax.f32 %v6633, 0.0
      %v6768 = vmax.f32 %v6638, 0.0
      %v6769 = vmax.f32 %v6643, 0.0
      %v6770 = vmax.f32 %v6648, 0.0
      %v6771 = vmax.f32 %v6653, 0.0
      %v6772 = vmax.f32 %v6658, 0.0
      %v6773 = vmax.f32 %v6663, 0.0
      %v6774 = vmax.f32 %v6668, 0.0
      %v6775 = vmax.f32 %v6673, 0.0
      %v6776 = vmax.f32 %v6678, 0.0
      %v6777 = vmax.f32 %v6683, 0.0
      %v6778 = vmax.f32 %v6688, 0.0
      %v6779 = vmax.f32 %v6693, 0.0
      %v6780 = vmax.f32 %v6698, 0.0
      %v6781 = vmax.f32 %v6703, 0.0
      %v6782 = vmax.f32 %v6708, 0.0
      %v6783 = vmax.f32 %v6713, 0.0
      %v6784 = vmax.f32 %v6718, 0.0
      %v6785 = vmax.f32 %v6723, 0.0
      %v6786 = vmax.f32 %v6728, 0.0
      %v6787 = vmax.f32 %v6733, 0.0
      %v6788 = vmax.f32 %v6738, 0.0
      %v6789 = vmax.f32 %v6743, 0.0
      %v6790 = vmax.f32 %v6748, 0.0
      %v6791 = vmax.f32 %v6753, 0.0
      %v6792 = vmax.f32 %v6758, 0.0
      %v6793 = vld [vmem:[%s11] sm:$0xff]
      %v6794 = vld [vmem:[%s11 + $0x8] sm:$0xff]
      %v6795 = vld [vmem:[%s11 + $0x10] sm:$0xff]
      %v6796 = vld [vmem:[%s11 + $0x18] sm:$0xff]
      %v6797 = vld [vmem:[%s11 + $0x20] sm:$0xff]
      %v6798 = vld [vmem:[%s11 + $0x28] sm:$0xff]
      %v6799 = vld [vmem:[%s11 + $0x30] sm:$0xff]
      %v6800 = vld [vmem:[%s11 + $0x38] sm:$0xff]
      %v6801 = vld [vmem:[%s12] sm:$0x1]
      %v6803 = vlaneseq
      %v6804 = vshrl.u32 %v6803, 7
      %v6805 = vsub.s32 0, %v6804
      %v6806 = vrot.slane %v6801, %v6805
      %v6809 = vsel %vm898, %v6761, 0
      %v6812 = vsel %vm898, %v6762, 0
      %v6815 = vsel %vm898, %v6763, 0
      %v6818 = vsel %vm898, %v6764, 0
      %v6821 = vsel %vm898, %v6765, 0
      %v6824 = vsel %vm898, %v6766, 0
      %v6827 = vsel %vm898, %v6767, 0
      %v6830 = vsel %vm898, %v6768, 0
      %v6833 = vsel %vm898, %v6769, 0
      %v6836 = vsel %vm898, %v6770, 0
      %v6839 = vsel %vm898, %v6771, 0
      %v6842 = vsel %vm898, %v6772, 0
      %v6845 = vsel %vm898, %v6773, 0
      %v6848 = vsel %vm898, %v6774, 0
      %v6851 = vsel %vm898, %v6775, 0
      %v6854 = vsel %vm898, %v6776, 0
      %v6857 = vsel %vm898, %v6777, 0
      %v6860 = vsel %vm898, %v6778, 0
      %v6863 = vsel %vm898, %v6779, 0
      %v6866 = vsel %vm898, %v6780, 0
      %v6869 = vsel %vm898, %v6781, 0
      %v6872 = vsel %vm898, %v6782, 0
      %v6875 = vsel %vm898, %v6783, 0
      %v6878 = vsel %vm898, %v6784, 0
      %v6881 = vsel %vm898, %v6785, 0
      %v6884 = vsel %vm898, %v6786, 0
      %v6887 = vsel %vm898, %v6787, 0
      %v6890 = vsel %vm898, %v6788, 0
      %v6893 = vsel %vm898, %v6789, 0
      %v6896 = vsel %vm898, %v6790, 0
      %v6899 = vsel %vm898, %v6791, 0
      %v6902 = vsel %vm898, %v6792, 0
      %6904 = vmatprep.subr.mxu0 0.0
      %6905 = vmatpush1.msra.mxu0 %v6793
      %6906 = vmatprep.subr.mxu0 0.0
      %6907 = vmatpush1.msra.mxu0 %v6794
      %6908 = vmatprep.subr.mxu0 0.0
      %6909 = vmatpush1.msra.mxu0 %v6795
      %6910 = vmatprep.subr.mxu0 0.0
      %6911 = vmatpush1.msra.mxu0 %v6796
      %6912 = vmatprep.subr.mxu0 0.0
      %6913 = vmatpush1.msra.mxu0 %v6797
      %6914 = vmatprep.subr.mxu0 0.0
      %6915 = vmatpush1.msra.mxu0 %v6798
      %6916 = vmatprep.subr.mxu0 0.0
      %6917 = vmatpush1.msra.mxu0 %v6799
      %6918 = vmatprep.subr.mxu0 0.0
      %6919 = vmatpush1.msra.mxu0 %v6800
      %6920 = vmatprep.subr.mxu0 0.0
      %6921 = vmatpush1.msra.mxu0 0.0
      %6922 = vmatprep.subr.mxu0 0.0
      %6923 = vmatpush1.msra.mxu0 0.0
      %6924 = vmatprep.subr.mxu0 0.0
      %6925 = vmatpush1.msra.mxu0 0.0
      %6926 = vmatprep.subr.mxu0 0.0
      %6927 = vmatpush1.msra.mxu0 0.0
      %6928 = vmatprep.subr.mxu0 0.0
      %6929 = vmatpush1.msra.mxu0 0.0
      %6930 = vmatprep.subr.mxu0 0.0
      %6931 = vmatpush1.msra.mxu0 0.0
      %6932 = vmatprep.subr.mxu0 0.0
      %6933 = vmatpush1.msra.mxu0 0.0
      %6934 = vmatprep.subr.mxu0 0.0
      %6935 = vmatpush1.msra.mxu0 0.0
      %6936 = vmatprep.subr.mxu0 0.0
      %6937 = vmatpush1.msra.mxu0 0.0
      %6938 = vmatprep.subr.mxu0 0.0
      %6939 = vmatpush1.msra.mxu0 0.0
      %6940 = vmatprep.subr.mxu0 0.0
      %6941 = vmatpush1.msra.mxu0 0.0
      %6942 = vmatprep.subr.mxu0 0.0
      %6943 = vmatpush1.msra.mxu0 0.0
      %6944 = vmatprep.subr.mxu0 0.0
      %6945 = vmatpush1.msra.mxu0 0.0
      %6946 = vmatprep.subr.mxu0 0.0
      %6947 = vmatpush1.msra.mxu0 0.0
      %6948 = vmatprep.subr.mxu0 0.0
      %6949 = vmatpush1.msra.mxu0 0.0
      %6950 = vmatprep.subr.mxu0 0.0
      %6951 = vmatpush1.msra.mxu0 0.0
      %6952 = vmatprep.subr.mxu0 0.0
      %6953 = vmatpush1.msra.mxu0 0.0
      %6954 = vmatprep.subr.mxu0 0.0
      %6955 = vmatpush1.msra.mxu0 0.0
      %6956 = vmatprep.subr.mxu0 0.0
      %6957 = vmatpush1.msra.mxu0 0.0
      %6958 = vmatprep.subr.mxu0 0.0
      %6959 = vmatpush1.msra.mxu0 0.0
      %6960 = vmatprep.subr.mxu0 0.0
      %6961 = vmatpush1.msra.mxu0 0.0
      %6962 = vmatprep.subr.mxu0 0.0
      %6963 = vmatpush1.msra.mxu0 0.0
      %6964 = vmatprep.subr.mxu0 0.0
      %6965 = vmatpush1.msra.mxu0 0.0
      %6966 = vmatprep.subr.mxu0 0.0
      %6967 = vmatpush1.msra.mxu0 0.0
      %6968 = vmatprep.mubr.f32.mxu0 0.0
      %6969 = vmatmul.mubr.f32.gmra.mrb[0].mxu0 %v6809
      %v6970 = vpop.f32.mrb[0].mxu0
      %v6971 = vadd.f32 %v6806, %v6970
      %v6972 = vpop.f32.mrb[0].mxu0
      %6973 = vmatprep.mubr.f32.mxu0 0.0
      %6974 = vmatmul.mubr.f32.gmra.mrb[0].mxu0 %v6812
      %v6975 = vpop.f32.mrb[0].mxu0
      %v6976 = vadd.f32 %v6806, %v6975
      %v6977 = vpop.f32.mrb[0].mxu0
      %6978 = vmatprep.mubr.f32.mxu0 0.0
      %6979 = vmatmul.mubr.f32.gmra.mrb[0].mxu0 %v6815
      %v6980 = vpop.f32.mrb[0].mxu0
      %v6981 = vadd.f32 %v6806, %v6980
      %v6982 = vpop.f32.mrb[0].mxu0
      %6983 = vmatprep.mubr.f32.mxu0 0.0
      %6984 = vmatmul.mubr.f32.gmra.mrb[0].mxu0 %v6818
      %v6985 = vpop.f32.mrb[0].mxu0
      %v6986 = vadd.f32 %v6806, %v6985
      %v6987 = vpop.f32.mrb[0].mxu0
      %6988 = vmatprep.mubr.f32.mxu0 0.0
      %6989 = vmatmul.mubr.f32.gmra.mrb[0].mxu0 %v6821
      %v6990 = vpop.f32.mrb[0].mxu0
      %v6991 = vadd.f32 %v6806, %v6990
      %v6992 = vpop.f32.mrb[0].mxu0
      %6993 = vmatprep.mubr.f32.mxu0 0.0
      %6994 = vmatmul.mubr.f32.gmra.mrb[0].mxu0 %v6824
      %v6995 = vpop.f32.mrb[0].mxu0
      %v6996 = vadd.f32 %v6806, %v6995
      %v6997 = vpop.f32.mrb[0].mxu0
      %6998 = vmatprep.mubr.f32.mxu0 0.0
      %6999 = vmatmul.mubr.f32.gmra.mrb[0].mxu0 %v6827
      %v7000 = vpop.f32.mrb[0].mxu0
      %v7001 = vadd.f32 %v6806, %v7000
      %v7002 = vpop.f32.mrb[0].mxu0
      %7003 = vmatprep.mubr.f32.mxu0 0.0
      %7004 = vmatmul.mubr.f32.gmra.mrb[0].mxu0 %v6830
      %v7005 = vpop.f32.mrb[0].mxu0
      %v7006 = vadd.f32 %v6806, %v7005
      %v7007 = vpop.f32.mrb[0].mxu0
      %7008 = vmatprep.mubr.f32.mxu0 0.0
      %7009 = vmatmul.mubr.f32.gmra.mrb[0].mxu0 %v6833
      %v7010 = vpop.f32.mrb[0].mxu0
      %v7011 = vadd.f32 %v6806, %v7010
      %v7012 = vpop.f32.mrb[0].mxu0
      %7013 = vmatprep.mubr.f32.mxu0 0.0
      %7014 = vmatmul.mubr.f32.gmra.mrb[0].mxu0 %v6836
      %v7015 = vpop.f32.mrb[0].mxu0
      %v7016 = vadd.f32 %v6806, %v7015
      %v7017 = vpop.f32.mrb[0].mxu0
      %7018 = vmatprep.mubr.f32.mxu0 0.0
      %7019 = vmatmul.mubr.f32.gmra.mrb[0].mxu0 %v6839
      %v7020 = vpop.f32.mrb[0].mxu0
      %v7021 = vadd.f32 %v6806, %v7020
      %v7022 = vpop.f32.mrb[0].mxu0
      %7023 = vmatprep.mubr.f32.mxu0 0.0
      %7024 = vmatmul.mubr.f32.gmra.mrb[0].mxu0 %v6842
      %v7025 = vpop.f32.mrb[0].mxu0
      %v7026 = vadd.f32 %v6806, %v7025
      %v7027 = vpop.f32.mrb[0].mxu0
      %7028 = vmatprep.mubr.f32.mxu0 0.0
      %7029 = vmatmul.mubr.f32.gmra.mrb[0].mxu0 %v6845
      %v7030 = vpop.f32.mrb[0].mxu0
      %v7031 = vadd.f32 %v6806, %v7030
      %v7032 = vpop.f32.mrb[0].mxu0
      %7033 = vmatprep.mubr.f32.mxu0 0.0
      %7034 = vmatmul.mubr.f32.gmra.mrb[0].mxu0 %v6848
      %v7035 = vpop.f32.mrb[0].mxu0
      %v7036 = vadd.f32 %v6806, %v7035
      %v7037 = vpop.f32.mrb[0].mxu0
      %7038 = vmatprep.mubr.f32.mxu0 0.0
      %7039 = vmatmul.mubr.f32.gmra.mrb[0].mxu0 %v6851
      %v7040 = vpop.f32.mrb[0].mxu0
      %v7041 = vadd.f32 %v6806, %v7040
      %v7042 = vpop.f32.mrb[0].mxu0
      %7043 = vmatprep.mubr.f32.mxu0 0.0
      %7044 = vmatmul.mubr.f32.gmra.mrb[0].mxu0 %v6854
      %v7045 = vpop.f32.mrb[0].mxu0
      %v7046 = vadd.f32 %v6806, %v7045
      %v7047 = vpop.f32.mrb[0].mxu0
      %7048 = vmatprep.mubr.f32.mxu0 0.0
      %7049 = vmatmul.mubr.f32.gmra.mrb[0].mxu0 %v6857
      %v7050 = vpop.f32.mrb[0].mxu0
      %v7051 = vadd.f32 %v6806, %v7050
      %v7052 = vpop.f32.mrb[0].mxu0
      %7053 = vmatprep.mubr.f32.mxu0 0.0
      %7054 = vmatmul.mubr.f32.gmra.mrb[0].mxu0 %v6860
      %v7055 = vpop.f32.mrb[0].mxu0
      %v7056 = vadd.f32 %v6806, %v7055
      %v7057 = vpop.f32.mrb[0].mxu0
      %7058 = vmatprep.mubr.f32.mxu0 0.0
      %7059 = vmatmul.mubr.f32.gmra.mrb[0].mxu0 %v6863
      %v7060 = vpop.f32.mrb[0].mxu0
      %v7061 = vadd.f32 %v6806, %v7060
      %v7062 = vpop.f32.mrb[0].mxu0
      %7063 = vmatprep.mubr.f32.mxu0 0.0
      %7064 = vmatmul.mubr.f32.gmra.mrb[0].mxu0 %v6866
      %v7065 = vpop.f32.mrb[0].mxu0
      %v7066 = vadd.f32 %v6806, %v7065
      %v7067 = vpop.f32.mrb[0].mxu0
      %7068 = vmatprep.mubr.f32.mxu0 0.0
      %7069 = vmatmul.mubr.f32.gmra.mrb[0].mxu0 %v6869
      %v7070 = vpop.f32.mrb[0].mxu0
      %v7071 = vadd.f32 %v6806, %v7070
      %v7072 = vpop.f32.mrb[0].mxu0
      %7073 = vmatprep.mubr.f32.mxu0 0.0
      %7074 = vmatmul.mubr.f32.gmra.mrb[0].mxu0 %v6872
      %v7075 = vpop.f32.mrb[0].mxu0
      %v7076 = vadd.f32 %v6806, %v7075
      %v7077 = vpop.f32.mrb[0].mxu0
      %7078 = vmatprep.mubr.f32.mxu0 0.0
      %7079 = vmatmul.mubr.f32.gmra.mrb[0].mxu0 %v6875
      %v7080 = vpop.f32.mrb[0].mxu0
      %v7081 = vadd.f32 %v6806, %v7080
      %v7082 = vpop.f32.mrb[0].mxu0
      %7083 = vmatprep.mubr.f32.mxu0 0.0
      %7084 = vmatmul.mubr.f32.gmra.mrb[0].mxu0 %v6878
      %v7085 = vpop.f32.mrb[0].mxu0
      %v7086 = vadd.f32 %v6806, %v7085
      %v7087 = vpop.f32.mrb[0].mxu0
      %7088 = vmatprep.mubr.f32.mxu0 0.0
      %7089 = vmatmul.mubr.f32.gmra.mrb[0].mxu0 %v6881
      %v7090 = vpop.f32.mrb[0].mxu0
      %v7091 = vadd.f32 %v6806, %v7090
      %v7092 = vpop.f32.mrb[0].mxu0
      %7093 = vmatprep.mubr.f32.mxu0 0.0
      %7094 = vmatmul.mubr.f32.gmra.mrb[0].mxu0 %v6884
      %v7095 = vpop.f32.mrb[0].mxu0
      %v7096 = vadd.f32 %v6806, %v7095
      %v7097 = vpop.f32.mrb[0].mxu0
      %7098 = vmatprep.mubr.f32.mxu0 0.0
      %7099 = vmatmul.mubr.f32.gmra.mrb[0].mxu0 %v6887
      %v7100 = vpop.f32.mrb[0].mxu0
      %v7101 = vadd.f32 %v6806, %v7100
      %v7102 = vpop.f32.mrb[0].mxu0
      %7103 = vmatprep.mubr.f32.mxu0 0.0
      %7104 = vmatmul.mubr.f32.gmra.mrb[0].mxu0 %v6890
      %v7105 = vpop.f32.mrb[0].mxu0
      %v7106 = vadd.f32 %v6806, %v7105
      %v7107 = vpop.f32.mrb[0].mxu0
      %7108 = vmatprep.mubr.f32.mxu0 0.0
      %7109 = vmatmul.mubr.f32.gmra.mrb[0].mxu0 %v6893
      %v7110 = vpop.f32.mrb[0].mxu0
      %v7111 = vadd.f32 %v6806, %v7110
      %v7112 = vpop.f32.mrb[0].mxu0
      %7113 = vmatprep.mubr.f32.mxu0 0.0
      %7114 = vmatmul.mubr.f32.gmra.mrb[0].mxu0 %v6896
      %v7115 = vpop.f32.mrb[0].mxu0
      %v7116 = vadd.f32 %v6806, %v7115
      %v7117 = vpop.f32.mrb[0].mxu0
      %7118 = vmatprep.mubr.f32.mxu0 0.0
      %7119 = vmatmul.mubr.f32.gmra.mrb[0].mxu0 %v6899
      %v7120 = vpop.f32.mrb[0].mxu0
      %v7121 = vadd.f32 %v6806, %v7120
      %v7122 = vpop.f32.mrb[0].mxu0
      %7123 = vmatprep.mubr.f32.mxu0 0.0
      %7124 = vmatmul.mubr.f32.gmra.mrb[0].mxu0 %v6902
      %v7125 = vpop.f32.mrb[0].mxu0
      %v7126 = vadd.f32 %v6806, %v7125
      %v7127 = vpop.f32.mrb[0].mxu0
      %7128 = vdwg.mxu0
      %s7129 = scalar_lea.vmem %s483, 512
      %7130 = vst.msk [vmem:[%s7129] sm:$0xff] %vm525, %v6971
      %7131 = vst.msk [vmem:[%s7129 + $0x8] sm:$0xff] %vm525, %v6976
      %7132 = vst.msk [vmem:[%s7129 + $0x10] sm:$0xff] %vm525, %v6981
      %7133 = vst.msk [vmem:[%s7129 + $0x18] sm:$0xff] %vm525, %v6986
      %7134 = vst.msk [vmem:[%s7129 + $0x20] sm:$0xff] %vm525, %v6991
      %7135 = vst.msk [vmem:[%s7129 + $0x28] sm:$0xff] %vm525, %v6996
      %7136 = vst.msk [vmem:[%s7129 + $0x30] sm:$0xff] %vm525, %v7001
      %7137 = vst.msk [vmem:[%s7129 + $0x38] sm:$0xff] %vm525, %v7006
      %7138 = vst.msk [vmem:[%s7129 + $0x40] sm:$0xff] %vm525, %v7011
      %7139 = vst.msk [vmem:[%s7129 + $0x48] sm:$0xff] %vm525, %v7016
      %7140 = vst.msk [vmem:[%s7129 + $0x50] sm:$0xff] %vm525, %v7021
      %7141 = vst.msk [vmem:[%s7129 + $0x58] sm:$0xff] %vm525, %v7026
      %7142 = vst.msk [vmem:[%s7129 + $0x60] sm:$0xff] %vm525, %v7031
      %7143 = vst.msk [vmem:[%s7129 + $0x68] sm:$0xff] %vm525, %v7036
      %7144 = vst.msk [vmem:[%s7129 + $0x70] sm:$0xff] %vm525, %v7041
      %7145 = vst.msk [vmem:[%s7129 + $0x78] sm:$0xff] %vm525, %v7046
      %7146 = vst.msk [vmem:[%s7129 + $0x80] sm:$0xff] %vm525, %v7051
      %7147 = vst.msk [vmem:[%s7129 + $0x88] sm:$0xff] %vm525, %v7056
      %7148 = vst.msk [vmem:[%s7129 + $0x90] sm:$0xff] %vm525, %v7061
      %7149 = vst.msk [vmem:[%s7129 + $0x98] sm:$0xff] %vm525, %v7066
      %7150 = vst.msk [vmem:[%s7129 + $0xa0] sm:$0xff] %vm525, %v7071
      %7151 = vst.msk [vmem:[%s7129 + $0xa8] sm:$0xff] %vm525, %v7076
      %7152 = vst.msk [vmem:[%s7129 + $0xb0] sm:$0xff] %vm525, %v7081
      %7153 = vst.msk [vmem:[%s7129 + $0xb8] sm:$0xff] %vm525, %v7086
      %7154 = vst.msk [vmem:[%s7129 + $0xc0] sm:$0xff] %vm525, %v7091
      %7155 = vst.msk [vmem:[%s7129 + $0xc8] sm:$0xff] %vm525, %v7096
      %7156 = vst.msk [vmem:[%s7129 + $0xd0] sm:$0xff] %vm525, %v7101
      %7157 = vst.msk [vmem:[%s7129 + $0xd8] sm:$0xff] %vm525, %v7106
      %7158 = vst.msk [vmem:[%s7129 + $0xe0] sm:$0xff] %vm525, %v7111
      %7159 = vst.msk [vmem:[%s7129 + $0xe8] sm:$0xff] %vm525, %v7116
      %7160 = vst.msk [vmem:[%s7129 + $0xf0] sm:$0xff] %vm525, %v7121
      %7161 = vst.msk [vmem:[%s7129 + $0xf8] sm:$0xff] %vm525, %v7126
      %s7162 = scalar_lea.vmem %s471, 768
      %v7163 = vld [vmem:[%s7162] sm:$0xff]
      %v7164 = vld [vmem:[%s7162 + $0x8] sm:$0xff]
      %v7165 = vld [vmem:[%s7162 + $0x10] sm:$0xff]
      %v7166 = vld [vmem:[%s7162 + $0x18] sm:$0xff]
      %v7167 = vld [vmem:[%s7162 + $0x20] sm:$0xff]
      %v7168 = vld [vmem:[%s7162 + $0x28] sm:$0xff]
      %v7169 = vld [vmem:[%s7162 + $0x30] sm:$0xff]
      %v7170 = vld [vmem:[%s7162 + $0x38] sm:$0xff]
      %v7171 = vld [vmem:[%s7162 + $0x40] sm:$0xff]
      %v7172 = vld [vmem:[%s7162 + $0x48] sm:$0xff]
      %v7173 = vld [vmem:[%s7162 + $0x50] sm:$0xff]
      %v7174 = vld [vmem:[%s7162 + $0x58] sm:$0xff]
      %v7175 = vld [vmem:[%s7162 + $0x60] sm:$0xff]
      %v7176 = vld [vmem:[%s7162 + $0x68] sm:$0xff]
      %v7177 = vld [vmem:[%s7162 + $0x70] sm:$0xff]
      %v7178 = vld [vmem:[%s7162 + $0x78] sm:$0xff]
      %v7179 = vld [vmem:[%s7162 + $0x80] sm:$0xff]
      %v7180 = vld [vmem:[%s7162 + $0x88] sm:$0xff]
      %v7181 = vld [vmem:[%s7162 + $0x90] sm:$0xff]
      %v7182 = vld [vmem:[%s7162 + $0x98] sm:$0xff]
      %v7183 = vld [vmem:[%s7162 + $0xa0] sm:$0xff]
      %v7184 = vld [vmem:[%s7162 + $0xa8] sm:$0xff]
      %v7185 = vld [vmem:[%s7162 + $0xb0] sm:$0xff]
      %v7186 = vld [vmem:[%s7162 + $0xb8] sm:$0xff]
      %v7187 = vld [vmem:[%s7162 + $0xc0] sm:$0xff]
      %v7188 = vld [vmem:[%s7162 + $0xc8] sm:$0xff]
      %v7189 = vld [vmem:[%s7162 + $0xd0] sm:$0xff]
      %v7190 = vld [vmem:[%s7162 + $0xd8] sm:$0xff]
      %v7191 = vld [vmem:[%s7162 + $0xe0] sm:$0xff]
      %v7192 = vld [vmem:[%s7162 + $0xe8] sm:$0xff]
      %v7193 = vld [vmem:[%s7162 + $0xf0] sm:$0xff]
      %v7194 = vld [vmem:[%s7162 + $0xf8] sm:$0xff]
      %v7195 = vld [vmem:[%s1] sm:$0x7]
      %v7196 = vld [vmem:[%s2] sm:$0x1]
      %v7198 = vlaneseq
      %v7199 = vshrl.u32 %v7198, 7
      %v7200 = vsub.s32 0, %v7199
      %v7201 = vrot.slane %v7196, %v7200
      %v7204 = vsel %vm525, %v7163, 0
      %v7207 = vsel %vm525, %v7164, 0
      %v7210 = vsel %vm525, %v7165, 0
      %v7213 = vsel %vm525, %v7166, 0
      %v7216 = vsel %vm525, %v7167, 0
      %v7219 = vsel %vm525, %v7168, 0
      %v7222 = vsel %vm525, %v7169, 0
      %v7225 = vsel %vm525, %v7170, 0
      %v7228 = vsel %vm525, %v7171, 0
      %v7231 = vsel %vm525, %v7172, 0
      %v7234 = vsel %vm525, %v7173, 0
      %v7237 = vsel %vm525, %v7174, 0
      %v7240 = vsel %vm525, %v7175, 0
      %v7243 = vsel %vm525, %v7176, 0
      %v7246 = vsel %vm525, %v7177, 0
      %v7249 = vsel %vm525, %v7178, 0
      %v7252 = vsel %vm525, %v7179, 0
      %v7255 = vsel %vm525, %v7180, 0
      %v7258 = vsel %vm525, %v7181, 0
      %v7261 = vsel %vm525, %v7182, 0
      %v7264 = vsel %vm525, %v7183, 0
      %v7267 = vsel %vm525, %v7184, 0
      %v7270 = vsel %vm525, %v7185, 0
      %v7273 = vsel %vm525, %v7186, 0
      %v7276 = vsel %vm525, %v7187, 0
      %v7279 = vsel %vm525, %v7188, 0
      %v7282 = vsel %vm525, %v7189, 0
      %v7285 = vsel %vm525, %v7190, 0
      %v7288 = vsel %vm525, %v7191, 0
      %v7291 = vsel %vm525, %v7192, 0
      %v7294 = vsel %vm525, %v7193, 0
      %v7297 = vsel %vm525, %v7194, 0
      %v7300 = vsel %vm622, %v7195, 0
      %7302 = vmatprep.subr.mxu0 0.0
      %7303 = vmatpush1.msra.mxu0 %v7300
      %7304 = vmatprep.subr.mxu0 0.0
      %7305 = vmatpush1.msra.mxu0 0.0
      %7306 = vmatprep.subr.mxu0 0.0
      %7307 = vmatpush1.msra.mxu0 0.0
      %7308 = vmatprep.subr.mxu0 0.0
      %7309 = vmatpush1.msra.mxu0 0.0
      %7310 = vmatprep.subr.mxu0 0.0
      %7311 = vmatpush1.msra.mxu0 0.0
      %7312 = vmatprep.subr.mxu0 0.0
      %7313 = vmatpush1.msra.mxu0 0.0
      %7314 = vmatprep.subr.mxu0 0.0
      %7315 = vmatpush1.msra.mxu0 0.0
      %7316 = vmatprep.subr.mxu0 0.0
      %7317 = vmatpush1.msra.mxu0 0.0
      %7318 = vmatprep.subr.mxu0 0.0
      %7319 = vmatpush1.msra.mxu0 0.0
      %7320 = vmatprep.subr.mxu0 0.0
      %7321 = vmatpush1.msra.mxu0 0.0
      %7322 = vmatprep.subr.mxu0 0.0
      %7323 = vmatpush1.msra.mxu0 0.0
      %7324 = vmatprep.subr.mxu0 0.0
      %7325 = vmatpush1.msra.mxu0 0.0
      %7326 = vmatprep.subr.mxu0 0.0
      %7327 = vmatpush1.msra.mxu0 0.0
      %7328 = vmatprep.subr.mxu0 0.0
      %7329 = vmatpush1.msra.mxu0 0.0
      %7330 = vmatprep.subr.mxu0 0.0
      %7331 = vmatpush1.msra.mxu0 0.0
      %7332 = vmatprep.subr.mxu0 0.0
      %7333 = vmatpush1.msra.mxu0 0.0
      %7334 = vmatprep.subr.mxu0 0.0
      %7335 = vmatpush1.msra.mxu0 0.0
      %7336 = vmatprep.subr.mxu0 0.0
      %7337 = vmatpush1.msra.mxu0 0.0
      %7338 = vmatprep.subr.mxu0 0.0
      %7339 = vmatpush1.msra.mxu0 0.0
      %7340 = vmatprep.subr.mxu0 0.0
      %7341 = vmatpush1.msra.mxu0 0.0
      %7342 = vmatprep.subr.mxu0 0.0
      %7343 = vmatpush1.msra.mxu0 0.0
      %7344 = vmatprep.subr.mxu0 0.0
      %7345 = vmatpush1.msra.mxu0 0.0
      %7346 = vmatprep.subr.mxu0 0.0
      %7347 = vmatpush1.msra.mxu0 0.0
      %7348 = vmatprep.subr.mxu0 0.0
      %7349 = vmatpush1.msra.mxu0 0.0
      %7350 = vmatprep.subr.mxu0 0.0
      %7351 = vmatpush1.msra.mxu0 0.0
      %7352 = vmatprep.subr.mxu0 0.0
      %7353 = vmatpush1.msra.mxu0 0.0
      %7354 = vmatprep.subr.mxu0 0.0
      %7355 = vmatpush1.msra.mxu0 0.0
      %7356 = vmatprep.subr.mxu0 0.0
      %7357 = vmatpush1.msra.mxu0 0.0
      %7358 = vmatprep.subr.mxu0 0.0
      %7359 = vmatpush1.msra.mxu0 0.0
      %7360 = vmatprep.subr.mxu0 0.0
      %7361 = vmatpush1.msra.mxu0 0.0
      %7362 = vmatprep.subr.mxu0 0.0
      %7363 = vmatpush1.msra.mxu0 0.0
      %7364 = vmatprep.subr.mxu0 0.0
      %7365 = vmatpush1.msra.mxu0 0.0
      %7366 = vmatprep.mubr.f32.mxu0 0.0
      %7367 = vmatmul.mubr.f32.gmra.mrb[0].mxu0 %v7204
      %v7368 = vpop.f32.mrb[0].mxu0
      %v7369 = vadd.f32 %v7201, %v7368
      %v7370 = vpop.f32.mrb[0].mxu0
      %7371 = vmatprep.mubr.f32.mxu0 0.0
      %7372 = vmatmul.mubr.f32.gmra.mrb[0].mxu0 %v7207
      %v7373 = vpop.f32.mrb[0].mxu0
      %v7374 = vadd.f32 %v7201, %v7373
      %v7375 = vpop.f32.mrb[0].mxu0
      %7376 = vmatprep.mubr.f32.mxu0 0.0
      %7377 = vmatmul.mubr.f32.gmra.mrb[0].mxu0 %v7210
      %v7378 = vpop.f32.mrb[0].mxu0
      %v7379 = vadd.f32 %v7201, %v7378
      %v7380 = vpop.f32.mrb[0].mxu0
      %7381 = vmatprep.mubr.f32.mxu0 0.0
      %7382 = vmatmul.mubr.f32.gmra.mrb[0].mxu0 %v7213
      %v7383 = vpop.f32.mrb[0].mxu0
      %v7384 = vadd.f32 %v7201, %v7383
      %v7385 = vpop.f32.mrb[0].mxu0
      %7386 = vmatprep.mubr.f32.mxu0 0.0
      %7387 = vmatmul.mubr.f32.gmra.mrb[0].mxu0 %v7216
      %v7388 = vpop.f32.mrb[0].mxu0
      %v7389 = vadd.f32 %v7201, %v7388
      %v7390 = vpop.f32.mrb[0].mxu0
      %7391 = vmatprep.mubr.f32.mxu0 0.0
      %7392 = vmatmul.mubr.f32.gmra.mrb[0].mxu0 %v7219
      %v7393 = vpop.f32.mrb[0].mxu0
      %v7394 = vadd.f32 %v7201, %v7393
      %v7395 = vpop.f32.mrb[0].mxu0
      %7396 = vmatprep.mubr.f32.mxu0 0.0
      %7397 = vmatmul.mubr.f32.gmra.mrb[0].mxu0 %v7222
      %v7398 = vpop.f32.mrb[0].mxu0
      %v7399 = vadd.f32 %v7201, %v7398
      %v7400 = vpop.f32.mrb[0].mxu0
      %7401 = vmatprep.mubr.f32.mxu0 0.0
      %7402 = vmatmul.mubr.f32.gmra.mrb[0].mxu0 %v7225
      %v7403 = vpop.f32.mrb[0].mxu0
      %v7404 = vadd.f32 %v7201, %v7403
      %v7405 = vpop.f32.mrb[0].mxu0
      %7406 = vmatprep.mubr.f32.mxu0 0.0
      %7407 = vmatmul.mubr.f32.gmra.mrb[0].mxu0 %v7228
      %v7408 = vpop.f32.mrb[0].mxu0
      %v7409 = vadd.f32 %v7201, %v7408
      %v7410 = vpop.f32.mrb[0].mxu0
      %7411 = vmatprep.mubr.f32.mxu0 0.0
      %7412 = vmatmul.mubr.f32.gmra.mrb[0].mxu0 %v7231
      %v7413 = vpop.f32.mrb[0].mxu0
      %v7414 = vadd.f32 %v7201, %v7413
      %v7415 = vpop.f32.mrb[0].mxu0
      %7416 = vmatprep.mubr.f32.mxu0 0.0
      %7417 = vmatmul.mubr.f32.gmra.mrb[0].mxu0 %v7234
      %v7418 = vpop.f32.mrb[0].mxu0
      %v7419 = vadd.f32 %v7201, %v7418
      %v7420 = vpop.f32.mrb[0].mxu0
      %7421 = vmatprep.mubr.f32.mxu0 0.0
      %7422 = vmatmul.mubr.f32.gmra.mrb[0].mxu0 %v7237
      %v7423 = vpop.f32.mrb[0].mxu0
      %v7424 = vadd.f32 %v7201, %v7423
      %v7425 = vpop.f32.mrb[0].mxu0
      %7426 = vmatprep.mubr.f32.mxu0 0.0
      %7427 = vmatmul.mubr.f32.gmra.mrb[0].mxu0 %v7240
      %v7428 = vpop.f32.mrb[0].mxu0
      %v7429 = vadd.f32 %v7201, %v7428
      %v7430 = vpop.f32.mrb[0].mxu0
      %7431 = vmatprep.mubr.f32.mxu0 0.0
      %7432 = vmatmul.mubr.f32.gmra.mrb[0].mxu0 %v7243
      %v7433 = vpop.f32.mrb[0].mxu0
      %v7434 = vadd.f32 %v7201, %v7433
      %v7435 = vpop.f32.mrb[0].mxu0
      %7436 = vmatprep.mubr.f32.mxu0 0.0
      %7437 = vmatmul.mubr.f32.gmra.mrb[0].mxu0 %v7246
      %v7438 = vpop.f32.mrb[0].mxu0
      %v7439 = vadd.f32 %v7201, %v7438
      %v7440 = vpop.f32.mrb[0].mxu0
      %7441 = vmatprep.mubr.f32.mxu0 0.0
      %7442 = vmatmul.mubr.f32.gmra.mrb[0].mxu0 %v7249
      %v7443 = vpop.f32.mrb[0].mxu0
      %v7444 = vadd.f32 %v7201, %v7443
      %v7445 = vpop.f32.mrb[0].mxu0
      %7446 = vmatprep.mubr.f32.mxu0 0.0
      %7447 = vmatmul.mubr.f32.gmra.mrb[0].mxu0 %v7252
      %v7448 = vpop.f32.mrb[0].mxu0
      %v7449 = vadd.f32 %v7201, %v7448
      %v7450 = vpop.f32.mrb[0].mxu0
      %7451 = vmatprep.mubr.f32.mxu0 0.0
      %7452 = vmatmul.mubr.f32.gmra.mrb[0].mxu0 %v7255
      %v7453 = vpop.f32.mrb[0].mxu0
      %v7454 = vadd.f32 %v7201, %v7453
      %v7455 = vpop.f32.mrb[0].mxu0
      %7456 = vmatprep.mubr.f32.mxu0 0.0
      %7457 = vmatmul.mubr.f32.gmra.mrb[0].mxu0 %v7258
      %v7458 = vpop.f32.mrb[0].mxu0
      %v7459 = vadd.f32 %v7201, %v7458
      %v7460 = vpop.f32.mrb[0].mxu0
      %7461 = vmatprep.mubr.f32.mxu0 0.0
      %7462 = vmatmul.mubr.f32.gmra.mrb[0].mxu0 %v7261
      %v7463 = vpop.f32.mrb[0].mxu0
      %v7464 = vadd.f32 %v7201, %v7463
      %v7465 = vpop.f32.mrb[0].mxu0
      %7466 = vmatprep.mubr.f32.mxu0 0.0
      %7467 = vmatmul.mubr.f32.gmra.mrb[0].mxu0 %v7264
      %v7468 = vpop.f32.mrb[0].mxu0
      %v7469 = vadd.f32 %v7201, %v7468
      %v7470 = vpop.f32.mrb[0].mxu0
      %7471 = vmatprep.mubr.f32.mxu0 0.0
      %7472 = vmatmul.mubr.f32.gmra.mrb[0].mxu0 %v7267
      %v7473 = vpop.f32.mrb[0].mxu0
      %v7474 = vadd.f32 %v7201, %v7473
      %v7475 = vpop.f32.mrb[0].mxu0
      %7476 = vmatprep.mubr.f32.mxu0 0.0
      %7477 = vmatmul.mubr.f32.gmra.mrb[0].mxu0 %v7270
      %v7478 = vpop.f32.mrb[0].mxu0
      %v7479 = vadd.f32 %v7201, %v7478
      %v7480 = vpop.f32.mrb[0].mxu0
      %7481 = vmatprep.mubr.f32.mxu0 0.0
      %7482 = vmatmul.mubr.f32.gmra.mrb[0].mxu0 %v7273
      %v7483 = vpop.f32.mrb[0].mxu0
      %v7484 = vadd.f32 %v7201, %v7483
      %v7485 = vpop.f32.mrb[0].mxu0
      %7486 = vmatprep.mubr.f32.mxu0 0.0
      %7487 = vmatmul.mubr.f32.gmra.mrb[0].mxu0 %v7276
      %v7488 = vpop.f32.mrb[0].mxu0
      %v7489 = vadd.f32 %v7201, %v7488
      %v7490 = vpop.f32.mrb[0].mxu0
      %7491 = vmatprep.mubr.f32.mxu0 0.0
      %7492 = vmatmul.mubr.f32.gmra.mrb[0].mxu0 %v7279
      %v7493 = vpop.f32.mrb[0].mxu0
      %v7494 = vadd.f32 %v7201, %v7493
      %v7495 = vpop.f32.mrb[0].mxu0
      %7496 = vmatprep.mubr.f32.mxu0 0.0
      %7497 = vmatmul.mubr.f32.gmra.mrb[0].mxu0 %v7282
      %v7498 = vpop.f32.mrb[0].mxu0
      %v7499 = vadd.f32 %v7201, %v7498
      %v7500 = vpop.f32.mrb[0].mxu0
      %7501 = vmatprep.mubr.f32.mxu0 0.0
      %7502 = vmatmul.mubr.f32.gmra.mrb[0].mxu0 %v7285
      %v7503 = vpop.f32.mrb[0].mxu0
      %v7504 = vadd.f32 %v7201, %v7503
      %v7505 = vpop.f32.mrb[0].mxu0
      %7506 = vmatprep.mubr.f32.mxu0 0.0
      %7507 = vmatmul.mubr.f32.gmra.mrb[0].mxu0 %v7288
      %v7508 = vpop.f32.mrb[0].mxu0
      %v7509 = vadd.f32 %v7201, %v7508
      %v7510 = vpop.f32.mrb[0].mxu0
      %7511 = vmatprep.mubr.f32.mxu0 0.0
      %7512 = vmatmul.mubr.f32.gmra.mrb[0].mxu0 %v7291
      %v7513 = vpop.f32.mrb[0].mxu0
      %v7514 = vadd.f32 %v7201, %v7513
      %v7515 = vpop.f32.mrb[0].mxu0
      %7516 = vmatprep.mubr.f32.mxu0 0.0
      %7517 = vmatmul.mubr.f32.gmra.mrb[0].mxu0 %v7294
      %v7518 = vpop.f32.mrb[0].mxu0
      %v7519 = vadd.f32 %v7201, %v7518
      %v7520 = vpop.f32.mrb[0].mxu0
      %7521 = vmatprep.mubr.f32.mxu0 0.0
      %7522 = vmatmul.mubr.f32.gmra.mrb[0].mxu0 %v7297
      %v7523 = vpop.f32.mrb[0].mxu0
      %v7524 = vadd.f32 %v7201, %v7523
      %v7525 = vpop.f32.mrb[0].mxu0
      %7526 = vdwg.mxu0
      %v7527 = vmax.f32 %v7369, 0.0
      %v7528 = vmax.f32 %v7374, 0.0
      %v7529 = vmax.f32 %v7379, 0.0
      %v7530 = vmax.f32 %v7384, 0.0
      %v7531 = vmax.f32 %v7389, 0.0
      %v7532 = vmax.f32 %v7394, 0.0
      %v7533 = vmax.f32 %v7399, 0.0
      %v7534 = vmax.f32 %v7404, 0.0
      %v7535 = vmax.f32 %v7409, 0.0
      %v7536 = vmax.f32 %v7414, 0.0
      %v7537 = vmax.f32 %v7419, 0.0
      %v7538 = vmax.f32 %v7424, 0.0
      %v7539 = vmax.f32 %v7429, 0.0
      %v7540 = vmax.f32 %v7434, 0.0
      %v7541 = vmax.f32 %v7439, 0.0
      %v7542 = vmax.f32 %v7444, 0.0
      %v7543 = vmax.f32 %v7449, 0.0
      %v7544 = vmax.f32 %v7454, 0.0
      %v7545 = vmax.f32 %v7459, 0.0
      %v7546 = vmax.f32 %v7464, 0.0
      %v7547 = vmax.f32 %v7469, 0.0
      %v7548 = vmax.f32 %v7474, 0.0
      %v7549 = vmax.f32 %v7479, 0.0
      %v7550 = vmax.f32 %v7484, 0.0
      %v7551 = vmax.f32 %v7489, 0.0
      %v7552 = vmax.f32 %v7494, 0.0
      %v7553 = vmax.f32 %v7499, 0.0
      %v7554 = vmax.f32 %v7504, 0.0
      %v7555 = vmax.f32 %v7509, 0.0
      %v7556 = vmax.f32 %v7514, 0.0
      %v7557 = vmax.f32 %v7519, 0.0
      %v7558 = vmax.f32 %v7524, 0.0
      %v7559 = vld [vmem:[%s3] sm:$0xff]
      %v7560 = vld [vmem:[%s3 + $0x8] sm:$0xff]
      %v7561 = vld [vmem:[%s3 + $0x10] sm:$0xff]
      %v7562 = vld [vmem:[%s3 + $0x18] sm:$0xff]
      %v7563 = vld [vmem:[%s3 + $0x20] sm:$0xff]
      %v7564 = vld [vmem:[%s3 + $0x28] sm:$0xff]
      %v7565 = vld [vmem:[%s3 + $0x30] sm:$0xff]
      %v7566 = vld [vmem:[%s3 + $0x38] sm:$0xff]
      %v7567 = vld [vmem:[%s4] sm:$0x1]
      %v7569 = vlaneseq
      %v7570 = vshrl.u32 %v7569, 7
      %v7571 = vsub.s32 0, %v7570
      %v7572 = vrot.slane %v7567, %v7571
      %v7575 = vsel %vm898, %v7527, 0
      %v7578 = vsel %vm898, %v7528, 0
      %v7581 = vsel %vm898, %v7529, 0
      %v7584 = vsel %vm898, %v7530, 0
      %v7587 = vsel %vm898, %v7531, 0
      %v7590 = vsel %vm898, %v7532, 0
      %v7593 = vsel %vm898, %v7533, 0
      %v7596 = vsel %vm898, %v7534, 0
      %v7599 = vsel %vm898, %v7535, 0
      %v7602 = vsel %vm898, %v7536, 0
      %v7605 = vsel %vm898, %v7537, 0
      %v7608 = vsel %vm898, %v7538, 0
      %v7611 = vsel %vm898, %v7539, 0
      %v7614 = vsel %vm898, %v7540, 0
      %v7617 = vsel %vm898, %v7541, 0
      %v7620 = vsel %vm898, %v7542, 0
      %v7623 = vsel %vm898, %v7543, 0
      %v7626 = vsel %vm898, %v7544, 0
      %v7629 = vsel %vm898, %v7545, 0
      %v7632 = vsel %vm898, %v7546, 0
      %v7635 = vsel %vm898, %v7547, 0
      %v7638 = vsel %vm898, %v7548, 0
      %v7641 = vsel %vm898, %v7549, 0
      %v7644 = vsel %vm898, %v7550, 0
      %v7647 = vsel %vm898, %v7551, 0
      %v7650 = vsel %vm898, %v7552, 0
      %v7653 = vsel %vm898, %v7553, 0
      %v7656 = vsel %vm898, %v7554, 0
      %v7659 = vsel %vm898, %v7555, 0
      %v7662 = vsel %vm898, %v7556, 0
      %v7665 = vsel %vm898, %v7557, 0
      %v7668 = vsel %vm898, %v7558, 0
      %7670 = vmatprep.subr.mxu0 0.0
      %7671 = vmatpush1.msra.mxu0 %v7559
      %7672 = vmatprep.subr.mxu0 0.0
      %7673 = vmatpush1.msra.mxu0 %v7560
      %7674 = vmatprep.subr.mxu0 0.0
      %7675 = vmatpush1.msra.mxu0 %v7561
      %7676 = vmatprep.subr.mxu0 0.0
      %7677 = vmatpush1.msra.mxu0 %v7562
      %7678 = vmatprep.subr.mxu0 0.0
      %7679 = vmatpush1.msra.mxu0 %v7563
      %7680 = vmatprep.subr.mxu0 0.0
      %7681 = vmatpush1.msra.mxu0 %v7564
      %7682 = vmatprep.subr.mxu0 0.0
      %7683 = vmatpush1.msra.mxu0 %v7565
      %7684 = vmatprep.subr.mxu0 0.0
      %7685 = vmatpush1.msra.mxu0 %v7566
      %7686 = vmatprep.subr.mxu0 0.0
      %7687 = vmatpush1.msra.mxu0 0.0
      %7688 = vmatprep.subr.mxu0 0.0
      %7689 = vmatpush1.msra.mxu0 0.0
      %7690 = vmatprep.subr.mxu0 0.0
      %7691 = vmatpush1.msra.mxu0 0.0
      %7692 = vmatprep.subr.mxu0 0.0
      %7693 = vmatpush1.msra.mxu0 0.0
      %7694 = vmatprep.subr.mxu0 0.0
      %7695 = vmatpush1.msra.mxu0 0.0
      %7696 = vmatprep.subr.mxu0 0.0
      %7697 = vmatpush1.msra.mxu0 0.0
      %7698 = vmatprep.subr.mxu0 0.0
      %7699 = vmatpush1.msra.mxu0 0.0
      %7700 = vmatprep.subr.mxu0 0.0
      %7701 = vmatpush1.msra.mxu0 0.0
      %7702 = vmatprep.subr.mxu0 0.0
      %7703 = vmatpush1.msra.mxu0 0.0
      %7704 = vmatprep.subr.mxu0 0.0
      %7705 = vmatpush1.msra.mxu0 0.0
      %7706 = vmatprep.subr.mxu0 0.0
      %7707 = vmatpush1.msra.mxu0 0.0
      %7708 = vmatprep.subr.mxu0 0.0
      %7709 = vmatpush1.msra.mxu0 0.0
      %7710 = vmatprep.subr.mxu0 0.0
      %7711 = vmatpush1.msra.mxu0 0.0
      %7712 = vmatprep.subr.mxu0 0.0
      %7713 = vmatpush1.msra.mxu0 0.0
      %7714 = vmatprep.subr.mxu0 0.0
      %7715 = vmatpush1.msra.mxu0 0.0
      %7716 = vmatprep.subr.mxu0 0.0
      %7717 = vmatpush1.msra.mxu0 0.0
      %7718 = vmatprep.subr.mxu0 0.0
      %7719 = vmatpush1.msra.mxu0 0.0
      %7720 = vmatprep.subr.mxu0 0.0
      %7721 = vmatpush1.msra.mxu0 0.0
      %7722 = vmatprep.subr.mxu0 0.0
      %7723 = vmatpush1.msra.mxu0 0.0
      %7724 = vmatprep.subr.mxu0 0.0
      %7725 = vmatpush1.msra.mxu0 0.0
      %7726 = vmatprep.subr.mxu0 0.0
      %7727 = vmatpush1.msra.mxu0 0.0
      %7728 = vmatprep.subr.mxu0 0.0
      %7729 = vmatpush1.msra.mxu0 0.0
      %7730 = vmatprep.subr.mxu0 0.0
      %7731 = vmatpush1.msra.mxu0 0.0
      %7732 = vmatprep.subr.mxu0 0.0
      %7733 = vmatpush1.msra.mxu0 0.0
      %7734 = vmatprep.mubr.f32.mxu0 0.0
      %7735 = vmatmul.mubr.f32.gmra.mrb[0].mxu0 %v7575
      %v7736 = vpop.f32.mrb[0].mxu0
      %v7737 = vadd.f32 %v7572, %v7736
      %v7738 = vpop.f32.mrb[0].mxu0
      %7739 = vmatprep.mubr.f32.mxu0 0.0
      %7740 = vmatmul.mubr.f32.gmra.mrb[0].mxu0 %v7578
      %v7741 = vpop.f32.mrb[0].mxu0
      %v7742 = vadd.f32 %v7572, %v7741
      %v7743 = vpop.f32.mrb[0].mxu0
      %7744 = vmatprep.mubr.f32.mxu0 0.0
      %7745 = vmatmul.mubr.f32.gmra.mrb[0].mxu0 %v7581
      %v7746 = vpop.f32.mrb[0].mxu0
      %v7747 = vadd.f32 %v7572, %v7746
      %v7748 = vpop.f32.mrb[0].mxu0
      %7749 = vmatprep.mubr.f32.mxu0 0.0
      %7750 = vmatmul.mubr.f32.gmra.mrb[0].mxu0 %v7584
      %v7751 = vpop.f32.mrb[0].mxu0
      %v7752 = vadd.f32 %v7572, %v7751
      %v7753 = vpop.f32.mrb[0].mxu0
      %7754 = vmatprep.mubr.f32.mxu0 0.0
      %7755 = vmatmul.mubr.f32.gmra.mrb[0].mxu0 %v7587
      %v7756 = vpop.f32.mrb[0].mxu0
      %v7757 = vadd.f32 %v7572, %v7756
      %v7758 = vpop.f32.mrb[0].mxu0
      %7759 = vmatprep.mubr.f32.mxu0 0.0
      %7760 = vmatmul.mubr.f32.gmra.mrb[0].mxu0 %v7590
      %v7761 = vpop.f32.mrb[0].mxu0
      %v7762 = vadd.f32 %v7572, %v7761
      %v7763 = vpop.f32.mrb[0].mxu0
      %7764 = vmatprep.mubr.f32.mxu0 0.0
      %7765 = vmatmul.mubr.f32.gmra.mrb[0].mxu0 %v7593
      %v7766 = vpop.f32.mrb[0].mxu0
      %v7767 = vadd.f32 %v7572, %v7766
      %v7768 = vpop.f32.mrb[0].mxu0
      %7769 = vmatprep.mubr.f32.mxu0 0.0
      %7770 = vmatmul.mubr.f32.gmra.mrb[0].mxu0 %v7596
      %v7771 = vpop.f32.mrb[0].mxu0
      %v7772 = vadd.f32 %v7572, %v7771
      %v7773 = vpop.f32.mrb[0].mxu0
      %7774 = vmatprep.mubr.f32.mxu0 0.0
      %7775 = vmatmul.mubr.f32.gmra.mrb[0].mxu0 %v7599
      %v7776 = vpop.f32.mrb[0].mxu0
      %v7777 = vadd.f32 %v7572, %v7776
      %v7778 = vpop.f32.mrb[0].mxu0
      %7779 = vmatprep.mubr.f32.mxu0 0.0
      %7780 = vmatmul.mubr.f32.gmra.mrb[0].mxu0 %v7602
      %v7781 = vpop.f32.mrb[0].mxu0
      %v7782 = vadd.f32 %v7572, %v7781
      %v7783 = vpop.f32.mrb[0].mxu0
      %7784 = vmatprep.mubr.f32.mxu0 0.0
      %7785 = vmatmul.mubr.f32.gmra.mrb[0].mxu0 %v7605
      %v7786 = vpop.f32.mrb[0].mxu0
      %v7787 = vadd.f32 %v7572, %v7786
      %v7788 = vpop.f32.mrb[0].mxu0
      %7789 = vmatprep.mubr.f32.mxu0 0.0
      %7790 = vmatmul.mubr.f32.gmra.mrb[0].mxu0 %v7608
      %v7791 = vpop.f32.mrb[0].mxu0
      %v7792 = vadd.f32 %v7572, %v7791
      %v7793 = vpop.f32.mrb[0].mxu0
      %7794 = vmatprep.mubr.f32.mxu0 0.0
      %7795 = vmatmul.mubr.f32.gmra.mrb[0].mxu0 %v7611
      %v7796 = vpop.f32.mrb[0].mxu0
      %v7797 = vadd.f32 %v7572, %v7796
      %v7798 = vpop.f32.mrb[0].mxu0
      %7799 = vmatprep.mubr.f32.mxu0 0.0
      %7800 = vmatmul.mubr.f32.gmra.mrb[0].mxu0 %v7614
      %v7801 = vpop.f32.mrb[0].mxu0
      %v7802 = vadd.f32 %v7572, %v7801
      %v7803 = vpop.f32.mrb[0].mxu0
      %7804 = vmatprep.mubr.f32.mxu0 0.0
      %7805 = vmatmul.mubr.f32.gmra.mrb[0].mxu0 %v7617
      %v7806 = vpop.f32.mrb[0].mxu0
      %v7807 = vadd.f32 %v7572, %v7806
      %v7808 = vpop.f32.mrb[0].mxu0
      %7809 = vmatprep.mubr.f32.mxu0 0.0
      %7810 = vmatmul.mubr.f32.gmra.mrb[0].mxu0 %v7620
      %v7811 = vpop.f32.mrb[0].mxu0
      %v7812 = vadd.f32 %v7572, %v7811
      %v7813 = vpop.f32.mrb[0].mxu0
      %7814 = vmatprep.mubr.f32.mxu0 0.0
      %7815 = vmatmul.mubr.f32.gmra.mrb[0].mxu0 %v7623
      %v7816 = vpop.f32.mrb[0].mxu0
      %v7817 = vadd.f32 %v7572, %v7816
      %v7818 = vpop.f32.mrb[0].mxu0
      %7819 = vmatprep.mubr.f32.mxu0 0.0
      %7820 = vmatmul.mubr.f32.gmra.mrb[0].mxu0 %v7626
      %v7821 = vpop.f32.mrb[0].mxu0
      %v7822 = vadd.f32 %v7572, %v7821
      %v7823 = vpop.f32.mrb[0].mxu0
      %7824 = vmatprep.mubr.f32.mxu0 0.0
      %7825 = vmatmul.mubr.f32.gmra.mrb[0].mxu0 %v7629
      %v7826 = vpop.f32.mrb[0].mxu0
      %v7827 = vadd.f32 %v7572, %v7826
      %v7828 = vpop.f32.mrb[0].mxu0
      %7829 = vmatprep.mubr.f32.mxu0 0.0
      %7830 = vmatmul.mubr.f32.gmra.mrb[0].mxu0 %v7632
      %v7831 = vpop.f32.mrb[0].mxu0
      %v7832 = vadd.f32 %v7572, %v7831
      %v7833 = vpop.f32.mrb[0].mxu0
      %7834 = vmatprep.mubr.f32.mxu0 0.0
      %7835 = vmatmul.mubr.f32.gmra.mrb[0].mxu0 %v7635
      %v7836 = vpop.f32.mrb[0].mxu0
      %v7837 = vadd.f32 %v7572, %v7836
      %v7838 = vpop.f32.mrb[0].mxu0
      %7839 = vmatprep.mubr.f32.mxu0 0.0
      %7840 = vmatmul.mubr.f32.gmra.mrb[0].mxu0 %v7638
      %v7841 = vpop.f32.mrb[0].mxu0
      %v7842 = vadd.f32 %v7572, %v7841
      %v7843 = vpop.f32.mrb[0].mxu0
      %7844 = vmatprep.mubr.f32.mxu0 0.0
      %7845 = vmatmul.mubr.f32.gmra.mrb[0].mxu0 %v7641
      %v7846 = vpop.f32.mrb[0].mxu0
      %v7847 = vadd.f32 %v7572, %v7846
      %v7848 = vpop.f32.mrb[0].mxu0
      %7849 = vmatprep.mubr.f32.mxu0 0.0
      %7850 = vmatmul.mubr.f32.gmra.mrb[0].mxu0 %v7644
      %v7851 = vpop.f32.mrb[0].mxu0
      %v7852 = vadd.f32 %v7572, %v7851
      %v7853 = vpop.f32.mrb[0].mxu0
      %7854 = vmatprep.mubr.f32.mxu0 0.0
      %7855 = vmatmul.mubr.f32.gmra.mrb[0].mxu0 %v7647
      %v7856 = vpop.f32.mrb[0].mxu0
      %v7857 = vadd.f32 %v7572, %v7856
      %v7858 = vpop.f32.mrb[0].mxu0
      %7859 = vmatprep.mubr.f32.mxu0 0.0
      %7860 = vmatmul.mubr.f32.gmra.mrb[0].mxu0 %v7650
      %v7861 = vpop.f32.mrb[0].mxu0
      %v7862 = vadd.f32 %v7572, %v7861
      %v7863 = vpop.f32.mrb[0].mxu0
      %7864 = vmatprep.mubr.f32.mxu0 0.0
      %7865 = vmatmul.mubr.f32.gmra.mrb[0].mxu0 %v7653
      %v7866 = vpop.f32.mrb[0].mxu0
      %v7867 = vadd.f32 %v7572, %v7866
      %v7868 = vpop.f32.mrb[0].mxu0
      %7869 = vmatprep.mubr.f32.mxu0 0.0
      %7870 = vmatmul.mubr.f32.gmra.mrb[0].mxu0 %v7656
      %v7871 = vpop.f32.mrb[0].mxu0
      %v7872 = vadd.f32 %v7572, %v7871
      %v7873 = vpop.f32.mrb[0].mxu0
      %7874 = vmatprep.mubr.f32.mxu0 0.0
      %7875 = vmatmul.mubr.f32.gmra.mrb[0].mxu0 %v7659
      %v7876 = vpop.f32.mrb[0].mxu0
      %v7877 = vadd.f32 %v7572, %v7876
      %v7878 = vpop.f32.mrb[0].mxu0
      %7879 = vmatprep.mubr.f32.mxu0 0.0
      %7880 = vmatmul.mubr.f32.gmra.mrb[0].mxu0 %v7662
      %v7881 = vpop.f32.mrb[0].mxu0
      %v7882 = vadd.f32 %v7572, %v7881
      %v7883 = vpop.f32.mrb[0].mxu0
      %7884 = vmatprep.mubr.f32.mxu0 0.0
      %7885 = vmatmul.mubr.f32.gmra.mrb[0].mxu0 %v7665
      %v7886 = vpop.f32.mrb[0].mxu0
      %v7887 = vadd.f32 %v7572, %v7886
      %v7888 = vpop.f32.mrb[0].mxu0
      %7889 = vmatprep.mubr.f32.mxu0 0.0
      %7890 = vmatmul.mubr.f32.gmra.mrb[0].mxu0 %v7668
      %v7891 = vpop.f32.mrb[0].mxu0
      %v7892 = vadd.f32 %v7572, %v7891
      %v7893 = vpop.f32.mrb[0].mxu0
      %7894 = vdwg.mxu0
      %v7895 = vmax.f32 %v7737, 0.0
      %v7896 = vmax.f32 %v7742, 0.0
      %v7897 = vmax.f32 %v7747, 0.0
      %v7898 = vmax.f32 %v7752, 0.0
      %v7899 = vmax.f32 %v7757, 0.0
      %v7900 = vmax.f32 %v7762, 0.0
      %v7901 = vmax.f32 %v7767, 0.0
      %v7902 = vmax.f32 %v7772, 0.0
      %v7903 = vmax.f32 %v7777, 0.0
      %v7904 = vmax.f32 %v7782, 0.0
      %v7905 = vmax.f32 %v7787, 0.0
      %v7906 = vmax.f32 %v7792, 0.0
      %v7907 = vmax.f32 %v7797, 0.0
      %v7908 = vmax.f32 %v7802, 0.0
      %v7909 = vmax.f32 %v7807, 0.0
      %v7910 = vmax.f32 %v7812, 0.0
      %v7911 = vmax.f32 %v7817, 0.0
      %v7912 = vmax.f32 %v7822, 0.0
      %v7913 = vmax.f32 %v7827, 0.0
      %v7914 = vmax.f32 %v7832, 0.0
      %v7915 = vmax.f32 %v7837, 0.0
      %v7916 = vmax.f32 %v7842, 0.0
      %v7917 = vmax.f32 %v7847, 0.0
      %v7918 = vmax.f32 %v7852, 0.0
      %v7919 = vmax.f32 %v7857, 0.0
      %v7920 = vmax.f32 %v7862, 0.0
      %v7921 = vmax.f32 %v7867, 0.0
      %v7922 = vmax.f32 %v7872, 0.0
      %v7923 = vmax.f32 %v7877, 0.0
      %v7924 = vmax.f32 %v7882, 0.0
      %v7925 = vmax.f32 %v7887, 0.0
      %v7926 = vmax.f32 %v7892, 0.0
      %v7927 = vld [vmem:[%s5] sm:$0xff]
      %v7928 = vld [vmem:[%s5 + $0x8] sm:$0xff]
      %v7929 = vld [vmem:[%s5 + $0x10] sm:$0xff]
      %v7930 = vld [vmem:[%s5 + $0x18] sm:$0xff]
      %v7931 = vld [vmem:[%s6] sm:$0x1]
      %v7933 = vlaneseq
      %v7934 = vshrl.u32 %v7933, 7
      %v7935 = vsub.s32 0, %v7934
      %v7936 = vrot.slane %v7931, %v7935
      %v7939 = vsel %vm1263, %v7895, 0
      %v7942 = vsel %vm1263, %v7896, 0
      %v7945 = vsel %vm1263, %v7897, 0
      %v7948 = vsel %vm1263, %v7898, 0
      %v7951 = vsel %vm1263, %v7899, 0
      %v7954 = vsel %vm1263, %v7900, 0
      %v7957 = vsel %vm1263, %v7901, 0
      %v7960 = vsel %vm1263, %v7902, 0
      %v7963 = vsel %vm1263, %v7903, 0
      %v7966 = vsel %vm1263, %v7904, 0
      %v7969 = vsel %vm1263, %v7905, 0
      %v7972 = vsel %vm1263, %v7906, 0
      %v7975 = vsel %vm1263, %v7907, 0
      %v7978 = vsel %vm1263, %v7908, 0
      %v7981 = vsel %vm1263, %v7909, 0
      %v7984 = vsel %vm1263, %v7910, 0
      %v7987 = vsel %vm1263, %v7911, 0
      %v7990 = vsel %vm1263, %v7912, 0
      %v7993 = vsel %vm1263, %v7913, 0
      %v7996 = vsel %vm1263, %v7914, 0
      %v7999 = vsel %vm1263, %v7915, 0
      %v8002 = vsel %vm1263, %v7916, 0
      %v8005 = vsel %vm1263, %v7917, 0
      %v8008 = vsel %vm1263, %v7918, 0
      %v8011 = vsel %vm1263, %v7919, 0
      %v8014 = vsel %vm1263, %v7920, 0
      %v8017 = vsel %vm1263, %v7921, 0
      %v8020 = vsel %vm1263, %v7922, 0
      %v8023 = vsel %vm1263, %v7923, 0
      %v8026 = vsel %vm1263, %v7924, 0
      %v8029 = vsel %vm1263, %v7925, 0
      %v8032 = vsel %vm1263, %v7926, 0
      %8034 = vmatprep.subr.mxu0 0.0
      %8035 = vmatpush1.msra.mxu0 %v7927
      %8036 = vmatprep.subr.mxu0 0.0
      %8037 = vmatpush1.msra.mxu0 %v7928
      %8038 = vmatprep.subr.mxu0 0.0
      %8039 = vmatpush1.msra.mxu0 %v7929
      %8040 = vmatprep.subr.mxu0 0.0
      %8041 = vmatpush1.msra.mxu0 %v7930
      %8042 = vmatprep.subr.mxu0 0.0
      %8043 = vmatpush1.msra.mxu0 0.0
      %8044 = vmatprep.subr.mxu0 0.0
      %8045 = vmatpush1.msra.mxu0 0.0
      %8046 = vmatprep.subr.mxu0 0.0
      %8047 = vmatpush1.msra.mxu0 0.0
      %8048 = vmatprep.subr.mxu0 0.0
      %8049 = vmatpush1.msra.mxu0 0.0
      %8050 = vmatprep.subr.mxu0 0.0
      %8051 = vmatpush1.msra.mxu0 0.0
      %8052 = vmatprep.subr.mxu0 0.0
      %8053 = vmatpush1.msra.mxu0 0.0
      %8054 = vmatprep.subr.mxu0 0.0
      %8055 = vmatpush1.msra.mxu0 0.0
      %8056 = vmatprep.subr.mxu0 0.0
      %8057 = vmatpush1.msra.mxu0 0.0
      %8058 = vmatprep.subr.mxu0 0.0
      %8059 = vmatpush1.msra.mxu0 0.0
      %8060 = vmatprep.subr.mxu0 0.0
      %8061 = vmatpush1.msra.mxu0 0.0
      %8062 = vmatprep.subr.mxu0 0.0
      %8063 = vmatpush1.msra.mxu0 0.0
      %8064 = vmatprep.subr.mxu0 0.0
      %8065 = vmatpush1.msra.mxu0 0.0
      %8066 = vmatprep.subr.mxu0 0.0
      %8067 = vmatpush1.msra.mxu0 0.0
      %8068 = vmatprep.subr.mxu0 0.0
      %8069 = vmatpush1.msra.mxu0 0.0
      %8070 = vmatprep.subr.mxu0 0.0
      %8071 = vmatpush1.msra.mxu0 0.0
      %8072 = vmatprep.subr.mxu0 0.0
      %8073 = vmatpush1.msra.mxu0 0.0
      %8074 = vmatprep.subr.mxu0 0.0
      %8075 = vmatpush1.msra.mxu0 0.0
      %8076 = vmatprep.subr.mxu0 0.0
      %8077 = vmatpush1.msra.mxu0 0.0
      %8078 = vmatprep.subr.mxu0 0.0
      %8079 = vmatpush1.msra.mxu0 0.0
      %8080 = vmatprep.subr.mxu0 0.0
      %8081 = vmatpush1.msra.mxu0 0.0
      %8082 = vmatprep.subr.mxu0 0.0
      %8083 = vmatpush1.msra.mxu0 0.0
      %8084 = vmatprep.subr.mxu0 0.0
      %8085 = vmatpush1.msra.mxu0 0.0
      %8086 = vmatprep.subr.mxu0 0.0
      %8087 = vmatpush1.msra.mxu0 0.0
      %8088 = vmatprep.subr.mxu0 0.0
      %8089 = vmatpush1.msra.mxu0 0.0
      %8090 = vmatprep.subr.mxu0 0.0
      %8091 = vmatpush1.msra.mxu0 0.0
      %8092 = vmatprep.subr.mxu0 0.0
      %8093 = vmatpush1.msra.mxu0 0.0
      %8094 = vmatprep.subr.mxu0 0.0
      %8095 = vmatpush1.msra.mxu0 0.0
      %8096 = vmatprep.subr.mxu0 0.0
      %8097 = vmatpush1.msra.mxu0 0.0
      %8098 = vmatprep.mubr.f32.mxu0 0.0
      %8099 = vmatmul.mubr.f32.gmra.mrb[0].mxu0 %v7939
      %v8100 = vpop.f32.mrb[0].mxu0
      %v8101 = vadd.f32 %v7936, %v8100
      %v8102 = vpop.f32.mrb[0].mxu0
      %8103 = vmatprep.mubr.f32.mxu0 0.0
      %8104 = vmatmul.mubr.f32.gmra.mrb[0].mxu0 %v7942
      %v8105 = vpop.f32.mrb[0].mxu0
      %v8106 = vadd.f32 %v7936, %v8105
      %v8107 = vpop.f32.mrb[0].mxu0
      %8108 = vmatprep.mubr.f32.mxu0 0.0
      %8109 = vmatmul.mubr.f32.gmra.mrb[0].mxu0 %v7945
      %v8110 = vpop.f32.mrb[0].mxu0
      %v8111 = vadd.f32 %v7936, %v8110
      %v8112 = vpop.f32.mrb[0].mxu0
      %8113 = vmatprep.mubr.f32.mxu0 0.0
      %8114 = vmatmul.mubr.f32.gmra.mrb[0].mxu0 %v7948
      %v8115 = vpop.f32.mrb[0].mxu0
      %v8116 = vadd.f32 %v7936, %v8115
      %v8117 = vpop.f32.mrb[0].mxu0
      %8118 = vmatprep.mubr.f32.mxu0 0.0
      %8119 = vmatmul.mubr.f32.gmra.mrb[0].mxu0 %v7951
      %v8120 = vpop.f32.mrb[0].mxu0
      %v8121 = vadd.f32 %v7936, %v8120
      %v8122 = vpop.f32.mrb[0].mxu0
      %8123 = vmatprep.mubr.f32.mxu0 0.0
      %8124 = vmatmul.mubr.f32.gmra.mrb[0].mxu0 %v7954
      %v8125 = vpop.f32.mrb[0].mxu0
      %v8126 = vadd.f32 %v7936, %v8125
      %v8127 = vpop.f32.mrb[0].mxu0
      %8128 = vmatprep.mubr.f32.mxu0 0.0
      %8129 = vmatmul.mubr.f32.gmra.mrb[0].mxu0 %v7957
      %v8130 = vpop.f32.mrb[0].mxu0
      %v8131 = vadd.f32 %v7936, %v8130
      %v8132 = vpop.f32.mrb[0].mxu0
      %8133 = vmatprep.mubr.f32.mxu0 0.0
      %8134 = vmatmul.mubr.f32.gmra.mrb[0].mxu0 %v7960
      %v8135 = vpop.f32.mrb[0].mxu0
      %v8136 = vadd.f32 %v7936, %v8135
      %v8137 = vpop.f32.mrb[0].mxu0
      %8138 = vmatprep.mubr.f32.mxu0 0.0
      %8139 = vmatmul.mubr.f32.gmra.mrb[0].mxu0 %v7963
      %v8140 = vpop.f32.mrb[0].mxu0
      %v8141 = vadd.f32 %v7936, %v8140
      %v8142 = vpop.f32.mrb[0].mxu0
      %8143 = vmatprep.mubr.f32.mxu0 0.0
      %8144 = vmatmul.mubr.f32.gmra.mrb[0].mxu0 %v7966
      %v8145 = vpop.f32.mrb[0].mxu0
      %v8146 = vadd.f32 %v7936, %v8145
      %v8147 = vpop.f32.mrb[0].mxu0
      %8148 = vmatprep.mubr.f32.mxu0 0.0
      %8149 = vmatmul.mubr.f32.gmra.mrb[0].mxu0 %v7969
      %v8150 = vpop.f32.mrb[0].mxu0
      %v8151 = vadd.f32 %v7936, %v8150
      %v8152 = vpop.f32.mrb[0].mxu0
      %8153 = vmatprep.mubr.f32.mxu0 0.0
      %8154 = vmatmul.mubr.f32.gmra.mrb[0].mxu0 %v7972
      %v8155 = vpop.f32.mrb[0].mxu0
      %v8156 = vadd.f32 %v7936, %v8155
      %v8157 = vpop.f32.mrb[0].mxu0
      %8158 = vmatprep.mubr.f32.mxu0 0.0
      %8159 = vmatmul.mubr.f32.gmra.mrb[0].mxu0 %v7975
      %v8160 = vpop.f32.mrb[0].mxu0
      %v8161 = vadd.f32 %v7936, %v8160
      %v8162 = vpop.f32.mrb[0].mxu0
      %8163 = vmatprep.mubr.f32.mxu0 0.0
      %8164 = vmatmul.mubr.f32.gmra.mrb[0].mxu0 %v7978
      %v8165 = vpop.f32.mrb[0].mxu0
      %v8166 = vadd.f32 %v7936, %v8165
      %v8167 = vpop.f32.mrb[0].mxu0
      %8168 = vmatprep.mubr.f32.mxu0 0.0
      %8169 = vmatmul.mubr.f32.gmra.mrb[0].mxu0 %v7981
      %v8170 = vpop.f32.mrb[0].mxu0
      %v8171 = vadd.f32 %v7936, %v8170
      %v8172 = vpop.f32.mrb[0].mxu0
      %8173 = vmatprep.mubr.f32.mxu0 0.0
      %8174 = vmatmul.mubr.f32.gmra.mrb[0].mxu0 %v7984
      %v8175 = vpop.f32.mrb[0].mxu0
      %v8176 = vadd.f32 %v7936, %v8175
      %v8177 = vpop.f32.mrb[0].mxu0
      %8178 = vmatprep.mubr.f32.mxu0 0.0
      %8179 = vmatmul.mubr.f32.gmra.mrb[0].mxu0 %v7987
      %v8180 = vpop.f32.mrb[0].mxu0
      %v8181 = vadd.f32 %v7936, %v8180
      %v8182 = vpop.f32.mrb[0].mxu0
      %8183 = vmatprep.mubr.f32.mxu0 0.0
      %8184 = vmatmul.mubr.f32.gmra.mrb[0].mxu0 %v7990
      %v8185 = vpop.f32.mrb[0].mxu0
      %v8186 = vadd.f32 %v7936, %v8185
      %v8187 = vpop.f32.mrb[0].mxu0
      %8188 = vmatprep.mubr.f32.mxu0 0.0
      %8189 = vmatmul.mubr.f32.gmra.mrb[0].mxu0 %v7993
      %v8190 = vpop.f32.mrb[0].mxu0
      %v8191 = vadd.f32 %v7936, %v8190
      %v8192 = vpop.f32.mrb[0].mxu0
      %8193 = vmatprep.mubr.f32.mxu0 0.0
      %8194 = vmatmul.mubr.f32.gmra.mrb[0].mxu0 %v7996
      %v8195 = vpop.f32.mrb[0].mxu0
      %v8196 = vadd.f32 %v7936, %v8195
      %v8197 = vpop.f32.mrb[0].mxu0
      %8198 = vmatprep.mubr.f32.mxu0 0.0
      %8199 = vmatmul.mubr.f32.gmra.mrb[0].mxu0 %v7999
      %v8200 = vpop.f32.mrb[0].mxu0
      %v8201 = vadd.f32 %v7936, %v8200
      %v8202 = vpop.f32.mrb[0].mxu0
      %8203 = vmatprep.mubr.f32.mxu0 0.0
      %8204 = vmatmul.mubr.f32.gmra.mrb[0].mxu0 %v8002
      %v8205 = vpop.f32.mrb[0].mxu0
      %v8206 = vadd.f32 %v7936, %v8205
      %v8207 = vpop.f32.mrb[0].mxu0
      %8208 = vmatprep.mubr.f32.mxu0 0.0
      %8209 = vmatmul.mubr.f32.gmra.mrb[0].mxu0 %v8005
      %v8210 = vpop.f32.mrb[0].mxu0
      %v8211 = vadd.f32 %v7936, %v8210
      %v8212 = vpop.f32.mrb[0].mxu0
      %8213 = vmatprep.mubr.f32.mxu0 0.0
      %8214 = vmatmul.mubr.f32.gmra.mrb[0].mxu0 %v8008
      %v8215 = vpop.f32.mrb[0].mxu0
      %v8216 = vadd.f32 %v7936, %v8215
      %v8217 = vpop.f32.mrb[0].mxu0
      %8218 = vmatprep.mubr.f32.mxu0 0.0
      %8219 = vmatmul.mubr.f32.gmra.mrb[0].mxu0 %v8011
      %v8220 = vpop.f32.mrb[0].mxu0
      %v8221 = vadd.f32 %v7936, %v8220
      %v8222 = vpop.f32.mrb[0].mxu0
      %8223 = vmatprep.mubr.f32.mxu0 0.0
      %8224 = vmatmul.mubr.f32.gmra.mrb[0].mxu0 %v8014
      %v8225 = vpop.f32.mrb[0].mxu0
      %v8226 = vadd.f32 %v7936, %v8225
      %v8227 = vpop.f32.mrb[0].mxu0
      %8228 = vmatprep.mubr.f32.mxu0 0.0
      %8229 = vmatmul.mubr.f32.gmra.mrb[0].mxu0 %v8017
      %v8230 = vpop.f32.mrb[0].mxu0
      %v8231 = vadd.f32 %v7936, %v8230
      %v8232 = vpop.f32.mrb[0].mxu0
      %8233 = vmatprep.mubr.f32.mxu0 0.0
      %8234 = vmatmul.mubr.f32.gmra.mrb[0].mxu0 %v8020
      %v8235 = vpop.f32.mrb[0].mxu0
      %v8236 = vadd.f32 %v7936, %v8235
      %v8237 = vpop.f32.mrb[0].mxu0
      %8238 = vmatprep.mubr.f32.mxu0 0.0
      %8239 = vmatmul.mubr.f32.gmra.mrb[0].mxu0 %v8023
      %v8240 = vpop.f32.mrb[0].mxu0
      %v8241 = vadd.f32 %v7936, %v8240
      %v8242 = vpop.f32.mrb[0].mxu0
      %8243 = vmatprep.mubr.f32.mxu0 0.0
      %8244 = vmatmul.mubr.f32.gmra.mrb[0].mxu0 %v8026
      %v8245 = vpop.f32.mrb[0].mxu0
      %v8246 = vadd.f32 %v7936, %v8245
      %v8247 = vpop.f32.mrb[0].mxu0
      %8248 = vmatprep.mubr.f32.mxu0 0.0
      %8249 = vmatmul.mubr.f32.gmra.mrb[0].mxu0 %v8029
      %v8250 = vpop.f32.mrb[0].mxu0
      %v8251 = vadd.f32 %v7936, %v8250
      %v8252 = vpop.f32.mrb[0].mxu0
      %8253 = vmatprep.mubr.f32.mxu0 0.0
      %8254 = vmatmul.mubr.f32.gmra.mrb[0].mxu0 %v8032
      %v8255 = vpop.f32.mrb[0].mxu0
      %v8256 = vadd.f32 %v7936, %v8255
      %v8257 = vpop.f32.mrb[0].mxu0
      %8258 = vdwg.mxu0
      %s8259 = scalar_lea.vmem %s477, 768
      %8260 = vst.msk [vmem:[%s8259] sm:$0xff] %vm1585, %v8101
      %8261 = vst.msk [vmem:[%s8259 + $0x8] sm:$0xff] %vm1585, %v8106
      %8262 = vst.msk [vmem:[%s8259 + $0x10] sm:$0xff] %vm1585, %v8111
      %8263 = vst.msk [vmem:[%s8259 + $0x18] sm:$0xff] %vm1585, %v8116
      %8264 = vst.msk [vmem:[%s8259 + $0x20] sm:$0xff] %vm1585, %v8121
      %8265 = vst.msk [vmem:[%s8259 + $0x28] sm:$0xff] %vm1585, %v8126
      %8266 = vst.msk [vmem:[%s8259 + $0x30] sm:$0xff] %vm1585, %v8131
      %8267 = vst.msk [vmem:[%s8259 + $0x38] sm:$0xff] %vm1585, %v8136
      %8268 = vst.msk [vmem:[%s8259 + $0x40] sm:$0xff] %vm1585, %v8141
      %8269 = vst.msk [vmem:[%s8259 + $0x48] sm:$0xff] %vm1585, %v8146
      %8270 = vst.msk [vmem:[%s8259 + $0x50] sm:$0xff] %vm1585, %v8151
      %8271 = vst.msk [vmem:[%s8259 + $0x58] sm:$0xff] %vm1585, %v8156
      %8272 = vst.msk [vmem:[%s8259 + $0x60] sm:$0xff] %vm1585, %v8161
      %8273 = vst.msk [vmem:[%s8259 + $0x68] sm:$0xff] %vm1585, %v8166
      %8274 = vst.msk [vmem:[%s8259 + $0x70] sm:$0xff] %vm1585, %v8171
      %8275 = vst.msk [vmem:[%s8259 + $0x78] sm:$0xff] %vm1585, %v8176
      %8276 = vst.msk [vmem:[%s8259 + $0x80] sm:$0xff] %vm1585, %v8181
      %8277 = vst.msk [vmem:[%s8259 + $0x88] sm:$0xff] %vm1585, %v8186
      %8278 = vst.msk [vmem:[%s8259 + $0x90] sm:$0xff] %vm1585, %v8191
      %8279 = vst.msk [vmem:[%s8259 + $0x98] sm:$0xff] %vm1585, %v8196
      %8280 = vst.msk [vmem:[%s8259 + $0xa0] sm:$0xff] %vm1585, %v8201
      %8281 = vst.msk [vmem:[%s8259 + $0xa8] sm:$0xff] %vm1585, %v8206
      %8282 = vst.msk [vmem:[%s8259 + $0xb0] sm:$0xff] %vm1585, %v8211
      %8283 = vst.msk [vmem:[%s8259 + $0xb8] sm:$0xff] %vm1585, %v8216
      %8284 = vst.msk [vmem:[%s8259 + $0xc0] sm:$0xff] %vm1585, %v8221
      %8285 = vst.msk [vmem:[%s8259 + $0xc8] sm:$0xff] %vm1585, %v8226
      %8286 = vst.msk [vmem:[%s8259 + $0xd0] sm:$0xff] %vm1585, %v8231
      %8287 = vst.msk [vmem:[%s8259 + $0xd8] sm:$0xff] %vm1585, %v8236
      %8288 = vst.msk [vmem:[%s8259 + $0xe0] sm:$0xff] %vm1585, %v8241
      %8289 = vst.msk [vmem:[%s8259 + $0xe8] sm:$0xff] %vm1585, %v8246
      %8290 = vst.msk [vmem:[%s8259 + $0xf0] sm:$0xff] %vm1585, %v8251
      %8291 = vst.msk [vmem:[%s8259 + $0xf8] sm:$0xff] %vm1585, %v8256
      %v8292 = vld [vmem:[%s7] sm:$0xff]
      %v8293 = vld [vmem:[%s7 + $0x8] sm:$0xff]
      %v8294 = vld [vmem:[%s8] sm:$0x1]
      %v8296 = vlaneseq
      %v8297 = vshrl.u32 %v8296, 7
      %v8298 = vsub.s32 0, %v8297
      %v8299 = vrot.slane %v8294, %v8298
      %v8302 = vsel %vm1585, %v8101, 0
      %v8305 = vsel %vm1585, %v8106, 0
      %v8308 = vsel %vm1585, %v8111, 0
      %v8311 = vsel %vm1585, %v8116, 0
      %v8314 = vsel %vm1585, %v8121, 0
      %v8317 = vsel %vm1585, %v8126, 0
      %v8320 = vsel %vm1585, %v8131, 0
      %v8323 = vsel %vm1585, %v8136, 0
      %v8326 = vsel %vm1585, %v8141, 0
      %v8329 = vsel %vm1585, %v8146, 0
      %v8332 = vsel %vm1585, %v8151, 0
      %v8335 = vsel %vm1585, %v8156, 0
      %v8338 = vsel %vm1585, %v8161, 0
      %v8341 = vsel %vm1585, %v8166, 0
      %v8344 = vsel %vm1585, %v8171, 0
      %v8347 = vsel %vm1585, %v8176, 0
      %v8350 = vsel %vm1585, %v8181, 0
      %v8353 = vsel %vm1585, %v8186, 0
      %v8356 = vsel %vm1585, %v8191, 0
      %v8359 = vsel %vm1585, %v8196, 0
      %v8362 = vsel %vm1585, %v8201, 0
      %v8365 = vsel %vm1585, %v8206, 0
      %v8368 = vsel %vm1585, %v8211, 0
      %v8371 = vsel %vm1585, %v8216, 0
      %v8374 = vsel %vm1585, %v8221, 0
      %v8377 = vsel %vm1585, %v8226, 0
      %v8380 = vsel %vm1585, %v8231, 0
      %v8383 = vsel %vm1585, %v8236, 0
      %v8386 = vsel %vm1585, %v8241, 0
      %v8389 = vsel %vm1585, %v8246, 0
      %v8392 = vsel %vm1585, %v8251, 0
      %v8395 = vsel %vm1585, %v8256, 0
      %8397 = vmatprep.subr.mxu0 0.0
      %8398 = vmatpush1.msra.mxu0 %v8292
      %8399 = vmatprep.subr.mxu0 0.0
      %8400 = vmatpush1.msra.mxu0 %v8293
      %8401 = vmatprep.subr.mxu0 0.0
      %8402 = vmatpush1.msra.mxu0 0.0
      %8403 = vmatprep.subr.mxu0 0.0
      %8404 = vmatpush1.msra.mxu0 0.0
      %8405 = vmatprep.subr.mxu0 0.0
      %8406 = vmatpush1.msra.mxu0 0.0
      %8407 = vmatprep.subr.mxu0 0.0
      %8408 = vmatpush1.msra.mxu0 0.0
      %8409 = vmatprep.subr.mxu0 0.0
      %8410 = vmatpush1.msra.mxu0 0.0
      %8411 = vmatprep.subr.mxu0 0.0
      %8412 = vmatpush1.msra.mxu0 0.0
      %8413 = vmatprep.subr.mxu0 0.0
      %8414 = vmatpush1.msra.mxu0 0.0
      %8415 = vmatprep.subr.mxu0 0.0
      %8416 = vmatpush1.msra.mxu0 0.0
      %8417 = vmatprep.subr.mxu0 0.0
      %8418 = vmatpush1.msra.mxu0 0.0
      %8419 = vmatprep.subr.mxu0 0.0
      %8420 = vmatpush1.msra.mxu0 0.0
      %8421 = vmatprep.subr.mxu0 0.0
      %8422 = vmatpush1.msra.mxu0 0.0
      %8423 = vmatprep.subr.mxu0 0.0
      %8424 = vmatpush1.msra.mxu0 0.0
      %8425 = vmatprep.subr.mxu0 0.0
      %8426 = vmatpush1.msra.mxu0 0.0
      %8427 = vmatprep.subr.mxu0 0.0
      %8428 = vmatpush1.msra.mxu0 0.0
      %8429 = vmatprep.subr.mxu0 0.0
      %8430 = vmatpush1.msra.mxu0 0.0
      %8431 = vmatprep.subr.mxu0 0.0
      %8432 = vmatpush1.msra.mxu0 0.0
      %8433 = vmatprep.subr.mxu0 0.0
      %8434 = vmatpush1.msra.mxu0 0.0
      %8435 = vmatprep.subr.mxu0 0.0
      %8436 = vmatpush1.msra.mxu0 0.0
      %8437 = vmatprep.subr.mxu0 0.0
      %8438 = vmatpush1.msra.mxu0 0.0
      %8439 = vmatprep.subr.mxu0 0.0
      %8440 = vmatpush1.msra.mxu0 0.0
      %8441 = vmatprep.subr.mxu0 0.0
      %8442 = vmatpush1.msra.mxu0 0.0
      %8443 = vmatprep.subr.mxu0 0.0
      %8444 = vmatpush1.msra.mxu0 0.0
      %8445 = vmatprep.subr.mxu0 0.0
      %8446 = vmatpush1.msra.mxu0 0.0
      %8447 = vmatprep.subr.mxu0 0.0
      %8448 = vmatpush1.msra.mxu0 0.0
      %8449 = vmatprep.subr.mxu0 0.0
      %8450 = vmatpush1.msra.mxu0 0.0
      %8451 = vmatprep.subr.mxu0 0.0
      %8452 = vmatpush1.msra.mxu0 0.0
      %8453 = vmatprep.subr.mxu0 0.0
      %8454 = vmatpush1.msra.mxu0 0.0
      %8455 = vmatprep.subr.mxu0 0.0
      %8456 = vmatpush1.msra.mxu0 0.0
      %8457 = vmatprep.subr.mxu0 0.0
      %8458 = vmatpush1.msra.mxu0 0.0
      %8459 = vmatprep.subr.mxu0 0.0
      %8460 = vmatpush1.msra.mxu0 0.0
      %8461 = vmatprep.mubr.f32.mxu0 0.0
      %8462 = vmatmul.mubr.f32.gmra.mrb[0].mxu0 %v8302
      %v8463 = vpop.f32.mrb[0].mxu0
      %v8464 = vadd.f32 %v8299, %v8463
      %v8465 = vpop.f32.mrb[0].mxu0
      %8466 = vmatprep.mubr.f32.mxu0 0.0
      %8467 = vmatmul.mubr.f32.gmra.mrb[0].mxu0 %v8305
      %v8468 = vpop.f32.mrb[0].mxu0
      %v8469 = vadd.f32 %v8299, %v8468
      %v8470 = vpop.f32.mrb[0].mxu0
      %8471 = vmatprep.mubr.f32.mxu0 0.0
      %8472 = vmatmul.mubr.f32.gmra.mrb[0].mxu0 %v8308
      %v8473 = vpop.f32.mrb[0].mxu0
      %v8474 = vadd.f32 %v8299, %v8473
      %v8475 = vpop.f32.mrb[0].mxu0
      %8476 = vmatprep.mubr.f32.mxu0 0.0
      %8477 = vmatmul.mubr.f32.gmra.mrb[0].mxu0 %v8311
      %v8478 = vpop.f32.mrb[0].mxu0
      %v8479 = vadd.f32 %v8299, %v8478
      %v8480 = vpop.f32.mrb[0].mxu0
      %8481 = vmatprep.mubr.f32.mxu0 0.0
      %8482 = vmatmul.mubr.f32.gmra.mrb[0].mxu0 %v8314
      %v8483 = vpop.f32.mrb[0].mxu0
      %v8484 = vadd.f32 %v8299, %v8483
      %v8485 = vpop.f32.mrb[0].mxu0
      %8486 = vmatprep.mubr.f32.mxu0 0.0
      %8487 = vmatmul.mubr.f32.gmra.mrb[0].mxu0 %v8317
      %v8488 = vpop.f32.mrb[0].mxu0
      %v8489 = vadd.f32 %v8299, %v8488
      %v8490 = vpop.f32.mrb[0].mxu0
      %8491 = vmatprep.mubr.f32.mxu0 0.0
      %8492 = vmatmul.mubr.f32.gmra.mrb[0].mxu0 %v8320
      %v8493 = vpop.f32.mrb[0].mxu0
      %v8494 = vadd.f32 %v8299, %v8493
      %v8495 = vpop.f32.mrb[0].mxu0
      %8496 = vmatprep.mubr.f32.mxu0 0.0
      %8497 = vmatmul.mubr.f32.gmra.mrb[0].mxu0 %v8323
      %v8498 = vpop.f32.mrb[0].mxu0
      %v8499 = vadd.f32 %v8299, %v8498
      %v8500 = vpop.f32.mrb[0].mxu0
      %8501 = vmatprep.mubr.f32.mxu0 0.0
      %8502 = vmatmul.mubr.f32.gmra.mrb[0].mxu0 %v8326
      %v8503 = vpop.f32.mrb[0].mxu0
      %v8504 = vadd.f32 %v8299, %v8503
      %v8505 = vpop.f32.mrb[0].mxu0
      %8506 = vmatprep.mubr.f32.mxu0 0.0
      %8507 = vmatmul.mubr.f32.gmra.mrb[0].mxu0 %v8329
      %v8508 = vpop.f32.mrb[0].mxu0
      %v8509 = vadd.f32 %v8299, %v8508
      %v8510 = vpop.f32.mrb[0].mxu0
      %8511 = vmatprep.mubr.f32.mxu0 0.0
      %8512 = vmatmul.mubr.f32.gmra.mrb[0].mxu0 %v8332
      %v8513 = vpop.f32.mrb[0].mxu0
      %v8514 = vadd.f32 %v8299, %v8513
      %v8515 = vpop.f32.mrb[0].mxu0
      %8516 = vmatprep.mubr.f32.mxu0 0.0
      %8517 = vmatmul.mubr.f32.gmra.mrb[0].mxu0 %v8335
      %v8518 = vpop.f32.mrb[0].mxu0
      %v8519 = vadd.f32 %v8299, %v8518
      %v8520 = vpop.f32.mrb[0].mxu0
      %8521 = vmatprep.mubr.f32.mxu0 0.0
      %8522 = vmatmul.mubr.f32.gmra.mrb[0].mxu0 %v8338
      %v8523 = vpop.f32.mrb[0].mxu0
      %v8524 = vadd.f32 %v8299, %v8523
      %v8525 = vpop.f32.mrb[0].mxu0
      %8526 = vmatprep.mubr.f32.mxu0 0.0
      %8527 = vmatmul.mubr.f32.gmra.mrb[0].mxu0 %v8341
      %v8528 = vpop.f32.mrb[0].mxu0
      %v8529 = vadd.f32 %v8299, %v8528
      %v8530 = vpop.f32.mrb[0].mxu0
      %8531 = vmatprep.mubr.f32.mxu0 0.0
      %8532 = vmatmul.mubr.f32.gmra.mrb[0].mxu0 %v8344
      %v8533 = vpop.f32.mrb[0].mxu0
      %v8534 = vadd.f32 %v8299, %v8533
      %v8535 = vpop.f32.mrb[0].mxu0
      %8536 = vmatprep.mubr.f32.mxu0 0.0
      %8537 = vmatmul.mubr.f32.gmra.mrb[0].mxu0 %v8347
      %v8538 = vpop.f32.mrb[0].mxu0
      %v8539 = vadd.f32 %v8299, %v8538
      %v8540 = vpop.f32.mrb[0].mxu0
      %8541 = vmatprep.mubr.f32.mxu0 0.0
      %8542 = vmatmul.mubr.f32.gmra.mrb[0].mxu0 %v8350
      %v8543 = vpop.f32.mrb[0].mxu0
      %v8544 = vadd.f32 %v8299, %v8543
      %v8545 = vpop.f32.mrb[0].mxu0
      %8546 = vmatprep.mubr.f32.mxu0 0.0
      %8547 = vmatmul.mubr.f32.gmra.mrb[0].mxu0 %v8353
      %v8548 = vpop.f32.mrb[0].mxu0
      %v8549 = vadd.f32 %v8299, %v8548
      %v8550 = vpop.f32.mrb[0].mxu0
      %8551 = vmatprep.mubr.f32.mxu0 0.0
      %8552 = vmatmul.mubr.f32.gmra.mrb[0].mxu0 %v8356
      %v8553 = vpop.f32.mrb[0].mxu0
      %v8554 = vadd.f32 %v8299, %v8553
      %v8555 = vpop.f32.mrb[0].mxu0
      %8556 = vmatprep.mubr.f32.mxu0 0.0
      %8557 = vmatmul.mubr.f32.gmra.mrb[0].mxu0 %v8359
      %v8558 = vpop.f32.mrb[0].mxu0
      %v8559 = vadd.f32 %v8299, %v8558
      %v8560 = vpop.f32.mrb[0].mxu0
      %8561 = vmatprep.mubr.f32.mxu0 0.0
      %8562 = vmatmul.mubr.f32.gmra.mrb[0].mxu0 %v8362
      %v8563 = vpop.f32.mrb[0].mxu0
      %v8564 = vadd.f32 %v8299, %v8563
      %v8565 = vpop.f32.mrb[0].mxu0
      %8566 = vmatprep.mubr.f32.mxu0 0.0
      %8567 = vmatmul.mubr.f32.gmra.mrb[0].mxu0 %v8365
      %v8568 = vpop.f32.mrb[0].mxu0
      %v8569 = vadd.f32 %v8299, %v8568
      %v8570 = vpop.f32.mrb[0].mxu0
      %8571 = vmatprep.mubr.f32.mxu0 0.0
      %8572 = vmatmul.mubr.f32.gmra.mrb[0].mxu0 %v8368
      %v8573 = vpop.f32.mrb[0].mxu0
      %v8574 = vadd.f32 %v8299, %v8573
      %v8575 = vpop.f32.mrb[0].mxu0
      %8576 = vmatprep.mubr.f32.mxu0 0.0
      %8577 = vmatmul.mubr.f32.gmra.mrb[0].mxu0 %v8371
      %v8578 = vpop.f32.mrb[0].mxu0
      %v8579 = vadd.f32 %v8299, %v8578
      %v8580 = vpop.f32.mrb[0].mxu0
      %8581 = vmatprep.mubr.f32.mxu0 0.0
      %8582 = vmatmul.mubr.f32.gmra.mrb[0].mxu0 %v8374
      %v8583 = vpop.f32.mrb[0].mxu0
      %v8584 = vadd.f32 %v8299, %v8583
      %v8585 = vpop.f32.mrb[0].mxu0
      %8586 = vmatprep.mubr.f32.mxu0 0.0
      %8587 = vmatmul.mubr.f32.gmra.mrb[0].mxu0 %v8377
      %v8588 = vpop.f32.mrb[0].mxu0
      %v8589 = vadd.f32 %v8299, %v8588
      %v8590 = vpop.f32.mrb[0].mxu0
      %8591 = vmatprep.mubr.f32.mxu0 0.0
      %8592 = vmatmul.mubr.f32.gmra.mrb[0].mxu0 %v8380
      %v8593 = vpop.f32.mrb[0].mxu0
      %v8594 = vadd.f32 %v8299, %v8593
      %v8595 = vpop.f32.mrb[0].mxu0
      %8596 = vmatprep.mubr.f32.mxu0 0.0
      %8597 = vmatmul.mubr.f32.gmra.mrb[0].mxu0 %v8383
      %v8598 = vpop.f32.mrb[0].mxu0
      %v8599 = vadd.f32 %v8299, %v8598
      %v8600 = vpop.f32.mrb[0].mxu0
      %8601 = vmatprep.mubr.f32.mxu0 0.0
      %8602 = vmatmul.mubr.f32.gmra.mrb[0].mxu0 %v8386
      %v8603 = vpop.f32.mrb[0].mxu0
      %v8604 = vadd.f32 %v8299, %v8603
      %v8605 = vpop.f32.mrb[0].mxu0
      %8606 = vmatprep.mubr.f32.mxu0 0.0
      %8607 = vmatmul.mubr.f32.gmra.mrb[0].mxu0 %v8389
      %v8608 = vpop.f32.mrb[0].mxu0
      %v8609 = vadd.f32 %v8299, %v8608
      %v8610 = vpop.f32.mrb[0].mxu0
      %8611 = vmatprep.mubr.f32.mxu0 0.0
      %8612 = vmatmul.mubr.f32.gmra.mrb[0].mxu0 %v8392
      %v8613 = vpop.f32.mrb[0].mxu0
      %v8614 = vadd.f32 %v8299, %v8613
      %v8615 = vpop.f32.mrb[0].mxu0
      %8616 = vmatprep.mubr.f32.mxu0 0.0
      %8617 = vmatmul.mubr.f32.gmra.mrb[0].mxu0 %v8395
      %v8618 = vpop.f32.mrb[0].mxu0
      %v8619 = vadd.f32 %v8299, %v8618
      %v8620 = vpop.f32.mrb[0].mxu0
      %8621 = vdwg.mxu0
      %v8622 = vmax.f32 %v8464, 0.0
      %v8623 = vmax.f32 %v8469, 0.0
      %v8624 = vmax.f32 %v8474, 0.0
      %v8625 = vmax.f32 %v8479, 0.0
      %v8626 = vmax.f32 %v8484, 0.0
      %v8627 = vmax.f32 %v8489, 0.0
      %v8628 = vmax.f32 %v8494, 0.0
      %v8629 = vmax.f32 %v8499, 0.0
      %v8630 = vmax.f32 %v8504, 0.0
      %v8631 = vmax.f32 %v8509, 0.0
      %v8632 = vmax.f32 %v8514, 0.0
      %v8633 = vmax.f32 %v8519, 0.0
      %v8634 = vmax.f32 %v8524, 0.0
      %v8635 = vmax.f32 %v8529, 0.0
      %v8636 = vmax.f32 %v8534, 0.0
      %v8637 = vmax.f32 %v8539, 0.0
      %v8638 = vmax.f32 %v8544, 0.0
      %v8639 = vmax.f32 %v8549, 0.0
      %v8640 = vmax.f32 %v8554, 0.0
      %v8641 = vmax.f32 %v8559, 0.0
      %v8642 = vmax.f32 %v8564, 0.0
      %v8643 = vmax.f32 %v8569, 0.0
      %v8644 = vmax.f32 %v8574, 0.0
      %v8645 = vmax.f32 %v8579, 0.0
      %v8646 = vmax.f32 %v8584, 0.0
      %v8647 = vmax.f32 %v8589, 0.0
      %v8648 = vmax.f32 %v8594, 0.0
      %v8649 = vmax.f32 %v8599, 0.0
      %v8650 = vmax.f32 %v8604, 0.0
      %v8651 = vmax.f32 %v8609, 0.0
      %v8652 = vmax.f32 %v8614, 0.0
      %v8653 = vmax.f32 %v8619, 0.0
      %v8654 = vld [vmem:[%s9] sm:$0xff]
      %v8655 = vld [vmem:[%s9 + $0x8] sm:$0xff]
      %v8656 = vld [vmem:[%s9 + $0x10] sm:$0xff]
      %v8657 = vld [vmem:[%s9 + $0x18] sm:$0xff]
      %v8658 = vld [vmem:[%s10] sm:$0x1]
      %v8660 = vlaneseq
      %v8661 = vshrl.u32 %v8660, 7
      %v8662 = vsub.s32 0, %v8661
      %v8663 = vrot.slane %v8658, %v8662
      %v8666 = vsel %vm1263, %v8622, 0
      %v8669 = vsel %vm1263, %v8623, 0
      %v8672 = vsel %vm1263, %v8624, 0
      %v8675 = vsel %vm1263, %v8625, 0
      %v8678 = vsel %vm1263, %v8626, 0
      %v8681 = vsel %vm1263, %v8627, 0
      %v8684 = vsel %vm1263, %v8628, 0
      %v8687 = vsel %vm1263, %v8629, 0
      %v8690 = vsel %vm1263, %v8630, 0
      %v8693 = vsel %vm1263, %v8631, 0
      %v8696 = vsel %vm1263, %v8632, 0
      %v8699 = vsel %vm1263, %v8633, 0
      %v8702 = vsel %vm1263, %v8634, 0
      %v8705 = vsel %vm1263, %v8635, 0
      %v8708 = vsel %vm1263, %v8636, 0
      %v8711 = vsel %vm1263, %v8637, 0
      %v8714 = vsel %vm1263, %v8638, 0
      %v8717 = vsel %vm1263, %v8639, 0
      %v8720 = vsel %vm1263, %v8640, 0
      %v8723 = vsel %vm1263, %v8641, 0
      %v8726 = vsel %vm1263, %v8642, 0
      %v8729 = vsel %vm1263, %v8643, 0
      %v8732 = vsel %vm1263, %v8644, 0
      %v8735 = vsel %vm1263, %v8645, 0
      %v8738 = vsel %vm1263, %v8646, 0
      %v8741 = vsel %vm1263, %v8647, 0
      %v8744 = vsel %vm1263, %v8648, 0
      %v8747 = vsel %vm1263, %v8649, 0
      %v8750 = vsel %vm1263, %v8650, 0
      %v8753 = vsel %vm1263, %v8651, 0
      %v8756 = vsel %vm1263, %v8652, 0
      %v8759 = vsel %vm1263, %v8653, 0
      %8761 = vmatprep.subr.mxu0 0.0
      %8762 = vmatpush1.msra.mxu0 %v8654
      %8763 = vmatprep.subr.mxu0 0.0
      %8764 = vmatpush1.msra.mxu0 %v8655
      %8765 = vmatprep.subr.mxu0 0.0
      %8766 = vmatpush1.msra.mxu0 %v8656
      %8767 = vmatprep.subr.mxu0 0.0
      %8768 = vmatpush1.msra.mxu0 %v8657
      %8769 = vmatprep.subr.mxu0 0.0
      %8770 = vmatpush1.msra.mxu0 0.0
      %8771 = vmatprep.subr.mxu0 0.0
      %8772 = vmatpush1.msra.mxu0 0.0
      %8773 = vmatprep.subr.mxu0 0.0
      %8774 = vmatpush1.msra.mxu0 0.0
      %8775 = vmatprep.subr.mxu0 0.0
      %8776 = vmatpush1.msra.mxu0 0.0
      %8777 = vmatprep.subr.mxu0 0.0
      %8778 = vmatpush1.msra.mxu0 0.0
      %8779 = vmatprep.subr.mxu0 0.0
      %8780 = vmatpush1.msra.mxu0 0.0
      %8781 = vmatprep.subr.mxu0 0.0
      %8782 = vmatpush1.msra.mxu0 0.0
      %8783 = vmatprep.subr.mxu0 0.0
      %8784 = vmatpush1.msra.mxu0 0.0
      %8785 = vmatprep.subr.mxu0 0.0
      %8786 = vmatpush1.msra.mxu0 0.0
      %8787 = vmatprep.subr.mxu0 0.0
      %8788 = vmatpush1.msra.mxu0 0.0
      %8789 = vmatprep.subr.mxu0 0.0
      %8790 = vmatpush1.msra.mxu0 0.0
      %8791 = vmatprep.subr.mxu0 0.0
      %8792 = vmatpush1.msra.mxu0 0.0
      %8793 = vmatprep.subr.mxu0 0.0
      %8794 = vmatpush1.msra.mxu0 0.0
      %8795 = vmatprep.subr.mxu0 0.0
      %8796 = vmatpush1.msra.mxu0 0.0
      %8797 = vmatprep.subr.mxu0 0.0
      %8798 = vmatpush1.msra.mxu0 0.0
      %8799 = vmatprep.subr.mxu0 0.0
      %8800 = vmatpush1.msra.mxu0 0.0
      %8801 = vmatprep.subr.mxu0 0.0
      %8802 = vmatpush1.msra.mxu0 0.0
      %8803 = vmatprep.subr.mxu0 0.0
      %8804 = vmatpush1.msra.mxu0 0.0
      %8805 = vmatprep.subr.mxu0 0.0
      %8806 = vmatpush1.msra.mxu0 0.0
      %8807 = vmatprep.subr.mxu0 0.0
      %8808 = vmatpush1.msra.mxu0 0.0
      %8809 = vmatprep.subr.mxu0 0.0
      %8810 = vmatpush1.msra.mxu0 0.0
      %8811 = vmatprep.subr.mxu0 0.0
      %8812 = vmatpush1.msra.mxu0 0.0
      %8813 = vmatprep.subr.mxu0 0.0
      %8814 = vmatpush1.msra.mxu0 0.0
      %8815 = vmatprep.subr.mxu0 0.0
      %8816 = vmatpush1.msra.mxu0 0.0
      %8817 = vmatprep.subr.mxu0 0.0
      %8818 = vmatpush1.msra.mxu0 0.0
      %8819 = vmatprep.subr.mxu0 0.0
      %8820 = vmatpush1.msra.mxu0 0.0
      %8821 = vmatprep.subr.mxu0 0.0
      %8822 = vmatpush1.msra.mxu0 0.0
      %8823 = vmatprep.subr.mxu0 0.0
      %8824 = vmatpush1.msra.mxu0 0.0
      %8825 = vmatprep.mubr.f32.mxu0 0.0
      %8826 = vmatmul.mubr.f32.gmra.mrb[0].mxu0 %v8666
      %v8827 = vpop.f32.mrb[0].mxu0
      %v8828 = vadd.f32 %v8663, %v8827
      %v8829 = vpop.f32.mrb[0].mxu0
      %8830 = vmatprep.mubr.f32.mxu0 0.0
      %8831 = vmatmul.mubr.f32.gmra.mrb[0].mxu0 %v8669
      %v8832 = vpop.f32.mrb[0].mxu0
      %v8833 = vadd.f32 %v8663, %v8832
      %v8834 = vpop.f32.mrb[0].mxu0
      %8835 = vmatprep.mubr.f32.mxu0 0.0
      %8836 = vmatmul.mubr.f32.gmra.mrb[0].mxu0 %v8672
      %v8837 = vpop.f32.mrb[0].mxu0
      %v8838 = vadd.f32 %v8663, %v8837
      %v8839 = vpop.f32.mrb[0].mxu0
      %8840 = vmatprep.mubr.f32.mxu0 0.0
      %8841 = vmatmul.mubr.f32.gmra.mrb[0].mxu0 %v8675
      %v8842 = vpop.f32.mrb[0].mxu0
      %v8843 = vadd.f32 %v8663, %v8842
      %v8844 = vpop.f32.mrb[0].mxu0
      %8845 = vmatprep.mubr.f32.mxu0 0.0
      %8846 = vmatmul.mubr.f32.gmra.mrb[0].mxu0 %v8678
      %v8847 = vpop.f32.mrb[0].mxu0
      %v8848 = vadd.f32 %v8663, %v8847
      %v8849 = vpop.f32.mrb[0].mxu0
      %8850 = vmatprep.mubr.f32.mxu0 0.0
      %8851 = vmatmul.mubr.f32.gmra.mrb[0].mxu0 %v8681
      %v8852 = vpop.f32.mrb[0].mxu0
      %v8853 = vadd.f32 %v8663, %v8852
      %v8854 = vpop.f32.mrb[0].mxu0
      %8855 = vmatprep.mubr.f32.mxu0 0.0
      %8856 = vmatmul.mubr.f32.gmra.mrb[0].mxu0 %v8684
      %v8857 = vpop.f32.mrb[0].mxu0
      %v8858 = vadd.f32 %v8663, %v8857
      %v8859 = vpop.f32.mrb[0].mxu0
      %8860 = vmatprep.mubr.f32.mxu0 0.0
      %8861 = vmatmul.mubr.f32.gmra.mrb[0].mxu0 %v8687
      %v8862 = vpop.f32.mrb[0].mxu0
      %v8863 = vadd.f32 %v8663, %v8862
      %v8864 = vpop.f32.mrb[0].mxu0
      %8865 = vmatprep.mubr.f32.mxu0 0.0
      %8866 = vmatmul.mubr.f32.gmra.mrb[0].mxu0 %v8690
      %v8867 = vpop.f32.mrb[0].mxu0
      %v8868 = vadd.f32 %v8663, %v8867
      %v8869 = vpop.f32.mrb[0].mxu0
      %8870 = vmatprep.mubr.f32.mxu0 0.0
      %8871 = vmatmul.mubr.f32.gmra.mrb[0].mxu0 %v8693
      %v8872 = vpop.f32.mrb[0].mxu0
      %v8873 = vadd.f32 %v8663, %v8872
      %v8874 = vpop.f32.mrb[0].mxu0
      %8875 = vmatprep.mubr.f32.mxu0 0.0
      %8876 = vmatmul.mubr.f32.gmra.mrb[0].mxu0 %v8696
      %v8877 = vpop.f32.mrb[0].mxu0
      %v8878 = vadd.f32 %v8663, %v8877
      %v8879 = vpop.f32.mrb[0].mxu0
      %8880 = vmatprep.mubr.f32.mxu0 0.0
      %8881 = vmatmul.mubr.f32.gmra.mrb[0].mxu0 %v8699
      %v8882 = vpop.f32.mrb[0].mxu0
      %v8883 = vadd.f32 %v8663, %v8882
      %v8884 = vpop.f32.mrb[0].mxu0
      %8885 = vmatprep.mubr.f32.mxu0 0.0
      %8886 = vmatmul.mubr.f32.gmra.mrb[0].mxu0 %v8702
      %v8887 = vpop.f32.mrb[0].mxu0
      %v8888 = vadd.f32 %v8663, %v8887
      %v8889 = vpop.f32.mrb[0].mxu0
      %8890 = vmatprep.mubr.f32.mxu0 0.0
      %8891 = vmatmul.mubr.f32.gmra.mrb[0].mxu0 %v8705
      %v8892 = vpop.f32.mrb[0].mxu0
      %v8893 = vadd.f32 %v8663, %v8892
      %v8894 = vpop.f32.mrb[0].mxu0
      %8895 = vmatprep.mubr.f32.mxu0 0.0
      %8896 = vmatmul.mubr.f32.gmra.mrb[0].mxu0 %v8708
      %v8897 = vpop.f32.mrb[0].mxu0
      %v8898 = vadd.f32 %v8663, %v8897
      %v8899 = vpop.f32.mrb[0].mxu0
      %8900 = vmatprep.mubr.f32.mxu0 0.0
      %8901 = vmatmul.mubr.f32.gmra.mrb[0].mxu0 %v8711
      %v8902 = vpop.f32.mrb[0].mxu0
      %v8903 = vadd.f32 %v8663, %v8902
      %v8904 = vpop.f32.mrb[0].mxu0
      %8905 = vmatprep.mubr.f32.mxu0 0.0
      %8906 = vmatmul.mubr.f32.gmra.mrb[0].mxu0 %v8714
      %v8907 = vpop.f32.mrb[0].mxu0
      %v8908 = vadd.f32 %v8663, %v8907
      %v8909 = vpop.f32.mrb[0].mxu0
      %8910 = vmatprep.mubr.f32.mxu0 0.0
      %8911 = vmatmul.mubr.f32.gmra.mrb[0].mxu0 %v8717
      %v8912 = vpop.f32.mrb[0].mxu0
      %v8913 = vadd.f32 %v8663, %v8912
      %v8914 = vpop.f32.mrb[0].mxu0
      %8915 = vmatprep.mubr.f32.mxu0 0.0
      %8916 = vmatmul.mubr.f32.gmra.mrb[0].mxu0 %v8720
      %v8917 = vpop.f32.mrb[0].mxu0
      %v8918 = vadd.f32 %v8663, %v8917
      %v8919 = vpop.f32.mrb[0].mxu0
      %8920 = vmatprep.mubr.f32.mxu0 0.0
      %8921 = vmatmul.mubr.f32.gmra.mrb[0].mxu0 %v8723
      %v8922 = vpop.f32.mrb[0].mxu0
      %v8923 = vadd.f32 %v8663, %v8922
      %v8924 = vpop.f32.mrb[0].mxu0
      %8925 = vmatprep.mubr.f32.mxu0 0.0
      %8926 = vmatmul.mubr.f32.gmra.mrb[0].mxu0 %v8726
      %v8927 = vpop.f32.mrb[0].mxu0
      %v8928 = vadd.f32 %v8663, %v8927
      %v8929 = vpop.f32.mrb[0].mxu0
      %8930 = vmatprep.mubr.f32.mxu0 0.0
      %8931 = vmatmul.mubr.f32.gmra.mrb[0].mxu0 %v8729
      %v8932 = vpop.f32.mrb[0].mxu0
      %v8933 = vadd.f32 %v8663, %v8932
      %v8934 = vpop.f32.mrb[0].mxu0
      %8935 = vmatprep.mubr.f32.mxu0 0.0
      %8936 = vmatmul.mubr.f32.gmra.mrb[0].mxu0 %v8732
      %v8937 = vpop.f32.mrb[0].mxu0
      %v8938 = vadd.f32 %v8663, %v8937
      %v8939 = vpop.f32.mrb[0].mxu0
      %8940 = vmatprep.mubr.f32.mxu0 0.0
      %8941 = vmatmul.mubr.f32.gmra.mrb[0].mxu0 %v8735
      %v8942 = vpop.f32.mrb[0].mxu0
      %v8943 = vadd.f32 %v8663, %v8942
      %v8944 = vpop.f32.mrb[0].mxu0
      %8945 = vmatprep.mubr.f32.mxu0 0.0
      %8946 = vmatmul.mubr.f32.gmra.mrb[0].mxu0 %v8738
      %v8947 = vpop.f32.mrb[0].mxu0
      %v8948 = vadd.f32 %v8663, %v8947
      %v8949 = vpop.f32.mrb[0].mxu0
      %8950 = vmatprep.mubr.f32.mxu0 0.0
      %8951 = vmatmul.mubr.f32.gmra.mrb[0].mxu0 %v8741
      %v8952 = vpop.f32.mrb[0].mxu0
      %v8953 = vadd.f32 %v8663, %v8952
      %v8954 = vpop.f32.mrb[0].mxu0
      %8955 = vmatprep.mubr.f32.mxu0 0.0
      %8956 = vmatmul.mubr.f32.gmra.mrb[0].mxu0 %v8744
      %v8957 = vpop.f32.mrb[0].mxu0
      %v8958 = vadd.f32 %v8663, %v8957
      %v8959 = vpop.f32.mrb[0].mxu0
      %8960 = vmatprep.mubr.f32.mxu0 0.0
      %8961 = vmatmul.mubr.f32.gmra.mrb[0].mxu0 %v8747
      %v8962 = vpop.f32.mrb[0].mxu0
      %v8963 = vadd.f32 %v8663, %v8962
      %v8964 = vpop.f32.mrb[0].mxu0
      %8965 = vmatprep.mubr.f32.mxu0 0.0
      %8966 = vmatmul.mubr.f32.gmra.mrb[0].mxu0 %v8750
      %v8967 = vpop.f32.mrb[0].mxu0
      %v8968 = vadd.f32 %v8663, %v8967
      %v8969 = vpop.f32.mrb[0].mxu0
      %8970 = vmatprep.mubr.f32.mxu0 0.0
      %8971 = vmatmul.mubr.f32.gmra.mrb[0].mxu0 %v8753
      %v8972 = vpop.f32.mrb[0].mxu0
      %v8973 = vadd.f32 %v8663, %v8972
      %v8974 = vpop.f32.mrb[0].mxu0
      %8975 = vmatprep.mubr.f32.mxu0 0.0
      %8976 = vmatmul.mubr.f32.gmra.mrb[0].mxu0 %v8756
      %v8977 = vpop.f32.mrb[0].mxu0
      %v8978 = vadd.f32 %v8663, %v8977
      %v8979 = vpop.f32.mrb[0].mxu0
      %8980 = vmatprep.mubr.f32.mxu0 0.0
      %8981 = vmatmul.mubr.f32.gmra.mrb[0].mxu0 %v8759
      %v8982 = vpop.f32.mrb[0].mxu0
      %v8983 = vadd.f32 %v8663, %v8982
      %v8984 = vpop.f32.mrb[0].mxu0
      %8985 = vdwg.mxu0
      %v8986 = vmax.f32 %v8828, 0.0
      %v8987 = vmax.f32 %v8833, 0.0
      %v8988 = vmax.f32 %v8838, 0.0
      %v8989 = vmax.f32 %v8843, 0.0
      %v8990 = vmax.f32 %v8848, 0.0
      %v8991 = vmax.f32 %v8853, 0.0
      %v8992 = vmax.f32 %v8858, 0.0
      %v8993 = vmax.f32 %v8863, 0.0
      %v8994 = vmax.f32 %v8868, 0.0
      %v8995 = vmax.f32 %v8873, 0.0
      %v8996 = vmax.f32 %v8878, 0.0
      %v8997 = vmax.f32 %v8883, 0.0
      %v8998 = vmax.f32 %v8888, 0.0
      %v8999 = vmax.f32 %v8893, 0.0
      %v9000 = vmax.f32 %v8898, 0.0
      %v9001 = vmax.f32 %v8903, 0.0
      %v9002 = vmax.f32 %v8908, 0.0
      %v9003 = vmax.f32 %v8913, 0.0
      %v9004 = vmax.f32 %v8918, 0.0
      %v9005 = vmax.f32 %v8923, 0.0
      %v9006 = vmax.f32 %v8928, 0.0
      %v9007 = vmax.f32 %v8933, 0.0
      %v9008 = vmax.f32 %v8938, 0.0
      %v9009 = vmax.f32 %v8943, 0.0
      %v9010 = vmax.f32 %v8948, 0.0
      %v9011 = vmax.f32 %v8953, 0.0
      %v9012 = vmax.f32 %v8958, 0.0
      %v9013 = vmax.f32 %v8963, 0.0
      %v9014 = vmax.f32 %v8968, 0.0
      %v9015 = vmax.f32 %v8973, 0.0
      %v9016 = vmax.f32 %v8978, 0.0
      %v9017 = vmax.f32 %v8983, 0.0
      %v9018 = vld [vmem:[%s11] sm:$0xff]
      %v9019 = vld [vmem:[%s11 + $0x8] sm:$0xff]
      %v9020 = vld [vmem:[%s11 + $0x10] sm:$0xff]
      %v9021 = vld [vmem:[%s11 + $0x18] sm:$0xff]
      %v9022 = vld [vmem:[%s11 + $0x20] sm:$0xff]
      %v9023 = vld [vmem:[%s11 + $0x28] sm:$0xff]
      %v9024 = vld [vmem:[%s11 + $0x30] sm:$0xff]
      %v9025 = vld [vmem:[%s11 + $0x38] sm:$0xff]
      %v9026 = vld [vmem:[%s12] sm:$0x1]
      %v9028 = vlaneseq
      %v9029 = vshrl.u32 %v9028, 7
      %v9030 = vsub.s32 0, %v9029
      %v9031 = vrot.slane %v9026, %v9030
      %v9034 = vsel %vm898, %v8986, 0
      %v9037 = vsel %vm898, %v8987, 0
      %v9040 = vsel %vm898, %v8988, 0
      %v9043 = vsel %vm898, %v8989, 0
      %v9046 = vsel %vm898, %v8990, 0
      %v9049 = vsel %vm898, %v8991, 0
      %v9052 = vsel %vm898, %v8992, 0
      %v9055 = vsel %vm898, %v8993, 0
      %v9058 = vsel %vm898, %v8994, 0
      %v9061 = vsel %vm898, %v8995, 0
      %v9064 = vsel %vm898, %v8996, 0
      %v9067 = vsel %vm898, %v8997, 0
      %v9070 = vsel %vm898, %v8998, 0
      %v9073 = vsel %vm898, %v8999, 0
      %v9076 = vsel %vm898, %v9000, 0
      %v9079 = vsel %vm898, %v9001, 0
      %v9082 = vsel %vm898, %v9002, 0
      %v9085 = vsel %vm898, %v9003, 0
      %v9088 = vsel %vm898, %v9004, 0
      %v9091 = vsel %vm898, %v9005, 0
      %v9094 = vsel %vm898, %v9006, 0
      %v9097 = vsel %vm898, %v9007, 0
      %v9100 = vsel %vm898, %v9008, 0
      %v9103 = vsel %vm898, %v9009, 0
      %v9106 = vsel %vm898, %v9010, 0
      %v9109 = vsel %vm898, %v9011, 0
      %v9112 = vsel %vm898, %v9012, 0
      %v9115 = vsel %vm898, %v9013, 0
      %v9118 = vsel %vm898, %v9014, 0
      %v9121 = vsel %vm898, %v9015, 0
      %v9124 = vsel %vm898, %v9016, 0
      %v9127 = vsel %vm898, %v9017, 0
      %9129 = vmatprep.subr.mxu0 0.0
      %9130 = vmatpush1.msra.mxu0 %v9018
      %9131 = vmatprep.subr.mxu0 0.0
      %9132 = vmatpush1.msra.mxu0 %v9019
      %9133 = vmatprep.subr.mxu0 0.0
      %9134 = vmatpush1.msra.mxu0 %v9020
      %9135 = vmatprep.subr.mxu0 0.0
      %9136 = vmatpush1.msra.mxu0 %v9021
      %9137 = vmatprep.subr.mxu0 0.0
      %9138 = vmatpush1.msra.mxu0 %v9022
      %9139 = vmatprep.subr.mxu0 0.0
      %9140 = vmatpush1.msra.mxu0 %v9023
      %9141 = vmatprep.subr.mxu0 0.0
      %9142 = vmatpush1.msra.mxu0 %v9024
      %9143 = vmatprep.subr.mxu0 0.0
      %9144 = vmatpush1.msra.mxu0 %v9025
      %9145 = vmatprep.subr.mxu0 0.0
      %9146 = vmatpush1.msra.mxu0 0.0
      %9147 = vmatprep.subr.mxu0 0.0
      %9148 = vmatpush1.msra.mxu0 0.0
      %9149 = vmatprep.subr.mxu0 0.0
      %9150 = vmatpush1.msra.mxu0 0.0
      %9151 = vmatprep.subr.mxu0 0.0
      %9152 = vmatpush1.msra.mxu0 0.0
      %9153 = vmatprep.subr.mxu0 0.0
      %9154 = vmatpush1.msra.mxu0 0.0
      %9155 = vmatprep.subr.mxu0 0.0
      %9156 = vmatpush1.msra.mxu0 0.0
      %9157 = vmatprep.subr.mxu0 0.0
      %9158 = vmatpush1.msra.mxu0 0.0
      %9159 = vmatprep.subr.mxu0 0.0
      %9160 = vmatpush1.msra.mxu0 0.0
      %9161 = vmatprep.subr.mxu0 0.0
      %9162 = vmatpush1.msra.mxu0 0.0
      %9163 = vmatprep.subr.mxu0 0.0
      %9164 = vmatpush1.msra.mxu0 0.0
      %9165 = vmatprep.subr.mxu0 0.0
      %9166 = vmatpush1.msra.mxu0 0.0
      %9167 = vmatprep.subr.mxu0 0.0
      %9168 = vmatpush1.msra.mxu0 0.0
      %9169 = vmatprep.subr.mxu0 0.0
      %9170 = vmatpush1.msra.mxu0 0.0
      %9171 = vmatprep.subr.mxu0 0.0
      %9172 = vmatpush1.msra.mxu0 0.0
      %9173 = vmatprep.subr.mxu0 0.0
      %9174 = vmatpush1.msra.mxu0 0.0
      %9175 = vmatprep.subr.mxu0 0.0
      %9176 = vmatpush1.msra.mxu0 0.0
      %9177 = vmatprep.subr.mxu0 0.0
      %9178 = vmatpush1.msra.mxu0 0.0
      %9179 = vmatprep.subr.mxu0 0.0
      %9180 = vmatpush1.msra.mxu0 0.0
      %9181 = vmatprep.subr.mxu0 0.0
      %9182 = vmatpush1.msra.mxu0 0.0
      %9183 = vmatprep.subr.mxu0 0.0
      %9184 = vmatpush1.msra.mxu0 0.0
      %9185 = vmatprep.subr.mxu0 0.0
      %9186 = vmatpush1.msra.mxu0 0.0
      %9187 = vmatprep.subr.mxu0 0.0
      %9188 = vmatpush1.msra.mxu0 0.0
      %9189 = vmatprep.subr.mxu0 0.0
      %9190 = vmatpush1.msra.mxu0 0.0
      %9191 = vmatprep.subr.mxu0 0.0
      %9192 = vmatpush1.msra.mxu0 0.0
      %9193 = vmatprep.mubr.f32.mxu0 0.0
      %9194 = vmatmul.mubr.f32.gmra.mrb[0].mxu0 %v9034
      %v9195 = vpop.f32.mrb[0].mxu0
      %v9196 = vadd.f32 %v9031, %v9195
      %v9197 = vpop.f32.mrb[0].mxu0
      %9198 = vmatprep.mubr.f32.mxu0 0.0
      %9199 = vmatmul.mubr.f32.gmra.mrb[0].mxu0 %v9037
      %v9200 = vpop.f32.mrb[0].mxu0
      %v9201 = vadd.f32 %v9031, %v9200
      %v9202 = vpop.f32.mrb[0].mxu0
      %9203 = vmatprep.mubr.f32.mxu0 0.0
      %9204 = vmatmul.mubr.f32.gmra.mrb[0].mxu0 %v9040
      %v9205 = vpop.f32.mrb[0].mxu0
      %v9206 = vadd.f32 %v9031, %v9205
      %v9207 = vpop.f32.mrb[0].mxu0
      %9208 = vmatprep.mubr.f32.mxu0 0.0
      %9209 = vmatmul.mubr.f32.gmra.mrb[0].mxu0 %v9043
      %v9210 = vpop.f32.mrb[0].mxu0
      %v9211 = vadd.f32 %v9031, %v9210
      %v9212 = vpop.f32.mrb[0].mxu0
      %9213 = vmatprep.mubr.f32.mxu0 0.0
      %9214 = vmatmul.mubr.f32.gmra.mrb[0].mxu0 %v9046
      %v9215 = vpop.f32.mrb[0].mxu0
      %v9216 = vadd.f32 %v9031, %v9215
      %v9217 = vpop.f32.mrb[0].mxu0
      %9218 = vmatprep.mubr.f32.mxu0 0.0
      %9219 = vmatmul.mubr.f32.gmra.mrb[0].mxu0 %v9049
      %v9220 = vpop.f32.mrb[0].mxu0
      %v9221 = vadd.f32 %v9031, %v9220
      %v9222 = vpop.f32.mrb[0].mxu0
      %9223 = vmatprep.mubr.f32.mxu0 0.0
      %9224 = vmatmul.mubr.f32.gmra.mrb[0].mxu0 %v9052
      %v9225 = vpop.f32.mrb[0].mxu0
      %v9226 = vadd.f32 %v9031, %v9225
      %v9227 = vpop.f32.mrb[0].mxu0
      %9228 = vmatprep.mubr.f32.mxu0 0.0
      %9229 = vmatmul.mubr.f32.gmra.mrb[0].mxu0 %v9055
      %v9230 = vpop.f32.mrb[0].mxu0
      %v9231 = vadd.f32 %v9031, %v9230
      %v9232 = vpop.f32.mrb[0].mxu0
      %9233 = vmatprep.mubr.f32.mxu0 0.0
      %9234 = vmatmul.mubr.f32.gmra.mrb[0].mxu0 %v9058
      %v9235 = vpop.f32.mrb[0].mxu0
      %v9236 = vadd.f32 %v9031, %v9235
      %v9237 = vpop.f32.mrb[0].mxu0
      %9238 = vmatprep.mubr.f32.mxu0 0.0
      %9239 = vmatmul.mubr.f32.gmra.mrb[0].mxu0 %v9061
      %v9240 = vpop.f32.mrb[0].mxu0
      %v9241 = vadd.f32 %v9031, %v9240
      %v9242 = vpop.f32.mrb[0].mxu0
      %9243 = vmatprep.mubr.f32.mxu0 0.0
      %9244 = vmatmul.mubr.f32.gmra.mrb[0].mxu0 %v9064
      %v9245 = vpop.f32.mrb[0].mxu0
      %v9246 = vadd.f32 %v9031, %v9245
      %v9247 = vpop.f32.mrb[0].mxu0
      %9248 = vmatprep.mubr.f32.mxu0 0.0
      %9249 = vmatmul.mubr.f32.gmra.mrb[0].mxu0 %v9067
      %v9250 = vpop.f32.mrb[0].mxu0
      %v9251 = vadd.f32 %v9031, %v9250
      %v9252 = vpop.f32.mrb[0].mxu0
      %9253 = vmatprep.mubr.f32.mxu0 0.0
      %9254 = vmatmul.mubr.f32.gmra.mrb[0].mxu0 %v9070
      %v9255 = vpop.f32.mrb[0].mxu0
      %v9256 = vadd.f32 %v9031, %v9255
      %v9257 = vpop.f32.mrb[0].mxu0
      %9258 = vmatprep.mubr.f32.mxu0 0.0
      %9259 = vmatmul.mubr.f32.gmra.mrb[0].mxu0 %v9073
      %v9260 = vpop.f32.mrb[0].mxu0
      %v9261 = vadd.f32 %v9031, %v9260
      %v9262 = vpop.f32.mrb[0].mxu0
      %9263 = vmatprep.mubr.f32.mxu0 0.0
      %9264 = vmatmul.mubr.f32.gmra.mrb[0].mxu0 %v9076
      %v9265 = vpop.f32.mrb[0].mxu0
      %v9266 = vadd.f32 %v9031, %v9265
      %v9267 = vpop.f32.mrb[0].mxu0
      %9268 = vmatprep.mubr.f32.mxu0 0.0
      %9269 = vmatmul.mubr.f32.gmra.mrb[0].mxu0 %v9079
      %v9270 = vpop.f32.mrb[0].mxu0
      %v9271 = vadd.f32 %v9031, %v9270
      %v9272 = vpop.f32.mrb[0].mxu0
      %9273 = vmatprep.mubr.f32.mxu0 0.0
      %9274 = vmatmul.mubr.f32.gmra.mrb[0].mxu0 %v9082
      %v9275 = vpop.f32.mrb[0].mxu0
      %v9276 = vadd.f32 %v9031, %v9275
      %v9277 = vpop.f32.mrb[0].mxu0
      %9278 = vmatprep.mubr.f32.mxu0 0.0
      %9279 = vmatmul.mubr.f32.gmra.mrb[0].mxu0 %v9085
      %v9280 = vpop.f32.mrb[0].mxu0
      %v9281 = vadd.f32 %v9031, %v9280
      %v9282 = vpop.f32.mrb[0].mxu0
      %9283 = vmatprep.mubr.f32.mxu0 0.0
      %9284 = vmatmul.mubr.f32.gmra.mrb[0].mxu0 %v9088
      %v9285 = vpop.f32.mrb[0].mxu0
      %v9286 = vadd.f32 %v9031, %v9285
      %v9287 = vpop.f32.mrb[0].mxu0
      %9288 = vmatprep.mubr.f32.mxu0 0.0
      %9289 = vmatmul.mubr.f32.gmra.mrb[0].mxu0 %v9091
      %v9290 = vpop.f32.mrb[0].mxu0
      %v9291 = vadd.f32 %v9031, %v9290
      %v9292 = vpop.f32.mrb[0].mxu0
      %9293 = vmatprep.mubr.f32.mxu0 0.0
      %9294 = vmatmul.mubr.f32.gmra.mrb[0].mxu0 %v9094
      %v9295 = vpop.f32.mrb[0].mxu0
      %v9296 = vadd.f32 %v9031, %v9295
      %v9297 = vpop.f32.mrb[0].mxu0
      %9298 = vmatprep.mubr.f32.mxu0 0.0
      %9299 = vmatmul.mubr.f32.gmra.mrb[0].mxu0 %v9097
      %v9300 = vpop.f32.mrb[0].mxu0
      %v9301 = vadd.f32 %v9031, %v9300
      %v9302 = vpop.f32.mrb[0].mxu0
      %9303 = vmatprep.mubr.f32.mxu0 0.0
      %9304 = vmatmul.mubr.f32.gmra.mrb[0].mxu0 %v9100
      %v9305 = vpop.f32.mrb[0].mxu0
      %v9306 = vadd.f32 %v9031, %v9305
      %v9307 = vpop.f32.mrb[0].mxu0
      %9308 = vmatprep.mubr.f32.mxu0 0.0
      %9309 = vmatmul.mubr.f32.gmra.mrb[0].mxu0 %v9103
      %v9310 = vpop.f32.mrb[0].mxu0
      %v9311 = vadd.f32 %v9031, %v9310
      %v9312 = vpop.f32.mrb[0].mxu0
      %9313 = vmatprep.mubr.f32.mxu0 0.0
      %9314 = vmatmul.mubr.f32.gmra.mrb[0].mxu0 %v9106
      %v9315 = vpop.f32.mrb[0].mxu0
      %v9316 = vadd.f32 %v9031, %v9315
      %v9317 = vpop.f32.mrb[0].mxu0
      %9318 = vmatprep.mubr.f32.mxu0 0.0
      %9319 = vmatmul.mubr.f32.gmra.mrb[0].mxu0 %v9109
      %v9320 = vpop.f32.mrb[0].mxu0
      %v9321 = vadd.f32 %v9031, %v9320
      %v9322 = vpop.f32.mrb[0].mxu0
      %9323 = vmatprep.mubr.f32.mxu0 0.0
      %9324 = vmatmul.mubr.f32.gmra.mrb[0].mxu0 %v9112
      %v9325 = vpop.f32.mrb[0].mxu0
      %v9326 = vadd.f32 %v9031, %v9325
      %v9327 = vpop.f32.mrb[0].mxu0
      %9328 = vmatprep.mubr.f32.mxu0 0.0
      %9329 = vmatmul.mubr.f32.gmra.mrb[0].mxu0 %v9115
      %v9330 = vpop.f32.mrb[0].mxu0
      %v9331 = vadd.f32 %v9031, %v9330
      %v9332 = vpop.f32.mrb[0].mxu0
      %9333 = vmatprep.mubr.f32.mxu0 0.0
      %9334 = vmatmul.mubr.f32.gmra.mrb[0].mxu0 %v9118
      %v9335 = vpop.f32.mrb[0].mxu0
      %v9336 = vadd.f32 %v9031, %v9335
      %v9337 = vpop.f32.mrb[0].mxu0
      %9338 = vmatprep.mubr.f32.mxu0 0.0
      %9339 = vmatmul.mubr.f32.gmra.mrb[0].mxu0 %v9121
      %v9340 = vpop.f32.mrb[0].mxu0
      %v9341 = vadd.f32 %v9031, %v9340
      %v9342 = vpop.f32.mrb[0].mxu0
      %9343 = vmatprep.mubr.f32.mxu0 0.0
      %9344 = vmatmul.mubr.f32.gmra.mrb[0].mxu0 %v9124
      %v9345 = vpop.f32.mrb[0].mxu0
      %v9346 = vadd.f32 %v9031, %v9345
      %v9347 = vpop.f32.mrb[0].mxu0
      %9348 = vmatprep.mubr.f32.mxu0 0.0
      %9349 = vmatmul.mubr.f32.gmra.mrb[0].mxu0 %v9127
      %v9350 = vpop.f32.mrb[0].mxu0
      %v9351 = vadd.f32 %v9031, %v9350
      %v9352 = vpop.f32.mrb[0].mxu0
      %9353 = vdwg.mxu0
      %s9354 = scalar_lea.vmem %s483, 768
      %9355 = vst.msk [vmem:[%s9354] sm:$0xff] %vm525, %v9196
      %9356 = vst.msk [vmem:[%s9354 + $0x8] sm:$0xff] %vm525, %v9201
      %9357 = vst.msk [vmem:[%s9354 + $0x10] sm:$0xff] %vm525, %v9206
      %9358 = vst.msk [vmem:[%s9354 + $0x18] sm:$0xff] %vm525, %v9211
      %9359 = vst.msk [vmem:[%s9354 + $0x20] sm:$0xff] %vm525, %v9216
      %9360 = vst.msk [vmem:[%s9354 + $0x28] sm:$0xff] %vm525, %v9221
      %9361 = vst.msk [vmem:[%s9354 + $0x30] sm:$0xff] %vm525, %v9226
      %9362 = vst.msk [vmem:[%s9354 + $0x38] sm:$0xff] %vm525, %v9231
      %9363 = vst.msk [vmem:[%s9354 + $0x40] sm:$0xff] %vm525, %v9236
      %9364 = vst.msk [vmem:[%s9354 + $0x48] sm:$0xff] %vm525, %v9241
      %9365 = vst.msk [vmem:[%s9354 + $0x50] sm:$0xff] %vm525, %v9246
      %9366 = vst.msk [vmem:[%s9354 + $0x58] sm:$0xff] %vm525, %v9251
      %9367 = vst.msk [vmem:[%s9354 + $0x60] sm:$0xff] %vm525, %v9256
      %9368 = vst.msk [vmem:[%s9354 + $0x68] sm:$0xff] %vm525, %v9261
      %9369 = vst.msk [vmem:[%s9354 + $0x70] sm:$0xff] %vm525, %v9266
      %9370 = vst.msk [vmem:[%s9354 + $0x78] sm:$0xff] %vm525, %v9271
      %9371 = vst.msk [vmem:[%s9354 + $0x80] sm:$0xff] %vm525, %v9276
      %9372 = vst.msk [vmem:[%s9354 + $0x88] sm:$0xff] %vm525, %v9281
      %9373 = vst.msk [vmem:[%s9354 + $0x90] sm:$0xff] %vm525, %v9286
      %9374 = vst.msk [vmem:[%s9354 + $0x98] sm:$0xff] %vm525, %v9291
      %9375 = vst.msk [vmem:[%s9354 + $0xa0] sm:$0xff] %vm525, %v9296
      %9376 = vst.msk [vmem:[%s9354 + $0xa8] sm:$0xff] %vm525, %v9301
      %9377 = vst.msk [vmem:[%s9354 + $0xb0] sm:$0xff] %vm525, %v9306
      %9378 = vst.msk [vmem:[%s9354 + $0xb8] sm:$0xff] %vm525, %v9311
      %9379 = vst.msk [vmem:[%s9354 + $0xc0] sm:$0xff] %vm525, %v9316
      %9380 = vst.msk [vmem:[%s9354 + $0xc8] sm:$0xff] %vm525, %v9321
      %9381 = vst.msk [vmem:[%s9354 + $0xd0] sm:$0xff] %vm525, %v9326
      %9382 = vst.msk [vmem:[%s9354 + $0xd8] sm:$0xff] %vm525, %v9331
      %9383 = vst.msk [vmem:[%s9354 + $0xe0] sm:$0xff] %vm525, %v9336
      %9384 = vst.msk [vmem:[%s9354 + $0xe8] sm:$0xff] %vm525, %v9341
      %9385 = vst.msk [vmem:[%s9354 + $0xf0] sm:$0xff] %vm525, %v9346
      %9386 = vst.msk [vmem:[%s9354 + $0xf8] sm:$0xff] %vm525, %v9351
      %s9387 = smul.u32 128, %s26
      %p9388 = scmp.lt.s32.totalorder %s9387, 255
      %s9389 = scalar_select %p9388, %s9387, 255
      %s9390 = smul.addr %s9389, 8
      %s9391 = scalar_lea.vmem %s13, %s9390
      %s9392 = smul.u32 128, %s26
      %p9393 = scmp.lt.s32.totalorder %s9392, 255
      %s9394 = scalar_select %p9393, %s9392, 255
      %s9395 = smul.addr %s9394, 8
      %s9396 = scalar_lea.vmem %s14, %s9395
      // Predicated region
      $region73: #{autoencoder_forward.1} parent=71 // pred_check
        %p9397 = pneg %p322
      $region74: #{autoencoder_forward.1} parent=71 // pred_check_branch
        %9399 = sbr.rel (%p9397) target = $region76
      $region75: #{autoencoder_forward.1} parent=71 // pred_region
        %s9400 = smul.u32 128, %s26
      $region76: #{autoencoder_forward.1} parent=71 // pred_fallthru
        _
      // Predicated region
      $region77: #{autoencoder_forward.1} parent=71 // pred_check
        %p9401 = pneg %p348
      $region78: #{autoencoder_forward.1} parent=71 // pred_check_branch
        %9403 = sbr.rel (%p9401) target = $region80
      $region79: #{autoencoder_forward.1} parent=71 // pred_region
        %s9404 = smul.u32 128, %s26
      $region80: #{autoencoder_forward.1} parent=71 // pred_fallthru
        _
    $region72: #{autoencoder_forward.1} parent=5 // pred_fallthru
      _
    %p9405 = scmp.le.s32.totalorder 2, %s21
    // Predicated region
    $region81: #{autoencoder_forward.1} parent=5 // pred_check
      %p9406 = pneg %p9405
    $region82: #{autoencoder_forward.1} parent=5 // pred_check_branch
      %9408 = sbr.rel (%p9406) target = $region84
    $region83: #{autoencoder_forward.1} parent=5 // pred_region
      %s9409 = ssub.s32 %s21, 2
      // Predicated region
      $region85: #{autoencoder_forward.1} parent=83 // pred_check
        %p9410 = pneg %p328
      $region86: #{autoencoder_forward.1} parent=83 // pred_check_branch
        %9412 = sbr.rel (%p9410) target = $region88
      $region87: #{autoencoder_forward.1} parent=83 // pred_region
        %s9413 = smul.u32 128, %s27
        %p9414 = scmp.lt.s32.totalorder %s9413, 255
        %s9415 = scalar_select %p9414, %s9413, 255
        %s9416 = smul.addr %s9415, 8
        %s9417 = scalar_lea.vmem %s13, %s9416
      $region88: #{autoencoder_forward.1} parent=83 // pred_fallthru
        _
      // Predicated region
      $region89: #{autoencoder_forward.1} parent=83 // pred_check
        %p9418 = pneg %p354
      $region90: #{autoencoder_forward.1} parent=83 // pred_check_branch
        %9420 = sbr.rel (%p9418) target = $region92
      $region91: #{autoencoder_forward.1} parent=83 // pred_region
        %s9421 = smul.u32 128, %s27
        %p9422 = scmp.lt.s32.totalorder %s9421, 255
        %s9423 = scalar_select %p9422, %s9421, 255
        %s9424 = smul.addr %s9423, 8
        %s9425 = scalar_lea.vmem %s14, %s9424
      $region92: #{autoencoder_forward.1} parent=83 // pred_fallthru
        _
    $region84: #{autoencoder_forward.1} parent=5 // pred_fallthru
      _
  $region6: #{autoencoder_forward.1} parent=0 // loop_footer
    %s25 = sadd.s32 1, %s21
  $region7: #{autoencoder_forward.1} parent=0 // loop_footer_branch
    %20 = sbr.rel target = $region3
  $region8: #{autoencoder_forward.1} parent=0 // loop_exit
    _

</llo_original>
